<compile_context>
chip_gen: v7x
topology: tpu7x:2x2x1
jax: 0.10.0
libtpu: 0.0.40
codegen_flags: <defaults>
</compile_context>

<pallas_src>
import numpy as np
import jax
import jax.numpy as jnp
from jax.experimental import pallas as pl
from jax.experimental.pallas import tpu as pltpu


# ----------------------------------------------------------------------------
# Fused Pallas kernel
# ----------------------------------------------------------------------------
def _fused_forward_kernel(x_ref, w1b_ref, b1_ref, w2f_ref, b2_ref,
                          wf1_ref, bf1_ref, wf2_ref, bf2_ref,
                          sqrt1_ref, sqrt2_ref, sqrt_fc1_ref, logp_ref,
                          c1p_scr, p2_scr, c2_scr, a2f_scr):
    f32 = jnp.float32
    B = sqrt1_ref.shape[0]

    # ---- conv1: banded-weight matmuls, one per kernel row --------------------
    # x_ref: (B, 1, 28, 28); w1b_ref: (5, 28, 240) with column = s*10 + o.
    x2 = x_ref[...][:, 0, :, :]                                   # (B, 28, 28)
    c1 = jnp.zeros((B * 24, 240), f32)
    for kh in range(5):
        rows = x2[:, kh:kh + 24, :].reshape(B * 24, 28)           # minor kept
        c1 = c1 + jnp.dot(rows, w1b_ref[kh], preferred_element_type=f32)

    # ---- 2x2 max-pool over width: pair-max of adjacent 10-lane groups --------
    for t in range(12):
        ga = c1[:, 20 * t:20 * t + 10]
        gb = c1[:, 20 * t + 10:20 * t + 20]
        c1p_scr[:, :, t, :] = jnp.maximum(ga, gb).reshape(B, 24, 10)

    # ---- 2x2 max-pool over height (stride-2 scratch reads) + bias/ReLU/sqrt --
    pooled1 = jnp.maximum(c1p_scr[:, pl.ds(0, 12, 2), :, :],
                          c1p_scr[:, pl.ds(1, 12, 2), :, :])      # (B,12,12,10)
    a1 = jnp.maximum(pooled1 + b1_ref[...], 0.0)                  # bias commutes w/ max
    sqrt1_ref[...] = jnp.sqrt(a1)

    # ---- conv2: im2col into VMEM (25 static stores) + ONE K=250 matmul -------
    for kh in range(5):
        for kw in range(5):
            col = (kh * 5 + kw) * 10
            win = a1[:, kh:kh + 8, kw:kw + 8, :].reshape(B * 64, 10)
            p2_scr[:, col:col + 10] = win
    c2 = jnp.dot(p2_scr[...], w2f_ref[...], preferred_element_type=f32)
    c2_scr[...] = c2.reshape(B, 8, 8, 20)

    # ---- 2x2 max-pool + bias + ReLU ------------------------------------------
    wmax2 = jnp.maximum(c2_scr[:, :, pl.ds(0, 4, 2), :],
                        c2_scr[:, :, pl.ds(1, 4, 2), :])          # (B,8,4,20)
    hsplit2 = wmax2.reshape(B, 4, 2, 4, 20)                       # leading split
    pooled2 = jnp.maximum(hsplit2[:, :, 0, :, :], hsplit2[:, :, 1, :, :])
    a2 = jnp.maximum(pooled2 + b2_ref[...], 0.0)                  # (B,4,4,20)

    # ---- flatten a2 to (B, 320) in (h, w, c) order (16 static stores) --------
    for i in range(4):
        for j in range(4):
            col = (i * 4 + j) * 20
            a2f_scr[:, col:col + 20] = a2[:, i, j, :]
    a2f = a2f_scr[...]                                            # (B, 320)

    # ---- sqrt(act_conv2) emitted lane-dense in PyTorch (c, h, w) order -------
    # Lane permutation k = hw*20 + c -> n = c*16 + hw via an exact 0/1 matmul.
    hw_i = jax.lax.broadcasted_iota(jnp.int32, (16, 20, 320), 0)
    c_i = jax.lax.broadcasted_iota(jnp.int32, (16, 20, 320), 1)
    n_i = jax.lax.broadcasted_iota(jnp.int32, (16, 20, 320), 2)
    perm = (n_i == c_i * 16 + hw_i).astype(f32).reshape(320, 320)
    sqrt2_ref[...] = jnp.dot(jnp.sqrt(a2f), perm, preferred_element_type=f32)

    # ---- fc1 (single matmul) + ReLU + sqrt ------------------------------------
    h1 = jnp.maximum(jnp.dot(a2f, wf1_ref[...], preferred_element_type=f32)
                     + bf1_ref[...], 0.0)
    sqrt_fc1_ref[...] = jnp.sqrt(h1)

    # ---- fc2 + log_softmax -----------------------------------------------------
    logits = (jnp.dot(h1, wf2_ref[...], preferred_element_type=f32)
              + bf2_ref[...])
    m = jnp.max(logits, axis=-1, keepdims=True)
    lse = jnp.log(jnp.sum(jnp.exp(logits - m), axis=-1, keepdims=True)) + m
    logp_ref[...] = logits - lse


def _fs(shape):
    # Full-array block (block == full dims), single grid point.
    n = len(shape)
    return pl.BlockSpec(shape, lambda i, _n=n: (0,) * _n)


def _fused_forward_call(x, w1b, b1, w2f, b2, wf1, bf1, wf2, bf2):
    B = x.shape[0]
    out_shape = (
        jax.ShapeDtypeStruct((B, 12, 12, 10), jnp.float32),   # sqrt(act_conv1), NHWC
        jax.ShapeDtypeStruct((B, 320), jnp.float32),          # sqrt(act_conv2), (c,h,w)
        jax.ShapeDtypeStruct((B, 50), jnp.float32),           # sqrt(act_fc1)
        jax.ShapeDtypeStruct((B, 10), jnp.float32),           # log_softmax
    )
    args = (x, w1b, b1, w2f, b2, wf1, bf1, wf2, bf2)
    return pl.pallas_call(
        _fused_forward_kernel,
        grid=(1,),
        in_specs=[_fs(a.shape) for a in args],
        out_specs=tuple(_fs(s.shape) for s in out_shape),
        out_shape=out_shape,
        scratch_shapes=[
            pltpu.VMEM((B, 24, 12, 10), jnp.float32),   # conv1, width-pooled
            pltpu.VMEM((B * 64, 250), jnp.float32),     # conv2 im2col patches
            pltpu.VMEM((B, 8, 8, 20), jnp.float32),     # conv2 pre-pool
            pltpu.VMEM((B, 320), jnp.float32),          # fc1 input, (h,w,c) order
        ],
        compiler_params=pltpu.CompilerParams(
            dimension_semantics=("arbitrary",)),
    )(*args)


# ----------------------------------------------------------------------------
# One-time parameter preprocessing (hoisted out of the jitted forward)
# ----------------------------------------------------------------------------
def prepare_params(params):
    cw1, cb1, cw2, cb2, fw1, fb1, fw2, fb2 = [np.asarray(p) for p in params]

    # conv1 banded (Toeplitz) weights: w1b[kh, j, s*10 + o] = cw1[o, 0, kh, j - s]
    # for 0 <= j - s < 5, else 0 -> conv1 becomes 5 dense (., 28) @ (28, 240) matmuls.
    w1b = np.zeros((5, 28, 240), np.float32)
    for s in range(24):
        for kw in range(5):
            w1b[:, s + kw, s * 10:(s + 1) * 10] = cw1[:, 0, :, kw].T  # (kh, o)

    # conv2 im2col weights: row (kh*5 + kw)*10 + c  ->  output channel o.
    w2f = np.transpose(cw2, (2, 3, 1, 0)).reshape(250, 20)

    # fc1 weights re-ordered so rows follow the kernel's (h, w, c) flatten.
    wf1m = np.transpose(fw1.reshape(50, 20, 4, 4), (2, 3, 1, 0)).reshape(320, 50)
    wf2m = fw2.T

    f = lambda a: jnp.asarray(a, jnp.float32)
    return (f(w1b), f(cb1.reshape(1, 10)), f(w2f), f(cb2.reshape(1, 20)),
            f(wf1m), f(fb1.reshape(1, 50)), f(wf2m), f(fb2.reshape(1, 10)))


# ----------------------------------------------------------------------------
# Full forward pass (mirrors MyCnnNet.forward)
# ----------------------------------------------------------------------------
@jax.jit
def my_cnn_net_forward(x, kparams):
    (w1b, b1, w2f, b2, wf1, bf1, wf2, bf2) = kparams
    s1, s2, s3, logp = _fused_forward_call(x, w1b, b1, w2f, b2,
                                           wf1, bf1, wf2, bf2)
    # Only remaining post-kernel op: tiny NHWC->NCHW transpose of sqrt(act_conv1).
    sqrt_act1 = jnp.transpose(s1, (0, 3, 1, 2))                   # (B, 10, 12, 12)
    return sqrt_act1, s2, s3, logp


# ----------------------------------------------------------------------------
# Pure-JAX reference (correctness check only)
# ----------------------------------------------------------------------------
def reference_forward(x, params):
    (cw1, cb1, cw2, cb2, fw1, fb1, fw2, fb2) = params
    dn = ('NCHW', 'OIHW', 'NCHW')
    c1 = jax.lax.conv_general_dilated(x, cw1, (1, 1), 'VALID',
                                      dimension_numbers=dn) + cb1.reshape(1, -1, 1, 1)
    p1 = jax.lax.reduce_window(c1, -jnp.inf, jax.lax.max,
                               (1, 1, 2, 2), (1, 1, 2, 2), 'VALID')
    a1 = jnp.maximum(p1, 0.0)
    c2 = jax.lax.conv_general_dilated(a1, cw2, (1, 1), 'VALID',
                                      dimension_numbers=dn) + cb2.reshape(1, -1, 1, 1)
    p2 = jax.lax.reduce_window(c2, -jnp.inf, jax.lax.max,
                               (1, 1, 2, 2), (1, 1, 2, 2), 'VALID')
    a2 = jnp.maximum(p2, 0.0).reshape(x.shape[0], 320)
    h1 = jnp.maximum(a2 @ fw1.T + fb1, 0.0)
    logits = h1 @ fw2.T + fb2
    return (jnp.sqrt(a1), jnp.sqrt(a2), jnp.sqrt(h1),
            jax.nn.log_softmax(logits, axis=1))


# ----------------------------------------------------------------------------
def init_params(key):
    ks = jax.random.split(key, 8)
    def w(k, shape, fan_in):
        return jax.random.normal(k, shape, jnp.float32) / jnp.sqrt(fan_in)
    cw1 = w(ks[0], (10, 1, 5, 5), 25.0)
    cb1 = w(ks[1], (10,), 25.0)
    cw2 = w(ks[2], (20, 10, 5, 5), 250.0)
    cb2 = w(ks[3], (20,), 250.0)
    fw1 = w(ks[4], (50, 320), 320.0)
    fb1 = w(ks[5], (50,), 320.0)
    fw2 = w(ks[6], (10, 50), 50.0)
    fb2 = w(ks[7], (10,), 50.0)
    return (cw1, cb1, cw2, cb2, fw1, fb1, fw2, fb2)


if __name__ == "__main__":
    key = jax.random.PRNGKey(0)
    k_x, k_p = jax.random.split(key)
    # The architecture forces 28x28 inputs (fc1 expects 20*4*4 = 320 features).
    x = jax.random.normal(k_x, (2, 1, 28, 28), jnp.float32)
    params = init_params(k_p)
    kparams = prepare_params(params)        # one-time weight re-layout

    outs = my_cnn_net_forward(x, kparams)
    outs = jax.block_until_ready(outs)

    refs = reference_forward(x, params)
    names = ["sqrt_act_conv1", "sqrt_act_conv2", "sqrt_act_fc1", "log_softmax"]
    for name, o, r in zip(names, outs, refs):
        assert o.shape == r.shape, (name, o.shape, r.shape)
        assert jnp.allclose(o, r, atol=2e-3, rtol=2e-3), name

    print("KERNEL_OK")
</pallas_src>

<mosaic_0001>
module attributes {stable_mosaic.version = 11 : i64} {
  func.func @_fused_forward_kernel(%arg0: i32, %arg1: memref<2x1x28x28xf32, #tpu.memory_space<vmem>>, %arg2: memref<5x28x240xf32, #tpu.memory_space<vmem>>, %arg3: memref<1x10xf32, #tpu.memory_space<vmem>>, %arg4: memref<250x20xf32, #tpu.memory_space<vmem>>, %arg5: memref<1x20xf32, #tpu.memory_space<vmem>>, %arg6: memref<320x50xf32, #tpu.memory_space<vmem>>, %arg7: memref<1x50xf32, #tpu.memory_space<vmem>>, %arg8: memref<50x10xf32, #tpu.memory_space<vmem>>, %arg9: memref<1x10xf32, #tpu.memory_space<vmem>>, %arg10: memref<2x12x12x10xf32, #tpu.memory_space<vmem>>, %arg11: memref<2x320xf32, #tpu.memory_space<vmem>>, %arg12: memref<2x50xf32, #tpu.memory_space<vmem>>, %arg13: memref<2x10xf32, #tpu.memory_space<vmem>>, %arg14: memref<2x24x12x10xf32, #tpu.memory_space<vmem>>, %arg15: memref<128x250xf32, #tpu.memory_space<vmem>>, %arg16: memref<2x8x8x20xf32, #tpu.memory_space<vmem>>, %arg17: memref<2x320xf32, #tpu.memory_space<vmem>>) attributes {dimension_semantics = [#tpu.dimension_semantics<arbitrary>], iteration_bounds = array<i64: 1>, scalar_prefetch = 0 : i64, scratch_operands = 4 : i64, tpu.core_type = #tpu.core_type<tc>, window_params = [{pipeline_mode = #tpu.pipeline_mode<synchronous>, transform_indices = @transform_0, window_bounds = array<i64: 2, 1, 28, 28>}, {pipeline_mode = #tpu.pipeline_mode<synchronous>, transform_indices = @transform_1, window_bounds = array<i64: 5, 28, 240>}, {pipeline_mode = #tpu.pipeline_mode<synchronous>, transform_indices = @transform_2, window_bounds = array<i64: 1, 10>}, {pipeline_mode = #tpu.pipeline_mode<synchronous>, transform_indices = @transform_3, window_bounds = array<i64: 250, 20>}, {pipeline_mode = #tpu.pipeline_mode<synchronous>, transform_indices = @transform_4, window_bounds = array<i64: 1, 20>}, {pipeline_mode = #tpu.pipeline_mode<synchronous>, transform_indices = @transform_5, window_bounds = array<i64: 320, 50>}, {pipeline_mode = #tpu.pipeline_mode<synchronous>, transform_indices = @transform_6, window_bounds = array<i64: 1, 50>}, {pipeline_mode = #tpu.pipeline_mode<synchronous>, transform_indices = @transform_7, window_bounds = array<i64: 50, 10>}, {pipeline_mode = #tpu.pipeline_mode<synchronous>, transform_indices = @transform_8, window_bounds = array<i64: 1, 10>}, {pipeline_mode = #tpu.pipeline_mode<synchronous>, transform_indices = @transform_9, window_bounds = array<i64: 2, 12, 12, 10>}, {pipeline_mode = #tpu.pipeline_mode<synchronous>, transform_indices = @transform_10, window_bounds = array<i64: 2, 320>}, {pipeline_mode = #tpu.pipeline_mode<synchronous>, transform_indices = @transform_11, window_bounds = array<i64: 2, 50>}, {pipeline_mode = #tpu.pipeline_mode<synchronous>, transform_indices = @transform_12, window_bounds = array<i64: 2, 10>}]} {
    %c0 = arith.constant 0 : index
    %c0_0 = arith.constant 0 : index
    %c0_1 = arith.constant 0 : index
    %c0_2 = arith.constant 0 : index
    %0 = vector.load %arg1[%c0, %c0_0, %c0_1, %c0_2] : memref<2x1x28x28xf32, #tpu.memory_space<vmem>>, vector<2x1x28x28xf32>
    %1 = vector.shape_cast %0 : vector<2x1x28x28xf32> to vector<2x28x28xf32>
    %cst = arith.constant 0.000000e+00 : f32
    %2 = vector.broadcast %cst : f32 to vector<48x240xf32>
    %3 = vector.extract_strided_slice %1 {offsets = [0, 0, 0], sizes = [2, 24, 28], strides = [1, 1, 1]} : vector<2x28x28xf32> to vector<2x24x28xf32>
    %4 = vector.shape_cast %3 : vector<2x24x28xf32> to vector<48x28xf32>
    %c0_3 = arith.constant 0 : index
    %c0_4 = arith.constant 0 : index
    %c0_5 = arith.constant 0 : index
    %5 = vector.load %arg2[%c0_3, %c0_4, %c0_5] : memref<5x28x240xf32, #tpu.memory_space<vmem>>, vector<1x28x240xf32>
    %6 = vector.shape_cast %5 : vector<1x28x240xf32> to vector<28x240xf32>
    %cst_6 = arith.constant dense<0.000000e+00> : vector<48x240xf32>
    %7 = tpu.matmul %4, %6, %cst_6 {dimension_numbers = #tpu.dot_dimension_numbers<[1], [0], [0], [1], [0, 0, 1, 1], [], []>} : vector<48x28xf32>, vector<28x240xf32>, vector<48x240xf32> -> vector<48x240xf32>
    %8 = arith.addf %2, %7 : vector<48x240xf32>
    %9 = vector.extract_strided_slice %1 {offsets = [0, 1, 0], sizes = [2, 24, 28], strides = [1, 1, 1]} : vector<2x28x28xf32> to vector<2x24x28xf32>
    %10 = vector.shape_cast %9 : vector<2x24x28xf32> to vector<48x28xf32>
    %c1 = arith.constant 1 : index
    %c0_7 = arith.constant 0 : index
    %c0_8 = arith.constant 0 : index
    %11 = vector.load %arg2[%c1, %c0_7, %c0_8] : memref<5x28x240xf32, #tpu.memory_space<vmem>>, vector<1x28x240xf32>
    %12 = vector.shape_cast %11 : vector<1x28x240xf32> to vector<28x240xf32>
    %cst_9 = arith.constant dense<0.000000e+00> : vector<48x240xf32>
    %13 = tpu.matmul %10, %12, %cst_9 {dimension_numbers = #tpu.dot_dimension_numbers<[1], [0], [0], [1], [0, 0, 1, 1], [], []>} : vector<48x28xf32>, vector<28x240xf32>, vector<48x240xf32> -> vector<48x240xf32>
    %14 = arith.addf %8, %13 : vector<48x240xf32>
    %15 = vector.extract_strided_slice %1 {offsets = [0, 2, 0], sizes = [2, 24, 28], strides = [1, 1, 1]} : vector<2x28x28xf32> to vector<2x24x28xf32>
    %16 = vector.shape_cast %15 : vector<2x24x28xf32> to vector<48x28xf32>
    %c2 = arith.constant 2 : index
    %c0_10 = arith.constant 0 : index
    %c0_11 = arith.constant 0 : index
    %17 = vector.load %arg2[%c2, %c0_10, %c0_11] : memref<5x28x240xf32, #tpu.memory_space<vmem>>, vector<1x28x240xf32>
    %18 = vector.shape_cast %17 : vector<1x28x240xf32> to vector<28x240xf32>
    %cst_12 = arith.constant dense<0.000000e+00> : vector<48x240xf32>
    %19 = tpu.matmul %16, %18, %cst_12 {dimension_numbers = #tpu.dot_dimension_numbers<[1], [0], [0], [1], [0, 0, 1, 1], [], []>} : vector<48x28xf32>, vector<28x240xf32>, vector<48x240xf32> -> vector<48x240xf32>
    %20 = arith.addf %14, %19 : vector<48x240xf32>
    %21 = vector.extract_strided_slice %1 {offsets = [0, 3, 0], sizes = [2, 24, 28], strides = [1, 1, 1]} : vector<2x28x28xf32> to vector<2x24x28xf32>
    %22 = vector.shape_cast %21 : vector<2x24x28xf32> to vector<48x28xf32>
    %c3 = arith.constant 3 : index
    %c0_13 = arith.constant 0 : index
    %c0_14 = arith.constant 0 : index
    %23 = vector.load %arg2[%c3, %c0_13, %c0_14] : memref<5x28x240xf32, #tpu.memory_space<vmem>>, vector<1x28x240xf32>
    %24 = vector.shape_cast %23 : vector<1x28x240xf32> to vector<28x240xf32>
    %cst_15 = arith.constant dense<0.000000e+00> : vector<48x240xf32>
    %25 = tpu.matmul %22, %24, %cst_15 {dimension_numbers = #tpu.dot_dimension_numbers<[1], [0], [0], [1], [0, 0, 1, 1], [], []>} : vector<48x28xf32>, vector<28x240xf32>, vector<48x240xf32> -> vector<48x240xf32>
    %26 = arith.addf %20, %25 : vector<48x240xf32>
    %27 = vector.extract_strided_slice %1 {offsets = [0, 4, 0], sizes = [2, 24, 28], strides = [1, 1, 1]} : vector<2x28x28xf32> to vector<2x24x28xf32>
    %28 = vector.shape_cast %27 : vector<2x24x28xf32> to vector<48x28xf32>
    %c4 = arith.constant 4 : index
    %c0_16 = arith.constant 0 : index
    %c0_17 = arith.constant 0 : index
    %29 = vector.load %arg2[%c4, %c0_16, %c0_17] : memref<5x28x240xf32, #tpu.memory_space<vmem>>, vector<1x28x240xf32>
    %30 = vector.shape_cast %29 : vector<1x28x240xf32> to vector<28x240xf32>
    %cst_18 = arith.constant dense<0.000000e+00> : vector<48x240xf32>
    %31 = tpu.matmul %28, %30, %cst_18 {dimension_numbers = #tpu.dot_dimension_numbers<[1], [0], [0], [1], [0, 0, 1, 1], [], []>} : vector<48x28xf32>, vector<28x240xf32>, vector<48x240xf32> -> vector<48x240xf32>
    %32 = arith.addf %26, %31 : vector<48x240xf32>
    %33 = vector.extract_strided_slice %32 {offsets = [0, 0], sizes = [48, 10], strides = [1, 1]} : vector<48x240xf32> to vector<48x10xf32>
    %34 = vector.extract_strided_slice %32 {offsets = [0, 10], sizes = [48, 10], strides = [1, 1]} : vector<48x240xf32> to vector<48x10xf32>
    %35 = arith.maximumf %33, %34 : vector<48x10xf32>
    %36 = vector.shape_cast %35 : vector<48x10xf32> to vector<2x24x10xf32>
    %c0_19 = arith.constant 0 : index
    %c0_20 = arith.constant 0 : index
    %c0_21 = arith.constant 0 : index
    %c0_22 = arith.constant 0 : index
    %37 = vector.load %arg14[%c0_19, %c0_20, %c0_21, %c0_22] : memref<2x24x12x10xf32, #tpu.memory_space<vmem>>, vector<2x24x1x10xf32>
    %38 = vector.shape_cast %37 : vector<2x24x1x10xf32> to vector<2x24x10xf32>
    %39 = vector.shape_cast %36 : vector<2x24x10xf32> to vector<2x24x1x10xf32>
    tpu.vector_store %arg14[%c0_19, %c0_20, %c0_21, %c0_22], %39 {strides = array<i32>} : memref<2x24x12x10xf32, #tpu.memory_space<vmem>>, vector<2x24x1x10xf32>,
    %40 = vector.extract_strided_slice %32 {offsets = [0, 20], sizes = [48, 10], strides = [1, 1]} : vector<48x240xf32> to vector<48x10xf32>
    %41 = vector.extract_strided_slice %32 {offsets = [0, 30], sizes = [48, 10], strides = [1, 1]} : vector<48x240xf32> to vector<48x10xf32>
    %42 = arith.maximumf %40, %41 : vector<48x10xf32>
    %43 = vector.shape_cast %42 : vector<48x10xf32> to vector<2x24x10xf32>
    %c0_23 = arith.constant 0 : index
    %c0_24 = arith.constant 0 : index
    %c1_25 = arith.constant 1 : index
    %c0_26 = arith.constant 0 : index
    %44 = vector.load %arg14[%c0_23, %c0_24, %c1_25, %c0_26] : memref<2x24x12x10xf32, #tpu.memory_space<vmem>>, vector<2x24x1x10xf32>
    %45 = vector.shape_cast %44 : vector<2x24x1x10xf32> to vector<2x24x10xf32>
    %46 = vector.shape_cast %43 : vector<2x24x10xf32> to vector<2x24x1x10xf32>
    tpu.vector_store %arg14[%c0_23, %c0_24, %c1_25, %c0_26], %46 {strides = array<i32>} : memref<2x24x12x10xf32, #tpu.memory_space<vmem>>, vector<2x24x1x10xf32>,
    %47 = vector.extract_strided_slice %32 {offsets = [0, 40], sizes = [48, 10], strides = [1, 1]} : vector<48x240xf32> to vector<48x10xf32>
    %48 = vector.extract_strided_slice %32 {offsets = [0, 50], sizes = [48, 10], strides = [1, 1]} : vector<48x240xf32> to vector<48x10xf32>
    %49 = arith.maximumf %47, %48 : vector<48x10xf32>
    %50 = vector.shape_cast %49 : vector<48x10xf32> to vector<2x24x10xf32>
    %c0_27 = arith.constant 0 : index
    %c0_28 = arith.constant 0 : index
    %c2_29 = arith.constant 2 : index
    %c0_30 = arith.constant 0 : index
    %51 = vector.load %arg14[%c0_27, %c0_28, %c2_29, %c0_30] : memref<2x24x12x10xf32, #tpu.memory_space<vmem>>, vector<2x24x1x10xf32>
    %52 = vector.shape_cast %51 : vector<2x24x1x10xf32> to vector<2x24x10xf32>
    %53 = vector.shape_cast %50 : vector<2x24x10xf32> to vector<2x24x1x10xf32>
    tpu.vector_store %arg14[%c0_27, %c0_28, %c2_29, %c0_30], %53 {strides = array<i32>} : memref<2x24x12x10xf32, #tpu.memory_space<vmem>>, vector<2x24x1x10xf32>,
    %54 = vector.extract_strided_slice %32 {offsets = [0, 60], sizes = [48, 10], strides = [1, 1]} : vector<48x240xf32> to vector<48x10xf32>
    %55 = vector.extract_strided_slice %32 {offsets = [0, 70], sizes = [48, 10], strides = [1, 1]} : vector<48x240xf32> to vector<48x10xf32>
    %56 = arith.maximumf %54, %55 : vector<48x10xf32>
    %57 = vector.shape_cast %56 : vector<48x10xf32> to vector<2x24x10xf32>
    %c0_31 = arith.constant 0 : index
    %c0_32 = arith.constant 0 : index
    %c3_33 = arith.constant 3 : index
    %c0_34 = arith.constant 0 : index
    %58 = vector.load %arg14[%c0_31, %c0_32, %c3_33, %c0_34] : memref<2x24x12x10xf32, #tpu.memory_space<vmem>>, vector<2x24x1x10xf32>
    %59 = vector.shape_cast %58 : vector<2x24x1x10xf32> to vector<2x24x10xf32>
    %60 = vector.shape_cast %57 : vector<2x24x10xf32> to vector<2x24x1x10xf32>
    tpu.vector_store %arg14[%c0_31, %c0_32, %c3_33, %c0_34], %60 {strides = array<i32>} : memref<2x24x12x10xf32, #tpu.memory_space<vmem>>, vector<2x24x1x10xf32>,
    %61 = vector.extract_strided_slice %32 {offsets = [0, 80], sizes = [48, 10], strides = [1, 1]} : vector<48x240xf32> to vector<48x10xf32>
    %62 = vector.extract_strided_slice %32 {offsets = [0, 90], sizes = [48, 10], strides = [1, 1]} : vector<48x240xf32> to vector<48x10xf32>
    %63 = arith.maximumf %61, %62 : vector<48x10xf32>
    %64 = vector.shape_cast %63 : vector<48x10xf32> to vector<2x24x10xf32>
    %c0_35 = arith.constant 0 : index
    %c0_36 = arith.constant 0 : index
    %c4_37 = arith.constant 4 : index
    %c0_38 = arith.constant 0 : index
    %65 = vector.load %arg14[%c0_35, %c0_36, %c4_37, %c0_38] : memref<2x24x12x10xf32, #tpu.memory_space<vmem>>, vector<2x24x1x10xf32>
    %66 = vector.shape_cast %65 : vector<2x24x1x10xf32> to vector<2x24x10xf32>
    %67 = vector.shape_cast %64 : vector<2x24x10xf32> to vector<2x24x1x10xf32>
    tpu.vector_store %arg14[%c0_35, %c0_36, %c4_37, %c0_38], %67 {strides = array<i32>} : memref<2x24x12x10xf32, #tpu.memory_space<vmem>>, vector<2x24x1x10xf32>,
    %68 = vector.extract_strided_slice %32 {offsets = [0, 100], sizes = [48, 10], strides = [1, 1]} : vector<48x240xf32> to vector<48x10xf32>
    %69 = vector.extract_strided_slice %32 {offsets = [0, 110], sizes = [48, 10], strides = [1, 1]} : vector<48x240xf32> to vector<48x10xf32>
    %70 = arith.maximumf %68, %69 : vector<48x10xf32>
    %71 = vector.shape_cast %70 : vector<48x10xf32> to vector<2x24x10xf32>
    %c0_39 = arith.constant 0 : index
    %c0_40 = arith.constant 0 : index
    %c5 = arith.constant 5 : index
    %c0_41 = arith.constant 0 : index
    %72 = vector.load %arg14[%c0_39, %c0_40, %c5, %c0_41] : memref<2x24x12x10xf32, #tpu.memory_space<vmem>>, vector<2x24x1x10xf32>
    %73 = vector.shape_cast %72 : vector<2x24x1x10xf32> to vector<2x24x10xf32>
    %74 = vector.shape_cast %71 : vector<2x24x10xf32> to vector<2x24x1x10xf32>
    tpu.vector_store %arg14[%c0_39, %c0_40, %c5, %c0_41], %74 {strides = array<i32>} : memref<2x24x12x10xf32, #tpu.memory_space<vmem>>, vector<2x24x1x10xf32>,
    %75 = vector.extract_strided_slice %32 {offsets = [0, 120], sizes = [48, 10], strides = [1, 1]} : vector<48x240xf32> to vector<48x10xf32>
    %76 = vector.extract_strided_slice %32 {offsets = [0, 130], sizes = [48, 10], strides = [1, 1]} : vector<48x240xf32> to vector<48x10xf32>
    %77 = arith.maximumf %75, %76 : vector<48x10xf32>
    %78 = vector.shape_cast %77 : vector<48x10xf32> to vector<2x24x10xf32>
    %c0_42 = arith.constant 0 : index
    %c0_43 = arith.constant 0 : index
    %c6 = arith.constant 6 : index
    %c0_44 = arith.constant 0 : index
    %79 = vector.load %arg14[%c0_42, %c0_43, %c6, %c0_44] : memref<2x24x12x10xf32, #tpu.memory_space<vmem>>, vector<2x24x1x10xf32>
    %80 = vector.shape_cast %79 : vector<2x24x1x10xf32> to vector<2x24x10xf32>
    %81 = vector.shape_cast %78 : vector<2x24x10xf32> to vector<2x24x1x10xf32>
    tpu.vector_store %arg14[%c0_42, %c0_43, %c6, %c0_44], %81 {strides = array<i32>} : memref<2x24x12x10xf32, #tpu.memory_space<vmem>>, vector<2x24x1x10xf32>,
    %82 = vector.extract_strided_slice %32 {offsets = [0, 140], sizes = [48, 10], strides = [1, 1]} : vector<48x240xf32> to vector<48x10xf32>
    %83 = vector.extract_strided_slice %32 {offsets = [0, 150], sizes = [48, 10], strides = [1, 1]} : vector<48x240xf32> to vector<48x10xf32>
    %84 = arith.maximumf %82, %83 : vector<48x10xf32>
    %85 = vector.shape_cast %84 : vector<48x10xf32> to vector<2x24x10xf32>
    %c0_45 = arith.constant 0 : index
    %c0_46 = arith.constant 0 : index
    %c7 = arith.constant 7 : index
    %c0_47 = arith.constant 0 : index
    %86 = vector.load %arg14[%c0_45, %c0_46, %c7, %c0_47] : memref<2x24x12x10xf32, #tpu.memory_space<vmem>>, vector<2x24x1x10xf32>
    %87 = vector.shape_cast %86 : vector<2x24x1x10xf32> to vector<2x24x10xf32>
    %88 = vector.shape_cast %85 : vector<2x24x10xf32> to vector<2x24x1x10xf32>
    tpu.vector_store %arg14[%c0_45, %c0_46, %c7, %c0_47], %88 {strides = array<i32>} : memref<2x24x12x10xf32, #tpu.memory_space<vmem>>, vector<2x24x1x10xf32>,
    %89 = vector.extract_strided_slice %32 {offsets = [0, 160], sizes = [48, 10], strides = [1, 1]} : vector<48x240xf32> to vector<48x10xf32>
    %90 = vector.extract_strided_slice %32 {offsets = [0, 170], sizes = [48, 10], strides = [1, 1]} : vector<48x240xf32> to vector<48x10xf32>
    %91 = arith.maximumf %89, %90 : vector<48x10xf32>
    %92 = vector.shape_cast %91 : vector<48x10xf32> to vector<2x24x10xf32>
    %c0_48 = arith.constant 0 : index
    %c0_49 = arith.constant 0 : index
    %c8 = arith.constant 8 : index
    %c0_50 = arith.constant 0 : index
    %93 = vector.load %arg14[%c0_48, %c0_49, %c8, %c0_50] : memref<2x24x12x10xf32, #tpu.memory_space<vmem>>, vector<2x24x1x10xf32>
    %94 = vector.shape_cast %93 : vector<2x24x1x10xf32> to vector<2x24x10xf32>
    %95 = vector.shape_cast %92 : vector<2x24x10xf32> to vector<2x24x1x10xf32>
    tpu.vector_store %arg14[%c0_48, %c0_49, %c8, %c0_50], %95 {strides = array<i32>} : memref<2x24x12x10xf32, #tpu.memory_space<vmem>>, vector<2x24x1x10xf32>,
    %96 = vector.extract_strided_slice %32 {offsets = [0, 180], sizes = [48, 10], strides = [1, 1]} : vector<48x240xf32> to vector<48x10xf32>
    %97 = vector.extract_strided_slice %32 {offsets = [0, 190], sizes = [48, 10], strides = [1, 1]} : vector<48x240xf32> to vector<48x10xf32>
    %98 = arith.maximumf %96, %97 : vector<48x10xf32>
    %99 = vector.shape_cast %98 : vector<48x10xf32> to vector<2x24x10xf32>
    %c0_51 = arith.constant 0 : index
    %c0_52 = arith.constant 0 : index
    %c9 = arith.constant 9 : index
    %c0_53 = arith.constant 0 : index
    %100 = vector.load %arg14[%c0_51, %c0_52, %c9, %c0_53] : memref<2x24x12x10xf32, #tpu.memory_space<vmem>>, vector<2x24x1x10xf32>
    %101 = vector.shape_cast %100 : vector<2x24x1x10xf32> to vector<2x24x10xf32>
    %102 = vector.shape_cast %99 : vector<2x24x10xf32> to vector<2x24x1x10xf32>
    tpu.vector_store %arg14[%c0_51, %c0_52, %c9, %c0_53], %102 {strides = array<i32>} : memref<2x24x12x10xf32, #tpu.memory_space<vmem>>, vector<2x24x1x10xf32>,
    %103 = vector.extract_strided_slice %32 {offsets = [0, 200], sizes = [48, 10], strides = [1, 1]} : vector<48x240xf32> to vector<48x10xf32>
    %104 = vector.extract_strided_slice %32 {offsets = [0, 210], sizes = [48, 10], strides = [1, 1]} : vector<48x240xf32> to vector<48x10xf32>
    %105 = arith.maximumf %103, %104 : vector<48x10xf32>
    %106 = vector.shape_cast %105 : vector<48x10xf32> to vector<2x24x10xf32>
    %c0_54 = arith.constant 0 : index
    %c0_55 = arith.constant 0 : index
    %c10 = arith.constant 10 : index
    %c0_56 = arith.constant 0 : index
    %107 = vector.load %arg14[%c0_54, %c0_55, %c10, %c0_56] : memref<2x24x12x10xf32, #tpu.memory_space<vmem>>, vector<2x24x1x10xf32>
    %108 = vector.shape_cast %107 : vector<2x24x1x10xf32> to vector<2x24x10xf32>
    %109 = vector.shape_cast %106 : vector<2x24x10xf32> to vector<2x24x1x10xf32>
    tpu.vector_store %arg14[%c0_54, %c0_55, %c10, %c0_56], %109 {strides = array<i32>} : memref<2x24x12x10xf32, #tpu.memory_space<vmem>>, vector<2x24x1x10xf32>,
    %110 = vector.extract_strided_slice %32 {offsets = [0, 220], sizes = [48, 10], strides = [1, 1]} : vector<48x240xf32> to vector<48x10xf32>
    %111 = vector.extract_strided_slice %32 {offsets = [0, 230], sizes = [48, 10], strides = [1, 1]} : vector<48x240xf32> to vector<48x10xf32>
    %112 = arith.maximumf %110, %111 : vector<48x10xf32>
    %113 = vector.shape_cast %112 : vector<48x10xf32> to vector<2x24x10xf32>
    %c0_57 = arith.constant 0 : index
    %c0_58 = arith.constant 0 : index
    %c11 = arith.constant 11 : index
    %c0_59 = arith.constant 0 : index
    %114 = vector.load %arg14[%c0_57, %c0_58, %c11, %c0_59] : memref<2x24x12x10xf32, #tpu.memory_space<vmem>>, vector<2x24x1x10xf32>
    %115 = vector.shape_cast %114 : vector<2x24x1x10xf32> to vector<2x24x10xf32>
    %116 = vector.shape_cast %113 : vector<2x24x10xf32> to vector<2x24x1x10xf32>
    tpu.vector_store %arg14[%c0_57, %c0_58, %c11, %c0_59], %116 {strides = array<i32>} : memref<2x24x12x10xf32, #tpu.memory_space<vmem>>, vector<2x24x1x10xf32>,
    %c0_60 = arith.constant 0 : index
    %c0_61 = arith.constant 0 : index
    %c0_62 = arith.constant 0 : index
    %c0_63 = arith.constant 0 : index
    %117 = tpu.strided_load %arg14[%c0_60, %c0_61, %c0_62, %c0_63] {strides = array<i32: 1, 2, 1, 1>} : memref<2x24x12x10xf32, #tpu.memory_space<vmem>>, vector<2x12x12x10xf32>
    %c0_64 = arith.constant 0 : index
    %c1_65 = arith.constant 1 : index
    %c0_66 = arith.constant 0 : index
    %c0_67 = arith.constant 0 : index
    %118 = tpu.strided_load %arg14[%c0_64, %c1_65, %c0_66, %c0_67] {strides = array<i32: 1, 2, 1, 1>} : memref<2x24x12x10xf32, #tpu.memory_space<vmem>>, vector<2x12x12x10xf32>
    %119 = arith.maximumf %117, %118 : vector<2x12x12x10xf32>
    %c0_68 = arith.constant 0 : index
    %c0_69 = arith.constant 0 : index
    %120 = vector.load %arg3[%c0_68, %c0_69] : memref<1x10xf32, #tpu.memory_space<vmem>>, vector<1x10xf32>
    %121 = vector.shape_cast %120 : vector<1x10xf32> to vector<1x1x1x10xf32>
    %122 = vector.broadcast %121 : vector<1x1x1x10xf32> to vector<2x12x12x10xf32>
    %123 = arith.addf %119, %122 : vector<2x12x12x10xf32>
    %cst_70 = arith.constant 0.000000e+00 : f32
    %124 = vector.broadcast %cst_70 : f32 to vector<2x12x12x10xf32>
    %125 = arith.maximumf %123, %124 : vector<2x12x12x10xf32>
    %126 = math.sqrt %125 : vector<2x12x12x10xf32>
    %c0_71 = arith.constant 0 : index
    %c0_72 = arith.constant 0 : index
    %c0_73 = arith.constant 0 : index
    %c0_74 = arith.constant 0 : index
    %127 = vector.load %arg10[%c0_71, %c0_72, %c0_73, %c0_74] : memref<2x12x12x10xf32, #tpu.memory_space<vmem>>, vector<2x12x12x10xf32>
    tpu.vector_store %arg10[%c0_71, %c0_72, %c0_73, %c0_74], %126 {strides = array<i32>} : memref<2x12x12x10xf32, #tpu.memory_space<vmem>>, vector<2x12x12x10xf32>,
    %128 = vector.extract_strided_slice %125 {offsets = [0, 0, 0, 0], sizes = [2, 8, 8, 10], strides = [1, 1, 1, 1]} : vector<2x12x12x10xf32> to vector<2x8x8x10xf32>
    %129 = vector.shape_cast %128 : vector<2x8x8x10xf32> to vector<128x10xf32>
    %c0_75 = arith.constant 0 : index
    %c0_76 = arith.constant 0 : index
    %130 = vector.load %arg15[%c0_75, %c0_76] : memref<128x250xf32, #tpu.memory_space<vmem>>, vector<128x10xf32>
    tpu.vector_store %arg15[%c0_75, %c0_76], %129 {strides = array<i32>} : memref<128x250xf32, #tpu.memory_space<vmem>>, vector<128x10xf32>,
    %131 = vector.extract_strided_slice %125 {offsets = [0, 0, 1, 0], sizes = [2, 8, 8, 10], strides = [1, 1, 1, 1]} : vector<2x12x12x10xf32> to vector<2x8x8x10xf32>
    %132 = vector.shape_cast %131 : vector<2x8x8x10xf32> to vector<128x10xf32>
    %c0_77 = arith.constant 0 : index
    %c10_78 = arith.constant 10 : index
    %133 = vector.load %arg15[%c0_77, %c10_78] : memref<128x250xf32, #tpu.memory_space<vmem>>, vector<128x10xf32>
    tpu.vector_store %arg15[%c0_77, %c10_78], %132 {strides = array<i32>} : memref<128x250xf32, #tpu.memory_space<vmem>>, vector<128x10xf32>,
    %134 = vector.extract_strided_slice %125 {offsets = [0, 0, 2, 0], sizes = [2, 8, 8, 10], strides = [1, 1, 1, 1]} : vector<2x12x12x10xf32> to vector<2x8x8x10xf32>
    %135 = vector.shape_cast %134 : vector<2x8x8x10xf32> to vector<128x10xf32>
    %c0_79 = arith.constant 0 : index
    %c20 = arith.constant 20 : index
    %136 = vector.load %arg15[%c0_79, %c20] : memref<128x250xf32, #tpu.memory_space<vmem>>, vector<128x10xf32>
    tpu.vector_store %arg15[%c0_79, %c20], %135 {strides = array<i32>} : memref<128x250xf32, #tpu.memory_space<vmem>>, vector<128x10xf32>,
    %137 = vector.extract_strided_slice %125 {offsets = [0, 0, 3, 0], sizes = [2, 8, 8, 10], strides = [1, 1, 1, 1]} : vector<2x12x12x10xf32> to vector<2x8x8x10xf32>
    %138 = vector.shape_cast %137 : vector<2x8x8x10xf32> to vector<128x10xf32>
    %c0_80 = arith.constant 0 : index
    %c30 = arith.constant 30 : index
    %139 = vector.load %arg15[%c0_80, %c30] : memref<128x250xf32, #tpu.memory_space<vmem>>, vector<128x10xf32>
    tpu.vector_store %arg15[%c0_80, %c30], %138 {strides = array<i32>} : memref<128x250xf32, #tpu.memory_space<vmem>>, vector<128x10xf32>,
    %140 = vector.extract_strided_slice %125 {offsets = [0, 0, 4, 0], sizes = [2, 8, 8, 10], strides = [1, 1, 1, 1]} : vector<2x12x12x10xf32> to vector<2x8x8x10xf32>
    %141 = vector.shape_cast %140 : vector<2x8x8x10xf32> to vector<128x10xf32>
    %c0_81 = arith.constant 0 : index
    %c40 = arith.constant 40 : index
    %142 = vector.load %arg15[%c0_81, %c40] : memref<128x250xf32, #tpu.memory_space<vmem>>, vector<128x10xf32>
    tpu.vector_store %arg15[%c0_81, %c40], %141 {strides = array<i32>} : memref<128x250xf32, #tpu.memory_space<vmem>>, vector<128x10xf32>,
    %143 = vector.extract_strided_slice %125 {offsets = [0, 1, 0, 0], sizes = [2, 8, 8, 10], strides = [1, 1, 1, 1]} : vector<2x12x12x10xf32> to vector<2x8x8x10xf32>
    %144 = vector.shape_cast %143 : vector<2x8x8x10xf32> to vector<128x10xf32>
    %c0_82 = arith.constant 0 : index
    %c50 = arith.constant 50 : index
    %145 = vector.load %arg15[%c0_82, %c50] : memref<128x250xf32, #tpu.memory_space<vmem>>, vector<128x10xf32>
    tpu.vector_store %arg15[%c0_82, %c50], %144 {strides = array<i32>} : memref<128x250xf32, #tpu.memory_space<vmem>>, vector<128x10xf32>,
    %146 = vector.extract_strided_slice %125 {offsets = [0, 1, 1, 0], sizes = [2, 8, 8, 10], strides = [1, 1, 1, 1]} : vector<2x12x12x10xf32> to vector<2x8x8x10xf32>
    %147 = vector.shape_cast %146 : vector<2x8x8x10xf32> to vector<128x10xf32>
    %c0_83 = arith.constant 0 : index
    %c60 = arith.constant 60 : index
    %148 = vector.load %arg15[%c0_83, %c60] : memref<128x250xf32, #tpu.memory_space<vmem>>, vector<128x10xf32>
    tpu.vector_store %arg15[%c0_83, %c60], %147 {strides = array<i32>} : memref<128x250xf32, #tpu.memory_space<vmem>>, vector<128x10xf32>,
    %149 = vector.extract_strided_slice %125 {offsets = [0, 1, 2, 0], sizes = [2, 8, 8, 10], strides = [1, 1, 1, 1]} : vector<2x12x12x10xf32> to vector<2x8x8x10xf32>
    %150 = vector.shape_cast %149 : vector<2x8x8x10xf32> to vector<128x10xf32>
    %c0_84 = arith.constant 0 : index
    %c70 = arith.constant 70 : index
    %151 = vector.load %arg15[%c0_84, %c70] : memref<128x250xf32, #tpu.memory_space<vmem>>, vector<128x10xf32>
    tpu.vector_store %arg15[%c0_84, %c70], %150 {strides = array<i32>} : memref<128x250xf32, #tpu.memory_space<vmem>>, vector<128x10xf32>,
    %152 = vector.extract_strided_slice %125 {offsets = [0, 1, 3, 0], sizes = [2, 8, 8, 10], strides = [1, 1, 1, 1]} : vector<2x12x12x10xf32> to vector<2x8x8x10xf32>
    %153 = vector.shape_cast %152 : vector<2x8x8x10xf32> to vector<128x10xf32>
    %c0_85 = arith.constant 0 : index
    %c80 = arith.constant 80 : index
    %154 = vector.load %arg15[%c0_85, %c80] : memref<128x250xf32, #tpu.memory_space<vmem>>, vector<128x10xf32>
    tpu.vector_store %arg15[%c0_85, %c80], %153 {strides = array<i32>} : memref<128x250xf32, #tpu.memory_space<vmem>>, vector<128x10xf32>,
    %155 = vector.extract_strided_slice %125 {offsets = [0, 1, 4, 0], sizes = [2, 8, 8, 10], strides = [1, 1, 1, 1]} : vector<2x12x12x10xf32> to vector<2x8x8x10xf32>
    %156 = vector.shape_cast %155 : vector<2x8x8x10xf32> to vector<128x10xf32>
    %c0_86 = arith.constant 0 : index
    %c90 = arith.constant 90 : index
    %157 = vector.load %arg15[%c0_86, %c90] : memref<128x250xf32, #tpu.memory_space<vmem>>, vector<128x10xf32>
    tpu.vector_store %arg15[%c0_86, %c90], %156 {strides = array<i32>} : memref<128x250xf32, #tpu.memory_space<vmem>>, vector<128x10xf32>,
    %158 = vector.extract_strided_slice %125 {offsets = [0, 2, 0, 0], sizes = [2, 8, 8, 10], strides = [1, 1, 1, 1]} : vector<2x12x12x10xf32> to vector<2x8x8x10xf32>
    %159 = vector.shape_cast %158 : vector<2x8x8x10xf32> to vector<128x10xf32>
    %c0_87 = arith.constant 0 : index
    %c100 = arith.constant 100 : index
    %160 = vector.load %arg15[%c0_87, %c100] : memref<128x250xf32, #tpu.memory_space<vmem>>, vector<128x10xf32>
    tpu.vector_store %arg15[%c0_87, %c100], %159 {strides = array<i32>} : memref<128x250xf32, #tpu.memory_space<vmem>>, vector<128x10xf32>,
    %161 = vector.extract_strided_slice %125 {offsets = [0, 2, 1, 0], sizes = [2, 8, 8, 10], strides = [1, 1, 1, 1]} : vector<2x12x12x10xf32> to vector<2x8x8x10xf32>
    %162 = vector.shape_cast %161 : vector<2x8x8x10xf32> to vector<128x10xf32>
    %c0_88 = arith.constant 0 : index
    %c110 = arith.constant 110 : index
    %163 = vector.load %arg15[%c0_88, %c110] : memref<128x250xf32, #tpu.memory_space<vmem>>, vector<128x10xf32>
    tpu.vector_store %arg15[%c0_88, %c110], %162 {strides = array<i32>} : memref<128x250xf32, #tpu.memory_space<vmem>>, vector<128x10xf32>,
    %164 = vector.extract_strided_slice %125 {offsets = [0, 2, 2, 0], sizes = [2, 8, 8, 10], strides = [1, 1, 1, 1]} : vector<2x12x12x10xf32> to vector<2x8x8x10xf32>
    %165 = vector.shape_cast %164 : vector<2x8x8x10xf32> to vector<128x10xf32>
    %c0_89 = arith.constant 0 : index
    %c120 = arith.constant 120 : index
    %166 = vector.load %arg15[%c0_89, %c120] : memref<128x250xf32, #tpu.memory_space<vmem>>, vector<128x10xf32>
    tpu.vector_store %arg15[%c0_89, %c120], %165 {strides = array<i32>} : memref<128x250xf32, #tpu.memory_space<vmem>>, vector<128x10xf32>,
    %167 = vector.extract_strided_slice %125 {offsets = [0, 2, 3, 0], sizes = [2, 8, 8, 10], strides = [1, 1, 1, 1]} : vector<2x12x12x10xf32> to vector<2x8x8x10xf32>
    %168 = vector.shape_cast %167 : vector<2x8x8x10xf32> to vector<128x10xf32>
    %c0_90 = arith.constant 0 : index
    %c130 = arith.constant 130 : index
    %169 = vector.load %arg15[%c0_90, %c130] : memref<128x250xf32, #tpu.memory_space<vmem>>, vector<128x10xf32>
    tpu.vector_store %arg15[%c0_90, %c130], %168 {strides = array<i32>} : memref<128x250xf32, #tpu.memory_space<vmem>>, vector<128x10xf32>,
    %170 = vector.extract_strided_slice %125 {offsets = [0, 2, 4, 0], sizes = [2, 8, 8, 10], strides = [1, 1, 1, 1]} : vector<2x12x12x10xf32> to vector<2x8x8x10xf32>
    %171 = vector.shape_cast %170 : vector<2x8x8x10xf32> to vector<128x10xf32>
    %c0_91 = arith.constant 0 : index
    %c140 = arith.constant 140 : index
    %172 = vector.load %arg15[%c0_91, %c140] : memref<128x250xf32, #tpu.memory_space<vmem>>, vector<128x10xf32>
    tpu.vector_store %arg15[%c0_91, %c140], %171 {strides = array<i32>} : memref<128x250xf32, #tpu.memory_space<vmem>>, vector<128x10xf32>,
    %173 = vector.extract_strided_slice %125 {offsets = [0, 3, 0, 0], sizes = [2, 8, 8, 10], strides = [1, 1, 1, 1]} : vector<2x12x12x10xf32> to vector<2x8x8x10xf32>
    %174 = vector.shape_cast %173 : vector<2x8x8x10xf32> to vector<128x10xf32>
    %c0_92 = arith.constant 0 : index
    %c150 = arith.constant 150 : index
    %175 = vector.load %arg15[%c0_92, %c150] : memref<128x250xf32, #tpu.memory_space<vmem>>, vector<128x10xf32>
    tpu.vector_store %arg15[%c0_92, %c150], %174 {strides = array<i32>} : memref<128x250xf32, #tpu.memory_space<vmem>>, vector<128x10xf32>,
    %176 = vector.extract_strided_slice %125 {offsets = [0, 3, 1, 0], sizes = [2, 8, 8, 10], strides = [1, 1, 1, 1]} : vector<2x12x12x10xf32> to vector<2x8x8x10xf32>
    %177 = vector.shape_cast %176 : vector<2x8x8x10xf32> to vector<128x10xf32>
    %c0_93 = arith.constant 0 : index
    %c160 = arith.constant 160 : index
    %178 = vector.load %arg15[%c0_93, %c160] : memref<128x250xf32, #tpu.memory_space<vmem>>, vector<128x10xf32>
    tpu.vector_store %arg15[%c0_93, %c160], %177 {strides = array<i32>} : memref<128x250xf32, #tpu.memory_space<vmem>>, vector<128x10xf32>,
    %179 = vector.extract_strided_slice %125 {offsets = [0, 3, 2, 0], sizes = [2, 8, 8, 10], strides = [1, 1, 1, 1]} : vector<2x12x12x10xf32> to vector<2x8x8x10xf32>
    %180 = vector.shape_cast %179 : vector<2x8x8x10xf32> to vector<128x10xf32>
    %c0_94 = arith.constant 0 : index
    %c170 = arith.constant 170 : index
    %181 = vector.load %arg15[%c0_94, %c170] : memref<128x250xf32, #tpu.memory_space<vmem>>, vector<128x10xf32>
    tpu.vector_store %arg15[%c0_94, %c170], %180 {strides = array<i32>} : memref<128x250xf32, #tpu.memory_space<vmem>>, vector<128x10xf32>,
    %182 = vector.extract_strided_slice %125 {offsets = [0, 3, 3, 0], sizes = [2, 8, 8, 10], strides = [1, 1, 1, 1]} : vector<2x12x12x10xf32> to vector<2x8x8x10xf32>
    %183 = vector.shape_cast %182 : vector<2x8x8x10xf32> to vector<128x10xf32>
    %c0_95 = arith.constant 0 : index
    %c180 = arith.constant 180 : index
    %184 = vector.load %arg15[%c0_95, %c180] : memref<128x250xf32, #tpu.memory_space<vmem>>, vector<128x10xf32>
    tpu.vector_store %arg15[%c0_95, %c180], %183 {strides = array<i32>} : memref<128x250xf32, #tpu.memory_space<vmem>>, vector<128x10xf32>,
    %185 = vector.extract_strided_slice %125 {offsets = [0, 3, 4, 0], sizes = [2, 8, 8, 10], strides = [1, 1, 1, 1]} : vector<2x12x12x10xf32> to vector<2x8x8x10xf32>
    %186 = vector.shape_cast %185 : vector<2x8x8x10xf32> to vector<128x10xf32>
    %c0_96 = arith.constant 0 : index
    %c190 = arith.constant 190 : index
    %187 = vector.load %arg15[%c0_96, %c190] : memref<128x250xf32, #tpu.memory_space<vmem>>, vector<128x10xf32>
    tpu.vector_store %arg15[%c0_96, %c190], %186 {strides = array<i32>} : memref<128x250xf32, #tpu.memory_space<vmem>>, vector<128x10xf32>,
    %188 = vector.extract_strided_slice %125 {offsets = [0, 4, 0, 0], sizes = [2, 8, 8, 10], strides = [1, 1, 1, 1]} : vector<2x12x12x10xf32> to vector<2x8x8x10xf32>
    %189 = vector.shape_cast %188 : vector<2x8x8x10xf32> to vector<128x10xf32>
    %c0_97 = arith.constant 0 : index
    %c200 = arith.constant 200 : index
    %190 = vector.load %arg15[%c0_97, %c200] : memref<128x250xf32, #tpu.memory_space<vmem>>, vector<128x10xf32>
    tpu.vector_store %arg15[%c0_97, %c200], %189 {strides = array<i32>} : memref<128x250xf32, #tpu.memory_space<vmem>>, vector<128x10xf32>,
    %191 = vector.extract_strided_slice %125 {offsets = [0, 4, 1, 0], sizes = [2, 8, 8, 10], strides = [1, 1, 1, 1]} : vector<2x12x12x10xf32> to vector<2x8x8x10xf32>
    %192 = vector.shape_cast %191 : vector<2x8x8x10xf32> to vector<128x10xf32>
    %c0_98 = arith.constant 0 : index
    %c210 = arith.constant 210 : index
    %193 = vector.load %arg15[%c0_98, %c210] : memref<128x250xf32, #tpu.memory_space<vmem>>, vector<128x10xf32>
    tpu.vector_store %arg15[%c0_98, %c210], %192 {strides = array<i32>} : memref<128x250xf32, #tpu.memory_space<vmem>>, vector<128x10xf32>,
    %194 = vector.extract_strided_slice %125 {offsets = [0, 4, 2, 0], sizes = [2, 8, 8, 10], strides = [1, 1, 1, 1]} : vector<2x12x12x10xf32> to vector<2x8x8x10xf32>
    %195 = vector.shape_cast %194 : vector<2x8x8x10xf32> to vector<128x10xf32>
    %c0_99 = arith.constant 0 : index
    %c220 = arith.constant 220 : index
    %196 = vector.load %arg15[%c0_99, %c220] : memref<128x250xf32, #tpu.memory_space<vmem>>, vector<128x10xf32>
    tpu.vector_store %arg15[%c0_99, %c220], %195 {strides = array<i32>} : memref<128x250xf32, #tpu.memory_space<vmem>>, vector<128x10xf32>,
    %197 = vector.extract_strided_slice %125 {offsets = [0, 4, 3, 0], sizes = [2, 8, 8, 10], strides = [1, 1, 1, 1]} : vector<2x12x12x10xf32> to vector<2x8x8x10xf32>
    %198 = vector.shape_cast %197 : vector<2x8x8x10xf32> to vector<128x10xf32>
    %c0_100 = arith.constant 0 : index
    %c230 = arith.constant 230 : index
    %199 = vector.load %arg15[%c0_100, %c230] : memref<128x250xf32, #tpu.memory_space<vmem>>, vector<128x10xf32>
    tpu.vector_store %arg15[%c0_100, %c230], %198 {strides = array<i32>} : memref<128x250xf32, #tpu.memory_space<vmem>>, vector<128x10xf32>,
    %200 = vector.extract_strided_slice %125 {offsets = [0, 4, 4, 0], sizes = [2, 8, 8, 10], strides = [1, 1, 1, 1]} : vector<2x12x12x10xf32> to vector<2x8x8x10xf32>
    %201 = vector.shape_cast %200 : vector<2x8x8x10xf32> to vector<128x10xf32>
    %c0_101 = arith.constant 0 : index
    %c240 = arith.constant 240 : index
    %202 = vector.load %arg15[%c0_101, %c240] : memref<128x250xf32, #tpu.memory_space<vmem>>, vector<128x10xf32>
    tpu.vector_store %arg15[%c0_101, %c240], %201 {strides = array<i32>} : memref<128x250xf32, #tpu.memory_space<vmem>>, vector<128x10xf32>,
    %c0_102 = arith.constant 0 : index
    %c0_103 = arith.constant 0 : index
    %203 = vector.load %arg15[%c0_102, %c0_103] : memref<128x250xf32, #tpu.memory_space<vmem>>, vector<128x250xf32>
    %c0_104 = arith.constant 0 : index
    %c0_105 = arith.constant 0 : index
    %204 = vector.load %arg4[%c0_104, %c0_105] : memref<250x20xf32, #tpu.memory_space<vmem>>, vector<250x20xf32>
    %cst_106 = arith.constant dense<0.000000e+00> : vector<128x20xf32>
    %205 = tpu.matmul %203, %204, %cst_106 {dimension_numbers = #tpu.dot_dimension_numbers<[1], [0], [0], [1], [0, 0, 1, 1], [], []>} : vector<128x250xf32>, vector<250x20xf32>, vector<128x20xf32> -> vector<128x20xf32>
    %206 = vector.shape_cast %205 : vector<128x20xf32> to vector<2x8x8x20xf32>
    %c0_107 = arith.constant 0 : index
    %c0_108 = arith.constant 0 : index
    %c0_109 = arith.constant 0 : index
    %c0_110 = arith.constant 0 : index
    %207 = vector.load %arg16[%c0_107, %c0_108, %c0_109, %c0_110] : memref<2x8x8x20xf32, #tpu.memory_space<vmem>>, vector<2x8x8x20xf32>
    tpu.vector_store %arg16[%c0_107, %c0_108, %c0_109, %c0_110], %206 {strides = array<i32>} : memref<2x8x8x20xf32, #tpu.memory_space<vmem>>, vector<2x8x8x20xf32>,
    %c0_111 = arith.constant 0 : index
    %c0_112 = arith.constant 0 : index
    %c0_113 = arith.constant 0 : index
    %c0_114 = arith.constant 0 : index
    %208 = tpu.strided_load %arg16[%c0_111, %c0_112, %c0_113, %c0_114] {strides = array<i32: 1, 1, 2, 1>} : memref<2x8x8x20xf32, #tpu.memory_space<vmem>>, vector<2x8x4x20xf32>
    %c0_115 = arith.constant 0 : index
    %c0_116 = arith.constant 0 : index
    %c1_117 = arith.constant 1 : index
    %c0_118 = arith.constant 0 : index
    %209 = tpu.strided_load %arg16[%c0_115, %c0_116, %c1_117, %c0_118] {strides = array<i32: 1, 1, 2, 1>} : memref<2x8x8x20xf32, #tpu.memory_space<vmem>>, vector<2x8x4x20xf32>
    %210 = arith.maximumf %208, %209 : vector<2x8x4x20xf32>
    %211 = vector.shape_cast %210 : vector<2x8x4x20xf32> to vector<2x4x2x4x20xf32>
    %212 = vector.extract_strided_slice %211 {offsets = [0, 0, 0, 0, 0], sizes = [2, 4, 1, 4, 20], strides = [1, 1, 1, 1, 1]} : vector<2x4x2x4x20xf32> to vector<2x4x1x4x20xf32>
    %213 = vector.shape_cast %212 : vector<2x4x1x4x20xf32> to vector<2x4x4x20xf32>
    %214 = vector.extract_strided_slice %211 {offsets = [0, 0, 1, 0, 0], sizes = [2, 4, 1, 4, 20], strides = [1, 1, 1, 1, 1]} : vector<2x4x2x4x20xf32> to vector<2x4x1x4x20xf32>
    %215 = vector.shape_cast %214 : vector<2x4x1x4x20xf32> to vector<2x4x4x20xf32>
    %216 = arith.maximumf %213, %215 : vector<2x4x4x20xf32>
    %c0_119 = arith.constant 0 : index
    %c0_120 = arith.constant 0 : index
    %217 = vector.load %arg5[%c0_119, %c0_120] : memref<1x20xf32, #tpu.memory_space<vmem>>, vector<1x20xf32>
    %218 = vector.shape_cast %217 : vector<1x20xf32> to vector<1x1x1x20xf32>
    %219 = vector.broadcast %218 : vector<1x1x1x20xf32> to vector<2x4x4x20xf32>
    %220 = arith.addf %216, %219 : vector<2x4x4x20xf32>
    %cst_121 = arith.constant 0.000000e+00 : f32
    %221 = vector.broadcast %cst_121 : f32 to vector<2x4x4x20xf32>
    %222 = arith.maximumf %220, %221 : vector<2x4x4x20xf32>
    %223 = vector.extract_strided_slice %222 {offsets = [0, 0, 0, 0], sizes = [2, 1, 1, 20], strides = [1, 1, 1, 1]} : vector<2x4x4x20xf32> to vector<2x1x1x20xf32>
    %224 = vector.shape_cast %223 : vector<2x1x1x20xf32> to vector<2x20xf32>
    %c0_122 = arith.constant 0 : index
    %c0_123 = arith.constant 0 : index
    %225 = vector.load %arg17[%c0_122, %c0_123] : memref<2x320xf32, #tpu.memory_space<vmem>>, vector<2x20xf32>
    tpu.vector_store %arg17[%c0_122, %c0_123], %224 {strides = array<i32>} : memref<2x320xf32, #tpu.memory_space<vmem>>, vector<2x20xf32>,
    %226 = vector.extract_strided_slice %222 {offsets = [0, 0, 1, 0], sizes = [2, 1, 1, 20], strides = [1, 1, 1, 1]} : vector<2x4x4x20xf32> to vector<2x1x1x20xf32>
    %227 = vector.shape_cast %226 : vector<2x1x1x20xf32> to vector<2x20xf32>
    %c0_124 = arith.constant 0 : index
    %c20_125 = arith.constant 20 : index
    %228 = vector.load %arg17[%c0_124, %c20_125] : memref<2x320xf32, #tpu.memory_space<vmem>>, vector<2x20xf32>
    tpu.vector_store %arg17[%c0_124, %c20_125], %227 {strides = array<i32>} : memref<2x320xf32, #tpu.memory_space<vmem>>, vector<2x20xf32>,
    %229 = vector.extract_strided_slice %222 {offsets = [0, 0, 2, 0], sizes = [2, 1, 1, 20], strides = [1, 1, 1, 1]} : vector<2x4x4x20xf32> to vector<2x1x1x20xf32>
    %230 = vector.shape_cast %229 : vector<2x1x1x20xf32> to vector<2x20xf32>
    %c0_126 = arith.constant 0 : index
    %c40_127 = arith.constant 40 : index
    %231 = vector.load %arg17[%c0_126, %c40_127] : memref<2x320xf32, #tpu.memory_space<vmem>>, vector<2x20xf32>
    tpu.vector_store %arg17[%c0_126, %c40_127], %230 {strides = array<i32>} : memref<2x320xf32, #tpu.memory_space<vmem>>, vector<2x20xf32>,
    %232 = vector.extract_strided_slice %222 {offsets = [0, 0, 3, 0], sizes = [2, 1, 1, 20], strides = [1, 1, 1, 1]} : vector<2x4x4x20xf32> to vector<2x1x1x20xf32>
    %233 = vector.shape_cast %232 : vector<2x1x1x20xf32> to vector<2x20xf32>
    %c0_128 = arith.constant 0 : index
    %c60_129 = arith.constant 60 : index
    %234 = vector.load %arg17[%c0_128, %c60_129] : memref<2x320xf32, #tpu.memory_space<vmem>>, vector<2x20xf32>
    tpu.vector_store %arg17[%c0_128, %c60_129], %233 {strides = array<i32>} : memref<2x320xf32, #tpu.memory_space<vmem>>, vector<2x20xf32>,
    %235 = vector.extract_strided_slice %222 {offsets = [0, 1, 0, 0], sizes = [2, 1, 1, 20], strides = [1, 1, 1, 1]} : vector<2x4x4x20xf32> to vector<2x1x1x20xf32>
    %236 = vector.shape_cast %235 : vector<2x1x1x20xf32> to vector<2x20xf32>
    %c0_130 = arith.constant 0 : index
    %c80_131 = arith.constant 80 : index
    %237 = vector.load %arg17[%c0_130, %c80_131] : memref<2x320xf32, #tpu.memory_space<vmem>>, vector<2x20xf32>
    tpu.vector_store %arg17[%c0_130, %c80_131], %236 {strides = array<i32>} : memref<2x320xf32, #tpu.memory_space<vmem>>, vector<2x20xf32>,
    %238 = vector.extract_strided_slice %222 {offsets = [0, 1, 1, 0], sizes = [2, 1, 1, 20], strides = [1, 1, 1, 1]} : vector<2x4x4x20xf32> to vector<2x1x1x20xf32>
    %239 = vector.shape_cast %238 : vector<2x1x1x20xf32> to vector<2x20xf32>
    %c0_132 = arith.constant 0 : index
    %c100_133 = arith.constant 100 : index
    %240 = vector.load %arg17[%c0_132, %c100_133] : memref<2x320xf32, #tpu.memory_space<vmem>>, vector<2x20xf32>
    tpu.vector_store %arg17[%c0_132, %c100_133], %239 {strides = array<i32>} : memref<2x320xf32, #tpu.memory_space<vmem>>, vector<2x20xf32>,
    %241 = vector.extract_strided_slice %222 {offsets = [0, 1, 2, 0], sizes = [2, 1, 1, 20], strides = [1, 1, 1, 1]} : vector<2x4x4x20xf32> to vector<2x1x1x20xf32>
    %242 = vector.shape_cast %241 : vector<2x1x1x20xf32> to vector<2x20xf32>
    %c0_134 = arith.constant 0 : index
    %c120_135 = arith.constant 120 : index
    %243 = vector.load %arg17[%c0_134, %c120_135] : memref<2x320xf32, #tpu.memory_space<vmem>>, vector<2x20xf32>
    tpu.vector_store %arg17[%c0_134, %c120_135], %242 {strides = array<i32>} : memref<2x320xf32, #tpu.memory_space<vmem>>, vector<2x20xf32>,
    %244 = vector.extract_strided_slice %222 {offsets = [0, 1, 3, 0], sizes = [2, 1, 1, 20], strides = [1, 1, 1, 1]} : vector<2x4x4x20xf32> to vector<2x1x1x20xf32>
    %245 = vector.shape_cast %244 : vector<2x1x1x20xf32> to vector<2x20xf32>
    %c0_136 = arith.constant 0 : index
    %c140_137 = arith.constant 140 : index
    %246 = vector.load %arg17[%c0_136, %c140_137] : memref<2x320xf32, #tpu.memory_space<vmem>>, vector<2x20xf32>
    tpu.vector_store %arg17[%c0_136, %c140_137], %245 {strides = array<i32>} : memref<2x320xf32, #tpu.memory_space<vmem>>, vector<2x20xf32>,
    %247 = vector.extract_strided_slice %222 {offsets = [0, 2, 0, 0], sizes = [2, 1, 1, 20], strides = [1, 1, 1, 1]} : vector<2x4x4x20xf32> to vector<2x1x1x20xf32>
    %248 = vector.shape_cast %247 : vector<2x1x1x20xf32> to vector<2x20xf32>
    %c0_138 = arith.constant 0 : index
    %c160_139 = arith.constant 160 : index
    %249 = vector.load %arg17[%c0_138, %c160_139] : memref<2x320xf32, #tpu.memory_space<vmem>>, vector<2x20xf32>
    tpu.vector_store %arg17[%c0_138, %c160_139], %248 {strides = array<i32>} : memref<2x320xf32, #tpu.memory_space<vmem>>, vector<2x20xf32>,
    %250 = vector.extract_strided_slice %222 {offsets = [0, 2, 1, 0], sizes = [2, 1, 1, 20], strides = [1, 1, 1, 1]} : vector<2x4x4x20xf32> to vector<2x1x1x20xf32>
    %251 = vector.shape_cast %250 : vector<2x1x1x20xf32> to vector<2x20xf32>
    %c0_140 = arith.constant 0 : index
    %c180_141 = arith.constant 180 : index
    %252 = vector.load %arg17[%c0_140, %c180_141] : memref<2x320xf32, #tpu.memory_space<vmem>>, vector<2x20xf32>
    tpu.vector_store %arg17[%c0_140, %c180_141], %251 {strides = array<i32>} : memref<2x320xf32, #tpu.memory_space<vmem>>, vector<2x20xf32>,
    %253 = vector.extract_strided_slice %222 {offsets = [0, 2, 2, 0], sizes = [2, 1, 1, 20], strides = [1, 1, 1, 1]} : vector<2x4x4x20xf32> to vector<2x1x1x20xf32>
    %254 = vector.shape_cast %253 : vector<2x1x1x20xf32> to vector<2x20xf32>
    %c0_142 = arith.constant 0 : index
    %c200_143 = arith.constant 200 : index
    %255 = vector.load %arg17[%c0_142, %c200_143] : memref<2x320xf32, #tpu.memory_space<vmem>>, vector<2x20xf32>
    tpu.vector_store %arg17[%c0_142, %c200_143], %254 {strides = array<i32>} : memref<2x320xf32, #tpu.memory_space<vmem>>, vector<2x20xf32>,
    %256 = vector.extract_strided_slice %222 {offsets = [0, 2, 3, 0], sizes = [2, 1, 1, 20], strides = [1, 1, 1, 1]} : vector<2x4x4x20xf32> to vector<2x1x1x20xf32>
    %257 = vector.shape_cast %256 : vector<2x1x1x20xf32> to vector<2x20xf32>
    %c0_144 = arith.constant 0 : index
    %c220_145 = arith.constant 220 : index
    %258 = vector.load %arg17[%c0_144, %c220_145] : memref<2x320xf32, #tpu.memory_space<vmem>>, vector<2x20xf32>
    tpu.vector_store %arg17[%c0_144, %c220_145], %257 {strides = array<i32>} : memref<2x320xf32, #tpu.memory_space<vmem>>, vector<2x20xf32>,
    %259 = vector.extract_strided_slice %222 {offsets = [0, 3, 0, 0], sizes = [2, 1, 1, 20], strides = [1, 1, 1, 1]} : vector<2x4x4x20xf32> to vector<2x1x1x20xf32>
    %260 = vector.shape_cast %259 : vector<2x1x1x20xf32> to vector<2x20xf32>
    %c0_146 = arith.constant 0 : index
    %c240_147 = arith.constant 240 : index
    %261 = vector.load %arg17[%c0_146, %c240_147] : memref<2x320xf32, #tpu.memory_space<vmem>>, vector<2x20xf32>
    tpu.vector_store %arg17[%c0_146, %c240_147], %260 {strides = array<i32>} : memref<2x320xf32, #tpu.memory_space<vmem>>, vector<2x20xf32>,
    %262 = vector.extract_strided_slice %222 {offsets = [0, 3, 1, 0], sizes = [2, 1, 1, 20], strides = [1, 1, 1, 1]} : vector<2x4x4x20xf32> to vector<2x1x1x20xf32>
    %263 = vector.shape_cast %262 : vector<2x1x1x20xf32> to vector<2x20xf32>
    %c0_148 = arith.constant 0 : index
    %c260 = arith.constant 260 : index
    %264 = vector.load %arg17[%c0_148, %c260] : memref<2x320xf32, #tpu.memory_space<vmem>>, vector<2x20xf32>
    tpu.vector_store %arg17[%c0_148, %c260], %263 {strides = array<i32>} : memref<2x320xf32, #tpu.memory_space<vmem>>, vector<2x20xf32>,
    %265 = vector.extract_strided_slice %222 {offsets = [0, 3, 2, 0], sizes = [2, 1, 1, 20], strides = [1, 1, 1, 1]} : vector<2x4x4x20xf32> to vector<2x1x1x20xf32>
    %266 = vector.shape_cast %265 : vector<2x1x1x20xf32> to vector<2x20xf32>
    %c0_149 = arith.constant 0 : index
    %c280 = arith.constant 280 : index
    %267 = vector.load %arg17[%c0_149, %c280] : memref<2x320xf32, #tpu.memory_space<vmem>>, vector<2x20xf32>
    tpu.vector_store %arg17[%c0_149, %c280], %266 {strides = array<i32>} : memref<2x320xf32, #tpu.memory_space<vmem>>, vector<2x20xf32>,
    %268 = vector.extract_strided_slice %222 {offsets = [0, 3, 3, 0], sizes = [2, 1, 1, 20], strides = [1, 1, 1, 1]} : vector<2x4x4x20xf32> to vector<2x1x1x20xf32>
    %269 = vector.shape_cast %268 : vector<2x1x1x20xf32> to vector<2x20xf32>
    %c0_150 = arith.constant 0 : index
    %c300 = arith.constant 300 : index
    %270 = vector.load %arg17[%c0_150, %c300] : memref<2x320xf32, #tpu.memory_space<vmem>>, vector<2x20xf32>
    tpu.vector_store %arg17[%c0_150, %c300], %269 {strides = array<i32>} : memref<2x320xf32, #tpu.memory_space<vmem>>, vector<2x20xf32>,
    %c0_151 = arith.constant 0 : index
    %c0_152 = arith.constant 0 : index
    %271 = vector.load %arg17[%c0_151, %c0_152] : memref<2x320xf32, #tpu.memory_space<vmem>>, vector<2x320xf32>
    %272 = tpu.iota {dimensions = array<i32: 0>} : vector<16x20x320xi32>
    %273 = tpu.iota {dimensions = array<i32: 1>} : vector<16x20x320xi32>
    %274 = tpu.iota {dimensions = array<i32: 2>} : vector<16x20x320xi32>
    %c16_i32 = arith.constant 16 : i32
    %275 = vector.broadcast %c16_i32 : i32 to vector<16x20x320xi32>
    %276 = arith.muli %273, %275 : vector<16x20x320xi32>
    %277 = arith.addi %276, %272 : vector<16x20x320xi32>
    %278 = arith.cmpi eq, %274, %277 : vector<16x20x320xi32>
    %279 = arith.extui %278 : vector<16x20x320xi1> to vector<16x20x320xi32>
    %280 = arith.sitofp %279 : vector<16x20x320xi32> to vector<16x20x320xf32>
    %281 = vector.shape_cast %280 : vector<16x20x320xf32> to vector<320x320xf32>
    %282 = math.sqrt %271 : vector<2x320xf32>
    %cst_153 = arith.constant dense<0.000000e+00> : vector<2x320xf32>
    %283 = tpu.matmul %282, %281, %cst_153 {dimension_numbers = #tpu.dot_dimension_numbers<[1], [0], [0], [1], [0, 0, 1, 1], [], []>} : vector<2x320xf32>, vector<320x320xf32>, vector<2x320xf32> -> vector<2x320xf32>
    %c0_154 = arith.constant 0 : index
    %c0_155 = arith.constant 0 : index
    %284 = vector.load %arg11[%c0_154, %c0_155] : memref<2x320xf32, #tpu.memory_space<vmem>>, vector<2x320xf32>
    tpu.vector_store %arg11[%c0_154, %c0_155], %283 {strides = array<i32>} : memref<2x320xf32, #tpu.memory_space<vmem>>, vector<2x320xf32>,
    %c0_156 = arith.constant 0 : index
    %c0_157 = arith.constant 0 : index
    %285 = vector.load %arg6[%c0_156, %c0_157] : memref<320x50xf32, #tpu.memory_space<vmem>>, vector<320x50xf32>
    %cst_158 = arith.constant dense<0.000000e+00> : vector<2x50xf32>
    %286 = tpu.matmul %271, %285, %cst_158 {dimension_numbers = #tpu.dot_dimension_numbers<[1], [0], [0], [1], [0, 0, 1, 1], [], []>} : vector<2x320xf32>, vector<320x50xf32>, vector<2x50xf32> -> vector<2x50xf32>
    %c0_159 = arith.constant 0 : index
    %c0_160 = arith.constant 0 : index
    %287 = vector.load %arg7[%c0_159, %c0_160] : memref<1x50xf32, #tpu.memory_space<vmem>>, vector<1x50xf32>
    %288 = vector.broadcast %287 : vector<1x50xf32> to vector<2x50xf32>
    %289 = arith.addf %286, %288 : vector<2x50xf32>
    %cst_161 = arith.constant 0.000000e+00 : f32
    %290 = vector.broadcast %cst_161 : f32 to vector<2x50xf32>
    %291 = arith.maximumf %289, %290 : vector<2x50xf32>
    %292 = math.sqrt %291 : vector<2x50xf32>
    %c0_162 = arith.constant 0 : index
    %c0_163 = arith.constant 0 : index
    %293 = vector.load %arg12[%c0_162, %c0_163] : memref<2x50xf32, #tpu.memory_space<vmem>>, vector<2x50xf32>
    tpu.vector_store %arg12[%c0_162, %c0_163], %292 {strides = array<i32>} : memref<2x50xf32, #tpu.memory_space<vmem>>, vector<2x50xf32>,
    %c0_164 = arith.constant 0 : index
    %c0_165 = arith.constant 0 : index
    %294 = vector.load %arg8[%c0_164, %c0_165] : memref<50x10xf32, #tpu.memory_space<vmem>>, vector<50x10xf32>
    %cst_166 = arith.constant dense<0.000000e+00> : vector<2x10xf32>
    %295 = tpu.matmul %291, %294, %cst_166 {dimension_numbers = #tpu.dot_dimension_numbers<[1], [0], [0], [1], [0, 0, 1, 1], [], []>} : vector<2x50xf32>, vector<50x10xf32>, vector<2x10xf32> -> vector<2x10xf32>
    %c0_167 = arith.constant 0 : index
    %c0_168 = arith.constant 0 : index
    %296 = vector.load %arg9[%c0_167, %c0_168] : memref<1x10xf32, #tpu.memory_space<vmem>>, vector<1x10xf32>
    %297 = vector.broadcast %296 : vector<1x10xf32> to vector<2x10xf32>
    %298 = arith.addf %295, %297 : vector<2x10xf32>
    %cst_169 = arith.constant dense<0xFF800000> : vector<2xf32>
    %299 = vector.multi_reduction <maximumf>, %298, %cst_169 [1] : vector<2x10xf32> to vector<2xf32>
    %300 = vector.shape_cast %299 : vector<2xf32> to vector<2x1xf32>
    %301 = vector.broadcast %300 : vector<2x1xf32> to vector<2x10xf32>
    %302 = arith.subf %298, %301 : vector<2x10xf32>
    %303 = math.exp %302 : vector<2x10xf32>
    %cst_170 = arith.constant dense<0.000000e+00> : vector<2xf32>
    %304 = vector.multi_reduction <add>, %303, %cst_170 [1] : vector<2x10xf32> to vector<2xf32>
    %305 = vector.shape_cast %304 : vector<2xf32> to vector<2x1xf32>
    %306 = math.log %305 : vector<2x1xf32>
    %307 = arith.addf %306, %300 : vector<2x1xf32>
    %308 = vector.broadcast %307 : vector<2x1xf32> to vector<2x10xf32>
    %309 = arith.subf %298, %308 : vector<2x10xf32>
    %c0_171 = arith.constant 0 : index
    %c0_172 = arith.constant 0 : index
    %310 = vector.load %arg13[%c0_171, %c0_172] : memref<2x10xf32, #tpu.memory_space<vmem>>, vector<2x10xf32>
    tpu.vector_store %arg13[%c0_171, %c0_172], %309 {strides = array<i32>} : memref<2x10xf32, #tpu.memory_space<vmem>>, vector<2x10xf32>,
    return
  }
  func.func @transform_0(%arg0: i32) -> (i32, i32, i32, i32) {
    %c0_i32 = arith.constant 0 : i32
    %c0_i32_0 = arith.constant 0 : i32
    %c0_i32_1 = arith.constant 0 : i32
    %c0_i32_2 = arith.constant 0 : i32
    %c0_i32_3 = arith.constant 0 : i32
    return %c0_i32, %c0_i32_0, %c0_i32_1, %c0_i32_2 : i32, i32, i32, i32
  }
  func.func @transform_1(%arg0: i32) -> (i32, i32, i32) {
    %c0_i32 = arith.constant 0 : i32
    %c0_i32_0 = arith.constant 0 : i32
    %c0_i32_1 = arith.constant 0 : i32
    %c0_i32_2 = arith.constant 0 : i32
    return %c0_i32, %c0_i32_0, %c0_i32_1 : i32, i32, i32
  }
  func.func @transform_2(%arg0: i32) -> (i32, i32) {
    %c0_i32 = arith.constant 0 : i32
    %c0_i32_0 = arith.constant 0 : i32
    %c0_i32_1 = arith.constant 0 : i32
    return %c0_i32, %c0_i32_0 : i32, i32
  }
  func.func @transform_3(%arg0: i32) -> (i32, i32) {
    %c0_i32 = arith.constant 0 : i32
    %c0_i32_0 = arith.constant 0 : i32
    %c0_i32_1 = arith.constant 0 : i32
    return %c0_i32, %c0_i32_0 : i32, i32
  }
  func.func @transform_4(%arg0: i32) -> (i32, i32) {
    %c0_i32 = arith.constant 0 : i32
    %c0_i32_0 = arith.constant 0 : i32
    %c0_i32_1 = arith.constant 0 : i32
    return %c0_i32, %c0_i32_0 : i32, i32
  }
  func.func @transform_5(%arg0: i32) -> (i32, i32) {
    %c0_i32 = arith.constant 0 : i32
    %c0_i32_0 = arith.constant 0 : i32
    %c0_i32_1 = arith.constant 0 : i32
    return %c0_i32, %c0_i32_0 : i32, i32
  }
  func.func @transform_6(%arg0: i32) -> (i32, i32) {
    %c0_i32 = arith.constant 0 : i32
    %c0_i32_0 = arith.constant 0 : i32
    %c0_i32_1 = arith.constant 0 : i32
    return %c0_i32, %c0_i32_0 : i32, i32
  }
  func.func @transform_7(%arg0: i32) -> (i32, i32) {
    %c0_i32 = arith.constant 0 : i32
    %c0_i32_0 = arith.constant 0 : i32
    %c0_i32_1 = arith.constant 0 : i32
    return %c0_i32, %c0_i32_0 : i32, i32
  }
  func.func @transform_8(%arg0: i32) -> (i32, i32) {
    %c0_i32 = arith.constant 0 : i32
    %c0_i32_0 = arith.constant 0 : i32
    %c0_i32_1 = arith.constant 0 : i32
    return %c0_i32, %c0_i32_0 : i32, i32
  }
  func.func @transform_9(%arg0: i32) -> (i32, i32, i32, i32) {
    %c0_i32 = arith.constant 0 : i32
    %c0_i32_0 = arith.constant 0 : i32
    %c0_i32_1 = arith.constant 0 : i32
    %c0_i32_2 = arith.constant 0 : i32
    %c0_i32_3 = arith.constant 0 : i32
    return %c0_i32, %c0_i32_0, %c0_i32_1, %c0_i32_2 : i32, i32, i32, i32
  }
  func.func @transform_10(%arg0: i32) -> (i32, i32) {
    %c0_i32 = arith.constant 0 : i32
    %c0_i32_0 = arith.constant 0 : i32
    %c0_i32_1 = arith.constant 0 : i32
    return %c0_i32, %c0_i32_0 : i32, i32
  }
  func.func @transform_11(%arg0: i32) -> (i32, i32) {
    %c0_i32 = arith.constant 0 : i32
    %c0_i32_0 = arith.constant 0 : i32
    %c0_i32_1 = arith.constant 0 : i32
    return %c0_i32, %c0_i32_0 : i32, i32
  }
  func.func @transform_12(%arg0: i32) -> (i32, i32) {
    %c0_i32 = arith.constant 0 : i32
    %c0_i32_0 = arith.constant 0 : i32
    %c0_i32_1 = arith.constant 0 : i32
    return %c0_i32, %c0_i32_0 : i32, i32
  }
}

</mosaic_0001>

<llo_original>
// kernel: my_cnn_net_forward.1
$region0: #{my_cnn_net_forward.1}
  #allocation0 [shape = 'u32[]', space=smem, size = 0x4, offset = 0x4, fixed_abs, tag = 'smem constant byte address 0x4 - core index']
  #allocation1 [shape = 'u32[144,128]{1,0:T(1,128)}', space=vmem, size = 0x12000, scoped, tag = 'internal scratch']
  #allocation2 [shape = 'f32[2,24,12,10]{3,2,1,0:T(8,128)}', space=vmem, size = 0x60000, scoped, tag = 'scratch operand']
  #allocation3 [shape = 'f32[128,250]{1,0:T(8,128)}', space=vmem, size = 0x20000, scoped, tag = 'scratch operand']
  #allocation4 [shape = 'f32[2,8,8,20]{3,2,1,0:T(8,128)}', space=vmem, size = 0x10000, scoped, tag = 'scratch operand']
  #allocation5 [shape = 'f32[2,320]{1,0:T(2,128)}', space=vmem, size = 0xc00, scoped, tag = 'scratch operand']
  %s0 = inlined_call_operand.vmem [shape: f32[2,1,28,28], index: 0, kind: input, shape index: {}]
  %s1 = inlined_call_operand.vmem [shape: f32[5,28,240], index: 1, kind: input, shape index: {}]
  %s2 = inlined_call_operand.vmem [shape: f32[1,10], index: 2, kind: input, shape index: {}]
  %s3 = inlined_call_operand.vmem [shape: f32[250,20], index: 3, kind: input, shape index: {}]
  %s4 = inlined_call_operand.vmem [shape: f32[1,20], index: 4, kind: input, shape index: {}]
  %s5 = inlined_call_operand.vmem [shape: f32[320,50], index: 5, kind: input, shape index: {}]
  %s6 = inlined_call_operand.vmem [shape: f32[1,50], index: 6, kind: input, shape index: {}]
  %s7 = inlined_call_operand.vmem [shape: f32[50,10], index: 7, kind: input, shape index: {}]
  %s8 = inlined_call_operand.vmem [shape: f32[1,10], index: 8, kind: input, shape index: {}]
  %s9 = inlined_call_operand.vmem [shape: f32[2,12,12,10], index: 9, kind: output, shape index: {0}]
  %s10 = inlined_call_operand.hbm [shape: f32[2,320], index: 10, kind: output, shape index: {1}]
  %s11 = inlined_call_operand.hbm [shape: f32[2,50], index: 11, kind: output, shape index: {2}]
  %s12 = inlined_call_operand.hbm [shape: f32[2,10], index: 12, kind: output, shape index: {3}]
  %13 = xla_tuple %s9, %s10, %s11, %s12
  %s14 = sld [smem:[#allocation0]]
  $region70: #{my_cnn_net_forward.1} parent=0
    _
  %s16 = ssub.s32 1, %s14
  %s17 = scalar_select 0, %s16, %s14
  $region1: #{my_cnn_net_forward.1} parent=0
    #allocation6 [shape = 'u8[3072]{0}', space=vmem, size = 0xc00, scoped, tag = 'output window, operand 1, single buffered']
    #allocation7 [shape = 's32[1]{0}', space=sflag, size = 0x4, scoped, tag = 'scoped memory for my_cnn_net_forward.1']
    #allocation8 [shape = 'u8[1024]{0}', space=vmem, size = 0x400, scoped, tag = 'output window, operand 2, single buffered']
    #allocation9 [shape = 's32[1]{0}', space=sflag, size = 0x4, scoped, tag = 'scoped memory for my_cnn_net_forward.1']
    #allocation10 [shape = 'u8[1024]{0}', space=vmem, size = 0x400, scoped, tag = 'output window, operand 3, single buffered']
    %18 = vsyncpa [#allocation7], 0
    %19 = vsyncpa [#allocation9], 0
    // Predicated region
    $region2: #{my_cnn_net_forward.1} parent=1 // pred_check
      _
    $region3: #{my_cnn_net_forward.1} parent=1 // pred_check_branch
      %21 = sbr.rel (0) target = $region5
    $region4: #{my_cnn_net_forward.1} parent=1 // pred_region
      _
    $region5: #{my_cnn_net_forward.1} parent=1 // pred_fallthru
      _
    // Predicated region
    $region6: #{my_cnn_net_forward.1} parent=1 // pred_check
      _
    $region7: #{my_cnn_net_forward.1} parent=1 // pred_check_branch
      %23 = sbr.rel (0) target = $region9
    $region8: #{my_cnn_net_forward.1} parent=1 // pred_region
      _
    $region9: #{my_cnn_net_forward.1} parent=1 // pred_fallthru
      _
    // Predicated region
    $region10: #{my_cnn_net_forward.1} parent=1 // pred_check
      _
    $region11: #{my_cnn_net_forward.1} parent=1 // pred_check_branch
      %25 = sbr.rel (0) target = $region13
    $region12: #{my_cnn_net_forward.1} parent=1 // pred_region
      _
    $region13: #{my_cnn_net_forward.1} parent=1 // pred_fallthru
      _
    // Predicated region
    $region14: #{my_cnn_net_forward.1} parent=1 // pred_check
      _
    $region15: #{my_cnn_net_forward.1} parent=1 // pred_check_branch
      %27 = sbr.rel (0) target = $region17
    $region16: #{my_cnn_net_forward.1} parent=1 // pred_region
      _
    $region17: #{my_cnn_net_forward.1} parent=1 // pred_fallthru
      _
    // Predicated region
    $region18: #{my_cnn_net_forward.1} parent=1 // pred_check
      _
    $region19: #{my_cnn_net_forward.1} parent=1 // pred_check_branch
      %29 = sbr.rel (0) target = $region21
    $region20: #{my_cnn_net_forward.1} parent=1 // pred_region
      _
    $region21: #{my_cnn_net_forward.1} parent=1 // pred_fallthru
      _
    // Predicated region
    $region22: #{my_cnn_net_forward.1} parent=1 // pred_check
      _
    $region23: #{my_cnn_net_forward.1} parent=1 // pred_check_branch
      %31 = sbr.rel (0) target = $region25
    $region24: #{my_cnn_net_forward.1} parent=1 // pred_region
      _
    $region25: #{my_cnn_net_forward.1} parent=1 // pred_fallthru
      _
    // Predicated region
    $region26: #{my_cnn_net_forward.1} parent=1 // pred_check
      _
    $region27: #{my_cnn_net_forward.1} parent=1 // pred_check_branch
      %33 = sbr.rel (0) target = $region29
    $region28: #{my_cnn_net_forward.1} parent=1 // pred_region
      _
    $region29: #{my_cnn_net_forward.1} parent=1 // pred_fallthru
      _
    // Predicated region
    $region30: #{my_cnn_net_forward.1} parent=1 // pred_check
      _
    $region31: #{my_cnn_net_forward.1} parent=1 // pred_check_branch
      %35 = sbr.rel (0) target = $region33
    $region32: #{my_cnn_net_forward.1} parent=1 // pred_region
      _
    $region33: #{my_cnn_net_forward.1} parent=1 // pred_fallthru
      _
    // Predicated region
    $region34: #{my_cnn_net_forward.1} parent=1 // pred_check
      _
    $region35: #{my_cnn_net_forward.1} parent=1 // pred_check_branch
      %37 = sbr.rel (0) target = $region37
    $region36: #{my_cnn_net_forward.1} parent=1 // pred_region
      _
    $region37: #{my_cnn_net_forward.1} parent=1 // pred_fallthru
      _
    %v38 = vld [vmem:[%s0] sm:$0xff]
    %v39 = vld [vmem:[%s0 + $0x8] sm:$0xff]
    %v40 = vld [vmem:[%s0 + $0x10] sm:$0xff]
    %v41 = vld [vmem:[%s0 + $0x18] sm:$0xf]
    %v42 = vld [vmem:[%s0 + $0x20] sm:$0xff]
    %v43 = vld [vmem:[%s0 + $0x28] sm:$0xff]
    %v44 = vld [vmem:[%s0 + $0x30] sm:$0xff]
    %v45 = vld [vmem:[%s0 + $0x38] sm:$0xf]
    %v46 = vld [vmem:[%s1] sm:$0xff]
    %v47 = vld [vmem:[%s1 + $0x8] sm:$0xff]
    %v48 = vld [vmem:[%s1 + $0x10] sm:$0xff]
    %v49 = vld [vmem:[%s1 + $0x18] sm:$0xff]
    %v50 = vld [vmem:[%s1 + $0x20] sm:$0xff]
    %v51 = vld [vmem:[%s1 + $0x28] sm:$0xff]
    %v52 = vld [vmem:[%s1 + $0x30] sm:$0xf]
    %v53 = vld [vmem:[%s1 + $0x38] sm:$0xf]
    %vm62 = vcmask 1046528
    %v63 = vrot.slane %v38, 1
    %v64 = vrot.slane %v39, 1
    %v65 = vsel %vm62, %v63, %v64
    %v66 = vrot.slane %v40, 1
    %v67 = vsel %vm62, %v64, %v66
    %v68 = vrot.slane %v41, 1
    %v69 = vsel %vm62, %v66, %v68
    %v70 = vrot.slane %v42, 1
    %v71 = vrot.slane %v43, 1
    %v72 = vsel %vm62, %v70, %v71
    %v73 = vrot.slane %v44, 1
    %v74 = vsel %vm62, %v71, %v73
    %v75 = vrot.slane %v45, 1
    %v76 = vsel %vm62, %v73, %v75
    %s77 = scalar_lea.vmem %s1, 64
    %v78 = vld [vmem:[%s77] sm:$0xff]
    %v79 = vld [vmem:[%s77 + $0x8] sm:$0xff]
    %v80 = vld [vmem:[%s77 + $0x10] sm:$0xff]
    %v81 = vld [vmem:[%s77 + $0x18] sm:$0xff]
    %v82 = vld [vmem:[%s77 + $0x20] sm:$0xff]
    %v83 = vld [vmem:[%s77 + $0x28] sm:$0xff]
    %v84 = vld [vmem:[%s77 + $0x30] sm:$0xf]
    %v85 = vld [vmem:[%s77 + $0x38] sm:$0xf]
    %vm86 = vcmask 228352
    %v87 = vsel %vm86, %v65, 0
    %v89 = vsel %vm86, %v67, 0
    %v91 = vsel %vm86, %v69, 0
    %v93 = vsel %vm86, %v72, 0
    %v95 = vsel %vm86, %v74, 0
    %v97 = vsel %vm86, %v76, 0
    %vm99 = vcmask 1043456
    %v101 = vsel %vm99, %v84, 0
    %v104 = vsel %vm99, %v85, 0
    %106 = vmatprep.subr.mxu0 %v79
    %107 = vmatpush1.msra.mxu0 %v78
    %108 = vmatprep.subr.mxu0 %v81
    %109 = vmatpush1.msra.mxu0 %v80
    %110 = vmatprep.subr.mxu0 %v83
    %111 = vmatpush1.msra.mxu0 %v82
    %112 = vmatprep.subr.mxu0 %v104
    %113 = vmatpush1.msra.mxu0 %v101
    %114 = vmatprep.subr.mxu0 0.0
    %115 = vmatpush1.msra.mxu0 0.0
    %116 = vmatprep.subr.mxu0 0.0
    %117 = vmatpush1.msra.mxu0 0.0
    %118 = vmatprep.subr.mxu0 0.0
    %119 = vmatpush1.msra.mxu0 0.0
    %120 = vmatprep.subr.mxu0 0.0
    %121 = vmatpush1.msra.mxu0 0.0
    %122 = vmatprep.subr.mxu0 0.0
    %123 = vmatpush1.msra.mxu0 0.0
    %124 = vmatprep.subr.mxu0 0.0
    %125 = vmatpush1.msra.mxu0 0.0
    %126 = vmatprep.subr.mxu0 0.0
    %127 = vmatpush1.msra.mxu0 0.0
    %128 = vmatprep.subr.mxu0 0.0
    %129 = vmatpush1.msra.mxu0 0.0
    %130 = vmatprep.subr.mxu0 0.0
    %131 = vmatpush1.msra.mxu0 0.0
    %132 = vmatprep.subr.mxu0 0.0
    %133 = vmatpush1.msra.mxu0 0.0
    %134 = vmatprep.subr.mxu0 0.0
    %135 = vmatpush1.msra.mxu0 0.0
    %136 = vmatprep.subr.mxu0 0.0
    %137 = vmatpush1.msra.mxu0 0.0
    %138 = vmatprep.subr.mxu0 0.0
    %139 = vmatpush1.msra.mxu0 0.0
    %140 = vmatprep.subr.mxu0 0.0
    %141 = vmatpush1.msra.mxu0 0.0
    %142 = vmatprep.subr.mxu0 0.0
    %143 = vmatpush1.msra.mxu0 0.0
    %144 = vmatprep.subr.mxu0 0.0
    %145 = vmatpush1.msra.mxu0 0.0
    %146 = vmatprep.subr.mxu0 0.0
    %147 = vmatpush1.msra.mxu0 0.0
    %148 = vmatprep.subr.mxu0 0.0
    %149 = vmatpush1.msra.mxu0 0.0
    %150 = vmatprep.subr.mxu0 0.0
    %151 = vmatpush1.msra.mxu0 0.0
    %152 = vmatprep.subr.mxu0 0.0
    %153 = vmatpush1.msra.mxu0 0.0
    %154 = vmatprep.subr.mxu0 0.0
    %155 = vmatpush1.msra.mxu0 0.0
    %156 = vmatprep.subr.mxu0 0.0
    %157 = vmatpush1.msra.mxu0 0.0
    %158 = vmatprep.subr.mxu0 0.0
    %159 = vmatpush1.msra.mxu0 0.0
    %160 = vmatprep.subr.mxu0 0.0
    %161 = vmatpush1.msra.mxu0 0.0
    %162 = vmatprep.subr.mxu0 0.0
    %163 = vmatpush1.msra.mxu0 0.0
    %164 = vmatprep.subr.mxu0 0.0
    %165 = vmatpush1.msra.mxu0 0.0
    %166 = vmatprep.subr.mxu0 0.0
    %167 = vmatpush1.msra.mxu0 0.0
    %168 = vmatprep.subr.mxu0 0.0
    %169 = vmatpush1.msra.mxu0 0.0
    %170 = vmatprep.mubr.f32.mxu0 0.0
    %171 = vmatmul.mubr.f32.gmra.mrb[0].mxu0 %v87
    %v172 = vpop.f32.mrb[0].mxu0
    %v173 = vadd.f32 0.0, %v172
    %v174 = vpop.f32.mrb[0].mxu0
    %v175 = vadd.f32 0.0, %v174
    %176 = vmatprep.mubr.f32.mxu0 0.0
    %177 = vmatmul.mubr.f32.gmra.mrb[0].mxu0 %v89
    %v178 = vpop.f32.mrb[0].mxu0
    %v179 = vadd.f32 0.0, %v178
    %v180 = vpop.f32.mrb[0].mxu0
    %v181 = vadd.f32 0.0, %v180
    %182 = vmatprep.mubr.f32.mxu0 0.0
    %183 = vmatmul.mubr.f32.gmra.mrb[0].mxu0 %v91
    %v184 = vpop.f32.mrb[0].mxu0
    %v185 = vadd.f32 0.0, %v184
    %v186 = vpop.f32.mrb[0].mxu0
    %v187 = vadd.f32 0.0, %v186
    %188 = vmatprep.mubr.f32.mxu0 0.0
    %189 = vmatmul.mubr.f32.gmra.mrb[0].mxu0 %v93
    %v190 = vpop.f32.mrb[0].mxu0
    %v191 = vadd.f32 0.0, %v190
    %v192 = vpop.f32.mrb[0].mxu0
    %v193 = vadd.f32 0.0, %v192
    %194 = vmatprep.mubr.f32.mxu0 0.0
    %195 = vmatmul.mubr.f32.gmra.mrb[0].mxu0 %v95
    %v196 = vpop.f32.mrb[0].mxu0
    %v197 = vadd.f32 0.0, %v196
    %v198 = vpop.f32.mrb[0].mxu0
    %v199 = vadd.f32 0.0, %v198
    %200 = vmatprep.mubr.f32.mxu0 0.0
    %201 = vmatmul.mubr.f32.gmra.mrb[0].mxu0 %v97
    %v202 = vpop.f32.mrb[0].mxu0
    %v203 = vadd.f32 0.0, %v202
    %v204 = vpop.f32.mrb[0].mxu0
    %v205 = vadd.f32 0.0, %v204
    %206 = vdwg.mxu0
    %v207 = vsel %vm86, %v38, 0
    %v209 = vsel %vm86, %v39, 0
    %v211 = vsel %vm86, %v40, 0
    %v213 = vsel %vm86, %v42, 0
    %v215 = vsel %vm86, %v43, 0
    %v217 = vsel %vm86, %v44, 0
    %v220 = vsel %vm99, %v52, 0
    %v223 = vsel %vm99, %v53, 0
    %225 = vmatprep.subr.mxu0 %v47
    %226 = vmatpush1.msra.mxu0 %v46
    %227 = vmatprep.subr.mxu0 %v49
    %228 = vmatpush1.msra.mxu0 %v48
    %229 = vmatprep.subr.mxu0 %v51
    %230 = vmatpush1.msra.mxu0 %v50
    %231 = vmatprep.subr.mxu0 %v223
    %232 = vmatpush1.msra.mxu0 %v220
    %233 = vmatprep.subr.mxu0 0.0
    %234 = vmatpush1.msra.mxu0 0.0
    %235 = vmatprep.subr.mxu0 0.0
    %236 = vmatpush1.msra.mxu0 0.0
    %237 = vmatprep.subr.mxu0 0.0
    %238 = vmatpush1.msra.mxu0 0.0
    %239 = vmatprep.subr.mxu0 0.0
    %240 = vmatpush1.msra.mxu0 0.0
    %241 = vmatprep.subr.mxu0 0.0
    %242 = vmatpush1.msra.mxu0 0.0
    %243 = vmatprep.subr.mxu0 0.0
    %244 = vmatpush1.msra.mxu0 0.0
    %245 = vmatprep.subr.mxu0 0.0
    %246 = vmatpush1.msra.mxu0 0.0
    %247 = vmatprep.subr.mxu0 0.0
    %248 = vmatpush1.msra.mxu0 0.0
    %249 = vmatprep.subr.mxu0 0.0
    %250 = vmatpush1.msra.mxu0 0.0
    %251 = vmatprep.subr.mxu0 0.0
    %252 = vmatpush1.msra.mxu0 0.0
    %253 = vmatprep.subr.mxu0 0.0
    %254 = vmatpush1.msra.mxu0 0.0
    %255 = vmatprep.subr.mxu0 0.0
    %256 = vmatpush1.msra.mxu0 0.0
    %257 = vmatprep.subr.mxu0 0.0
    %258 = vmatpush1.msra.mxu0 0.0
    %259 = vmatprep.subr.mxu0 0.0
    %260 = vmatpush1.msra.mxu0 0.0
    %261 = vmatprep.subr.mxu0 0.0
    %262 = vmatpush1.msra.mxu0 0.0
    %263 = vmatprep.subr.mxu0 0.0
    %264 = vmatpush1.msra.mxu0 0.0
    %265 = vmatprep.subr.mxu0 0.0
    %266 = vmatpush1.msra.mxu0 0.0
    %267 = vmatprep.subr.mxu0 0.0
    %268 = vmatpush1.msra.mxu0 0.0
    %269 = vmatprep.subr.mxu0 0.0
    %270 = vmatpush1.msra.mxu0 0.0
    %271 = vmatprep.subr.mxu0 0.0
    %272 = vmatpush1.msra.mxu0 0.0
    %273 = vmatprep.subr.mxu0 0.0
    %274 = vmatpush1.msra.mxu0 0.0
    %275 = vmatprep.subr.mxu0 0.0
    %276 = vmatpush1.msra.mxu0 0.0
    %277 = vmatprep.subr.mxu0 0.0
    %278 = vmatpush1.msra.mxu0 0.0
    %279 = vmatprep.subr.mxu0 0.0
    %280 = vmatpush1.msra.mxu0 0.0
    %281 = vmatprep.subr.mxu0 0.0
    %282 = vmatpush1.msra.mxu0 0.0
    %283 = vmatprep.subr.mxu0 0.0
    %284 = vmatpush1.msra.mxu0 0.0
    %285 = vmatprep.subr.mxu0 0.0
    %286 = vmatpush1.msra.mxu0 0.0
    %287 = vmatprep.subr.mxu0 0.0
    %288 = vmatpush1.msra.mxu0 0.0
    %289 = vmatprep.mubr.f32.mxu0 0.0
    %290 = vmatmul.mubr.f32.gmra.mrb[0].mxu0 %v207
    %v291 = vpop.f32.mrb[0].mxu0
    %v292 = vadd.f32 %v173, %v291
    %v293 = vpop.f32.mrb[0].mxu0
    %v294 = vadd.f32 %v175, %v293
    %295 = vmatprep.mubr.f32.mxu0 0.0
    %296 = vmatmul.mubr.f32.gmra.mrb[0].mxu0 %v209
    %v297 = vpop.f32.mrb[0].mxu0
    %v298 = vadd.f32 %v179, %v297
    %v299 = vpop.f32.mrb[0].mxu0
    %v300 = vadd.f32 %v181, %v299
    %301 = vmatprep.mubr.f32.mxu0 0.0
    %302 = vmatmul.mubr.f32.gmra.mrb[0].mxu0 %v211
    %v303 = vpop.f32.mrb[0].mxu0
    %v304 = vadd.f32 %v185, %v303
    %v305 = vpop.f32.mrb[0].mxu0
    %v306 = vadd.f32 %v187, %v305
    %307 = vmatprep.mubr.f32.mxu0 0.0
    %308 = vmatmul.mubr.f32.gmra.mrb[0].mxu0 %v213
    %v309 = vpop.f32.mrb[0].mxu0
    %v310 = vadd.f32 %v191, %v309
    %v311 = vpop.f32.mrb[0].mxu0
    %v312 = vadd.f32 %v193, %v311
    %313 = vmatprep.mubr.f32.mxu0 0.0
    %314 = vmatmul.mubr.f32.gmra.mrb[0].mxu0 %v215
    %v315 = vpop.f32.mrb[0].mxu0
    %v316 = vadd.f32 %v197, %v315
    %v317 = vpop.f32.mrb[0].mxu0
    %v318 = vadd.f32 %v199, %v317
    %319 = vmatprep.mubr.f32.mxu0 0.0
    %320 = vmatmul.mubr.f32.gmra.mrb[0].mxu0 %v217
    %v321 = vpop.f32.mrb[0].mxu0
    %v322 = vadd.f32 %v203, %v321
    %v323 = vpop.f32.mrb[0].mxu0
    %v324 = vadd.f32 %v205, %v323
    %325 = vdwg.mxu0
    %vm326 = vcmask 1045504
    %v327 = vrot.slane %v38, 2
    %v328 = vrot.slane %v39, 2
    %v329 = vsel %vm326, %v327, %v328
    %v330 = vrot.slane %v40, 2
    %v331 = vsel %vm326, %v328, %v330
    %v332 = vrot.slane %v41, 2
    %v333 = vsel %vm326, %v330, %v332
    %v334 = vrot.slane %v42, 2
    %v335 = vrot.slane %v43, 2
    %v336 = vsel %vm326, %v334, %v335
    %v337 = vrot.slane %v44, 2
    %v338 = vsel %vm326, %v335, %v337
    %v339 = vrot.slane %v45, 2
    %v340 = vsel %vm326, %v337, %v339
    %s341 = scalar_lea.vmem %s1, 128
    %v342 = vld [vmem:[%s341] sm:$0xff]
    %v343 = vld [vmem:[%s341 + $0x8] sm:$0xff]
    %v344 = vld [vmem:[%s341 + $0x10] sm:$0xff]
    %v345 = vld [vmem:[%s341 + $0x18] sm:$0xff]
    %v346 = vld [vmem:[%s341 + $0x20] sm:$0xff]
    %v347 = vld [vmem:[%s341 + $0x28] sm:$0xff]
    %v348 = vld [vmem:[%s341 + $0x30] sm:$0xf]
    %v349 = vld [vmem:[%s341 + $0x38] sm:$0xf]
    %v350 = vsel %vm86, %v329, 0
    %v352 = vsel %vm86, %v331, 0
    %v354 = vsel %vm86, %v333, 0
    %v356 = vsel %vm86, %v336, 0
    %v358 = vsel %vm86, %v338, 0
    %v360 = vsel %vm86, %v340, 0
    %v363 = vsel %vm99, %v348, 0
    %v366 = vsel %vm99, %v349, 0
    %368 = vmatprep.subr.mxu0 %v343
    %369 = vmatpush1.msra.mxu0 %v342
    %370 = vmatprep.subr.mxu0 %v345
    %371 = vmatpush1.msra.mxu0 %v344
    %372 = vmatprep.subr.mxu0 %v347
    %373 = vmatpush1.msra.mxu0 %v346
    %374 = vmatprep.subr.mxu0 %v366
    %375 = vmatpush1.msra.mxu0 %v363
    %376 = vmatprep.subr.mxu0 0.0
    %377 = vmatpush1.msra.mxu0 0.0
    %378 = vmatprep.subr.mxu0 0.0
    %379 = vmatpush1.msra.mxu0 0.0
    %380 = vmatprep.subr.mxu0 0.0
    %381 = vmatpush1.msra.mxu0 0.0
    %382 = vmatprep.subr.mxu0 0.0
    %383 = vmatpush1.msra.mxu0 0.0
    %384 = vmatprep.subr.mxu0 0.0
    %385 = vmatpush1.msra.mxu0 0.0
    %386 = vmatprep.subr.mxu0 0.0
    %387 = vmatpush1.msra.mxu0 0.0
    %388 = vmatprep.subr.mxu0 0.0
    %389 = vmatpush1.msra.mxu0 0.0
    %390 = vmatprep.subr.mxu0 0.0
    %391 = vmatpush1.msra.mxu0 0.0
    %392 = vmatprep.subr.mxu0 0.0
    %393 = vmatpush1.msra.mxu0 0.0
    %394 = vmatprep.subr.mxu0 0.0
    %395 = vmatpush1.msra.mxu0 0.0
    %396 = vmatprep.subr.mxu0 0.0
    %397 = vmatpush1.msra.mxu0 0.0
    %398 = vmatprep.subr.mxu0 0.0
    %399 = vmatpush1.msra.mxu0 0.0
    %400 = vmatprep.subr.mxu0 0.0
    %401 = vmatpush1.msra.mxu0 0.0
    %402 = vmatprep.subr.mxu0 0.0
    %403 = vmatpush1.msra.mxu0 0.0
    %404 = vmatprep.subr.mxu0 0.0
    %405 = vmatpush1.msra.mxu0 0.0
    %406 = vmatprep.subr.mxu0 0.0
    %407 = vmatpush1.msra.mxu0 0.0
    %408 = vmatprep.subr.mxu0 0.0
    %409 = vmatpush1.msra.mxu0 0.0
    %410 = vmatprep.subr.mxu0 0.0
    %411 = vmatpush1.msra.mxu0 0.0
    %412 = vmatprep.subr.mxu0 0.0
    %413 = vmatpush1.msra.mxu0 0.0
    %414 = vmatprep.subr.mxu0 0.0
    %415 = vmatpush1.msra.mxu0 0.0
    %416 = vmatprep.subr.mxu0 0.0
    %417 = vmatpush1.msra.mxu0 0.0
    %418 = vmatprep.subr.mxu0 0.0
    %419 = vmatpush1.msra.mxu0 0.0
    %420 = vmatprep.subr.mxu0 0.0
    %421 = vmatpush1.msra.mxu0 0.0
    %422 = vmatprep.subr.mxu0 0.0
    %423 = vmatpush1.msra.mxu0 0.0
    %424 = vmatprep.subr.mxu0 0.0
    %425 = vmatpush1.msra.mxu0 0.0
    %426 = vmatprep.subr.mxu0 0.0
    %427 = vmatpush1.msra.mxu0 0.0
    %428 = vmatprep.subr.mxu0 0.0
    %429 = vmatpush1.msra.mxu0 0.0
    %430 = vmatprep.subr.mxu0 0.0
    %431 = vmatpush1.msra.mxu0 0.0
    %432 = vmatprep.mubr.f32.mxu0 0.0
    %433 = vmatmul.mubr.f32.gmra.mrb[0].mxu0 %v350
    %v434 = vpop.f32.mrb[0].mxu0
    %v435 = vadd.f32 0.0, %v434
    %v436 = vpop.f32.mrb[0].mxu0
    %v437 = vadd.f32 0.0, %v436
    %438 = vmatprep.mubr.f32.mxu0 0.0
    %439 = vmatmul.mubr.f32.gmra.mrb[0].mxu0 %v352
    %v440 = vpop.f32.mrb[0].mxu0
    %v441 = vadd.f32 0.0, %v440
    %v442 = vpop.f32.mrb[0].mxu0
    %v443 = vadd.f32 0.0, %v442
    %444 = vmatprep.mubr.f32.mxu0 0.0
    %445 = vmatmul.mubr.f32.gmra.mrb[0].mxu0 %v354
    %v446 = vpop.f32.mrb[0].mxu0
    %v447 = vadd.f32 0.0, %v446
    %v448 = vpop.f32.mrb[0].mxu0
    %v449 = vadd.f32 0.0, %v448
    %450 = vmatprep.mubr.f32.mxu0 0.0
    %451 = vmatmul.mubr.f32.gmra.mrb[0].mxu0 %v356
    %v452 = vpop.f32.mrb[0].mxu0
    %v453 = vadd.f32 0.0, %v452
    %v454 = vpop.f32.mrb[0].mxu0
    %v455 = vadd.f32 0.0, %v454
    %456 = vmatprep.mubr.f32.mxu0 0.0
    %457 = vmatmul.mubr.f32.gmra.mrb[0].mxu0 %v358
    %v458 = vpop.f32.mrb[0].mxu0
    %v459 = vadd.f32 0.0, %v458
    %v460 = vpop.f32.mrb[0].mxu0
    %v461 = vadd.f32 0.0, %v460
    %462 = vmatprep.mubr.f32.mxu0 0.0
    %463 = vmatmul.mubr.f32.gmra.mrb[0].mxu0 %v360
    %v464 = vpop.f32.mrb[0].mxu0
    %v465 = vadd.f32 0.0, %v464
    %v466 = vpop.f32.mrb[0].mxu0
    %v467 = vadd.f32 0.0, %v466
    %468 = vdwg.mxu0
    %v469 = vadd.f32 %v292, %v435
    %v470 = vadd.f32 %v294, %v437
    %v471 = vadd.f32 %v298, %v441
    %v472 = vadd.f32 %v300, %v443
    %v473 = vadd.f32 %v304, %v447
    %v474 = vadd.f32 %v306, %v449
    %v475 = vadd.f32 %v310, %v453
    %v476 = vadd.f32 %v312, %v455
    %v477 = vadd.f32 %v316, %v459
    %v478 = vadd.f32 %v318, %v461
    %v479 = vadd.f32 %v322, %v465
    %v480 = vadd.f32 %v324, %v467
    %vm481 = vcmask 1044480
    %v482 = vrot.slane %v38, 3
    %v483 = vrot.slane %v39, 3
    %v484 = vsel %vm481, %v482, %v483
    %v485 = vrot.slane %v40, 3
    %v486 = vsel %vm481, %v483, %v485
    %v487 = vrot.slane %v41, 3
    %v488 = vsel %vm481, %v485, %v487
    %v489 = vrot.slane %v42, 3
    %v490 = vrot.slane %v43, 3
    %v491 = vsel %vm481, %v489, %v490
    %v492 = vrot.slane %v44, 3
    %v493 = vsel %vm481, %v490, %v492
    %v494 = vrot.slane %v45, 3
    %v495 = vsel %vm481, %v492, %v494
    %s496 = scalar_lea.vmem %s1, 192
    %v497 = vld [vmem:[%s496] sm:$0xff]
    %v498 = vld [vmem:[%s496 + $0x8] sm:$0xff]
    %v499 = vld [vmem:[%s496 + $0x10] sm:$0xff]
    %v500 = vld [vmem:[%s496 + $0x18] sm:$0xff]
    %v501 = vld [vmem:[%s496 + $0x20] sm:$0xff]
    %v502 = vld [vmem:[%s496 + $0x28] sm:$0xff]
    %v503 = vld [vmem:[%s496 + $0x30] sm:$0xf]
    %v504 = vld [vmem:[%s496 + $0x38] sm:$0xf]
    %v505 = vsel %vm86, %v484, 0
    %v507 = vsel %vm86, %v486, 0
    %v509 = vsel %vm86, %v488, 0
    %v511 = vsel %vm86, %v491, 0
    %v513 = vsel %vm86, %v493, 0
    %v515 = vsel %vm86, %v495, 0
    %v518 = vsel %vm99, %v503, 0
    %v521 = vsel %vm99, %v504, 0
    %523 = vmatprep.subr.mxu0 %v498
    %524 = vmatpush1.msra.mxu0 %v497
    %525 = vmatprep.subr.mxu0 %v500
    %526 = vmatpush1.msra.mxu0 %v499
    %527 = vmatprep.subr.mxu0 %v502
    %528 = vmatpush1.msra.mxu0 %v501
    %529 = vmatprep.subr.mxu0 %v521
    %530 = vmatpush1.msra.mxu0 %v518
    %531 = vmatprep.subr.mxu0 0.0
    %532 = vmatpush1.msra.mxu0 0.0
    %533 = vmatprep.subr.mxu0 0.0
    %534 = vmatpush1.msra.mxu0 0.0
    %535 = vmatprep.subr.mxu0 0.0
    %536 = vmatpush1.msra.mxu0 0.0
    %537 = vmatprep.subr.mxu0 0.0
    %538 = vmatpush1.msra.mxu0 0.0
    %539 = vmatprep.subr.mxu0 0.0
    %540 = vmatpush1.msra.mxu0 0.0
    %541 = vmatprep.subr.mxu0 0.0
    %542 = vmatpush1.msra.mxu0 0.0
    %543 = vmatprep.subr.mxu0 0.0
    %544 = vmatpush1.msra.mxu0 0.0
    %545 = vmatprep.subr.mxu0 0.0
    %546 = vmatpush1.msra.mxu0 0.0
    %547 = vmatprep.subr.mxu0 0.0
    %548 = vmatpush1.msra.mxu0 0.0
    %549 = vmatprep.subr.mxu0 0.0
    %550 = vmatpush1.msra.mxu0 0.0
    %551 = vmatprep.subr.mxu0 0.0
    %552 = vmatpush1.msra.mxu0 0.0
    %553 = vmatprep.subr.mxu0 0.0
    %554 = vmatpush1.msra.mxu0 0.0
    %555 = vmatprep.subr.mxu0 0.0
    %556 = vmatpush1.msra.mxu0 0.0
    %557 = vmatprep.subr.mxu0 0.0
    %558 = vmatpush1.msra.mxu0 0.0
    %559 = vmatprep.subr.mxu0 0.0
    %560 = vmatpush1.msra.mxu0 0.0
    %561 = vmatprep.subr.mxu0 0.0
    %562 = vmatpush1.msra.mxu0 0.0
    %563 = vmatprep.subr.mxu0 0.0
    %564 = vmatpush1.msra.mxu0 0.0
    %565 = vmatprep.subr.mxu0 0.0
    %566 = vmatpush1.msra.mxu0 0.0
    %567 = vmatprep.subr.mxu0 0.0
    %568 = vmatpush1.msra.mxu0 0.0
    %569 = vmatprep.subr.mxu0 0.0
    %570 = vmatpush1.msra.mxu0 0.0
    %571 = vmatprep.subr.mxu0 0.0
    %572 = vmatpush1.msra.mxu0 0.0
    %573 = vmatprep.subr.mxu0 0.0
    %574 = vmatpush1.msra.mxu0 0.0
    %575 = vmatprep.subr.mxu0 0.0
    %576 = vmatpush1.msra.mxu0 0.0
    %577 = vmatprep.subr.mxu0 0.0
    %578 = vmatpush1.msra.mxu0 0.0
    %579 = vmatprep.subr.mxu0 0.0
    %580 = vmatpush1.msra.mxu0 0.0
    %581 = vmatprep.subr.mxu0 0.0
    %582 = vmatpush1.msra.mxu0 0.0
    %583 = vmatprep.subr.mxu0 0.0
    %584 = vmatpush1.msra.mxu0 0.0
    %585 = vmatprep.subr.mxu0 0.0
    %586 = vmatpush1.msra.mxu0 0.0
    %587 = vmatprep.mubr.f32.mxu0 0.0
    %588 = vmatmul.mubr.f32.gmra.mrb[0].mxu0 %v505
    %v589 = vpop.f32.mrb[0].mxu0
    %v590 = vadd.f32 0.0, %v589
    %v591 = vpop.f32.mrb[0].mxu0
    %v592 = vadd.f32 0.0, %v591
    %593 = vmatprep.mubr.f32.mxu0 0.0
    %594 = vmatmul.mubr.f32.gmra.mrb[0].mxu0 %v507
    %v595 = vpop.f32.mrb[0].mxu0
    %v596 = vadd.f32 0.0, %v595
    %v597 = vpop.f32.mrb[0].mxu0
    %v598 = vadd.f32 0.0, %v597
    %599 = vmatprep.mubr.f32.mxu0 0.0
    %600 = vmatmul.mubr.f32.gmra.mrb[0].mxu0 %v509
    %v601 = vpop.f32.mrb[0].mxu0
    %v602 = vadd.f32 0.0, %v601
    %v603 = vpop.f32.mrb[0].mxu0
    %v604 = vadd.f32 0.0, %v603
    %605 = vmatprep.mubr.f32.mxu0 0.0
    %606 = vmatmul.mubr.f32.gmra.mrb[0].mxu0 %v511
    %v607 = vpop.f32.mrb[0].mxu0
    %v608 = vadd.f32 0.0, %v607
    %v609 = vpop.f32.mrb[0].mxu0
    %v610 = vadd.f32 0.0, %v609
    %611 = vmatprep.mubr.f32.mxu0 0.0
    %612 = vmatmul.mubr.f32.gmra.mrb[0].mxu0 %v513
    %v613 = vpop.f32.mrb[0].mxu0
    %v614 = vadd.f32 0.0, %v613
    %v615 = vpop.f32.mrb[0].mxu0
    %v616 = vadd.f32 0.0, %v615
    %617 = vmatprep.mubr.f32.mxu0 0.0
    %618 = vmatmul.mubr.f32.gmra.mrb[0].mxu0 %v515
    %v619 = vpop.f32.mrb[0].mxu0
    %v620 = vadd.f32 0.0, %v619
    %v621 = vpop.f32.mrb[0].mxu0
    %v622 = vadd.f32 0.0, %v621
    %623 = vdwg.mxu0
    %v624 = vadd.f32 %v469, %v590
    %v625 = vadd.f32 %v470, %v592
    %v626 = vadd.f32 %v471, %v596
    %v627 = vadd.f32 %v472, %v598
    %v628 = vadd.f32 %v473, %v602
    %v629 = vadd.f32 %v474, %v604
    %v630 = vadd.f32 %v475, %v608
    %v631 = vadd.f32 %v476, %v610
    %v632 = vadd.f32 %v477, %v614
    %v633 = vadd.f32 %v478, %v616
    %v634 = vadd.f32 %v479, %v620
    %v635 = vadd.f32 %v480, %v622
    %v636 = vrot.slane %v38, 4
    %v637 = vrot.slane %v39, 4
    %v638 = vsel %vm99, %v636, %v637
    %v639 = vrot.slane %v40, 4
    %v640 = vsel %vm99, %v637, %v639
    %v641 = vrot.slane %v41, 4
    %v642 = vsel %vm99, %v639, %v641
    %v643 = vrot.slane %v42, 4
    %v644 = vrot.slane %v43, 4
    %v645 = vsel %vm99, %v643, %v644
    %v646 = vrot.slane %v44, 4
    %v647 = vsel %vm99, %v644, %v646
    %v648 = vrot.slane %v45, 4
    %v649 = vsel %vm99, %v646, %v648
    %s650 = scalar_lea.vmem %s1, 256
    %v651 = vld [vmem:[%s650] sm:$0xff]
    %v652 = vld [vmem:[%s650 + $0x8] sm:$0xff]
    %v653 = vld [vmem:[%s650 + $0x10] sm:$0xff]
    %v654 = vld [vmem:[%s650 + $0x18] sm:$0xff]
    %v655 = vld [vmem:[%s650 + $0x20] sm:$0xff]
    %v656 = vld [vmem:[%s650 + $0x28] sm:$0xff]
    %v657 = vld [vmem:[%s650 + $0x30] sm:$0xf]
    %v658 = vld [vmem:[%s650 + $0x38] sm:$0xf]
    %v659 = vsel %vm86, %v638, 0
    %v661 = vsel %vm86, %v640, 0
    %v663 = vsel %vm86, %v642, 0
    %v665 = vsel %vm86, %v645, 0
    %v667 = vsel %vm86, %v647, 0
    %v669 = vsel %vm86, %v649, 0
    %v672 = vsel %vm99, %v657, 0
    %v675 = vsel %vm99, %v658, 0
    %677 = vmatprep.subr.mxu0 %v652
    %678 = vmatpush1.msra.mxu0 %v651
    %679 = vmatprep.subr.mxu0 %v654
    %680 = vmatpush1.msra.mxu0 %v653
    %681 = vmatprep.subr.mxu0 %v656
    %682 = vmatpush1.msra.mxu0 %v655
    %683 = vmatprep.subr.mxu0 %v675
    %684 = vmatpush1.msra.mxu0 %v672
    %685 = vmatprep.subr.mxu0 0.0
    %686 = vmatpush1.msra.mxu0 0.0
    %687 = vmatprep.subr.mxu0 0.0
    %688 = vmatpush1.msra.mxu0 0.0
    %689 = vmatprep.subr.mxu0 0.0
    %690 = vmatpush1.msra.mxu0 0.0
    %691 = vmatprep.subr.mxu0 0.0
    %692 = vmatpush1.msra.mxu0 0.0
    %693 = vmatprep.subr.mxu0 0.0
    %694 = vmatpush1.msra.mxu0 0.0
    %695 = vmatprep.subr.mxu0 0.0
    %696 = vmatpush1.msra.mxu0 0.0
    %697 = vmatprep.subr.mxu0 0.0
    %698 = vmatpush1.msra.mxu0 0.0
    %699 = vmatprep.subr.mxu0 0.0
    %700 = vmatpush1.msra.mxu0 0.0
    %701 = vmatprep.subr.mxu0 0.0
    %702 = vmatpush1.msra.mxu0 0.0
    %703 = vmatprep.subr.mxu0 0.0
    %704 = vmatpush1.msra.mxu0 0.0
    %705 = vmatprep.subr.mxu0 0.0
    %706 = vmatpush1.msra.mxu0 0.0
    %707 = vmatprep.subr.mxu0 0.0
    %708 = vmatpush1.msra.mxu0 0.0
    %709 = vmatprep.subr.mxu0 0.0
    %710 = vmatpush1.msra.mxu0 0.0
    %711 = vmatprep.subr.mxu0 0.0
    %712 = vmatpush1.msra.mxu0 0.0
    %713 = vmatprep.subr.mxu0 0.0
    %714 = vmatpush1.msra.mxu0 0.0
    %715 = vmatprep.subr.mxu0 0.0
    %716 = vmatpush1.msra.mxu0 0.0
    %717 = vmatprep.subr.mxu0 0.0
    %718 = vmatpush1.msra.mxu0 0.0
    %719 = vmatprep.subr.mxu0 0.0
    %720 = vmatpush1.msra.mxu0 0.0
    %721 = vmatprep.subr.mxu0 0.0
    %722 = vmatpush1.msra.mxu0 0.0
    %723 = vmatprep.subr.mxu0 0.0
    %724 = vmatpush1.msra.mxu0 0.0
    %725 = vmatprep.subr.mxu0 0.0
    %726 = vmatpush1.msra.mxu0 0.0
    %727 = vmatprep.subr.mxu0 0.0
    %728 = vmatpush1.msra.mxu0 0.0
    %729 = vmatprep.subr.mxu0 0.0
    %730 = vmatpush1.msra.mxu0 0.0
    %731 = vmatprep.subr.mxu0 0.0
    %732 = vmatpush1.msra.mxu0 0.0
    %733 = vmatprep.subr.mxu0 0.0
    %734 = vmatpush1.msra.mxu0 0.0
    %735 = vmatprep.subr.mxu0 0.0
    %736 = vmatpush1.msra.mxu0 0.0
    %737 = vmatprep.subr.mxu0 0.0
    %738 = vmatpush1.msra.mxu0 0.0
    %739 = vmatprep.subr.mxu0 0.0
    %740 = vmatpush1.msra.mxu0 0.0
    %741 = vmatprep.mubr.f32.mxu0 0.0
    %742 = vmatmul.mubr.f32.gmra.mrb[0].mxu0 %v659
    %v743 = vpop.f32.mrb[0].mxu0
    %v744 = vadd.f32 0.0, %v743
    %v745 = vpop.f32.mrb[0].mxu0
    %v746 = vadd.f32 0.0, %v745
    %747 = vmatprep.mubr.f32.mxu0 0.0
    %748 = vmatmul.mubr.f32.gmra.mrb[0].mxu0 %v661
    %v749 = vpop.f32.mrb[0].mxu0
    %v750 = vadd.f32 0.0, %v749
    %v751 = vpop.f32.mrb[0].mxu0
    %v752 = vadd.f32 0.0, %v751
    %753 = vmatprep.mubr.f32.mxu0 0.0
    %754 = vmatmul.mubr.f32.gmra.mrb[0].mxu0 %v663
    %v755 = vpop.f32.mrb[0].mxu0
    %v756 = vadd.f32 0.0, %v755
    %v757 = vpop.f32.mrb[0].mxu0
    %v758 = vadd.f32 0.0, %v757
    %759 = vmatprep.mubr.f32.mxu0 0.0
    %760 = vmatmul.mubr.f32.gmra.mrb[0].mxu0 %v665
    %v761 = vpop.f32.mrb[0].mxu0
    %v762 = vadd.f32 0.0, %v761
    %v763 = vpop.f32.mrb[0].mxu0
    %v764 = vadd.f32 0.0, %v763
    %765 = vmatprep.mubr.f32.mxu0 0.0
    %766 = vmatmul.mubr.f32.gmra.mrb[0].mxu0 %v667
    %v767 = vpop.f32.mrb[0].mxu0
    %v768 = vadd.f32 0.0, %v767
    %v769 = vpop.f32.mrb[0].mxu0
    %v770 = vadd.f32 0.0, %v769
    %771 = vmatprep.mubr.f32.mxu0 0.0
    %772 = vmatmul.mubr.f32.gmra.mrb[0].mxu0 %v669
    %v773 = vpop.f32.mrb[0].mxu0
    %v774 = vadd.f32 0.0, %v773
    %v775 = vpop.f32.mrb[0].mxu0
    %v776 = vadd.f32 0.0, %v775
    %777 = vdwg.mxu0
    %v778 = vadd.f32 %v624, %v744
    %v779 = vadd.f32 %v625, %v746
    %v780 = vadd.f32 %v626, %v750
    %v781 = vadd.f32 %v627, %v752
    %v782 = vadd.f32 %v628, %v756
    %v783 = vadd.f32 %v629, %v758
    %v784 = vadd.f32 %v630, %v762
    %v785 = vadd.f32 %v631, %v764
    %v786 = vadd.f32 %v632, %v768
    %v787 = vadd.f32 %v633, %v770
    %v788 = vadd.f32 %v634, %v774
    %v789 = vadd.f32 %v635, %v776
    %796 = vrot.lane.b32.xlu0 %v778, 118
    %v797 = vpop.permute.xlu0 %796
    %798 = vrot.lane.b32.xlu0 %v780, 118
    %v799 = vpop.permute.xlu0 %798
    %800 = vrot.lane.b32.xlu0 %v782, 118
    %v801 = vpop.permute.xlu0 %800
    %802 = vrot.lane.b32.xlu0 %v784, 118
    %v803 = vpop.permute.xlu0 %802
    %804 = vrot.lane.b32.xlu0 %v786, 118
    %v805 = vpop.permute.xlu0 %804
    %806 = vrot.lane.b32.xlu0 %v788, 118
    %v807 = vpop.permute.xlu0 %806
    %v814 = vmax.f32 %v778, %v797
    %v815 = vmax.f32 %v780, %v799
    %v816 = vmax.f32 %v782, %v801
    %v817 = vmax.f32 %v784, %v803
    %v818 = vmax.f32 %v786, %v805
    %v819 = vmax.f32 %v788, %v807
    %v826 = vcombine.high %v814, %v814
    %v828 = vunpack.c.l.s4 1966171168
    %v829 = vunpack.c.0.s8 %v828
    %v830 = vlaneseq
    %v831 = vshrl.u32 %v830, 7
    %v832 = vsub.s32 %v829, %v831
    %v833 = vrot.slane %v814, %v832
    %v835 = vunpack.c.l.s4 1966171168
    %v836 = vunpack.c.0.s8 %v835
    %v837 = vlaneseq
    %v838 = vshrl.u32 %v837, 7
    %v839 = vsub.s32 %v836, %v838
    %v840 = vrot.slane %v826, %v839
    %v841 = vcombine.high %v833, %v833
    %v842 = vcombine.high %v840, %v840
    %v844 = vunpack.c.l.s4 1966171168
    %v845 = vunpack.c.0.s8 %v844
    %v846 = vlaneseq
    %v847 = vshrl.u32 %v846, 7
    %v848 = vsub.s32 %v845, %v847
    %v849 = vrot.slane %v833, %v848
    %v851 = vunpack.c.l.s4 1966171168
    %v852 = vunpack.c.0.s8 %v851
    %v853 = vlaneseq
    %v854 = vshrl.u32 %v853, 7
    %v855 = vsub.s32 %v852, %v854
    %v856 = vrot.slane %v840, %v855
    %v858 = vunpack.c.l.s4 1966171168
    %v859 = vunpack.c.0.s8 %v858
    %v860 = vlaneseq
    %v861 = vshrl.u32 %v860, 7
    %v862 = vsub.s32 %v859, %v861
    %v863 = vrot.slane %v841, %v862
    %v865 = vunpack.c.l.s4 1966171168
    %v866 = vunpack.c.0.s8 %v865
    %v867 = vlaneseq
    %v868 = vshrl.u32 %v867, 7
    %v869 = vsub.s32 %v866, %v868
    %v870 = vrot.slane %v842, %v869
    %v871 = vcombine.high %v849, %v849
    %v872 = vcombine.high %v856, %v856
    %v873 = vcombine.high %v863, %v863
    %v874 = vcombine.high %v870, %v870
    %v875 = vcombine.high %v815, %v815
    %v877 = vunpack.c.l.s4 1966171168
    %v878 = vunpack.c.0.s8 %v877
    %v879 = vlaneseq
    %v880 = vshrl.u32 %v879, 7
    %v881 = vsub.s32 %v878, %v880
    %v882 = vrot.slane %v815, %v881
    %v884 = vunpack.c.l.s4 1966171168
    %v885 = vunpack.c.0.s8 %v884
    %v886 = vlaneseq
    %v887 = vshrl.u32 %v886, 7
    %v888 = vsub.s32 %v885, %v887
    %v889 = vrot.slane %v875, %v888
    %v890 = vcombine.high %v882, %v882
    %v891 = vcombine.high %v889, %v889
    %v893 = vunpack.c.l.s4 1966171168
    %v894 = vunpack.c.0.s8 %v893
    %v895 = vlaneseq
    %v896 = vshrl.u32 %v895, 7
    %v897 = vsub.s32 %v894, %v896
    %v898 = vrot.slane %v882, %v897
    %v900 = vunpack.c.l.s4 1966171168
    %v901 = vunpack.c.0.s8 %v900
    %v902 = vlaneseq
    %v903 = vshrl.u32 %v902, 7
    %v904 = vsub.s32 %v901, %v903
    %v905 = vrot.slane %v889, %v904
    %v907 = vunpack.c.l.s4 1966171168
    %v908 = vunpack.c.0.s8 %v907
    %v909 = vlaneseq
    %v910 = vshrl.u32 %v909, 7
    %v911 = vsub.s32 %v908, %v910
    %v912 = vrot.slane %v890, %v911
    %v914 = vunpack.c.l.s4 1966171168
    %v915 = vunpack.c.0.s8 %v914
    %v916 = vlaneseq
    %v917 = vshrl.u32 %v916, 7
    %v918 = vsub.s32 %v915, %v917
    %v919 = vrot.slane %v891, %v918
    %v920 = vcombine.high %v898, %v898
    %v921 = vcombine.high %v905, %v905
    %v922 = vcombine.high %v912, %v912
    %v923 = vcombine.high %v919, %v919
    %v924 = vcombine.high %v816, %v816
    %v926 = vunpack.c.l.s4 1966171168
    %v927 = vunpack.c.0.s8 %v926
    %v928 = vlaneseq
    %v929 = vshrl.u32 %v928, 7
    %v930 = vsub.s32 %v927, %v929
    %v931 = vrot.slane %v816, %v930
    %v933 = vunpack.c.l.s4 1966171168
    %v934 = vunpack.c.0.s8 %v933
    %v935 = vlaneseq
    %v936 = vshrl.u32 %v935, 7
    %v937 = vsub.s32 %v934, %v936
    %v938 = vrot.slane %v924, %v937
    %v939 = vcombine.high %v931, %v931
    %v940 = vcombine.high %v938, %v938
    %v942 = vunpack.c.l.s4 1966171168
    %v943 = vunpack.c.0.s8 %v942
    %v944 = vlaneseq
    %v945 = vshrl.u32 %v944, 7
    %v946 = vsub.s32 %v943, %v945
    %v947 = vrot.slane %v931, %v946
    %v949 = vunpack.c.l.s4 1966171168
    %v950 = vunpack.c.0.s8 %v949
    %v951 = vlaneseq
    %v952 = vshrl.u32 %v951, 7
    %v953 = vsub.s32 %v950, %v952
    %v954 = vrot.slane %v938, %v953
    %v956 = vunpack.c.l.s4 1966171168
    %v957 = vunpack.c.0.s8 %v956
    %v958 = vlaneseq
    %v959 = vshrl.u32 %v958, 7
    %v960 = vsub.s32 %v957, %v959
    %v961 = vrot.slane %v939, %v960
    %v963 = vunpack.c.l.s4 1966171168
    %v964 = vunpack.c.0.s8 %v963
    %v965 = vlaneseq
    %v966 = vshrl.u32 %v965, 7
    %v967 = vsub.s32 %v964, %v966
    %v968 = vrot.slane %v940, %v967
    %v969 = vcombine.high %v947, %v947
    %v970 = vcombine.high %v954, %v954
    %v971 = vcombine.high %v961, %v961
    %v972 = vcombine.high %v968, %v968
    %v973 = vcombine.high %v817, %v817
    %v975 = vunpack.c.l.s4 1966171168
    %v976 = vunpack.c.0.s8 %v975
    %v977 = vlaneseq
    %v978 = vshrl.u32 %v977, 7
    %v979 = vsub.s32 %v976, %v978
    %v980 = vrot.slane %v817, %v979
    %v982 = vunpack.c.l.s4 1966171168
    %v983 = vunpack.c.0.s8 %v982
    %v984 = vlaneseq
    %v985 = vshrl.u32 %v984, 7
    %v986 = vsub.s32 %v983, %v985
    %v987 = vrot.slane %v973, %v986
    %v988 = vcombine.high %v980, %v980
    %v989 = vcombine.high %v987, %v987
    %v991 = vunpack.c.l.s4 1966171168
    %v992 = vunpack.c.0.s8 %v991
    %v993 = vlaneseq
    %v994 = vshrl.u32 %v993, 7
    %v995 = vsub.s32 %v992, %v994
    %v996 = vrot.slane %v980, %v995
    %v998 = vunpack.c.l.s4 1966171168
    %v999 = vunpack.c.0.s8 %v998
    %v1000 = vlaneseq
    %v1001 = vshrl.u32 %v1000, 7
    %v1002 = vsub.s32 %v999, %v1001
    %v1003 = vrot.slane %v987, %v1002
    %v1005 = vunpack.c.l.s4 1966171168
    %v1006 = vunpack.c.0.s8 %v1005
    %v1007 = vlaneseq
    %v1008 = vshrl.u32 %v1007, 7
    %v1009 = vsub.s32 %v1006, %v1008
    %v1010 = vrot.slane %v988, %v1009
    %v1012 = vunpack.c.l.s4 1966171168
    %v1013 = vunpack.c.0.s8 %v1012
    %v1014 = vlaneseq
    %v1015 = vshrl.u32 %v1014, 7
    %v1016 = vsub.s32 %v1013, %v1015
    %v1017 = vrot.slane %v989, %v1016
    %v1018 = vcombine.high %v996, %v996
    %v1019 = vcombine.high %v1003, %v1003
    %v1020 = vcombine.high %v1010, %v1010
    %v1021 = vcombine.high %v1017, %v1017
    %v1022 = vcombine.high %v818, %v818
    %v1024 = vunpack.c.l.s4 1966171168
    %v1025 = vunpack.c.0.s8 %v1024
    %v1026 = vlaneseq
    %v1027 = vshrl.u32 %v1026, 7
    %v1028 = vsub.s32 %v1025, %v1027
    %v1029 = vrot.slane %v818, %v1028
    %v1031 = vunpack.c.l.s4 1966171168
    %v1032 = vunpack.c.0.s8 %v1031
    %v1033 = vlaneseq
    %v1034 = vshrl.u32 %v1033, 7
    %v1035 = vsub.s32 %v1032, %v1034
    %v1036 = vrot.slane %v1022, %v1035
    %v1037 = vcombine.high %v1029, %v1029
    %v1038 = vcombine.high %v1036, %v1036
    %v1040 = vunpack.c.l.s4 1966171168
    %v1041 = vunpack.c.0.s8 %v1040
    %v1042 = vlaneseq
    %v1043 = vshrl.u32 %v1042, 7
    %v1044 = vsub.s32 %v1041, %v1043
    %v1045 = vrot.slane %v1029, %v1044
    %v1047 = vunpack.c.l.s4 1966171168
    %v1048 = vunpack.c.0.s8 %v1047
    %v1049 = vlaneseq
    %v1050 = vshrl.u32 %v1049, 7
    %v1051 = vsub.s32 %v1048, %v1050
    %v1052 = vrot.slane %v1036, %v1051
    %v1054 = vunpack.c.l.s4 1966171168
    %v1055 = vunpack.c.0.s8 %v1054
    %v1056 = vlaneseq
    %v1057 = vshrl.u32 %v1056, 7
    %v1058 = vsub.s32 %v1055, %v1057
    %v1059 = vrot.slane %v1037, %v1058
    %v1061 = vunpack.c.l.s4 1966171168
    %v1062 = vunpack.c.0.s8 %v1061
    %v1063 = vlaneseq
    %v1064 = vshrl.u32 %v1063, 7
    %v1065 = vsub.s32 %v1062, %v1064
    %v1066 = vrot.slane %v1038, %v1065
    %v1067 = vcombine.high %v1045, %v1045
    %v1068 = vcombine.high %v1052, %v1052
    %v1069 = vcombine.high %v1059, %v1059
    %v1070 = vcombine.high %v1066, %v1066
    %v1071 = vcombine.high %v819, %v819
    %v1073 = vunpack.c.l.s4 1966171168
    %v1074 = vunpack.c.0.s8 %v1073
    %v1075 = vlaneseq
    %v1076 = vshrl.u32 %v1075, 7
    %v1077 = vsub.s32 %v1074, %v1076
    %v1078 = vrot.slane %v819, %v1077
    %v1080 = vunpack.c.l.s4 1966171168
    %v1081 = vunpack.c.0.s8 %v1080
    %v1082 = vlaneseq
    %v1083 = vshrl.u32 %v1082, 7
    %v1084 = vsub.s32 %v1081, %v1083
    %v1085 = vrot.slane %v1071, %v1084
    %v1086 = vcombine.high %v1078, %v1078
    %v1087 = vcombine.high %v1085, %v1085
    %v1089 = vunpack.c.l.s4 1966171168
    %v1090 = vunpack.c.0.s8 %v1089
    %v1091 = vlaneseq
    %v1092 = vshrl.u32 %v1091, 7
    %v1093 = vsub.s32 %v1090, %v1092
    %v1094 = vrot.slane %v1078, %v1093
    %v1096 = vunpack.c.l.s4 1966171168
    %v1097 = vunpack.c.0.s8 %v1096
    %v1098 = vlaneseq
    %v1099 = vshrl.u32 %v1098, 7
    %v1100 = vsub.s32 %v1097, %v1099
    %v1101 = vrot.slane %v1085, %v1100
    %v1103 = vunpack.c.l.s4 1966171168
    %v1104 = vunpack.c.0.s8 %v1103
    %v1105 = vlaneseq
    %v1106 = vshrl.u32 %v1105, 7
    %v1107 = vsub.s32 %v1104, %v1106
    %v1108 = vrot.slane %v1086, %v1107
    %v1110 = vunpack.c.l.s4 1966171168
    %v1111 = vunpack.c.0.s8 %v1110
    %v1112 = vlaneseq
    %v1113 = vshrl.u32 %v1112, 7
    %v1114 = vsub.s32 %v1111, %v1113
    %v1115 = vrot.slane %v1087, %v1114
    %v1116 = vcombine.high %v1094, %v1094
    %v1117 = vcombine.high %v1101, %v1101
    %v1118 = vcombine.high %v1108, %v1108
    %v1119 = vcombine.high %v1115, %v1115
    %vm1168 = vcmask 73728
    %1169 = vst.msk [vmem:[#allocation2] sm:$0x1] %vm1168, %v849
    %1170 = vst.msk [vmem:[#allocation2 + $0x10] sm:$0x1] %vm1168, %v863
    %1171 = vst.msk [vmem:[#allocation2 + $0x20] sm:$0x1] %vm1168, %v871
    %1172 = vst.msk [vmem:[#allocation2 + $0x30] sm:$0x1] %vm1168, %v873
    %1173 = vst.msk [vmem:[#allocation2 + $0x40] sm:$0x1] %vm1168, %v856
    %1174 = vst.msk [vmem:[#allocation2 + $0x50] sm:$0x1] %vm1168, %v870
    %1175 = vst.msk [vmem:[#allocation2 + $0x60] sm:$0x1] %vm1168, %v872
    %1176 = vst.msk [vmem:[#allocation2 + $0x70] sm:$0x1] %vm1168, %v874
    %1177 = vst.msk [vmem:[#allocation2 + $0x80] sm:$0x1] %vm1168, %v898
    %1178 = vst.msk [vmem:[#allocation2 + $0x90] sm:$0x1] %vm1168, %v912
    %1179 = vst.msk [vmem:[#allocation2 + $0xa0] sm:$0x1] %vm1168, %v920
    %1180 = vst.msk [vmem:[#allocation2 + $0xb0] sm:$0x1] %vm1168, %v922
    %1181 = vst.msk [vmem:[#allocation2 + $0xc0] sm:$0x1] %vm1168, %v905
    %1182 = vst.msk [vmem:[#allocation2 + $0xd0] sm:$0x1] %vm1168, %v919
    %1183 = vst.msk [vmem:[#allocation2 + $0xe0] sm:$0x1] %vm1168, %v921
    %1184 = vst.msk [vmem:[#allocation2 + $0xf0] sm:$0x1] %vm1168, %v923
    %1185 = vst.msk [vmem:[#allocation2 + $0x100] sm:$0x1] %vm1168, %v947
    %1186 = vst.msk [vmem:[#allocation2 + $0x110] sm:$0x1] %vm1168, %v961
    %1187 = vst.msk [vmem:[#allocation2 + $0x120] sm:$0x1] %vm1168, %v969
    %1188 = vst.msk [vmem:[#allocation2 + $0x130] sm:$0x1] %vm1168, %v971
    %1189 = vst.msk [vmem:[#allocation2 + $0x140] sm:$0x1] %vm1168, %v954
    %1190 = vst.msk [vmem:[#allocation2 + $0x150] sm:$0x1] %vm1168, %v968
    %1191 = vst.msk [vmem:[#allocation2 + $0x160] sm:$0x1] %vm1168, %v970
    %1192 = vst.msk [vmem:[#allocation2 + $0x170] sm:$0x1] %vm1168, %v972
    %1193 = vst.msk [vmem:[#allocation2 + $0x180] sm:$0x1] %vm1168, %v996
    %1194 = vst.msk [vmem:[#allocation2 + $0x190] sm:$0x1] %vm1168, %v1010
    %1195 = vst.msk [vmem:[#allocation2 + $0x1a0] sm:$0x1] %vm1168, %v1018
    %1196 = vst.msk [vmem:[#allocation2 + $0x1b0] sm:$0x1] %vm1168, %v1020
    %1197 = vst.msk [vmem:[#allocation2 + $0x1c0] sm:$0x1] %vm1168, %v1003
    %1198 = vst.msk [vmem:[#allocation2 + $0x1d0] sm:$0x1] %vm1168, %v1017
    %1199 = vst.msk [vmem:[#allocation2 + $0x1e0] sm:$0x1] %vm1168, %v1019
    %1200 = vst.msk [vmem:[#allocation2 + $0x1f0] sm:$0x1] %vm1168, %v1021
    %1201 = vst.msk [vmem:[#allocation2 + $0x200] sm:$0x1] %vm1168, %v1045
    %1202 = vst.msk [vmem:[#allocation2 + $0x210] sm:$0x1] %vm1168, %v1059
    %1203 = vst.msk [vmem:[#allocation2 + $0x220] sm:$0x1] %vm1168, %v1067
    %1204 = vst.msk [vmem:[#allocation2 + $0x230] sm:$0x1] %vm1168, %v1069
    %1205 = vst.msk [vmem:[#allocation2 + $0x240] sm:$0x1] %vm1168, %v1052
    %1206 = vst.msk [vmem:[#allocation2 + $0x250] sm:$0x1] %vm1168, %v1066
    %1207 = vst.msk [vmem:[#allocation2 + $0x260] sm:$0x1] %vm1168, %v1068
    %1208 = vst.msk [vmem:[#allocation2 + $0x270] sm:$0x1] %vm1168, %v1070
    %1209 = vst.msk [vmem:[#allocation2 + $0x280] sm:$0x1] %vm1168, %v1094
    %1210 = vst.msk [vmem:[#allocation2 + $0x290] sm:$0x1] %vm1168, %v1108
    %1211 = vst.msk [vmem:[#allocation2 + $0x2a0] sm:$0x1] %vm1168, %v1116
    %1212 = vst.msk [vmem:[#allocation2 + $0x2b0] sm:$0x1] %vm1168, %v1118
    %1213 = vst.msk [vmem:[#allocation2 + $0x2c0] sm:$0x1] %vm1168, %v1101
    %1214 = vst.msk [vmem:[#allocation2 + $0x2d0] sm:$0x1] %vm1168, %v1115
    %1215 = vst.msk [vmem:[#allocation2 + $0x2e0] sm:$0x1] %vm1168, %v1117
    %1216 = vst.msk [vmem:[#allocation2 + $0x2f0] sm:$0x1] %vm1168, %v1119
    %v1217 = vlaneseq
    %v1218 = vshrl.u32 %v1217, 7
    %v1219 = vsub.s32 0, %v1218
    %v1220 = vrot.slane %v849, %v1219
    %v1221 = vlaneseq
    %v1222 = vshrl.u32 %v1221, 7
    %v1223 = vsub.s32 0, %v1222
    %v1224 = vrot.slane %v863, %v1223
    %v1225 = vlaneseq
    %v1226 = vshrl.u32 %v1225, 7
    %v1227 = vsub.s32 0, %v1226
    %v1228 = vrot.slane %v871, %v1227
    %v1229 = vlaneseq
    %v1230 = vshrl.u32 %v1229, 7
    %v1231 = vsub.s32 0, %v1230
    %v1232 = vrot.slane %v873, %v1231
    %v1233 = vlaneseq
    %v1234 = vshrl.u32 %v1233, 7
    %v1235 = vsub.s32 0, %v1234
    %v1236 = vrot.slane %v856, %v1235
    %v1237 = vlaneseq
    %v1238 = vshrl.u32 %v1237, 7
    %v1239 = vsub.s32 0, %v1238
    %v1240 = vrot.slane %v870, %v1239
    %v1241 = vlaneseq
    %v1242 = vshrl.u32 %v1241, 7
    %v1243 = vsub.s32 0, %v1242
    %v1244 = vrot.slane %v872, %v1243
    %v1245 = vlaneseq
    %v1246 = vshrl.u32 %v1245, 7
    %v1247 = vsub.s32 0, %v1246
    %v1248 = vrot.slane %v874, %v1247
    %v1249 = vlaneseq
    %v1250 = vshrl.u32 %v1249, 7
    %v1251 = vsub.s32 0, %v1250
    %v1252 = vrot.slane %v898, %v1251
    %v1253 = vlaneseq
    %v1254 = vshrl.u32 %v1253, 7
    %v1255 = vsub.s32 0, %v1254
    %v1256 = vrot.slane %v912, %v1255
    %v1257 = vlaneseq
    %v1258 = vshrl.u32 %v1257, 7
    %v1259 = vsub.s32 0, %v1258
    %v1260 = vrot.slane %v920, %v1259
    %v1261 = vlaneseq
    %v1262 = vshrl.u32 %v1261, 7
    %v1263 = vsub.s32 0, %v1262
    %v1264 = vrot.slane %v922, %v1263
    %v1265 = vlaneseq
    %v1266 = vshrl.u32 %v1265, 7
    %v1267 = vsub.s32 0, %v1266
    %v1268 = vrot.slane %v905, %v1267
    %v1269 = vlaneseq
    %v1270 = vshrl.u32 %v1269, 7
    %v1271 = vsub.s32 0, %v1270
    %v1272 = vrot.slane %v919, %v1271
    %v1273 = vlaneseq
    %v1274 = vshrl.u32 %v1273, 7
    %v1275 = vsub.s32 0, %v1274
    %v1276 = vrot.slane %v921, %v1275
    %v1277 = vlaneseq
    %v1278 = vshrl.u32 %v1277, 7
    %v1279 = vsub.s32 0, %v1278
    %v1280 = vrot.slane %v923, %v1279
    %v1281 = vlaneseq
    %v1282 = vshrl.u32 %v1281, 7
    %v1283 = vsub.s32 0, %v1282
    %v1284 = vrot.slane %v947, %v1283
    %v1285 = vlaneseq
    %v1286 = vshrl.u32 %v1285, 7
    %v1287 = vsub.s32 0, %v1286
    %v1288 = vrot.slane %v961, %v1287
    %v1289 = vlaneseq
    %v1290 = vshrl.u32 %v1289, 7
    %v1291 = vsub.s32 0, %v1290
    %v1292 = vrot.slane %v969, %v1291
    %v1293 = vlaneseq
    %v1294 = vshrl.u32 %v1293, 7
    %v1295 = vsub.s32 0, %v1294
    %v1296 = vrot.slane %v971, %v1295
    %v1297 = vlaneseq
    %v1298 = vshrl.u32 %v1297, 7
    %v1299 = vsub.s32 0, %v1298
    %v1300 = vrot.slane %v954, %v1299
    %v1301 = vlaneseq
    %v1302 = vshrl.u32 %v1301, 7
    %v1303 = vsub.s32 0, %v1302
    %v1304 = vrot.slane %v968, %v1303
    %v1305 = vlaneseq
    %v1306 = vshrl.u32 %v1305, 7
    %v1307 = vsub.s32 0, %v1306
    %v1308 = vrot.slane %v970, %v1307
    %v1309 = vlaneseq
    %v1310 = vshrl.u32 %v1309, 7
    %v1311 = vsub.s32 0, %v1310
    %v1312 = vrot.slane %v972, %v1311
    %v1313 = vlaneseq
    %v1314 = vshrl.u32 %v1313, 7
    %v1315 = vsub.s32 0, %v1314
    %v1316 = vrot.slane %v996, %v1315
    %v1317 = vlaneseq
    %v1318 = vshrl.u32 %v1317, 7
    %v1319 = vsub.s32 0, %v1318
    %v1320 = vrot.slane %v1010, %v1319
    %v1321 = vlaneseq
    %v1322 = vshrl.u32 %v1321, 7
    %v1323 = vsub.s32 0, %v1322
    %v1324 = vrot.slane %v1018, %v1323
    %v1325 = vlaneseq
    %v1326 = vshrl.u32 %v1325, 7
    %v1327 = vsub.s32 0, %v1326
    %v1328 = vrot.slane %v1020, %v1327
    %v1329 = vlaneseq
    %v1330 = vshrl.u32 %v1329, 7
    %v1331 = vsub.s32 0, %v1330
    %v1332 = vrot.slane %v1003, %v1331
    %v1333 = vlaneseq
    %v1334 = vshrl.u32 %v1333, 7
    %v1335 = vsub.s32 0, %v1334
    %v1336 = vrot.slane %v1017, %v1335
    %v1337 = vlaneseq
    %v1338 = vshrl.u32 %v1337, 7
    %v1339 = vsub.s32 0, %v1338
    %v1340 = vrot.slane %v1019, %v1339
    %v1341 = vlaneseq
    %v1342 = vshrl.u32 %v1341, 7
    %v1343 = vsub.s32 0, %v1342
    %v1344 = vrot.slane %v1021, %v1343
    %v1345 = vlaneseq
    %v1346 = vshrl.u32 %v1345, 7
    %v1347 = vsub.s32 0, %v1346
    %v1348 = vrot.slane %v1045, %v1347
    %v1349 = vlaneseq
    %v1350 = vshrl.u32 %v1349, 7
    %v1351 = vsub.s32 0, %v1350
    %v1352 = vrot.slane %v1059, %v1351
    %v1353 = vlaneseq
    %v1354 = vshrl.u32 %v1353, 7
    %v1355 = vsub.s32 0, %v1354
    %v1356 = vrot.slane %v1067, %v1355
    %v1357 = vlaneseq
    %v1358 = vshrl.u32 %v1357, 7
    %v1359 = vsub.s32 0, %v1358
    %v1360 = vrot.slane %v1069, %v1359
    %v1361 = vlaneseq
    %v1362 = vshrl.u32 %v1361, 7
    %v1363 = vsub.s32 0, %v1362
    %v1364 = vrot.slane %v1052, %v1363
    %v1365 = vlaneseq
    %v1366 = vshrl.u32 %v1365, 7
    %v1367 = vsub.s32 0, %v1366
    %v1368 = vrot.slane %v1066, %v1367
    %v1369 = vlaneseq
    %v1370 = vshrl.u32 %v1369, 7
    %v1371 = vsub.s32 0, %v1370
    %v1372 = vrot.slane %v1068, %v1371
    %v1373 = vlaneseq
    %v1374 = vshrl.u32 %v1373, 7
    %v1375 = vsub.s32 0, %v1374
    %v1376 = vrot.slane %v1070, %v1375
    %v1377 = vlaneseq
    %v1378 = vshrl.u32 %v1377, 7
    %v1379 = vsub.s32 0, %v1378
    %v1380 = vrot.slane %v1094, %v1379
    %v1381 = vlaneseq
    %v1382 = vshrl.u32 %v1381, 7
    %v1383 = vsub.s32 0, %v1382
    %v1384 = vrot.slane %v1108, %v1383
    %v1385 = vlaneseq
    %v1386 = vshrl.u32 %v1385, 7
    %v1387 = vsub.s32 0, %v1386
    %v1388 = vrot.slane %v1116, %v1387
    %v1389 = vlaneseq
    %v1390 = vshrl.u32 %v1389, 7
    %v1391 = vsub.s32 0, %v1390
    %v1392 = vrot.slane %v1118, %v1391
    %v1393 = vlaneseq
    %v1394 = vshrl.u32 %v1393, 7
    %v1395 = vsub.s32 0, %v1394
    %v1396 = vrot.slane %v1101, %v1395
    %v1397 = vlaneseq
    %v1398 = vshrl.u32 %v1397, 7
    %v1399 = vsub.s32 0, %v1398
    %v1400 = vrot.slane %v1115, %v1399
    %v1401 = vlaneseq
    %v1402 = vshrl.u32 %v1401, 7
    %v1403 = vsub.s32 0, %v1402
    %v1404 = vrot.slane %v1117, %v1403
    %v1405 = vlaneseq
    %v1406 = vshrl.u32 %v1405, 7
    %v1407 = vsub.s32 0, %v1406
    %v1408 = vrot.slane %v1119, %v1407
    %1409 = vrot.lane.b32.xlu0 %v1220, 108
    %v1410 = vpop.permute.xlu0 %1409
    %1411 = vrot.lane.b32.xlu0 %v1224, 108
    %v1412 = vpop.permute.xlu0 %1411
    %1413 = vrot.lane.b32.xlu0 %v1228, 108
    %v1414 = vpop.permute.xlu0 %1413
    %1415 = vrot.lane.b32.xlu0 %v1232, 108
    %v1416 = vpop.permute.xlu0 %1415
    %1417 = vrot.lane.b32.xlu0 %v1236, 108
    %v1418 = vpop.permute.xlu0 %1417
    %1419 = vrot.lane.b32.xlu0 %v1240, 108
    %v1420 = vpop.permute.xlu0 %1419
    %1421 = vrot.lane.b32.xlu0 %v1244, 108
    %v1422 = vpop.permute.xlu0 %1421
    %1423 = vrot.lane.b32.xlu0 %v1248, 108
    %v1424 = vpop.permute.xlu0 %1423
    %1425 = vrot.lane.b32.xlu0 %v1252, 108
    %v1426 = vpop.permute.xlu0 %1425
    %1427 = vrot.lane.b32.xlu0 %v1256, 108
    %v1428 = vpop.permute.xlu0 %1427
    %1429 = vrot.lane.b32.xlu0 %v1260, 108
    %v1430 = vpop.permute.xlu0 %1429
    %1431 = vrot.lane.b32.xlu0 %v1264, 108
    %v1432 = vpop.permute.xlu0 %1431
    %1433 = vrot.lane.b32.xlu0 %v1268, 108
    %v1434 = vpop.permute.xlu0 %1433
    %1435 = vrot.lane.b32.xlu0 %v1272, 108
    %v1436 = vpop.permute.xlu0 %1435
    %1437 = vrot.lane.b32.xlu0 %v1276, 108
    %v1438 = vpop.permute.xlu0 %1437
    %1439 = vrot.lane.b32.xlu0 %v1280, 108
    %v1440 = vpop.permute.xlu0 %1439
    %1441 = vrot.lane.b32.xlu0 %v1284, 108
    %v1442 = vpop.permute.xlu0 %1441
    %1443 = vrot.lane.b32.xlu0 %v1288, 108
    %v1444 = vpop.permute.xlu0 %1443
    %1445 = vrot.lane.b32.xlu0 %v1292, 108
    %v1446 = vpop.permute.xlu0 %1445
    %1447 = vrot.lane.b32.xlu0 %v1296, 108
    %v1448 = vpop.permute.xlu0 %1447
    %1449 = vrot.lane.b32.xlu0 %v1300, 108
    %v1450 = vpop.permute.xlu0 %1449
    %1451 = vrot.lane.b32.xlu0 %v1304, 108
    %v1452 = vpop.permute.xlu0 %1451
    %1453 = vrot.lane.b32.xlu0 %v1308, 108
    %v1454 = vpop.permute.xlu0 %1453
    %1455 = vrot.lane.b32.xlu0 %v1312, 108
    %v1456 = vpop.permute.xlu0 %1455
    %1457 = vrot.lane.b32.xlu0 %v1316, 108
    %v1458 = vpop.permute.xlu0 %1457
    %1459 = vrot.lane.b32.xlu0 %v1320, 108
    %v1460 = vpop.permute.xlu0 %1459
    %1461 = vrot.lane.b32.xlu0 %v1324, 108
    %v1462 = vpop.permute.xlu0 %1461
    %1463 = vrot.lane.b32.xlu0 %v1328, 108
    %v1464 = vpop.permute.xlu0 %1463
    %1465 = vrot.lane.b32.xlu0 %v1332, 108
    %v1466 = vpop.permute.xlu0 %1465
    %1467 = vrot.lane.b32.xlu0 %v1336, 108
    %v1468 = vpop.permute.xlu0 %1467
    %1469 = vrot.lane.b32.xlu0 %v1340, 108
    %v1470 = vpop.permute.xlu0 %1469
    %1471 = vrot.lane.b32.xlu0 %v1344, 108
    %v1472 = vpop.permute.xlu0 %1471
    %1473 = vrot.lane.b32.xlu0 %v1348, 108
    %v1474 = vpop.permute.xlu0 %1473
    %1475 = vrot.lane.b32.xlu0 %v1352, 108
    %v1476 = vpop.permute.xlu0 %1475
    %1477 = vrot.lane.b32.xlu0 %v1356, 108
    %v1478 = vpop.permute.xlu0 %1477
    %1479 = vrot.lane.b32.xlu0 %v1360, 108
    %v1480 = vpop.permute.xlu0 %1479
    %1481 = vrot.lane.b32.xlu0 %v1364, 108
    %v1482 = vpop.permute.xlu0 %1481
    %1483 = vrot.lane.b32.xlu0 %v1368, 108
    %v1484 = vpop.permute.xlu0 %1483
    %1485 = vrot.lane.b32.xlu0 %v1372, 108
    %v1486 = vpop.permute.xlu0 %1485
    %1487 = vrot.lane.b32.xlu0 %v1376, 108
    %v1488 = vpop.permute.xlu0 %1487
    %1489 = vrot.lane.b32.xlu0 %v1380, 108
    %v1490 = vpop.permute.xlu0 %1489
    %1491 = vrot.lane.b32.xlu0 %v1384, 108
    %v1492 = vpop.permute.xlu0 %1491
    %1493 = vrot.lane.b32.xlu0 %v1388, 108
    %v1494 = vpop.permute.xlu0 %1493
    %1495 = vrot.lane.b32.xlu0 %v1392, 108
    %v1496 = vpop.permute.xlu0 %1495
    %1497 = vrot.lane.b32.xlu0 %v1396, 108
    %v1498 = vpop.permute.xlu0 %1497
    %1499 = vrot.lane.b32.xlu0 %v1400, 108
    %v1500 = vpop.permute.xlu0 %1499
    %1501 = vrot.lane.b32.xlu0 %v1404, 108
    %v1502 = vpop.permute.xlu0 %1501
    %1503 = vrot.lane.b32.xlu0 %v1408, 108
    %v1504 = vpop.permute.xlu0 %1503
    %1553 = vst.msk [vmem:[#allocation2 + $0x1] sm:$0x1] %vm1168, %v1410
    %1554 = vst.msk [vmem:[#allocation2 + $0x11] sm:$0x1] %vm1168, %v1412
    %1555 = vst.msk [vmem:[#allocation2 + $0x21] sm:$0x1] %vm1168, %v1414
    %1556 = vst.msk [vmem:[#allocation2 + $0x31] sm:$0x1] %vm1168, %v1416
    %1557 = vst.msk [vmem:[#allocation2 + $0x41] sm:$0x1] %vm1168, %v1418
    %1558 = vst.msk [vmem:[#allocation2 + $0x51] sm:$0x1] %vm1168, %v1420
    %1559 = vst.msk [vmem:[#allocation2 + $0x61] sm:$0x1] %vm1168, %v1422
    %1560 = vst.msk [vmem:[#allocation2 + $0x71] sm:$0x1] %vm1168, %v1424
    %1561 = vst.msk [vmem:[#allocation2 + $0x81] sm:$0x1] %vm1168, %v1426
    %1562 = vst.msk [vmem:[#allocation2 + $0x91] sm:$0x1] %vm1168, %v1428
    %1563 = vst.msk [vmem:[#allocation2 + $0xa1] sm:$0x1] %vm1168, %v1430
    %1564 = vst.msk [vmem:[#allocation2 + $0xb1] sm:$0x1] %vm1168, %v1432
    %1565 = vst.msk [vmem:[#allocation2 + $0xc1] sm:$0x1] %vm1168, %v1434
    %1566 = vst.msk [vmem:[#allocation2 + $0xd1] sm:$0x1] %vm1168, %v1436
    %1567 = vst.msk [vmem:[#allocation2 + $0xe1] sm:$0x1] %vm1168, %v1438
    %1568 = vst.msk [vmem:[#allocation2 + $0xf1] sm:$0x1] %vm1168, %v1440
    %1569 = vst.msk [vmem:[#allocation2 + $0x101] sm:$0x1] %vm1168, %v1442
    %1570 = vst.msk [vmem:[#allocation2 + $0x111] sm:$0x1] %vm1168, %v1444
    %1571 = vst.msk [vmem:[#allocation2 + $0x121] sm:$0x1] %vm1168, %v1446
    %1572 = vst.msk [vmem:[#allocation2 + $0x131] sm:$0x1] %vm1168, %v1448
    %1573 = vst.msk [vmem:[#allocation2 + $0x141] sm:$0x1] %vm1168, %v1450
    %1574 = vst.msk [vmem:[#allocation2 + $0x151] sm:$0x1] %vm1168, %v1452
    %1575 = vst.msk [vmem:[#allocation2 + $0x161] sm:$0x1] %vm1168, %v1454
    %1576 = vst.msk [vmem:[#allocation2 + $0x171] sm:$0x1] %vm1168, %v1456
    %1577 = vst.msk [vmem:[#allocation2 + $0x181] sm:$0x1] %vm1168, %v1458
    %1578 = vst.msk [vmem:[#allocation2 + $0x191] sm:$0x1] %vm1168, %v1460
    %1579 = vst.msk [vmem:[#allocation2 + $0x1a1] sm:$0x1] %vm1168, %v1462
    %1580 = vst.msk [vmem:[#allocation2 + $0x1b1] sm:$0x1] %vm1168, %v1464
    %1581 = vst.msk [vmem:[#allocation2 + $0x1c1] sm:$0x1] %vm1168, %v1466
    %1582 = vst.msk [vmem:[#allocation2 + $0x1d1] sm:$0x1] %vm1168, %v1468
    %1583 = vst.msk [vmem:[#allocation2 + $0x1e1] sm:$0x1] %vm1168, %v1470
    %1584 = vst.msk [vmem:[#allocation2 + $0x1f1] sm:$0x1] %vm1168, %v1472
    %1585 = vst.msk [vmem:[#allocation2 + $0x201] sm:$0x1] %vm1168, %v1474
    %1586 = vst.msk [vmem:[#allocation2 + $0x211] sm:$0x1] %vm1168, %v1476
    %1587 = vst.msk [vmem:[#allocation2 + $0x221] sm:$0x1] %vm1168, %v1478
    %1588 = vst.msk [vmem:[#allocation2 + $0x231] sm:$0x1] %vm1168, %v1480
    %1589 = vst.msk [vmem:[#allocation2 + $0x241] sm:$0x1] %vm1168, %v1482
    %1590 = vst.msk [vmem:[#allocation2 + $0x251] sm:$0x1] %vm1168, %v1484
    %1591 = vst.msk [vmem:[#allocation2 + $0x261] sm:$0x1] %vm1168, %v1486
    %1592 = vst.msk [vmem:[#allocation2 + $0x271] sm:$0x1] %vm1168, %v1488
    %1593 = vst.msk [vmem:[#allocation2 + $0x281] sm:$0x1] %vm1168, %v1490
    %1594 = vst.msk [vmem:[#allocation2 + $0x291] sm:$0x1] %vm1168, %v1492
    %1595 = vst.msk [vmem:[#allocation2 + $0x2a1] sm:$0x1] %vm1168, %v1494
    %1596 = vst.msk [vmem:[#allocation2 + $0x2b1] sm:$0x1] %vm1168, %v1496
    %1597 = vst.msk [vmem:[#allocation2 + $0x2c1] sm:$0x1] %vm1168, %v1498
    %1598 = vst.msk [vmem:[#allocation2 + $0x2d1] sm:$0x1] %vm1168, %v1500
    %1599 = vst.msk [vmem:[#allocation2 + $0x2e1] sm:$0x1] %vm1168, %v1502
    %1600 = vst.msk [vmem:[#allocation2 + $0x2f1] sm:$0x1] %vm1168, %v1504
    %1601 = vrot.lane.b32.xlu0 %v1220, 88
    %v1602 = vpop.permute.xlu0 %1601
    %1603 = vrot.lane.b32.xlu0 %v1224, 88
    %v1604 = vpop.permute.xlu0 %1603
    %1605 = vrot.lane.b32.xlu0 %v1228, 88
    %v1606 = vpop.permute.xlu0 %1605
    %1607 = vrot.lane.b32.xlu0 %v1232, 88
    %v1608 = vpop.permute.xlu0 %1607
    %1609 = vrot.lane.b32.xlu0 %v1236, 88
    %v1610 = vpop.permute.xlu0 %1609
    %1611 = vrot.lane.b32.xlu0 %v1240, 88
    %v1612 = vpop.permute.xlu0 %1611
    %1613 = vrot.lane.b32.xlu0 %v1244, 88
    %v1614 = vpop.permute.xlu0 %1613
    %1615 = vrot.lane.b32.xlu0 %v1248, 88
    %v1616 = vpop.permute.xlu0 %1615
    %1617 = vrot.lane.b32.xlu0 %v1252, 88
    %v1618 = vpop.permute.xlu0 %1617
    %1619 = vrot.lane.b32.xlu0 %v1256, 88
    %v1620 = vpop.permute.xlu0 %1619
    %1621 = vrot.lane.b32.xlu0 %v1260, 88
    %v1622 = vpop.permute.xlu0 %1621
    %1623 = vrot.lane.b32.xlu0 %v1264, 88
    %v1624 = vpop.permute.xlu0 %1623
    %1625 = vrot.lane.b32.xlu0 %v1268, 88
    %v1626 = vpop.permute.xlu0 %1625
    %1627 = vrot.lane.b32.xlu0 %v1272, 88
    %v1628 = vpop.permute.xlu0 %1627
    %1629 = vrot.lane.b32.xlu0 %v1276, 88
    %v1630 = vpop.permute.xlu0 %1629
    %1631 = vrot.lane.b32.xlu0 %v1280, 88
    %v1632 = vpop.permute.xlu0 %1631
    %1633 = vrot.lane.b32.xlu0 %v1284, 88
    %v1634 = vpop.permute.xlu0 %1633
    %1635 = vrot.lane.b32.xlu0 %v1288, 88
    %v1636 = vpop.permute.xlu0 %1635
    %1637 = vrot.lane.b32.xlu0 %v1292, 88
    %v1638 = vpop.permute.xlu0 %1637
    %1639 = vrot.lane.b32.xlu0 %v1296, 88
    %v1640 = vpop.permute.xlu0 %1639
    %1641 = vrot.lane.b32.xlu0 %v1300, 88
    %v1642 = vpop.permute.xlu0 %1641
    %1643 = vrot.lane.b32.xlu0 %v1304, 88
    %v1644 = vpop.permute.xlu0 %1643
    %1645 = vrot.lane.b32.xlu0 %v1308, 88
    %v1646 = vpop.permute.xlu0 %1645
    %1647 = vrot.lane.b32.xlu0 %v1312, 88
    %v1648 = vpop.permute.xlu0 %1647
    %1649 = vrot.lane.b32.xlu0 %v1316, 88
    %v1650 = vpop.permute.xlu0 %1649
    %1651 = vrot.lane.b32.xlu0 %v1320, 88
    %v1652 = vpop.permute.xlu0 %1651
    %1653 = vrot.lane.b32.xlu0 %v1324, 88
    %v1654 = vpop.permute.xlu0 %1653
    %1655 = vrot.lane.b32.xlu0 %v1328, 88
    %v1656 = vpop.permute.xlu0 %1655
    %1657 = vrot.lane.b32.xlu0 %v1332, 88
    %v1658 = vpop.permute.xlu0 %1657
    %1659 = vrot.lane.b32.xlu0 %v1336, 88
    %v1660 = vpop.permute.xlu0 %1659
    %1661 = vrot.lane.b32.xlu0 %v1340, 88
    %v1662 = vpop.permute.xlu0 %1661
    %1663 = vrot.lane.b32.xlu0 %v1344, 88
    %v1664 = vpop.permute.xlu0 %1663
    %1665 = vrot.lane.b32.xlu0 %v1348, 88
    %v1666 = vpop.permute.xlu0 %1665
    %1667 = vrot.lane.b32.xlu0 %v1352, 88
    %v1668 = vpop.permute.xlu0 %1667
    %1669 = vrot.lane.b32.xlu0 %v1356, 88
    %v1670 = vpop.permute.xlu0 %1669
    %1671 = vrot.lane.b32.xlu0 %v1360, 88
    %v1672 = vpop.permute.xlu0 %1671
    %1673 = vrot.lane.b32.xlu0 %v1364, 88
    %v1674 = vpop.permute.xlu0 %1673
    %1675 = vrot.lane.b32.xlu0 %v1368, 88
    %v1676 = vpop.permute.xlu0 %1675
    %1677 = vrot.lane.b32.xlu0 %v1372, 88
    %v1678 = vpop.permute.xlu0 %1677
    %1679 = vrot.lane.b32.xlu0 %v1376, 88
    %v1680 = vpop.permute.xlu0 %1679
    %1681 = vrot.lane.b32.xlu0 %v1380, 88
    %v1682 = vpop.permute.xlu0 %1681
    %1683 = vrot.lane.b32.xlu0 %v1384, 88
    %v1684 = vpop.permute.xlu0 %1683
    %1685 = vrot.lane.b32.xlu0 %v1388, 88
    %v1686 = vpop.permute.xlu0 %1685
    %1687 = vrot.lane.b32.xlu0 %v1392, 88
    %v1688 = vpop.permute.xlu0 %1687
    %1689 = vrot.lane.b32.xlu0 %v1396, 88
    %v1690 = vpop.permute.xlu0 %1689
    %1691 = vrot.lane.b32.xlu0 %v1400, 88
    %v1692 = vpop.permute.xlu0 %1691
    %1693 = vrot.lane.b32.xlu0 %v1404, 88
    %v1694 = vpop.permute.xlu0 %1693
    %1695 = vrot.lane.b32.xlu0 %v1408, 88
    %v1696 = vpop.permute.xlu0 %1695
    %1745 = vst.msk [vmem:[#allocation2 + $0x2] sm:$0x1] %vm1168, %v1602
    %1746 = vst.msk [vmem:[#allocation2 + $0x12] sm:$0x1] %vm1168, %v1604
    %1747 = vst.msk [vmem:[#allocation2 + $0x22] sm:$0x1] %vm1168, %v1606
    %1748 = vst.msk [vmem:[#allocation2 + $0x32] sm:$0x1] %vm1168, %v1608
    %1749 = vst.msk [vmem:[#allocation2 + $0x42] sm:$0x1] %vm1168, %v1610
    %1750 = vst.msk [vmem:[#allocation2 + $0x52] sm:$0x1] %vm1168, %v1612
    %1751 = vst.msk [vmem:[#allocation2 + $0x62] sm:$0x1] %vm1168, %v1614
    %1752 = vst.msk [vmem:[#allocation2 + $0x72] sm:$0x1] %vm1168, %v1616
    %1753 = vst.msk [vmem:[#allocation2 + $0x82] sm:$0x1] %vm1168, %v1618
    %1754 = vst.msk [vmem:[#allocation2 + $0x92] sm:$0x1] %vm1168, %v1620
    %1755 = vst.msk [vmem:[#allocation2 + $0xa2] sm:$0x1] %vm1168, %v1622
    %1756 = vst.msk [vmem:[#allocation2 + $0xb2] sm:$0x1] %vm1168, %v1624
    %1757 = vst.msk [vmem:[#allocation2 + $0xc2] sm:$0x1] %vm1168, %v1626
    %1758 = vst.msk [vmem:[#allocation2 + $0xd2] sm:$0x1] %vm1168, %v1628
    %1759 = vst.msk [vmem:[#allocation2 + $0xe2] sm:$0x1] %vm1168, %v1630
    %1760 = vst.msk [vmem:[#allocation2 + $0xf2] sm:$0x1] %vm1168, %v1632
    %1761 = vst.msk [vmem:[#allocation2 + $0x102] sm:$0x1] %vm1168, %v1634
    %1762 = vst.msk [vmem:[#allocation2 + $0x112] sm:$0x1] %vm1168, %v1636
    %1763 = vst.msk [vmem:[#allocation2 + $0x122] sm:$0x1] %vm1168, %v1638
    %1764 = vst.msk [vmem:[#allocation2 + $0x132] sm:$0x1] %vm1168, %v1640
    %1765 = vst.msk [vmem:[#allocation2 + $0x142] sm:$0x1] %vm1168, %v1642
    %1766 = vst.msk [vmem:[#allocation2 + $0x152] sm:$0x1] %vm1168, %v1644
    %1767 = vst.msk [vmem:[#allocation2 + $0x162] sm:$0x1] %vm1168, %v1646
    %1768 = vst.msk [vmem:[#allocation2 + $0x172] sm:$0x1] %vm1168, %v1648
    %1769 = vst.msk [vmem:[#allocation2 + $0x182] sm:$0x1] %vm1168, %v1650
    %1770 = vst.msk [vmem:[#allocation2 + $0x192] sm:$0x1] %vm1168, %v1652
    %1771 = vst.msk [vmem:[#allocation2 + $0x1a2] sm:$0x1] %vm1168, %v1654
    %1772 = vst.msk [vmem:[#allocation2 + $0x1b2] sm:$0x1] %vm1168, %v1656
    %1773 = vst.msk [vmem:[#allocation2 + $0x1c2] sm:$0x1] %vm1168, %v1658
    %1774 = vst.msk [vmem:[#allocation2 + $0x1d2] sm:$0x1] %vm1168, %v1660
    %1775 = vst.msk [vmem:[#allocation2 + $0x1e2] sm:$0x1] %vm1168, %v1662
    %1776 = vst.msk [vmem:[#allocation2 + $0x1f2] sm:$0x1] %vm1168, %v1664
    %1777 = vst.msk [vmem:[#allocation2 + $0x202] sm:$0x1] %vm1168, %v1666
    %1778 = vst.msk [vmem:[#allocation2 + $0x212] sm:$0x1] %vm1168, %v1668
    %1779 = vst.msk [vmem:[#allocation2 + $0x222] sm:$0x1] %vm1168, %v1670
    %1780 = vst.msk [vmem:[#allocation2 + $0x232] sm:$0x1] %vm1168, %v1672
    %1781 = vst.msk [vmem:[#allocation2 + $0x242] sm:$0x1] %vm1168, %v1674
    %1782 = vst.msk [vmem:[#allocation2 + $0x252] sm:$0x1] %vm1168, %v1676
    %1783 = vst.msk [vmem:[#allocation2 + $0x262] sm:$0x1] %vm1168, %v1678
    %1784 = vst.msk [vmem:[#allocation2 + $0x272] sm:$0x1] %vm1168, %v1680
    %1785 = vst.msk [vmem:[#allocation2 + $0x282] sm:$0x1] %vm1168, %v1682
    %1786 = vst.msk [vmem:[#allocation2 + $0x292] sm:$0x1] %vm1168, %v1684
    %1787 = vst.msk [vmem:[#allocation2 + $0x2a2] sm:$0x1] %vm1168, %v1686
    %1788 = vst.msk [vmem:[#allocation2 + $0x2b2] sm:$0x1] %vm1168, %v1688
    %1789 = vst.msk [vmem:[#allocation2 + $0x2c2] sm:$0x1] %vm1168, %v1690
    %1790 = vst.msk [vmem:[#allocation2 + $0x2d2] sm:$0x1] %vm1168, %v1692
    %1791 = vst.msk [vmem:[#allocation2 + $0x2e2] sm:$0x1] %vm1168, %v1694
    %1792 = vst.msk [vmem:[#allocation2 + $0x2f2] sm:$0x1] %vm1168, %v1696
    %1793 = vrot.lane.b32.xlu0 %v1220, 68
    %v1794 = vpop.permute.xlu0 %1793
    %1795 = vrot.lane.b32.xlu0 %v1224, 68
    %v1796 = vpop.permute.xlu0 %1795
    %1797 = vrot.lane.b32.xlu0 %v1228, 68
    %v1798 = vpop.permute.xlu0 %1797
    %1799 = vrot.lane.b32.xlu0 %v1232, 68
    %v1800 = vpop.permute.xlu0 %1799
    %1801 = vrot.lane.b32.xlu0 %v1236, 68
    %v1802 = vpop.permute.xlu0 %1801
    %1803 = vrot.lane.b32.xlu0 %v1240, 68
    %v1804 = vpop.permute.xlu0 %1803
    %1805 = vrot.lane.b32.xlu0 %v1244, 68
    %v1806 = vpop.permute.xlu0 %1805
    %1807 = vrot.lane.b32.xlu0 %v1248, 68
    %v1808 = vpop.permute.xlu0 %1807
    %1809 = vrot.lane.b32.xlu0 %v1252, 68
    %v1810 = vpop.permute.xlu0 %1809
    %1811 = vrot.lane.b32.xlu0 %v1256, 68
    %v1812 = vpop.permute.xlu0 %1811
    %1813 = vrot.lane.b32.xlu0 %v1260, 68
    %v1814 = vpop.permute.xlu0 %1813
    %1815 = vrot.lane.b32.xlu0 %v1264, 68
    %v1816 = vpop.permute.xlu0 %1815
    %1817 = vrot.lane.b32.xlu0 %v1268, 68
    %v1818 = vpop.permute.xlu0 %1817
    %1819 = vrot.lane.b32.xlu0 %v1272, 68
    %v1820 = vpop.permute.xlu0 %1819
    %1821 = vrot.lane.b32.xlu0 %v1276, 68
    %v1822 = vpop.permute.xlu0 %1821
    %1823 = vrot.lane.b32.xlu0 %v1280, 68
    %v1824 = vpop.permute.xlu0 %1823
    %1825 = vrot.lane.b32.xlu0 %v1284, 68
    %v1826 = vpop.permute.xlu0 %1825
    %1827 = vrot.lane.b32.xlu0 %v1288, 68
    %v1828 = vpop.permute.xlu0 %1827
    %1829 = vrot.lane.b32.xlu0 %v1292, 68
    %v1830 = vpop.permute.xlu0 %1829
    %1831 = vrot.lane.b32.xlu0 %v1296, 68
    %v1832 = vpop.permute.xlu0 %1831
    %1833 = vrot.lane.b32.xlu0 %v1300, 68
    %v1834 = vpop.permute.xlu0 %1833
    %1835 = vrot.lane.b32.xlu0 %v1304, 68
    %v1836 = vpop.permute.xlu0 %1835
    %1837 = vrot.lane.b32.xlu0 %v1308, 68
    %v1838 = vpop.permute.xlu0 %1837
    %1839 = vrot.lane.b32.xlu0 %v1312, 68
    %v1840 = vpop.permute.xlu0 %1839
    %1841 = vrot.lane.b32.xlu0 %v1316, 68
    %v1842 = vpop.permute.xlu0 %1841
    %1843 = vrot.lane.b32.xlu0 %v1320, 68
    %v1844 = vpop.permute.xlu0 %1843
    %1845 = vrot.lane.b32.xlu0 %v1324, 68
    %v1846 = vpop.permute.xlu0 %1845
    %1847 = vrot.lane.b32.xlu0 %v1328, 68
    %v1848 = vpop.permute.xlu0 %1847
    %1849 = vrot.lane.b32.xlu0 %v1332, 68
    %v1850 = vpop.permute.xlu0 %1849
    %1851 = vrot.lane.b32.xlu0 %v1336, 68
    %v1852 = vpop.permute.xlu0 %1851
    %1853 = vrot.lane.b32.xlu0 %v1340, 68
    %v1854 = vpop.permute.xlu0 %1853
    %1855 = vrot.lane.b32.xlu0 %v1344, 68
    %v1856 = vpop.permute.xlu0 %1855
    %1857 = vrot.lane.b32.xlu0 %v1348, 68
    %v1858 = vpop.permute.xlu0 %1857
    %1859 = vrot.lane.b32.xlu0 %v1352, 68
    %v1860 = vpop.permute.xlu0 %1859
    %1861 = vrot.lane.b32.xlu0 %v1356, 68
    %v1862 = vpop.permute.xlu0 %1861
    %1863 = vrot.lane.b32.xlu0 %v1360, 68
    %v1864 = vpop.permute.xlu0 %1863
    %1865 = vrot.lane.b32.xlu0 %v1364, 68
    %v1866 = vpop.permute.xlu0 %1865
    %1867 = vrot.lane.b32.xlu0 %v1368, 68
    %v1868 = vpop.permute.xlu0 %1867
    %1869 = vrot.lane.b32.xlu0 %v1372, 68
    %v1870 = vpop.permute.xlu0 %1869
    %1871 = vrot.lane.b32.xlu0 %v1376, 68
    %v1872 = vpop.permute.xlu0 %1871
    %1873 = vrot.lane.b32.xlu0 %v1380, 68
    %v1874 = vpop.permute.xlu0 %1873
    %1875 = vrot.lane.b32.xlu0 %v1384, 68
    %v1876 = vpop.permute.xlu0 %1875
    %1877 = vrot.lane.b32.xlu0 %v1388, 68
    %v1878 = vpop.permute.xlu0 %1877
    %1879 = vrot.lane.b32.xlu0 %v1392, 68
    %v1880 = vpop.permute.xlu0 %1879
    %1881 = vrot.lane.b32.xlu0 %v1396, 68
    %v1882 = vpop.permute.xlu0 %1881
    %1883 = vrot.lane.b32.xlu0 %v1400, 68
    %v1884 = vpop.permute.xlu0 %1883
    %1885 = vrot.lane.b32.xlu0 %v1404, 68
    %v1886 = vpop.permute.xlu0 %1885
    %1887 = vrot.lane.b32.xlu0 %v1408, 68
    %v1888 = vpop.permute.xlu0 %1887
    %1937 = vst.msk [vmem:[#allocation2 + $0x3] sm:$0x1] %vm1168, %v1794
    %1938 = vst.msk [vmem:[#allocation2 + $0x13] sm:$0x1] %vm1168, %v1796
    %1939 = vst.msk [vmem:[#allocation2 + $0x23] sm:$0x1] %vm1168, %v1798
    %1940 = vst.msk [vmem:[#allocation2 + $0x33] sm:$0x1] %vm1168, %v1800
    %1941 = vst.msk [vmem:[#allocation2 + $0x43] sm:$0x1] %vm1168, %v1802
    %1942 = vst.msk [vmem:[#allocation2 + $0x53] sm:$0x1] %vm1168, %v1804
    %1943 = vst.msk [vmem:[#allocation2 + $0x63] sm:$0x1] %vm1168, %v1806
    %1944 = vst.msk [vmem:[#allocation2 + $0x73] sm:$0x1] %vm1168, %v1808
    %1945 = vst.msk [vmem:[#allocation2 + $0x83] sm:$0x1] %vm1168, %v1810
    %1946 = vst.msk [vmem:[#allocation2 + $0x93] sm:$0x1] %vm1168, %v1812
    %1947 = vst.msk [vmem:[#allocation2 + $0xa3] sm:$0x1] %vm1168, %v1814
    %1948 = vst.msk [vmem:[#allocation2 + $0xb3] sm:$0x1] %vm1168, %v1816
    %1949 = vst.msk [vmem:[#allocation2 + $0xc3] sm:$0x1] %vm1168, %v1818
    %1950 = vst.msk [vmem:[#allocation2 + $0xd3] sm:$0x1] %vm1168, %v1820
    %1951 = vst.msk [vmem:[#allocation2 + $0xe3] sm:$0x1] %vm1168, %v1822
    %1952 = vst.msk [vmem:[#allocation2 + $0xf3] sm:$0x1] %vm1168, %v1824
    %1953 = vst.msk [vmem:[#allocation2 + $0x103] sm:$0x1] %vm1168, %v1826
    %1954 = vst.msk [vmem:[#allocation2 + $0x113] sm:$0x1] %vm1168, %v1828
    %1955 = vst.msk [vmem:[#allocation2 + $0x123] sm:$0x1] %vm1168, %v1830
    %1956 = vst.msk [vmem:[#allocation2 + $0x133] sm:$0x1] %vm1168, %v1832
    %1957 = vst.msk [vmem:[#allocation2 + $0x143] sm:$0x1] %vm1168, %v1834
    %1958 = vst.msk [vmem:[#allocation2 + $0x153] sm:$0x1] %vm1168, %v1836
    %1959 = vst.msk [vmem:[#allocation2 + $0x163] sm:$0x1] %vm1168, %v1838
    %1960 = vst.msk [vmem:[#allocation2 + $0x173] sm:$0x1] %vm1168, %v1840
    %1961 = vst.msk [vmem:[#allocation2 + $0x183] sm:$0x1] %vm1168, %v1842
    %1962 = vst.msk [vmem:[#allocation2 + $0x193] sm:$0x1] %vm1168, %v1844
    %1963 = vst.msk [vmem:[#allocation2 + $0x1a3] sm:$0x1] %vm1168, %v1846
    %1964 = vst.msk [vmem:[#allocation2 + $0x1b3] sm:$0x1] %vm1168, %v1848
    %1965 = vst.msk [vmem:[#allocation2 + $0x1c3] sm:$0x1] %vm1168, %v1850
    %1966 = vst.msk [vmem:[#allocation2 + $0x1d3] sm:$0x1] %vm1168, %v1852
    %1967 = vst.msk [vmem:[#allocation2 + $0x1e3] sm:$0x1] %vm1168, %v1854
    %1968 = vst.msk [vmem:[#allocation2 + $0x1f3] sm:$0x1] %vm1168, %v1856
    %1969 = vst.msk [vmem:[#allocation2 + $0x203] sm:$0x1] %vm1168, %v1858
    %1970 = vst.msk [vmem:[#allocation2 + $0x213] sm:$0x1] %vm1168, %v1860
    %1971 = vst.msk [vmem:[#allocation2 + $0x223] sm:$0x1] %vm1168, %v1862
    %1972 = vst.msk [vmem:[#allocation2 + $0x233] sm:$0x1] %vm1168, %v1864
    %1973 = vst.msk [vmem:[#allocation2 + $0x243] sm:$0x1] %vm1168, %v1866
    %1974 = vst.msk [vmem:[#allocation2 + $0x253] sm:$0x1] %vm1168, %v1868
    %1975 = vst.msk [vmem:[#allocation2 + $0x263] sm:$0x1] %vm1168, %v1870
    %1976 = vst.msk [vmem:[#allocation2 + $0x273] sm:$0x1] %vm1168, %v1872
    %1977 = vst.msk [vmem:[#allocation2 + $0x283] sm:$0x1] %vm1168, %v1874
    %1978 = vst.msk [vmem:[#allocation2 + $0x293] sm:$0x1] %vm1168, %v1876
    %1979 = vst.msk [vmem:[#allocation2 + $0x2a3] sm:$0x1] %vm1168, %v1878
    %1980 = vst.msk [vmem:[#allocation2 + $0x2b3] sm:$0x1] %vm1168, %v1880
    %1981 = vst.msk [vmem:[#allocation2 + $0x2c3] sm:$0x1] %vm1168, %v1882
    %1982 = vst.msk [vmem:[#allocation2 + $0x2d3] sm:$0x1] %vm1168, %v1884
    %1983 = vst.msk [vmem:[#allocation2 + $0x2e3] sm:$0x1] %vm1168, %v1886
    %1984 = vst.msk [vmem:[#allocation2 + $0x2f3] sm:$0x1] %vm1168, %v1888
    %1985 = vrot.lane.b32.xlu0 %v1220, 48
    %v1986 = vpop.permute.xlu0 %1985
    %1987 = vrot.lane.b32.xlu0 %v1224, 48
    %v1988 = vpop.permute.xlu0 %1987
    %1989 = vrot.lane.b32.xlu0 %v1228, 48
    %v1990 = vpop.permute.xlu0 %1989
    %1991 = vrot.lane.b32.xlu0 %v1232, 48
    %v1992 = vpop.permute.xlu0 %1991
    %1993 = vrot.lane.b32.xlu0 %v1236, 48
    %v1994 = vpop.permute.xlu0 %1993
    %1995 = vrot.lane.b32.xlu0 %v1240, 48
    %v1996 = vpop.permute.xlu0 %1995
    %1997 = vrot.lane.b32.xlu0 %v1244, 48
    %v1998 = vpop.permute.xlu0 %1997
    %1999 = vrot.lane.b32.xlu0 %v1248, 48
    %v2000 = vpop.permute.xlu0 %1999
    %2001 = vrot.lane.b32.xlu0 %v1252, 48
    %v2002 = vpop.permute.xlu0 %2001
    %2003 = vrot.lane.b32.xlu0 %v1256, 48
    %v2004 = vpop.permute.xlu0 %2003
    %2005 = vrot.lane.b32.xlu0 %v1260, 48
    %v2006 = vpop.permute.xlu0 %2005
    %2007 = vrot.lane.b32.xlu0 %v1264, 48
    %v2008 = vpop.permute.xlu0 %2007
    %2009 = vrot.lane.b32.xlu0 %v1268, 48
    %v2010 = vpop.permute.xlu0 %2009
    %2011 = vrot.lane.b32.xlu0 %v1272, 48
    %v2012 = vpop.permute.xlu0 %2011
    %2013 = vrot.lane.b32.xlu0 %v1276, 48
    %v2014 = vpop.permute.xlu0 %2013
    %2015 = vrot.lane.b32.xlu0 %v1280, 48
    %v2016 = vpop.permute.xlu0 %2015
    %2017 = vrot.lane.b32.xlu0 %v1284, 48
    %v2018 = vpop.permute.xlu0 %2017
    %2019 = vrot.lane.b32.xlu0 %v1288, 48
    %v2020 = vpop.permute.xlu0 %2019
    %2021 = vrot.lane.b32.xlu0 %v1292, 48
    %v2022 = vpop.permute.xlu0 %2021
    %2023 = vrot.lane.b32.xlu0 %v1296, 48
    %v2024 = vpop.permute.xlu0 %2023
    %2025 = vrot.lane.b32.xlu0 %v1300, 48
    %v2026 = vpop.permute.xlu0 %2025
    %2027 = vrot.lane.b32.xlu0 %v1304, 48
    %v2028 = vpop.permute.xlu0 %2027
    %2029 = vrot.lane.b32.xlu0 %v1308, 48
    %v2030 = vpop.permute.xlu0 %2029
    %2031 = vrot.lane.b32.xlu0 %v1312, 48
    %v2032 = vpop.permute.xlu0 %2031
    %2033 = vrot.lane.b32.xlu0 %v1316, 48
    %v2034 = vpop.permute.xlu0 %2033
    %2035 = vrot.lane.b32.xlu0 %v1320, 48
    %v2036 = vpop.permute.xlu0 %2035
    %2037 = vrot.lane.b32.xlu0 %v1324, 48
    %v2038 = vpop.permute.xlu0 %2037
    %2039 = vrot.lane.b32.xlu0 %v1328, 48
    %v2040 = vpop.permute.xlu0 %2039
    %2041 = vrot.lane.b32.xlu0 %v1332, 48
    %v2042 = vpop.permute.xlu0 %2041
    %2043 = vrot.lane.b32.xlu0 %v1336, 48
    %v2044 = vpop.permute.xlu0 %2043
    %2045 = vrot.lane.b32.xlu0 %v1340, 48
    %v2046 = vpop.permute.xlu0 %2045
    %2047 = vrot.lane.b32.xlu0 %v1344, 48
    %v2048 = vpop.permute.xlu0 %2047
    %2049 = vrot.lane.b32.xlu0 %v1348, 48
    %v2050 = vpop.permute.xlu0 %2049
    %2051 = vrot.lane.b32.xlu0 %v1352, 48
    %v2052 = vpop.permute.xlu0 %2051
    %2053 = vrot.lane.b32.xlu0 %v1356, 48
    %v2054 = vpop.permute.xlu0 %2053
    %2055 = vrot.lane.b32.xlu0 %v1360, 48
    %v2056 = vpop.permute.xlu0 %2055
    %2057 = vrot.lane.b32.xlu0 %v1364, 48
    %v2058 = vpop.permute.xlu0 %2057
    %2059 = vrot.lane.b32.xlu0 %v1368, 48
    %v2060 = vpop.permute.xlu0 %2059
    %2061 = vrot.lane.b32.xlu0 %v1372, 48
    %v2062 = vpop.permute.xlu0 %2061
    %2063 = vrot.lane.b32.xlu0 %v1376, 48
    %v2064 = vpop.permute.xlu0 %2063
    %2065 = vrot.lane.b32.xlu0 %v1380, 48
    %v2066 = vpop.permute.xlu0 %2065
    %2067 = vrot.lane.b32.xlu0 %v1384, 48
    %v2068 = vpop.permute.xlu0 %2067
    %2069 = vrot.lane.b32.xlu0 %v1388, 48
    %v2070 = vpop.permute.xlu0 %2069
    %2071 = vrot.lane.b32.xlu0 %v1392, 48
    %v2072 = vpop.permute.xlu0 %2071
    %2073 = vrot.lane.b32.xlu0 %v1396, 48
    %v2074 = vpop.permute.xlu0 %2073
    %2075 = vrot.lane.b32.xlu0 %v1400, 48
    %v2076 = vpop.permute.xlu0 %2075
    %2077 = vrot.lane.b32.xlu0 %v1404, 48
    %v2078 = vpop.permute.xlu0 %2077
    %2079 = vrot.lane.b32.xlu0 %v1408, 48
    %v2080 = vpop.permute.xlu0 %2079
    %2129 = vst.msk [vmem:[#allocation2 + $0x4] sm:$0x1] %vm1168, %v1986
    %2130 = vst.msk [vmem:[#allocation2 + $0x14] sm:$0x1] %vm1168, %v1988
    %2131 = vst.msk [vmem:[#allocation2 + $0x24] sm:$0x1] %vm1168, %v1990
    %2132 = vst.msk [vmem:[#allocation2 + $0x34] sm:$0x1] %vm1168, %v1992
    %2133 = vst.msk [vmem:[#allocation2 + $0x44] sm:$0x1] %vm1168, %v1994
    %2134 = vst.msk [vmem:[#allocation2 + $0x54] sm:$0x1] %vm1168, %v1996
    %2135 = vst.msk [vmem:[#allocation2 + $0x64] sm:$0x1] %vm1168, %v1998
    %2136 = vst.msk [vmem:[#allocation2 + $0x74] sm:$0x1] %vm1168, %v2000
    %2137 = vst.msk [vmem:[#allocation2 + $0x84] sm:$0x1] %vm1168, %v2002
    %2138 = vst.msk [vmem:[#allocation2 + $0x94] sm:$0x1] %vm1168, %v2004
    %2139 = vst.msk [vmem:[#allocation2 + $0xa4] sm:$0x1] %vm1168, %v2006
    %2140 = vst.msk [vmem:[#allocation2 + $0xb4] sm:$0x1] %vm1168, %v2008
    %2141 = vst.msk [vmem:[#allocation2 + $0xc4] sm:$0x1] %vm1168, %v2010
    %2142 = vst.msk [vmem:[#allocation2 + $0xd4] sm:$0x1] %vm1168, %v2012
    %2143 = vst.msk [vmem:[#allocation2 + $0xe4] sm:$0x1] %vm1168, %v2014
    %2144 = vst.msk [vmem:[#allocation2 + $0xf4] sm:$0x1] %vm1168, %v2016
    %2145 = vst.msk [vmem:[#allocation2 + $0x104] sm:$0x1] %vm1168, %v2018
    %2146 = vst.msk [vmem:[#allocation2 + $0x114] sm:$0x1] %vm1168, %v2020
    %2147 = vst.msk [vmem:[#allocation2 + $0x124] sm:$0x1] %vm1168, %v2022
    %2148 = vst.msk [vmem:[#allocation2 + $0x134] sm:$0x1] %vm1168, %v2024
    %2149 = vst.msk [vmem:[#allocation2 + $0x144] sm:$0x1] %vm1168, %v2026
    %2150 = vst.msk [vmem:[#allocation2 + $0x154] sm:$0x1] %vm1168, %v2028
    %2151 = vst.msk [vmem:[#allocation2 + $0x164] sm:$0x1] %vm1168, %v2030
    %2152 = vst.msk [vmem:[#allocation2 + $0x174] sm:$0x1] %vm1168, %v2032
    %2153 = vst.msk [vmem:[#allocation2 + $0x184] sm:$0x1] %vm1168, %v2034
    %2154 = vst.msk [vmem:[#allocation2 + $0x194] sm:$0x1] %vm1168, %v2036
    %2155 = vst.msk [vmem:[#allocation2 + $0x1a4] sm:$0x1] %vm1168, %v2038
    %2156 = vst.msk [vmem:[#allocation2 + $0x1b4] sm:$0x1] %vm1168, %v2040
    %2157 = vst.msk [vmem:[#allocation2 + $0x1c4] sm:$0x1] %vm1168, %v2042
    %2158 = vst.msk [vmem:[#allocation2 + $0x1d4] sm:$0x1] %vm1168, %v2044
    %2159 = vst.msk [vmem:[#allocation2 + $0x1e4] sm:$0x1] %vm1168, %v2046
    %2160 = vst.msk [vmem:[#allocation2 + $0x1f4] sm:$0x1] %vm1168, %v2048
    %2161 = vst.msk [vmem:[#allocation2 + $0x204] sm:$0x1] %vm1168, %v2050
    %2162 = vst.msk [vmem:[#allocation2 + $0x214] sm:$0x1] %vm1168, %v2052
    %2163 = vst.msk [vmem:[#allocation2 + $0x224] sm:$0x1] %vm1168, %v2054
    %2164 = vst.msk [vmem:[#allocation2 + $0x234] sm:$0x1] %vm1168, %v2056
    %2165 = vst.msk [vmem:[#allocation2 + $0x244] sm:$0x1] %vm1168, %v2058
    %2166 = vst.msk [vmem:[#allocation2 + $0x254] sm:$0x1] %vm1168, %v2060
    %2167 = vst.msk [vmem:[#allocation2 + $0x264] sm:$0x1] %vm1168, %v2062
    %2168 = vst.msk [vmem:[#allocation2 + $0x274] sm:$0x1] %vm1168, %v2064
    %2169 = vst.msk [vmem:[#allocation2 + $0x284] sm:$0x1] %vm1168, %v2066
    %2170 = vst.msk [vmem:[#allocation2 + $0x294] sm:$0x1] %vm1168, %v2068
    %2171 = vst.msk [vmem:[#allocation2 + $0x2a4] sm:$0x1] %vm1168, %v2070
    %2172 = vst.msk [vmem:[#allocation2 + $0x2b4] sm:$0x1] %vm1168, %v2072
    %2173 = vst.msk [vmem:[#allocation2 + $0x2c4] sm:$0x1] %vm1168, %v2074
    %2174 = vst.msk [vmem:[#allocation2 + $0x2d4] sm:$0x1] %vm1168, %v2076
    %2175 = vst.msk [vmem:[#allocation2 + $0x2e4] sm:$0x1] %vm1168, %v2078
    %2176 = vst.msk [vmem:[#allocation2 + $0x2f4] sm:$0x1] %vm1168, %v2080
    %2177 = vrot.lane.b32.xlu0 %v1220, 28
    %v2178 = vpop.permute.xlu0 %2177
    %2179 = vrot.lane.b32.xlu0 %v1224, 28
    %v2180 = vpop.permute.xlu0 %2179
    %2181 = vrot.lane.b32.xlu0 %v1228, 28
    %v2182 = vpop.permute.xlu0 %2181
    %2183 = vrot.lane.b32.xlu0 %v1232, 28
    %v2184 = vpop.permute.xlu0 %2183
    %2185 = vrot.lane.b32.xlu0 %v1236, 28
    %v2186 = vpop.permute.xlu0 %2185
    %2187 = vrot.lane.b32.xlu0 %v1240, 28
    %v2188 = vpop.permute.xlu0 %2187
    %2189 = vrot.lane.b32.xlu0 %v1244, 28
    %v2190 = vpop.permute.xlu0 %2189
    %2191 = vrot.lane.b32.xlu0 %v1248, 28
    %v2192 = vpop.permute.xlu0 %2191
    %2193 = vrot.lane.b32.xlu0 %v1252, 28
    %v2194 = vpop.permute.xlu0 %2193
    %2195 = vrot.lane.b32.xlu0 %v1256, 28
    %v2196 = vpop.permute.xlu0 %2195
    %2197 = vrot.lane.b32.xlu0 %v1260, 28
    %v2198 = vpop.permute.xlu0 %2197
    %2199 = vrot.lane.b32.xlu0 %v1264, 28
    %v2200 = vpop.permute.xlu0 %2199
    %2201 = vrot.lane.b32.xlu0 %v1268, 28
    %v2202 = vpop.permute.xlu0 %2201
    %2203 = vrot.lane.b32.xlu0 %v1272, 28
    %v2204 = vpop.permute.xlu0 %2203
    %2205 = vrot.lane.b32.xlu0 %v1276, 28
    %v2206 = vpop.permute.xlu0 %2205
    %2207 = vrot.lane.b32.xlu0 %v1280, 28
    %v2208 = vpop.permute.xlu0 %2207
    %2209 = vrot.lane.b32.xlu0 %v1284, 28
    %v2210 = vpop.permute.xlu0 %2209
    %2211 = vrot.lane.b32.xlu0 %v1288, 28
    %v2212 = vpop.permute.xlu0 %2211
    %2213 = vrot.lane.b32.xlu0 %v1292, 28
    %v2214 = vpop.permute.xlu0 %2213
    %2215 = vrot.lane.b32.xlu0 %v1296, 28
    %v2216 = vpop.permute.xlu0 %2215
    %2217 = vrot.lane.b32.xlu0 %v1300, 28
    %v2218 = vpop.permute.xlu0 %2217
    %2219 = vrot.lane.b32.xlu0 %v1304, 28
    %v2220 = vpop.permute.xlu0 %2219
    %2221 = vrot.lane.b32.xlu0 %v1308, 28
    %v2222 = vpop.permute.xlu0 %2221
    %2223 = vrot.lane.b32.xlu0 %v1312, 28
    %v2224 = vpop.permute.xlu0 %2223
    %2225 = vrot.lane.b32.xlu0 %v1316, 28
    %v2226 = vpop.permute.xlu0 %2225
    %2227 = vrot.lane.b32.xlu0 %v1320, 28
    %v2228 = vpop.permute.xlu0 %2227
    %2229 = vrot.lane.b32.xlu0 %v1324, 28
    %v2230 = vpop.permute.xlu0 %2229
    %2231 = vrot.lane.b32.xlu0 %v1328, 28
    %v2232 = vpop.permute.xlu0 %2231
    %2233 = vrot.lane.b32.xlu0 %v1332, 28
    %v2234 = vpop.permute.xlu0 %2233
    %2235 = vrot.lane.b32.xlu0 %v1336, 28
    %v2236 = vpop.permute.xlu0 %2235
    %2237 = vrot.lane.b32.xlu0 %v1340, 28
    %v2238 = vpop.permute.xlu0 %2237
    %2239 = vrot.lane.b32.xlu0 %v1344, 28
    %v2240 = vpop.permute.xlu0 %2239
    %2241 = vrot.lane.b32.xlu0 %v1348, 28
    %v2242 = vpop.permute.xlu0 %2241
    %2243 = vrot.lane.b32.xlu0 %v1352, 28
    %v2244 = vpop.permute.xlu0 %2243
    %2245 = vrot.lane.b32.xlu0 %v1356, 28
    %v2246 = vpop.permute.xlu0 %2245
    %2247 = vrot.lane.b32.xlu0 %v1360, 28
    %v2248 = vpop.permute.xlu0 %2247
    %2249 = vrot.lane.b32.xlu0 %v1364, 28
    %v2250 = vpop.permute.xlu0 %2249
    %2251 = vrot.lane.b32.xlu0 %v1368, 28
    %v2252 = vpop.permute.xlu0 %2251
    %2253 = vrot.lane.b32.xlu0 %v1372, 28
    %v2254 = vpop.permute.xlu0 %2253
    %2255 = vrot.lane.b32.xlu0 %v1376, 28
    %v2256 = vpop.permute.xlu0 %2255
    %2257 = vrot.lane.b32.xlu0 %v1380, 28
    %v2258 = vpop.permute.xlu0 %2257
    %2259 = vrot.lane.b32.xlu0 %v1384, 28
    %v2260 = vpop.permute.xlu0 %2259
    %2261 = vrot.lane.b32.xlu0 %v1388, 28
    %v2262 = vpop.permute.xlu0 %2261
    %2263 = vrot.lane.b32.xlu0 %v1392, 28
    %v2264 = vpop.permute.xlu0 %2263
    %2265 = vrot.lane.b32.xlu0 %v1396, 28
    %v2266 = vpop.permute.xlu0 %2265
    %2267 = vrot.lane.b32.xlu0 %v1400, 28
    %v2268 = vpop.permute.xlu0 %2267
    %2269 = vrot.lane.b32.xlu0 %v1404, 28
    %v2270 = vpop.permute.xlu0 %2269
    %2271 = vrot.lane.b32.xlu0 %v1408, 28
    %v2272 = vpop.permute.xlu0 %2271
    %2321 = vst.msk [vmem:[#allocation2 + $0x5] sm:$0x1] %vm1168, %v2178
    %2322 = vst.msk [vmem:[#allocation2 + $0x15] sm:$0x1] %vm1168, %v2180
    %2323 = vst.msk [vmem:[#allocation2 + $0x25] sm:$0x1] %vm1168, %v2182
    %2324 = vst.msk [vmem:[#allocation2 + $0x35] sm:$0x1] %vm1168, %v2184
    %2325 = vst.msk [vmem:[#allocation2 + $0x45] sm:$0x1] %vm1168, %v2186
    %2326 = vst.msk [vmem:[#allocation2 + $0x55] sm:$0x1] %vm1168, %v2188
    %2327 = vst.msk [vmem:[#allocation2 + $0x65] sm:$0x1] %vm1168, %v2190
    %2328 = vst.msk [vmem:[#allocation2 + $0x75] sm:$0x1] %vm1168, %v2192
    %2329 = vst.msk [vmem:[#allocation2 + $0x85] sm:$0x1] %vm1168, %v2194
    %2330 = vst.msk [vmem:[#allocation2 + $0x95] sm:$0x1] %vm1168, %v2196
    %2331 = vst.msk [vmem:[#allocation2 + $0xa5] sm:$0x1] %vm1168, %v2198
    %2332 = vst.msk [vmem:[#allocation2 + $0xb5] sm:$0x1] %vm1168, %v2200
    %2333 = vst.msk [vmem:[#allocation2 + $0xc5] sm:$0x1] %vm1168, %v2202
    %2334 = vst.msk [vmem:[#allocation2 + $0xd5] sm:$0x1] %vm1168, %v2204
    %2335 = vst.msk [vmem:[#allocation2 + $0xe5] sm:$0x1] %vm1168, %v2206
    %2336 = vst.msk [vmem:[#allocation2 + $0xf5] sm:$0x1] %vm1168, %v2208
    %2337 = vst.msk [vmem:[#allocation2 + $0x105] sm:$0x1] %vm1168, %v2210
    %2338 = vst.msk [vmem:[#allocation2 + $0x115] sm:$0x1] %vm1168, %v2212
    %2339 = vst.msk [vmem:[#allocation2 + $0x125] sm:$0x1] %vm1168, %v2214
    %2340 = vst.msk [vmem:[#allocation2 + $0x135] sm:$0x1] %vm1168, %v2216
    %2341 = vst.msk [vmem:[#allocation2 + $0x145] sm:$0x1] %vm1168, %v2218
    %2342 = vst.msk [vmem:[#allocation2 + $0x155] sm:$0x1] %vm1168, %v2220
    %2343 = vst.msk [vmem:[#allocation2 + $0x165] sm:$0x1] %vm1168, %v2222
    %2344 = vst.msk [vmem:[#allocation2 + $0x175] sm:$0x1] %vm1168, %v2224
    %2345 = vst.msk [vmem:[#allocation2 + $0x185] sm:$0x1] %vm1168, %v2226
    %2346 = vst.msk [vmem:[#allocation2 + $0x195] sm:$0x1] %vm1168, %v2228
    %2347 = vst.msk [vmem:[#allocation2 + $0x1a5] sm:$0x1] %vm1168, %v2230
    %2348 = vst.msk [vmem:[#allocation2 + $0x1b5] sm:$0x1] %vm1168, %v2232
    %2349 = vst.msk [vmem:[#allocation2 + $0x1c5] sm:$0x1] %vm1168, %v2234
    %2350 = vst.msk [vmem:[#allocation2 + $0x1d5] sm:$0x1] %vm1168, %v2236
    %2351 = vst.msk [vmem:[#allocation2 + $0x1e5] sm:$0x1] %vm1168, %v2238
    %2352 = vst.msk [vmem:[#allocation2 + $0x1f5] sm:$0x1] %vm1168, %v2240
    %2353 = vst.msk [vmem:[#allocation2 + $0x205] sm:$0x1] %vm1168, %v2242
    %2354 = vst.msk [vmem:[#allocation2 + $0x215] sm:$0x1] %vm1168, %v2244
    %2355 = vst.msk [vmem:[#allocation2 + $0x225] sm:$0x1] %vm1168, %v2246
    %2356 = vst.msk [vmem:[#allocation2 + $0x235] sm:$0x1] %vm1168, %v2248
    %2357 = vst.msk [vmem:[#allocation2 + $0x245] sm:$0x1] %vm1168, %v2250
    %2358 = vst.msk [vmem:[#allocation2 + $0x255] sm:$0x1] %vm1168, %v2252
    %2359 = vst.msk [vmem:[#allocation2 + $0x265] sm:$0x1] %vm1168, %v2254
    %2360 = vst.msk [vmem:[#allocation2 + $0x275] sm:$0x1] %vm1168, %v2256
    %2361 = vst.msk [vmem:[#allocation2 + $0x285] sm:$0x1] %vm1168, %v2258
    %2362 = vst.msk [vmem:[#allocation2 + $0x295] sm:$0x1] %vm1168, %v2260
    %2363 = vst.msk [vmem:[#allocation2 + $0x2a5] sm:$0x1] %vm1168, %v2262
    %2364 = vst.msk [vmem:[#allocation2 + $0x2b5] sm:$0x1] %vm1168, %v2264
    %2365 = vst.msk [vmem:[#allocation2 + $0x2c5] sm:$0x1] %vm1168, %v2266
    %2366 = vst.msk [vmem:[#allocation2 + $0x2d5] sm:$0x1] %vm1168, %v2268
    %2367 = vst.msk [vmem:[#allocation2 + $0x2e5] sm:$0x1] %vm1168, %v2270
    %2368 = vst.msk [vmem:[#allocation2 + $0x2f5] sm:$0x1] %vm1168, %v2272
    %2375 = vrot.lane.b32.xlu0 %v779, 118
    %v2376 = vpop.permute.xlu0 %2375
    %2377 = vrot.lane.b32.xlu0 %v781, 118
    %v2378 = vpop.permute.xlu0 %2377
    %2379 = vrot.lane.b32.xlu0 %v783, 118
    %v2380 = vpop.permute.xlu0 %2379
    %2381 = vrot.lane.b32.xlu0 %v785, 118
    %v2382 = vpop.permute.xlu0 %2381
    %2383 = vrot.lane.b32.xlu0 %v787, 118
    %v2384 = vpop.permute.xlu0 %2383
    %2385 = vrot.lane.b32.xlu0 %v789, 118
    %v2386 = vpop.permute.xlu0 %2385
    %v2393 = vmax.f32 %v778, %v2376
    %v2394 = vmax.f32 %v779, %v2376
    %v2395 = vmax.f32 %v780, %v2378
    %v2396 = vmax.f32 %v781, %v2378
    %v2397 = vmax.f32 %v782, %v2380
    %v2398 = vmax.f32 %v783, %v2380
    %v2399 = vmax.f32 %v784, %v2382
    %v2400 = vmax.f32 %v785, %v2382
    %v2401 = vmax.f32 %v786, %v2384
    %v2402 = vmax.f32 %v787, %v2384
    %v2403 = vmax.f32 %v788, %v2386
    %v2404 = vmax.f32 %v789, %v2386
    %v2417 = vcombine.low %v2393, %v2394
    %v2418 = vcombine.high %v2393, %v2394
    %v2420 = vunpack.c.l.s4 1966171168
    %v2421 = vunpack.c.0.s8 %v2420
    %v2422 = vlaneseq
    %v2423 = vshrl.u32 %v2422, 7
    %v2424 = vsub.s32 %v2421, %v2423
    %v2425 = vrot.slane %v2417, %v2424
    %v2427 = vunpack.c.l.s4 1966171168
    %v2428 = vunpack.c.0.s8 %v2427
    %v2429 = vlaneseq
    %v2430 = vshrl.u32 %v2429, 7
    %v2431 = vsub.s32 %v2428, %v2430
    %v2432 = vrot.slane %v2418, %v2431
    %v2433 = vcombine.high %v2425, %v2425
    %v2434 = vcombine.high %v2432, %v2432
    %v2436 = vunpack.c.l.s4 1966171168
    %v2437 = vunpack.c.0.s8 %v2436
    %v2438 = vlaneseq
    %v2439 = vshrl.u32 %v2438, 7
    %v2440 = vsub.s32 %v2437, %v2439
    %v2441 = vrot.slane %v2425, %v2440
    %v2443 = vunpack.c.l.s4 1966171168
    %v2444 = vunpack.c.0.s8 %v2443
    %v2445 = vlaneseq
    %v2446 = vshrl.u32 %v2445, 7
    %v2447 = vsub.s32 %v2444, %v2446
    %v2448 = vrot.slane %v2432, %v2447
    %v2450 = vunpack.c.l.s4 1966171168
    %v2451 = vunpack.c.0.s8 %v2450
    %v2452 = vlaneseq
    %v2453 = vshrl.u32 %v2452, 7
    %v2454 = vsub.s32 %v2451, %v2453
    %v2455 = vrot.slane %v2433, %v2454
    %v2457 = vunpack.c.l.s4 1966171168
    %v2458 = vunpack.c.0.s8 %v2457
    %v2459 = vlaneseq
    %v2460 = vshrl.u32 %v2459, 7
    %v2461 = vsub.s32 %v2458, %v2460
    %v2462 = vrot.slane %v2434, %v2461
    %v2463 = vcombine.high %v2441, %v2441
    %v2464 = vcombine.high %v2448, %v2448
    %v2465 = vcombine.high %v2455, %v2455
    %v2466 = vcombine.high %v2462, %v2462
    %v2467 = vcombine.low %v2395, %v2396
    %v2468 = vcombine.high %v2395, %v2396
    %v2470 = vunpack.c.l.s4 1966171168
    %v2471 = vunpack.c.0.s8 %v2470
    %v2472 = vlaneseq
    %v2473 = vshrl.u32 %v2472, 7
    %v2474 = vsub.s32 %v2471, %v2473
    %v2475 = vrot.slane %v2467, %v2474
    %v2477 = vunpack.c.l.s4 1966171168
    %v2478 = vunpack.c.0.s8 %v2477
    %v2479 = vlaneseq
    %v2480 = vshrl.u32 %v2479, 7
    %v2481 = vsub.s32 %v2478, %v2480
    %v2482 = vrot.slane %v2468, %v2481
    %v2483 = vcombine.high %v2475, %v2475
    %v2484 = vcombine.high %v2482, %v2482
    %v2486 = vunpack.c.l.s4 1966171168
    %v2487 = vunpack.c.0.s8 %v2486
    %v2488 = vlaneseq
    %v2489 = vshrl.u32 %v2488, 7
    %v2490 = vsub.s32 %v2487, %v2489
    %v2491 = vrot.slane %v2475, %v2490
    %v2493 = vunpack.c.l.s4 1966171168
    %v2494 = vunpack.c.0.s8 %v2493
    %v2495 = vlaneseq
    %v2496 = vshrl.u32 %v2495, 7
    %v2497 = vsub.s32 %v2494, %v2496
    %v2498 = vrot.slane %v2482, %v2497
    %v2500 = vunpack.c.l.s4 1966171168
    %v2501 = vunpack.c.0.s8 %v2500
    %v2502 = vlaneseq
    %v2503 = vshrl.u32 %v2502, 7
    %v2504 = vsub.s32 %v2501, %v2503
    %v2505 = vrot.slane %v2483, %v2504
    %v2507 = vunpack.c.l.s4 1966171168
    %v2508 = vunpack.c.0.s8 %v2507
    %v2509 = vlaneseq
    %v2510 = vshrl.u32 %v2509, 7
    %v2511 = vsub.s32 %v2508, %v2510
    %v2512 = vrot.slane %v2484, %v2511
    %v2513 = vcombine.high %v2491, %v2491
    %v2514 = vcombine.high %v2498, %v2498
    %v2515 = vcombine.high %v2505, %v2505
    %v2516 = vcombine.high %v2512, %v2512
    %v2517 = vcombine.low %v2397, %v2398
    %v2518 = vcombine.high %v2397, %v2398
    %v2520 = vunpack.c.l.s4 1966171168
    %v2521 = vunpack.c.0.s8 %v2520
    %v2522 = vlaneseq
    %v2523 = vshrl.u32 %v2522, 7
    %v2524 = vsub.s32 %v2521, %v2523
    %v2525 = vrot.slane %v2517, %v2524
    %v2527 = vunpack.c.l.s4 1966171168
    %v2528 = vunpack.c.0.s8 %v2527
    %v2529 = vlaneseq
    %v2530 = vshrl.u32 %v2529, 7
    %v2531 = vsub.s32 %v2528, %v2530
    %v2532 = vrot.slane %v2518, %v2531
    %v2533 = vcombine.high %v2525, %v2525
    %v2534 = vcombine.high %v2532, %v2532
    %v2536 = vunpack.c.l.s4 1966171168
    %v2537 = vunpack.c.0.s8 %v2536
    %v2538 = vlaneseq
    %v2539 = vshrl.u32 %v2538, 7
    %v2540 = vsub.s32 %v2537, %v2539
    %v2541 = vrot.slane %v2525, %v2540
    %v2543 = vunpack.c.l.s4 1966171168
    %v2544 = vunpack.c.0.s8 %v2543
    %v2545 = vlaneseq
    %v2546 = vshrl.u32 %v2545, 7
    %v2547 = vsub.s32 %v2544, %v2546
    %v2548 = vrot.slane %v2532, %v2547
    %v2550 = vunpack.c.l.s4 1966171168
    %v2551 = vunpack.c.0.s8 %v2550
    %v2552 = vlaneseq
    %v2553 = vshrl.u32 %v2552, 7
    %v2554 = vsub.s32 %v2551, %v2553
    %v2555 = vrot.slane %v2533, %v2554
    %v2557 = vunpack.c.l.s4 1966171168
    %v2558 = vunpack.c.0.s8 %v2557
    %v2559 = vlaneseq
    %v2560 = vshrl.u32 %v2559, 7
    %v2561 = vsub.s32 %v2558, %v2560
    %v2562 = vrot.slane %v2534, %v2561
    %v2563 = vcombine.high %v2541, %v2541
    %v2564 = vcombine.high %v2548, %v2548
    %v2565 = vcombine.high %v2555, %v2555
    %v2566 = vcombine.high %v2562, %v2562
    %v2567 = vcombine.low %v2399, %v2400
    %v2568 = vcombine.high %v2399, %v2400
    %v2570 = vunpack.c.l.s4 1966171168
    %v2571 = vunpack.c.0.s8 %v2570
    %v2572 = vlaneseq
    %v2573 = vshrl.u32 %v2572, 7
    %v2574 = vsub.s32 %v2571, %v2573
    %v2575 = vrot.slane %v2567, %v2574
    %v2577 = vunpack.c.l.s4 1966171168
    %v2578 = vunpack.c.0.s8 %v2577
    %v2579 = vlaneseq
    %v2580 = vshrl.u32 %v2579, 7
    %v2581 = vsub.s32 %v2578, %v2580
    %v2582 = vrot.slane %v2568, %v2581
    %v2583 = vcombine.high %v2575, %v2575
    %v2584 = vcombine.high %v2582, %v2582
    %v2586 = vunpack.c.l.s4 1966171168
    %v2587 = vunpack.c.0.s8 %v2586
    %v2588 = vlaneseq
    %v2589 = vshrl.u32 %v2588, 7
    %v2590 = vsub.s32 %v2587, %v2589
    %v2591 = vrot.slane %v2575, %v2590
    %v2593 = vunpack.c.l.s4 1966171168
    %v2594 = vunpack.c.0.s8 %v2593
    %v2595 = vlaneseq
    %v2596 = vshrl.u32 %v2595, 7
    %v2597 = vsub.s32 %v2594, %v2596
    %v2598 = vrot.slane %v2582, %v2597
    %v2600 = vunpack.c.l.s4 1966171168
    %v2601 = vunpack.c.0.s8 %v2600
    %v2602 = vlaneseq
    %v2603 = vshrl.u32 %v2602, 7
    %v2604 = vsub.s32 %v2601, %v2603
    %v2605 = vrot.slane %v2583, %v2604
    %v2607 = vunpack.c.l.s4 1966171168
    %v2608 = vunpack.c.0.s8 %v2607
    %v2609 = vlaneseq
    %v2610 = vshrl.u32 %v2609, 7
    %v2611 = vsub.s32 %v2608, %v2610
    %v2612 = vrot.slane %v2584, %v2611
    %v2613 = vcombine.high %v2591, %v2591
    %v2614 = vcombine.high %v2598, %v2598
    %v2615 = vcombine.high %v2605, %v2605
    %v2616 = vcombine.high %v2612, %v2612
    %v2617 = vcombine.low %v2401, %v2402
    %v2618 = vcombine.high %v2401, %v2402
    %v2620 = vunpack.c.l.s4 1966171168
    %v2621 = vunpack.c.0.s8 %v2620
    %v2622 = vlaneseq
    %v2623 = vshrl.u32 %v2622, 7
    %v2624 = vsub.s32 %v2621, %v2623
    %v2625 = vrot.slane %v2617, %v2624
    %v2627 = vunpack.c.l.s4 1966171168
    %v2628 = vunpack.c.0.s8 %v2627
    %v2629 = vlaneseq
    %v2630 = vshrl.u32 %v2629, 7
    %v2631 = vsub.s32 %v2628, %v2630
    %v2632 = vrot.slane %v2618, %v2631
    %v2633 = vcombine.high %v2625, %v2625
    %v2634 = vcombine.high %v2632, %v2632
    %v2636 = vunpack.c.l.s4 1966171168
    %v2637 = vunpack.c.0.s8 %v2636
    %v2638 = vlaneseq
    %v2639 = vshrl.u32 %v2638, 7
    %v2640 = vsub.s32 %v2637, %v2639
    %v2641 = vrot.slane %v2625, %v2640
    %v2643 = vunpack.c.l.s4 1966171168
    %v2644 = vunpack.c.0.s8 %v2643
    %v2645 = vlaneseq
    %v2646 = vshrl.u32 %v2645, 7
    %v2647 = vsub.s32 %v2644, %v2646
    %v2648 = vrot.slane %v2632, %v2647
    %v2650 = vunpack.c.l.s4 1966171168
    %v2651 = vunpack.c.0.s8 %v2650
    %v2652 = vlaneseq
    %v2653 = vshrl.u32 %v2652, 7
    %v2654 = vsub.s32 %v2651, %v2653
    %v2655 = vrot.slane %v2633, %v2654
    %v2657 = vunpack.c.l.s4 1966171168
    %v2658 = vunpack.c.0.s8 %v2657
    %v2659 = vlaneseq
    %v2660 = vshrl.u32 %v2659, 7
    %v2661 = vsub.s32 %v2658, %v2660
    %v2662 = vrot.slane %v2634, %v2661
    %v2663 = vcombine.high %v2641, %v2641
    %v2664 = vcombine.high %v2648, %v2648
    %v2665 = vcombine.high %v2655, %v2655
    %v2666 = vcombine.high %v2662, %v2662
    %v2667 = vcombine.low %v2403, %v2404
    %v2668 = vcombine.high %v2403, %v2404
    %v2670 = vunpack.c.l.s4 1966171168
    %v2671 = vunpack.c.0.s8 %v2670
    %v2672 = vlaneseq
    %v2673 = vshrl.u32 %v2672, 7
    %v2674 = vsub.s32 %v2671, %v2673
    %v2675 = vrot.slane %v2667, %v2674
    %v2677 = vunpack.c.l.s4 1966171168
    %v2678 = vunpack.c.0.s8 %v2677
    %v2679 = vlaneseq
    %v2680 = vshrl.u32 %v2679, 7
    %v2681 = vsub.s32 %v2678, %v2680
    %v2682 = vrot.slane %v2668, %v2681
    %v2683 = vcombine.high %v2675, %v2675
    %v2684 = vcombine.high %v2682, %v2682
    %v2686 = vunpack.c.l.s4 1966171168
    %v2687 = vunpack.c.0.s8 %v2686
    %v2688 = vlaneseq
    %v2689 = vshrl.u32 %v2688, 7
    %v2690 = vsub.s32 %v2687, %v2689
    %v2691 = vrot.slane %v2675, %v2690
    %v2693 = vunpack.c.l.s4 1966171168
    %v2694 = vunpack.c.0.s8 %v2693
    %v2695 = vlaneseq
    %v2696 = vshrl.u32 %v2695, 7
    %v2697 = vsub.s32 %v2694, %v2696
    %v2698 = vrot.slane %v2682, %v2697
    %v2700 = vunpack.c.l.s4 1966171168
    %v2701 = vunpack.c.0.s8 %v2700
    %v2702 = vlaneseq
    %v2703 = vshrl.u32 %v2702, 7
    %v2704 = vsub.s32 %v2701, %v2703
    %v2705 = vrot.slane %v2683, %v2704
    %v2707 = vunpack.c.l.s4 1966171168
    %v2708 = vunpack.c.0.s8 %v2707
    %v2709 = vlaneseq
    %v2710 = vshrl.u32 %v2709, 7
    %v2711 = vsub.s32 %v2708, %v2710
    %v2712 = vrot.slane %v2684, %v2711
    %v2713 = vcombine.high %v2691, %v2691
    %v2714 = vcombine.high %v2698, %v2698
    %v2715 = vcombine.high %v2705, %v2705
    %v2716 = vcombine.high %v2712, %v2712
    %v2717 = vlaneseq
    %v2718 = vshrl.u32 %v2717, 7
    %v2719 = vsub.s32 0, %v2718
    %v2720 = vrot.slane %v2441, %v2719
    %v2721 = vlaneseq
    %v2722 = vshrl.u32 %v2721, 7
    %v2723 = vsub.s32 1, %v2722
    %v2724 = vrot.slane %v2441, %v2723
    %v2725 = vlaneseq
    %v2726 = vshrl.u32 %v2725, 7
    %v2727 = vsub.s32 0, %v2726
    %v2728 = vrot.slane %v2455, %v2727
    %v2729 = vlaneseq
    %v2730 = vshrl.u32 %v2729, 7
    %v2731 = vsub.s32 1, %v2730
    %v2732 = vrot.slane %v2455, %v2731
    %v2733 = vlaneseq
    %v2734 = vshrl.u32 %v2733, 7
    %v2735 = vsub.s32 0, %v2734
    %v2736 = vrot.slane %v2463, %v2735
    %v2737 = vlaneseq
    %v2738 = vshrl.u32 %v2737, 7
    %v2739 = vsub.s32 1, %v2738
    %v2740 = vrot.slane %v2463, %v2739
    %v2741 = vlaneseq
    %v2742 = vshrl.u32 %v2741, 7
    %v2743 = vsub.s32 0, %v2742
    %v2744 = vrot.slane %v2465, %v2743
    %v2745 = vlaneseq
    %v2746 = vshrl.u32 %v2745, 7
    %v2747 = vsub.s32 1, %v2746
    %v2748 = vrot.slane %v2465, %v2747
    %v2749 = vlaneseq
    %v2750 = vshrl.u32 %v2749, 7
    %v2751 = vsub.s32 0, %v2750
    %v2752 = vrot.slane %v2448, %v2751
    %v2753 = vlaneseq
    %v2754 = vshrl.u32 %v2753, 7
    %v2755 = vsub.s32 1, %v2754
    %v2756 = vrot.slane %v2448, %v2755
    %v2757 = vlaneseq
    %v2758 = vshrl.u32 %v2757, 7
    %v2759 = vsub.s32 0, %v2758
    %v2760 = vrot.slane %v2462, %v2759
    %v2761 = vlaneseq
    %v2762 = vshrl.u32 %v2761, 7
    %v2763 = vsub.s32 1, %v2762
    %v2764 = vrot.slane %v2462, %v2763
    %v2765 = vlaneseq
    %v2766 = vshrl.u32 %v2765, 7
    %v2767 = vsub.s32 0, %v2766
    %v2768 = vrot.slane %v2464, %v2767
    %v2769 = vlaneseq
    %v2770 = vshrl.u32 %v2769, 7
    %v2771 = vsub.s32 1, %v2770
    %v2772 = vrot.slane %v2464, %v2771
    %v2773 = vlaneseq
    %v2774 = vshrl.u32 %v2773, 7
    %v2775 = vsub.s32 0, %v2774
    %v2776 = vrot.slane %v2466, %v2775
    %v2777 = vlaneseq
    %v2778 = vshrl.u32 %v2777, 7
    %v2779 = vsub.s32 1, %v2778
    %v2780 = vrot.slane %v2466, %v2779
    %v2781 = vlaneseq
    %v2782 = vshrl.u32 %v2781, 7
    %v2783 = vsub.s32 0, %v2782
    %v2784 = vrot.slane %v2491, %v2783
    %v2785 = vlaneseq
    %v2786 = vshrl.u32 %v2785, 7
    %v2787 = vsub.s32 1, %v2786
    %v2788 = vrot.slane %v2491, %v2787
    %v2789 = vlaneseq
    %v2790 = vshrl.u32 %v2789, 7
    %v2791 = vsub.s32 0, %v2790
    %v2792 = vrot.slane %v2505, %v2791
    %v2793 = vlaneseq
    %v2794 = vshrl.u32 %v2793, 7
    %v2795 = vsub.s32 1, %v2794
    %v2796 = vrot.slane %v2505, %v2795
    %v2797 = vlaneseq
    %v2798 = vshrl.u32 %v2797, 7
    %v2799 = vsub.s32 0, %v2798
    %v2800 = vrot.slane %v2513, %v2799
    %v2801 = vlaneseq
    %v2802 = vshrl.u32 %v2801, 7
    %v2803 = vsub.s32 1, %v2802
    %v2804 = vrot.slane %v2513, %v2803
    %v2805 = vlaneseq
    %v2806 = vshrl.u32 %v2805, 7
    %v2807 = vsub.s32 0, %v2806
    %v2808 = vrot.slane %v2515, %v2807
    %v2809 = vlaneseq
    %v2810 = vshrl.u32 %v2809, 7
    %v2811 = vsub.s32 1, %v2810
    %v2812 = vrot.slane %v2515, %v2811
    %v2813 = vlaneseq
    %v2814 = vshrl.u32 %v2813, 7
    %v2815 = vsub.s32 0, %v2814
    %v2816 = vrot.slane %v2498, %v2815
    %v2817 = vlaneseq
    %v2818 = vshrl.u32 %v2817, 7
    %v2819 = vsub.s32 1, %v2818
    %v2820 = vrot.slane %v2498, %v2819
    %v2821 = vlaneseq
    %v2822 = vshrl.u32 %v2821, 7
    %v2823 = vsub.s32 0, %v2822
    %v2824 = vrot.slane %v2512, %v2823
    %v2825 = vlaneseq
    %v2826 = vshrl.u32 %v2825, 7
    %v2827 = vsub.s32 1, %v2826
    %v2828 = vrot.slane %v2512, %v2827
    %v2829 = vlaneseq
    %v2830 = vshrl.u32 %v2829, 7
    %v2831 = vsub.s32 0, %v2830
    %v2832 = vrot.slane %v2514, %v2831
    %v2833 = vlaneseq
    %v2834 = vshrl.u32 %v2833, 7
    %v2835 = vsub.s32 1, %v2834
    %v2836 = vrot.slane %v2514, %v2835
    %v2837 = vlaneseq
    %v2838 = vshrl.u32 %v2837, 7
    %v2839 = vsub.s32 0, %v2838
    %v2840 = vrot.slane %v2516, %v2839
    %v2841 = vlaneseq
    %v2842 = vshrl.u32 %v2841, 7
    %v2843 = vsub.s32 1, %v2842
    %v2844 = vrot.slane %v2516, %v2843
    %v2845 = vlaneseq
    %v2846 = vshrl.u32 %v2845, 7
    %v2847 = vsub.s32 0, %v2846
    %v2848 = vrot.slane %v2541, %v2847
    %v2849 = vlaneseq
    %v2850 = vshrl.u32 %v2849, 7
    %v2851 = vsub.s32 1, %v2850
    %v2852 = vrot.slane %v2541, %v2851
    %v2853 = vlaneseq
    %v2854 = vshrl.u32 %v2853, 7
    %v2855 = vsub.s32 0, %v2854
    %v2856 = vrot.slane %v2555, %v2855
    %v2857 = vlaneseq
    %v2858 = vshrl.u32 %v2857, 7
    %v2859 = vsub.s32 1, %v2858
    %v2860 = vrot.slane %v2555, %v2859
    %v2861 = vlaneseq
    %v2862 = vshrl.u32 %v2861, 7
    %v2863 = vsub.s32 0, %v2862
    %v2864 = vrot.slane %v2563, %v2863
    %v2865 = vlaneseq
    %v2866 = vshrl.u32 %v2865, 7
    %v2867 = vsub.s32 1, %v2866
    %v2868 = vrot.slane %v2563, %v2867
    %v2869 = vlaneseq
    %v2870 = vshrl.u32 %v2869, 7
    %v2871 = vsub.s32 0, %v2870
    %v2872 = vrot.slane %v2565, %v2871
    %v2873 = vlaneseq
    %v2874 = vshrl.u32 %v2873, 7
    %v2875 = vsub.s32 1, %v2874
    %v2876 = vrot.slane %v2565, %v2875
    %v2877 = vlaneseq
    %v2878 = vshrl.u32 %v2877, 7
    %v2879 = vsub.s32 0, %v2878
    %v2880 = vrot.slane %v2548, %v2879
    %v2881 = vlaneseq
    %v2882 = vshrl.u32 %v2881, 7
    %v2883 = vsub.s32 1, %v2882
    %v2884 = vrot.slane %v2548, %v2883
    %v2885 = vlaneseq
    %v2886 = vshrl.u32 %v2885, 7
    %v2887 = vsub.s32 0, %v2886
    %v2888 = vrot.slane %v2562, %v2887
    %v2889 = vlaneseq
    %v2890 = vshrl.u32 %v2889, 7
    %v2891 = vsub.s32 1, %v2890
    %v2892 = vrot.slane %v2562, %v2891
    %v2893 = vlaneseq
    %v2894 = vshrl.u32 %v2893, 7
    %v2895 = vsub.s32 0, %v2894
    %v2896 = vrot.slane %v2564, %v2895
    %v2897 = vlaneseq
    %v2898 = vshrl.u32 %v2897, 7
    %v2899 = vsub.s32 1, %v2898
    %v2900 = vrot.slane %v2564, %v2899
    %v2901 = vlaneseq
    %v2902 = vshrl.u32 %v2901, 7
    %v2903 = vsub.s32 0, %v2902
    %v2904 = vrot.slane %v2566, %v2903
    %v2905 = vlaneseq
    %v2906 = vshrl.u32 %v2905, 7
    %v2907 = vsub.s32 1, %v2906
    %v2908 = vrot.slane %v2566, %v2907
    %v2909 = vlaneseq
    %v2910 = vshrl.u32 %v2909, 7
    %v2911 = vsub.s32 0, %v2910
    %v2912 = vrot.slane %v2591, %v2911
    %v2913 = vlaneseq
    %v2914 = vshrl.u32 %v2913, 7
    %v2915 = vsub.s32 1, %v2914
    %v2916 = vrot.slane %v2591, %v2915
    %v2917 = vlaneseq
    %v2918 = vshrl.u32 %v2917, 7
    %v2919 = vsub.s32 0, %v2918
    %v2920 = vrot.slane %v2605, %v2919
    %v2921 = vlaneseq
    %v2922 = vshrl.u32 %v2921, 7
    %v2923 = vsub.s32 1, %v2922
    %v2924 = vrot.slane %v2605, %v2923
    %v2925 = vlaneseq
    %v2926 = vshrl.u32 %v2925, 7
    %v2927 = vsub.s32 0, %v2926
    %v2928 = vrot.slane %v2613, %v2927
    %v2929 = vlaneseq
    %v2930 = vshrl.u32 %v2929, 7
    %v2931 = vsub.s32 1, %v2930
    %v2932 = vrot.slane %v2613, %v2931
    %v2933 = vlaneseq
    %v2934 = vshrl.u32 %v2933, 7
    %v2935 = vsub.s32 0, %v2934
    %v2936 = vrot.slane %v2615, %v2935
    %v2937 = vlaneseq
    %v2938 = vshrl.u32 %v2937, 7
    %v2939 = vsub.s32 1, %v2938
    %v2940 = vrot.slane %v2615, %v2939
    %v2941 = vlaneseq
    %v2942 = vshrl.u32 %v2941, 7
    %v2943 = vsub.s32 0, %v2942
    %v2944 = vrot.slane %v2598, %v2943
    %v2945 = vlaneseq
    %v2946 = vshrl.u32 %v2945, 7
    %v2947 = vsub.s32 1, %v2946
    %v2948 = vrot.slane %v2598, %v2947
    %v2949 = vlaneseq
    %v2950 = vshrl.u32 %v2949, 7
    %v2951 = vsub.s32 0, %v2950
    %v2952 = vrot.slane %v2612, %v2951
    %v2953 = vlaneseq
    %v2954 = vshrl.u32 %v2953, 7
    %v2955 = vsub.s32 1, %v2954
    %v2956 = vrot.slane %v2612, %v2955
    %v2957 = vlaneseq
    %v2958 = vshrl.u32 %v2957, 7
    %v2959 = vsub.s32 0, %v2958
    %v2960 = vrot.slane %v2614, %v2959
    %v2961 = vlaneseq
    %v2962 = vshrl.u32 %v2961, 7
    %v2963 = vsub.s32 1, %v2962
    %v2964 = vrot.slane %v2614, %v2963
    %v2965 = vlaneseq
    %v2966 = vshrl.u32 %v2965, 7
    %v2967 = vsub.s32 0, %v2966
    %v2968 = vrot.slane %v2616, %v2967
    %v2969 = vlaneseq
    %v2970 = vshrl.u32 %v2969, 7
    %v2971 = vsub.s32 1, %v2970
    %v2972 = vrot.slane %v2616, %v2971
    %v2973 = vlaneseq
    %v2974 = vshrl.u32 %v2973, 7
    %v2975 = vsub.s32 0, %v2974
    %v2976 = vrot.slane %v2641, %v2975
    %v2977 = vlaneseq
    %v2978 = vshrl.u32 %v2977, 7
    %v2979 = vsub.s32 1, %v2978
    %v2980 = vrot.slane %v2641, %v2979
    %v2981 = vlaneseq
    %v2982 = vshrl.u32 %v2981, 7
    %v2983 = vsub.s32 0, %v2982
    %v2984 = vrot.slane %v2655, %v2983
    %v2985 = vlaneseq
    %v2986 = vshrl.u32 %v2985, 7
    %v2987 = vsub.s32 1, %v2986
    %v2988 = vrot.slane %v2655, %v2987
    %v2989 = vlaneseq
    %v2990 = vshrl.u32 %v2989, 7
    %v2991 = vsub.s32 0, %v2990
    %v2992 = vrot.slane %v2663, %v2991
    %v2993 = vlaneseq
    %v2994 = vshrl.u32 %v2993, 7
    %v2995 = vsub.s32 1, %v2994
    %v2996 = vrot.slane %v2663, %v2995
    %v2997 = vlaneseq
    %v2998 = vshrl.u32 %v2997, 7
    %v2999 = vsub.s32 0, %v2998
    %v3000 = vrot.slane %v2665, %v2999
    %v3001 = vlaneseq
    %v3002 = vshrl.u32 %v3001, 7
    %v3003 = vsub.s32 1, %v3002
    %v3004 = vrot.slane %v2665, %v3003
    %v3005 = vlaneseq
    %v3006 = vshrl.u32 %v3005, 7
    %v3007 = vsub.s32 0, %v3006
    %v3008 = vrot.slane %v2648, %v3007
    %v3009 = vlaneseq
    %v3010 = vshrl.u32 %v3009, 7
    %v3011 = vsub.s32 1, %v3010
    %v3012 = vrot.slane %v2648, %v3011
    %v3013 = vlaneseq
    %v3014 = vshrl.u32 %v3013, 7
    %v3015 = vsub.s32 0, %v3014
    %v3016 = vrot.slane %v2662, %v3015
    %v3017 = vlaneseq
    %v3018 = vshrl.u32 %v3017, 7
    %v3019 = vsub.s32 1, %v3018
    %v3020 = vrot.slane %v2662, %v3019
    %v3021 = vlaneseq
    %v3022 = vshrl.u32 %v3021, 7
    %v3023 = vsub.s32 0, %v3022
    %v3024 = vrot.slane %v2664, %v3023
    %v3025 = vlaneseq
    %v3026 = vshrl.u32 %v3025, 7
    %v3027 = vsub.s32 1, %v3026
    %v3028 = vrot.slane %v2664, %v3027
    %v3029 = vlaneseq
    %v3030 = vshrl.u32 %v3029, 7
    %v3031 = vsub.s32 0, %v3030
    %v3032 = vrot.slane %v2666, %v3031
    %v3033 = vlaneseq
    %v3034 = vshrl.u32 %v3033, 7
    %v3035 = vsub.s32 1, %v3034
    %v3036 = vrot.slane %v2666, %v3035
    %v3037 = vlaneseq
    %v3038 = vshrl.u32 %v3037, 7
    %v3039 = vsub.s32 0, %v3038
    %v3040 = vrot.slane %v2691, %v3039
    %v3041 = vlaneseq
    %v3042 = vshrl.u32 %v3041, 7
    %v3043 = vsub.s32 1, %v3042
    %v3044 = vrot.slane %v2691, %v3043
    %v3045 = vlaneseq
    %v3046 = vshrl.u32 %v3045, 7
    %v3047 = vsub.s32 0, %v3046
    %v3048 = vrot.slane %v2705, %v3047
    %v3049 = vlaneseq
    %v3050 = vshrl.u32 %v3049, 7
    %v3051 = vsub.s32 1, %v3050
    %v3052 = vrot.slane %v2705, %v3051
    %v3053 = vlaneseq
    %v3054 = vshrl.u32 %v3053, 7
    %v3055 = vsub.s32 0, %v3054
    %v3056 = vrot.slane %v2713, %v3055
    %v3057 = vlaneseq
    %v3058 = vshrl.u32 %v3057, 7
    %v3059 = vsub.s32 1, %v3058
    %v3060 = vrot.slane %v2713, %v3059
    %v3061 = vlaneseq
    %v3062 = vshrl.u32 %v3061, 7
    %v3063 = vsub.s32 0, %v3062
    %v3064 = vrot.slane %v2715, %v3063
    %v3065 = vlaneseq
    %v3066 = vshrl.u32 %v3065, 7
    %v3067 = vsub.s32 1, %v3066
    %v3068 = vrot.slane %v2715, %v3067
    %v3069 = vlaneseq
    %v3070 = vshrl.u32 %v3069, 7
    %v3071 = vsub.s32 0, %v3070
    %v3072 = vrot.slane %v2698, %v3071
    %v3073 = vlaneseq
    %v3074 = vshrl.u32 %v3073, 7
    %v3075 = vsub.s32 1, %v3074
    %v3076 = vrot.slane %v2698, %v3075
    %v3077 = vlaneseq
    %v3078 = vshrl.u32 %v3077, 7
    %v3079 = vsub.s32 0, %v3078
    %v3080 = vrot.slane %v2712, %v3079
    %v3081 = vlaneseq
    %v3082 = vshrl.u32 %v3081, 7
    %v3083 = vsub.s32 1, %v3082
    %v3084 = vrot.slane %v2712, %v3083
    %v3085 = vlaneseq
    %v3086 = vshrl.u32 %v3085, 7
    %v3087 = vsub.s32 0, %v3086
    %v3088 = vrot.slane %v2714, %v3087
    %v3089 = vlaneseq
    %v3090 = vshrl.u32 %v3089, 7
    %v3091 = vsub.s32 1, %v3090
    %v3092 = vrot.slane %v2714, %v3091
    %v3093 = vlaneseq
    %v3094 = vshrl.u32 %v3093, 7
    %v3095 = vsub.s32 0, %v3094
    %v3096 = vrot.slane %v2716, %v3095
    %v3097 = vlaneseq
    %v3098 = vshrl.u32 %v3097, 7
    %v3099 = vsub.s32 1, %v3098
    %v3100 = vrot.slane %v2716, %v3099
    %3101 = vrot.lane.b32.xlu0 %v2720, 8
    %v3102 = vpop.permute.xlu0 %3101
    %3103 = vrot.lane.b32.xlu0 %v2724, 8
    %v3104 = vpop.permute.xlu0 %3103
    %3105 = vrot.lane.b32.xlu0 %v2728, 8
    %v3106 = vpop.permute.xlu0 %3105
    %3107 = vrot.lane.b32.xlu0 %v2732, 8
    %v3108 = vpop.permute.xlu0 %3107
    %3109 = vrot.lane.b32.xlu0 %v2736, 8
    %v3110 = vpop.permute.xlu0 %3109
    %3111 = vrot.lane.b32.xlu0 %v2740, 8
    %v3112 = vpop.permute.xlu0 %3111
    %3113 = vrot.lane.b32.xlu0 %v2744, 8
    %v3114 = vpop.permute.xlu0 %3113
    %3115 = vrot.lane.b32.xlu0 %v2748, 8
    %v3116 = vpop.permute.xlu0 %3115
    %3117 = vrot.lane.b32.xlu0 %v2752, 8
    %v3118 = vpop.permute.xlu0 %3117
    %3119 = vrot.lane.b32.xlu0 %v2756, 8
    %v3120 = vpop.permute.xlu0 %3119
    %3121 = vrot.lane.b32.xlu0 %v2760, 8
    %v3122 = vpop.permute.xlu0 %3121
    %3123 = vrot.lane.b32.xlu0 %v2764, 8
    %v3124 = vpop.permute.xlu0 %3123
    %3125 = vrot.lane.b32.xlu0 %v2768, 8
    %v3126 = vpop.permute.xlu0 %3125
    %3127 = vrot.lane.b32.xlu0 %v2772, 8
    %v3128 = vpop.permute.xlu0 %3127
    %3129 = vrot.lane.b32.xlu0 %v2776, 8
    %v3130 = vpop.permute.xlu0 %3129
    %3131 = vrot.lane.b32.xlu0 %v2780, 8
    %v3132 = vpop.permute.xlu0 %3131
    %3133 = vrot.lane.b32.xlu0 %v2784, 8
    %v3134 = vpop.permute.xlu0 %3133
    %3135 = vrot.lane.b32.xlu0 %v2788, 8
    %v3136 = vpop.permute.xlu0 %3135
    %3137 = vrot.lane.b32.xlu0 %v2792, 8
    %v3138 = vpop.permute.xlu0 %3137
    %3139 = vrot.lane.b32.xlu0 %v2796, 8
    %v3140 = vpop.permute.xlu0 %3139
    %3141 = vrot.lane.b32.xlu0 %v2800, 8
    %v3142 = vpop.permute.xlu0 %3141
    %3143 = vrot.lane.b32.xlu0 %v2804, 8
    %v3144 = vpop.permute.xlu0 %3143
    %3145 = vrot.lane.b32.xlu0 %v2808, 8
    %v3146 = vpop.permute.xlu0 %3145
    %3147 = vrot.lane.b32.xlu0 %v2812, 8
    %v3148 = vpop.permute.xlu0 %3147
    %3149 = vrot.lane.b32.xlu0 %v2816, 8
    %v3150 = vpop.permute.xlu0 %3149
    %3151 = vrot.lane.b32.xlu0 %v2820, 8
    %v3152 = vpop.permute.xlu0 %3151
    %3153 = vrot.lane.b32.xlu0 %v2824, 8
    %v3154 = vpop.permute.xlu0 %3153
    %3155 = vrot.lane.b32.xlu0 %v2828, 8
    %v3156 = vpop.permute.xlu0 %3155
    %3157 = vrot.lane.b32.xlu0 %v2832, 8
    %v3158 = vpop.permute.xlu0 %3157
    %3159 = vrot.lane.b32.xlu0 %v2836, 8
    %v3160 = vpop.permute.xlu0 %3159
    %3161 = vrot.lane.b32.xlu0 %v2840, 8
    %v3162 = vpop.permute.xlu0 %3161
    %3163 = vrot.lane.b32.xlu0 %v2844, 8
    %v3164 = vpop.permute.xlu0 %3163
    %3165 = vrot.lane.b32.xlu0 %v2848, 8
    %v3166 = vpop.permute.xlu0 %3165
    %3167 = vrot.lane.b32.xlu0 %v2852, 8
    %v3168 = vpop.permute.xlu0 %3167
    %3169 = vrot.lane.b32.xlu0 %v2856, 8
    %v3170 = vpop.permute.xlu0 %3169
    %3171 = vrot.lane.b32.xlu0 %v2860, 8
    %v3172 = vpop.permute.xlu0 %3171
    %3173 = vrot.lane.b32.xlu0 %v2864, 8
    %v3174 = vpop.permute.xlu0 %3173
    %3175 = vrot.lane.b32.xlu0 %v2868, 8
    %v3176 = vpop.permute.xlu0 %3175
    %3177 = vrot.lane.b32.xlu0 %v2872, 8
    %v3178 = vpop.permute.xlu0 %3177
    %3179 = vrot.lane.b32.xlu0 %v2876, 8
    %v3180 = vpop.permute.xlu0 %3179
    %3181 = vrot.lane.b32.xlu0 %v2880, 8
    %v3182 = vpop.permute.xlu0 %3181
    %3183 = vrot.lane.b32.xlu0 %v2884, 8
    %v3184 = vpop.permute.xlu0 %3183
    %3185 = vrot.lane.b32.xlu0 %v2888, 8
    %v3186 = vpop.permute.xlu0 %3185
    %3187 = vrot.lane.b32.xlu0 %v2892, 8
    %v3188 = vpop.permute.xlu0 %3187
    %3189 = vrot.lane.b32.xlu0 %v2896, 8
    %v3190 = vpop.permute.xlu0 %3189
    %3191 = vrot.lane.b32.xlu0 %v2900, 8
    %v3192 = vpop.permute.xlu0 %3191
    %3193 = vrot.lane.b32.xlu0 %v2904, 8
    %v3194 = vpop.permute.xlu0 %3193
    %3195 = vrot.lane.b32.xlu0 %v2908, 8
    %v3196 = vpop.permute.xlu0 %3195
    %3197 = vrot.lane.b32.xlu0 %v2912, 8
    %v3198 = vpop.permute.xlu0 %3197
    %3199 = vrot.lane.b32.xlu0 %v2916, 8
    %v3200 = vpop.permute.xlu0 %3199
    %3201 = vrot.lane.b32.xlu0 %v2920, 8
    %v3202 = vpop.permute.xlu0 %3201
    %3203 = vrot.lane.b32.xlu0 %v2924, 8
    %v3204 = vpop.permute.xlu0 %3203
    %3205 = vrot.lane.b32.xlu0 %v2928, 8
    %v3206 = vpop.permute.xlu0 %3205
    %3207 = vrot.lane.b32.xlu0 %v2932, 8
    %v3208 = vpop.permute.xlu0 %3207
    %3209 = vrot.lane.b32.xlu0 %v2936, 8
    %v3210 = vpop.permute.xlu0 %3209
    %3211 = vrot.lane.b32.xlu0 %v2940, 8
    %v3212 = vpop.permute.xlu0 %3211
    %3213 = vrot.lane.b32.xlu0 %v2944, 8
    %v3214 = vpop.permute.xlu0 %3213
    %3215 = vrot.lane.b32.xlu0 %v2948, 8
    %v3216 = vpop.permute.xlu0 %3215
    %3217 = vrot.lane.b32.xlu0 %v2952, 8
    %v3218 = vpop.permute.xlu0 %3217
    %3219 = vrot.lane.b32.xlu0 %v2956, 8
    %v3220 = vpop.permute.xlu0 %3219
    %3221 = vrot.lane.b32.xlu0 %v2960, 8
    %v3222 = vpop.permute.xlu0 %3221
    %3223 = vrot.lane.b32.xlu0 %v2964, 8
    %v3224 = vpop.permute.xlu0 %3223
    %3225 = vrot.lane.b32.xlu0 %v2968, 8
    %v3226 = vpop.permute.xlu0 %3225
    %3227 = vrot.lane.b32.xlu0 %v2972, 8
    %v3228 = vpop.permute.xlu0 %3227
    %3229 = vrot.lane.b32.xlu0 %v2976, 8
    %v3230 = vpop.permute.xlu0 %3229
    %3231 = vrot.lane.b32.xlu0 %v2980, 8
    %v3232 = vpop.permute.xlu0 %3231
    %3233 = vrot.lane.b32.xlu0 %v2984, 8
    %v3234 = vpop.permute.xlu0 %3233
    %3235 = vrot.lane.b32.xlu0 %v2988, 8
    %v3236 = vpop.permute.xlu0 %3235
    %3237 = vrot.lane.b32.xlu0 %v2992, 8
    %v3238 = vpop.permute.xlu0 %3237
    %3239 = vrot.lane.b32.xlu0 %v2996, 8
    %v3240 = vpop.permute.xlu0 %3239
    %3241 = vrot.lane.b32.xlu0 %v3000, 8
    %v3242 = vpop.permute.xlu0 %3241
    %3243 = vrot.lane.b32.xlu0 %v3004, 8
    %v3244 = vpop.permute.xlu0 %3243
    %3245 = vrot.lane.b32.xlu0 %v3008, 8
    %v3246 = vpop.permute.xlu0 %3245
    %3247 = vrot.lane.b32.xlu0 %v3012, 8
    %v3248 = vpop.permute.xlu0 %3247
    %3249 = vrot.lane.b32.xlu0 %v3016, 8
    %v3250 = vpop.permute.xlu0 %3249
    %3251 = vrot.lane.b32.xlu0 %v3020, 8
    %v3252 = vpop.permute.xlu0 %3251
    %3253 = vrot.lane.b32.xlu0 %v3024, 8
    %v3254 = vpop.permute.xlu0 %3253
    %3255 = vrot.lane.b32.xlu0 %v3028, 8
    %v3256 = vpop.permute.xlu0 %3255
    %3257 = vrot.lane.b32.xlu0 %v3032, 8
    %v3258 = vpop.permute.xlu0 %3257
    %3259 = vrot.lane.b32.xlu0 %v3036, 8
    %v3260 = vpop.permute.xlu0 %3259
    %3261 = vrot.lane.b32.xlu0 %v3040, 8
    %v3262 = vpop.permute.xlu0 %3261
    %3263 = vrot.lane.b32.xlu0 %v3044, 8
    %v3264 = vpop.permute.xlu0 %3263
    %3265 = vrot.lane.b32.xlu0 %v3048, 8
    %v3266 = vpop.permute.xlu0 %3265
    %3267 = vrot.lane.b32.xlu0 %v3052, 8
    %v3268 = vpop.permute.xlu0 %3267
    %3269 = vrot.lane.b32.xlu0 %v3056, 8
    %v3270 = vpop.permute.xlu0 %3269
    %3271 = vrot.lane.b32.xlu0 %v3060, 8
    %v3272 = vpop.permute.xlu0 %3271
    %3273 = vrot.lane.b32.xlu0 %v3064, 8
    %v3274 = vpop.permute.xlu0 %3273
    %3275 = vrot.lane.b32.xlu0 %v3068, 8
    %v3276 = vpop.permute.xlu0 %3275
    %3277 = vrot.lane.b32.xlu0 %v3072, 8
    %v3278 = vpop.permute.xlu0 %3277
    %3279 = vrot.lane.b32.xlu0 %v3076, 8
    %v3280 = vpop.permute.xlu0 %3279
    %3281 = vrot.lane.b32.xlu0 %v3080, 8
    %v3282 = vpop.permute.xlu0 %3281
    %3283 = vrot.lane.b32.xlu0 %v3084, 8
    %v3284 = vpop.permute.xlu0 %3283
    %3285 = vrot.lane.b32.xlu0 %v3088, 8
    %v3286 = vpop.permute.xlu0 %3285
    %3287 = vrot.lane.b32.xlu0 %v3092, 8
    %v3288 = vpop.permute.xlu0 %3287
    %3289 = vrot.lane.b32.xlu0 %v3096, 8
    %v3290 = vpop.permute.xlu0 %3289
    %3291 = vrot.lane.b32.xlu0 %v3100, 8
    %v3292 = vpop.permute.xlu0 %3291
    %vm3293 = vcmask 64512
    %v3294 = vsel %vm3293, %v3102, %v3104
    %v3295 = vsel %vm3293, %v3106, %v3108
    %v3296 = vsel %vm3293, %v3110, %v3112
    %v3297 = vsel %vm3293, %v3114, %v3116
    %v3298 = vsel %vm3293, %v3118, %v3120
    %v3299 = vsel %vm3293, %v3122, %v3124
    %v3300 = vsel %vm3293, %v3126, %v3128
    %v3301 = vsel %vm3293, %v3130, %v3132
    %v3302 = vsel %vm3293, %v3134, %v3136
    %v3303 = vsel %vm3293, %v3138, %v3140
    %v3304 = vsel %vm3293, %v3142, %v3144
    %v3305 = vsel %vm3293, %v3146, %v3148
    %v3306 = vsel %vm3293, %v3150, %v3152
    %v3307 = vsel %vm3293, %v3154, %v3156
    %v3308 = vsel %vm3293, %v3158, %v3160
    %v3309 = vsel %vm3293, %v3162, %v3164
    %v3310 = vsel %vm3293, %v3166, %v3168
    %v3311 = vsel %vm3293, %v3170, %v3172
    %v3312 = vsel %vm3293, %v3174, %v3176
    %v3313 = vsel %vm3293, %v3178, %v3180
    %v3314 = vsel %vm3293, %v3182, %v3184
    %v3315 = vsel %vm3293, %v3186, %v3188
    %v3316 = vsel %vm3293, %v3190, %v3192
    %v3317 = vsel %vm3293, %v3194, %v3196
    %v3318 = vsel %vm3293, %v3198, %v3200
    %v3319 = vsel %vm3293, %v3202, %v3204
    %v3320 = vsel %vm3293, %v3206, %v3208
    %v3321 = vsel %vm3293, %v3210, %v3212
    %v3322 = vsel %vm3293, %v3214, %v3216
    %v3323 = vsel %vm3293, %v3218, %v3220
    %v3324 = vsel %vm3293, %v3222, %v3224
    %v3325 = vsel %vm3293, %v3226, %v3228
    %v3326 = vsel %vm3293, %v3230, %v3232
    %v3327 = vsel %vm3293, %v3234, %v3236
    %v3328 = vsel %vm3293, %v3238, %v3240
    %v3329 = vsel %vm3293, %v3242, %v3244
    %v3330 = vsel %vm3293, %v3246, %v3248
    %v3331 = vsel %vm3293, %v3250, %v3252
    %v3332 = vsel %vm3293, %v3254, %v3256
    %v3333 = vsel %vm3293, %v3258, %v3260
    %v3334 = vsel %vm3293, %v3262, %v3264
    %v3335 = vsel %vm3293, %v3266, %v3268
    %v3336 = vsel %vm3293, %v3270, %v3272
    %v3337 = vsel %vm3293, %v3274, %v3276
    %v3338 = vsel %vm3293, %v3278, %v3280
    %v3339 = vsel %vm3293, %v3282, %v3284
    %v3340 = vsel %vm3293, %v3286, %v3288
    %v3341 = vsel %vm3293, %v3290, %v3292
    %3390 = vst.msk [vmem:[#allocation2 + $0x6] sm:$0x1] %vm1168, %v3294
    %3391 = vst.msk [vmem:[#allocation2 + $0x16] sm:$0x1] %vm1168, %v3295
    %3392 = vst.msk [vmem:[#allocation2 + $0x26] sm:$0x1] %vm1168, %v3296
    %3393 = vst.msk [vmem:[#allocation2 + $0x36] sm:$0x1] %vm1168, %v3297
    %3394 = vst.msk [vmem:[#allocation2 + $0x46] sm:$0x1] %vm1168, %v3298
    %3395 = vst.msk [vmem:[#allocation2 + $0x56] sm:$0x1] %vm1168, %v3299
    %3396 = vst.msk [vmem:[#allocation2 + $0x66] sm:$0x1] %vm1168, %v3300
    %3397 = vst.msk [vmem:[#allocation2 + $0x76] sm:$0x1] %vm1168, %v3301
    %3398 = vst.msk [vmem:[#allocation2 + $0x86] sm:$0x1] %vm1168, %v3302
    %3399 = vst.msk [vmem:[#allocation2 + $0x96] sm:$0x1] %vm1168, %v3303
    %3400 = vst.msk [vmem:[#allocation2 + $0xa6] sm:$0x1] %vm1168, %v3304
    %3401 = vst.msk [vmem:[#allocation2 + $0xb6] sm:$0x1] %vm1168, %v3305
    %3402 = vst.msk [vmem:[#allocation2 + $0xc6] sm:$0x1] %vm1168, %v3306
    %3403 = vst.msk [vmem:[#allocation2 + $0xd6] sm:$0x1] %vm1168, %v3307
    %3404 = vst.msk [vmem:[#allocation2 + $0xe6] sm:$0x1] %vm1168, %v3308
    %3405 = vst.msk [vmem:[#allocation2 + $0xf6] sm:$0x1] %vm1168, %v3309
    %3406 = vst.msk [vmem:[#allocation2 + $0x106] sm:$0x1] %vm1168, %v3310
    %3407 = vst.msk [vmem:[#allocation2 + $0x116] sm:$0x1] %vm1168, %v3311
    %3408 = vst.msk [vmem:[#allocation2 + $0x126] sm:$0x1] %vm1168, %v3312
    %3409 = vst.msk [vmem:[#allocation2 + $0x136] sm:$0x1] %vm1168, %v3313
    %3410 = vst.msk [vmem:[#allocation2 + $0x146] sm:$0x1] %vm1168, %v3314
    %3411 = vst.msk [vmem:[#allocation2 + $0x156] sm:$0x1] %vm1168, %v3315
    %3412 = vst.msk [vmem:[#allocation2 + $0x166] sm:$0x1] %vm1168, %v3316
    %3413 = vst.msk [vmem:[#allocation2 + $0x176] sm:$0x1] %vm1168, %v3317
    %3414 = vst.msk [vmem:[#allocation2 + $0x186] sm:$0x1] %vm1168, %v3318
    %3415 = vst.msk [vmem:[#allocation2 + $0x196] sm:$0x1] %vm1168, %v3319
    %3416 = vst.msk [vmem:[#allocation2 + $0x1a6] sm:$0x1] %vm1168, %v3320
    %3417 = vst.msk [vmem:[#allocation2 + $0x1b6] sm:$0x1] %vm1168, %v3321
    %3418 = vst.msk [vmem:[#allocation2 + $0x1c6] sm:$0x1] %vm1168, %v3322
    %3419 = vst.msk [vmem:[#allocation2 + $0x1d6] sm:$0x1] %vm1168, %v3323
    %3420 = vst.msk [vmem:[#allocation2 + $0x1e6] sm:$0x1] %vm1168, %v3324
    %3421 = vst.msk [vmem:[#allocation2 + $0x1f6] sm:$0x1] %vm1168, %v3325
    %3422 = vst.msk [vmem:[#allocation2 + $0x206] sm:$0x1] %vm1168, %v3326
    %3423 = vst.msk [vmem:[#allocation2 + $0x216] sm:$0x1] %vm1168, %v3327
    %3424 = vst.msk [vmem:[#allocation2 + $0x226] sm:$0x1] %vm1168, %v3328
    %3425 = vst.msk [vmem:[#allocation2 + $0x236] sm:$0x1] %vm1168, %v3329
    %3426 = vst.msk [vmem:[#allocation2 + $0x246] sm:$0x1] %vm1168, %v3330
    %3427 = vst.msk [vmem:[#allocation2 + $0x256] sm:$0x1] %vm1168, %v3331
    %3428 = vst.msk [vmem:[#allocation2 + $0x266] sm:$0x1] %vm1168, %v3332
    %3429 = vst.msk [vmem:[#allocation2 + $0x276] sm:$0x1] %vm1168, %v3333
    %3430 = vst.msk [vmem:[#allocation2 + $0x286] sm:$0x1] %vm1168, %v3334
    %3431 = vst.msk [vmem:[#allocation2 + $0x296] sm:$0x1] %vm1168, %v3335
    %3432 = vst.msk [vmem:[#allocation2 + $0x2a6] sm:$0x1] %vm1168, %v3336
    %3433 = vst.msk [vmem:[#allocation2 + $0x2b6] sm:$0x1] %vm1168, %v3337
    %3434 = vst.msk [vmem:[#allocation2 + $0x2c6] sm:$0x1] %vm1168, %v3338
    %3435 = vst.msk [vmem:[#allocation2 + $0x2d6] sm:$0x1] %vm1168, %v3339
    %3436 = vst.msk [vmem:[#allocation2 + $0x2e6] sm:$0x1] %vm1168, %v3340
    %3437 = vst.msk [vmem:[#allocation2 + $0x2f6] sm:$0x1] %vm1168, %v3341
    %v3438 = vcombine.high %v2394, %v2394
    %v3440 = vunpack.c.l.s4 1966171168
    %v3441 = vunpack.c.0.s8 %v3440
    %v3442 = vlaneseq
    %v3443 = vshrl.u32 %v3442, 7
    %v3444 = vsub.s32 %v3441, %v3443
    %v3445 = vrot.slane %v2394, %v3444
    %v3447 = vunpack.c.l.s4 1966171168
    %v3448 = vunpack.c.0.s8 %v3447
    %v3449 = vlaneseq
    %v3450 = vshrl.u32 %v3449, 7
    %v3451 = vsub.s32 %v3448, %v3450
    %v3452 = vrot.slane %v3438, %v3451
    %v3453 = vcombine.high %v3445, %v3445
    %v3454 = vcombine.high %v3452, %v3452
    %v3456 = vunpack.c.l.s4 1966171168
    %v3457 = vunpack.c.0.s8 %v3456
    %v3458 = vlaneseq
    %v3459 = vshrl.u32 %v3458, 7
    %v3460 = vsub.s32 %v3457, %v3459
    %v3461 = vrot.slane %v3445, %v3460
    %v3463 = vunpack.c.l.s4 1966171168
    %v3464 = vunpack.c.0.s8 %v3463
    %v3465 = vlaneseq
    %v3466 = vshrl.u32 %v3465, 7
    %v3467 = vsub.s32 %v3464, %v3466
    %v3468 = vrot.slane %v3452, %v3467
    %v3470 = vunpack.c.l.s4 1966171168
    %v3471 = vunpack.c.0.s8 %v3470
    %v3472 = vlaneseq
    %v3473 = vshrl.u32 %v3472, 7
    %v3474 = vsub.s32 %v3471, %v3473
    %v3475 = vrot.slane %v3453, %v3474
    %v3477 = vunpack.c.l.s4 1966171168
    %v3478 = vunpack.c.0.s8 %v3477
    %v3479 = vlaneseq
    %v3480 = vshrl.u32 %v3479, 7
    %v3481 = vsub.s32 %v3478, %v3480
    %v3482 = vrot.slane %v3454, %v3481
    %v3483 = vcombine.high %v3461, %v3461
    %v3484 = vcombine.high %v3468, %v3468
    %v3485 = vcombine.high %v3475, %v3475
    %v3486 = vcombine.high %v3482, %v3482
    %v3487 = vcombine.high %v2396, %v2396
    %v3489 = vunpack.c.l.s4 1966171168
    %v3490 = vunpack.c.0.s8 %v3489
    %v3491 = vlaneseq
    %v3492 = vshrl.u32 %v3491, 7
    %v3493 = vsub.s32 %v3490, %v3492
    %v3494 = vrot.slane %v2396, %v3493
    %v3496 = vunpack.c.l.s4 1966171168
    %v3497 = vunpack.c.0.s8 %v3496
    %v3498 = vlaneseq
    %v3499 = vshrl.u32 %v3498, 7
    %v3500 = vsub.s32 %v3497, %v3499
    %v3501 = vrot.slane %v3487, %v3500
    %v3502 = vcombine.high %v3494, %v3494
    %v3503 = vcombine.high %v3501, %v3501
    %v3505 = vunpack.c.l.s4 1966171168
    %v3506 = vunpack.c.0.s8 %v3505
    %v3507 = vlaneseq
    %v3508 = vshrl.u32 %v3507, 7
    %v3509 = vsub.s32 %v3506, %v3508
    %v3510 = vrot.slane %v3494, %v3509
    %v3512 = vunpack.c.l.s4 1966171168
    %v3513 = vunpack.c.0.s8 %v3512
    %v3514 = vlaneseq
    %v3515 = vshrl.u32 %v3514, 7
    %v3516 = vsub.s32 %v3513, %v3515
    %v3517 = vrot.slane %v3501, %v3516
    %v3519 = vunpack.c.l.s4 1966171168
    %v3520 = vunpack.c.0.s8 %v3519
    %v3521 = vlaneseq
    %v3522 = vshrl.u32 %v3521, 7
    %v3523 = vsub.s32 %v3520, %v3522
    %v3524 = vrot.slane %v3502, %v3523
    %v3526 = vunpack.c.l.s4 1966171168
    %v3527 = vunpack.c.0.s8 %v3526
    %v3528 = vlaneseq
    %v3529 = vshrl.u32 %v3528, 7
    %v3530 = vsub.s32 %v3527, %v3529
    %v3531 = vrot.slane %v3503, %v3530
    %v3532 = vcombine.high %v3510, %v3510
    %v3533 = vcombine.high %v3517, %v3517
    %v3534 = vcombine.high %v3524, %v3524
    %v3535 = vcombine.high %v3531, %v3531
    %v3536 = vcombine.high %v2398, %v2398
    %v3538 = vunpack.c.l.s4 1966171168
    %v3539 = vunpack.c.0.s8 %v3538
    %v3540 = vlaneseq
    %v3541 = vshrl.u32 %v3540, 7
    %v3542 = vsub.s32 %v3539, %v3541
    %v3543 = vrot.slane %v2398, %v3542
    %v3545 = vunpack.c.l.s4 1966171168
    %v3546 = vunpack.c.0.s8 %v3545
    %v3547 = vlaneseq
    %v3548 = vshrl.u32 %v3547, 7
    %v3549 = vsub.s32 %v3546, %v3548
    %v3550 = vrot.slane %v3536, %v3549
    %v3551 = vcombine.high %v3543, %v3543
    %v3552 = vcombine.high %v3550, %v3550
    %v3554 = vunpack.c.l.s4 1966171168
    %v3555 = vunpack.c.0.s8 %v3554
    %v3556 = vlaneseq
    %v3557 = vshrl.u32 %v3556, 7
    %v3558 = vsub.s32 %v3555, %v3557
    %v3559 = vrot.slane %v3543, %v3558
    %v3561 = vunpack.c.l.s4 1966171168
    %v3562 = vunpack.c.0.s8 %v3561
    %v3563 = vlaneseq
    %v3564 = vshrl.u32 %v3563, 7
    %v3565 = vsub.s32 %v3562, %v3564
    %v3566 = vrot.slane %v3550, %v3565
    %v3568 = vunpack.c.l.s4 1966171168
    %v3569 = vunpack.c.0.s8 %v3568
    %v3570 = vlaneseq
    %v3571 = vshrl.u32 %v3570, 7
    %v3572 = vsub.s32 %v3569, %v3571
    %v3573 = vrot.slane %v3551, %v3572
    %v3575 = vunpack.c.l.s4 1966171168
    %v3576 = vunpack.c.0.s8 %v3575
    %v3577 = vlaneseq
    %v3578 = vshrl.u32 %v3577, 7
    %v3579 = vsub.s32 %v3576, %v3578
    %v3580 = vrot.slane %v3552, %v3579
    %v3581 = vcombine.high %v3559, %v3559
    %v3582 = vcombine.high %v3566, %v3566
    %v3583 = vcombine.high %v3573, %v3573
    %v3584 = vcombine.high %v3580, %v3580
    %v3585 = vcombine.high %v2400, %v2400
    %v3587 = vunpack.c.l.s4 1966171168
    %v3588 = vunpack.c.0.s8 %v3587
    %v3589 = vlaneseq
    %v3590 = vshrl.u32 %v3589, 7
    %v3591 = vsub.s32 %v3588, %v3590
    %v3592 = vrot.slane %v2400, %v3591
    %v3594 = vunpack.c.l.s4 1966171168
    %v3595 = vunpack.c.0.s8 %v3594
    %v3596 = vlaneseq
    %v3597 = vshrl.u32 %v3596, 7
    %v3598 = vsub.s32 %v3595, %v3597
    %v3599 = vrot.slane %v3585, %v3598
    %v3600 = vcombine.high %v3592, %v3592
    %v3601 = vcombine.high %v3599, %v3599
    %v3603 = vunpack.c.l.s4 1966171168
    %v3604 = vunpack.c.0.s8 %v3603
    %v3605 = vlaneseq
    %v3606 = vshrl.u32 %v3605, 7
    %v3607 = vsub.s32 %v3604, %v3606
    %v3608 = vrot.slane %v3592, %v3607
    %v3610 = vunpack.c.l.s4 1966171168
    %v3611 = vunpack.c.0.s8 %v3610
    %v3612 = vlaneseq
    %v3613 = vshrl.u32 %v3612, 7
    %v3614 = vsub.s32 %v3611, %v3613
    %v3615 = vrot.slane %v3599, %v3614
    %v3617 = vunpack.c.l.s4 1966171168
    %v3618 = vunpack.c.0.s8 %v3617
    %v3619 = vlaneseq
    %v3620 = vshrl.u32 %v3619, 7
    %v3621 = vsub.s32 %v3618, %v3620
    %v3622 = vrot.slane %v3600, %v3621
    %v3624 = vunpack.c.l.s4 1966171168
    %v3625 = vunpack.c.0.s8 %v3624
    %v3626 = vlaneseq
    %v3627 = vshrl.u32 %v3626, 7
    %v3628 = vsub.s32 %v3625, %v3627
    %v3629 = vrot.slane %v3601, %v3628
    %v3630 = vcombine.high %v3608, %v3608
    %v3631 = vcombine.high %v3615, %v3615
    %v3632 = vcombine.high %v3622, %v3622
    %v3633 = vcombine.high %v3629, %v3629
    %v3634 = vcombine.high %v2402, %v2402
    %v3636 = vunpack.c.l.s4 1966171168
    %v3637 = vunpack.c.0.s8 %v3636
    %v3638 = vlaneseq
    %v3639 = vshrl.u32 %v3638, 7
    %v3640 = vsub.s32 %v3637, %v3639
    %v3641 = vrot.slane %v2402, %v3640
    %v3643 = vunpack.c.l.s4 1966171168
    %v3644 = vunpack.c.0.s8 %v3643
    %v3645 = vlaneseq
    %v3646 = vshrl.u32 %v3645, 7
    %v3647 = vsub.s32 %v3644, %v3646
    %v3648 = vrot.slane %v3634, %v3647
    %v3649 = vcombine.high %v3641, %v3641
    %v3650 = vcombine.high %v3648, %v3648
    %v3652 = vunpack.c.l.s4 1966171168
    %v3653 = vunpack.c.0.s8 %v3652
    %v3654 = vlaneseq
    %v3655 = vshrl.u32 %v3654, 7
    %v3656 = vsub.s32 %v3653, %v3655
    %v3657 = vrot.slane %v3641, %v3656
    %v3659 = vunpack.c.l.s4 1966171168
    %v3660 = vunpack.c.0.s8 %v3659
    %v3661 = vlaneseq
    %v3662 = vshrl.u32 %v3661, 7
    %v3663 = vsub.s32 %v3660, %v3662
    %v3664 = vrot.slane %v3648, %v3663
    %v3666 = vunpack.c.l.s4 1966171168
    %v3667 = vunpack.c.0.s8 %v3666
    %v3668 = vlaneseq
    %v3669 = vshrl.u32 %v3668, 7
    %v3670 = vsub.s32 %v3667, %v3669
    %v3671 = vrot.slane %v3649, %v3670
    %v3673 = vunpack.c.l.s4 1966171168
    %v3674 = vunpack.c.0.s8 %v3673
    %v3675 = vlaneseq
    %v3676 = vshrl.u32 %v3675, 7
    %v3677 = vsub.s32 %v3674, %v3676
    %v3678 = vrot.slane %v3650, %v3677
    %v3679 = vcombine.high %v3657, %v3657
    %v3680 = vcombine.high %v3664, %v3664
    %v3681 = vcombine.high %v3671, %v3671
    %v3682 = vcombine.high %v3678, %v3678
    %v3683 = vcombine.high %v2404, %v2404
    %v3685 = vunpack.c.l.s4 1966171168
    %v3686 = vunpack.c.0.s8 %v3685
    %v3687 = vlaneseq
    %v3688 = vshrl.u32 %v3687, 7
    %v3689 = vsub.s32 %v3686, %v3688
    %v3690 = vrot.slane %v2404, %v3689
    %v3692 = vunpack.c.l.s4 1966171168
    %v3693 = vunpack.c.0.s8 %v3692
    %v3694 = vlaneseq
    %v3695 = vshrl.u32 %v3694, 7
    %v3696 = vsub.s32 %v3693, %v3695
    %v3697 = vrot.slane %v3683, %v3696
    %v3698 = vcombine.high %v3690, %v3690
    %v3699 = vcombine.high %v3697, %v3697
    %v3701 = vunpack.c.l.s4 1966171168
    %v3702 = vunpack.c.0.s8 %v3701
    %v3703 = vlaneseq
    %v3704 = vshrl.u32 %v3703, 7
    %v3705 = vsub.s32 %v3702, %v3704
    %v3706 = vrot.slane %v3690, %v3705
    %v3708 = vunpack.c.l.s4 1966171168
    %v3709 = vunpack.c.0.s8 %v3708
    %v3710 = vlaneseq
    %v3711 = vshrl.u32 %v3710, 7
    %v3712 = vsub.s32 %v3709, %v3711
    %v3713 = vrot.slane %v3697, %v3712
    %v3715 = vunpack.c.l.s4 1966171168
    %v3716 = vunpack.c.0.s8 %v3715
    %v3717 = vlaneseq
    %v3718 = vshrl.u32 %v3717, 7
    %v3719 = vsub.s32 %v3716, %v3718
    %v3720 = vrot.slane %v3698, %v3719
    %v3722 = vunpack.c.l.s4 1966171168
    %v3723 = vunpack.c.0.s8 %v3722
    %v3724 = vlaneseq
    %v3725 = vshrl.u32 %v3724, 7
    %v3726 = vsub.s32 %v3723, %v3725
    %v3727 = vrot.slane %v3699, %v3726
    %v3728 = vcombine.high %v3706, %v3706
    %v3729 = vcombine.high %v3713, %v3713
    %v3730 = vcombine.high %v3720, %v3720
    %v3731 = vcombine.high %v3727, %v3727
    %v3732 = vlaneseq
    %v3733 = vshrl.u32 %v3732, 7
    %v3734 = vsub.s32 0, %v3733
    %v3735 = vrot.slane %v3461, %v3734
    %v3736 = vlaneseq
    %v3737 = vshrl.u32 %v3736, 7
    %v3738 = vsub.s32 0, %v3737
    %v3739 = vrot.slane %v3475, %v3738
    %v3740 = vlaneseq
    %v3741 = vshrl.u32 %v3740, 7
    %v3742 = vsub.s32 0, %v3741
    %v3743 = vrot.slane %v3483, %v3742
    %v3744 = vlaneseq
    %v3745 = vshrl.u32 %v3744, 7
    %v3746 = vsub.s32 0, %v3745
    %v3747 = vrot.slane %v3485, %v3746
    %v3748 = vlaneseq
    %v3749 = vshrl.u32 %v3748, 7
    %v3750 = vsub.s32 0, %v3749
    %v3751 = vrot.slane %v3468, %v3750
    %v3752 = vlaneseq
    %v3753 = vshrl.u32 %v3752, 7
    %v3754 = vsub.s32 0, %v3753
    %v3755 = vrot.slane %v3482, %v3754
    %v3756 = vlaneseq
    %v3757 = vshrl.u32 %v3756, 7
    %v3758 = vsub.s32 0, %v3757
    %v3759 = vrot.slane %v3484, %v3758
    %v3760 = vlaneseq
    %v3761 = vshrl.u32 %v3760, 7
    %v3762 = vsub.s32 0, %v3761
    %v3763 = vrot.slane %v3486, %v3762
    %v3764 = vlaneseq
    %v3765 = vshrl.u32 %v3764, 7
    %v3766 = vsub.s32 0, %v3765
    %v3767 = vrot.slane %v3510, %v3766
    %v3768 = vlaneseq
    %v3769 = vshrl.u32 %v3768, 7
    %v3770 = vsub.s32 0, %v3769
    %v3771 = vrot.slane %v3524, %v3770
    %v3772 = vlaneseq
    %v3773 = vshrl.u32 %v3772, 7
    %v3774 = vsub.s32 0, %v3773
    %v3775 = vrot.slane %v3532, %v3774
    %v3776 = vlaneseq
    %v3777 = vshrl.u32 %v3776, 7
    %v3778 = vsub.s32 0, %v3777
    %v3779 = vrot.slane %v3534, %v3778
    %v3780 = vlaneseq
    %v3781 = vshrl.u32 %v3780, 7
    %v3782 = vsub.s32 0, %v3781
    %v3783 = vrot.slane %v3517, %v3782
    %v3784 = vlaneseq
    %v3785 = vshrl.u32 %v3784, 7
    %v3786 = vsub.s32 0, %v3785
    %v3787 = vrot.slane %v3531, %v3786
    %v3788 = vlaneseq
    %v3789 = vshrl.u32 %v3788, 7
    %v3790 = vsub.s32 0, %v3789
    %v3791 = vrot.slane %v3533, %v3790
    %v3792 = vlaneseq
    %v3793 = vshrl.u32 %v3792, 7
    %v3794 = vsub.s32 0, %v3793
    %v3795 = vrot.slane %v3535, %v3794
    %v3796 = vlaneseq
    %v3797 = vshrl.u32 %v3796, 7
    %v3798 = vsub.s32 0, %v3797
    %v3799 = vrot.slane %v3559, %v3798
    %v3800 = vlaneseq
    %v3801 = vshrl.u32 %v3800, 7
    %v3802 = vsub.s32 0, %v3801
    %v3803 = vrot.slane %v3573, %v3802
    %v3804 = vlaneseq
    %v3805 = vshrl.u32 %v3804, 7
    %v3806 = vsub.s32 0, %v3805
    %v3807 = vrot.slane %v3581, %v3806
    %v3808 = vlaneseq
    %v3809 = vshrl.u32 %v3808, 7
    %v3810 = vsub.s32 0, %v3809
    %v3811 = vrot.slane %v3583, %v3810
    %v3812 = vlaneseq
    %v3813 = vshrl.u32 %v3812, 7
    %v3814 = vsub.s32 0, %v3813
    %v3815 = vrot.slane %v3566, %v3814
    %v3816 = vlaneseq
    %v3817 = vshrl.u32 %v3816, 7
    %v3818 = vsub.s32 0, %v3817
    %v3819 = vrot.slane %v3580, %v3818
    %v3820 = vlaneseq
    %v3821 = vshrl.u32 %v3820, 7
    %v3822 = vsub.s32 0, %v3821
    %v3823 = vrot.slane %v3582, %v3822
    %v3824 = vlaneseq
    %v3825 = vshrl.u32 %v3824, 7
    %v3826 = vsub.s32 0, %v3825
    %v3827 = vrot.slane %v3584, %v3826
    %v3828 = vlaneseq
    %v3829 = vshrl.u32 %v3828, 7
    %v3830 = vsub.s32 0, %v3829
    %v3831 = vrot.slane %v3608, %v3830
    %v3832 = vlaneseq
    %v3833 = vshrl.u32 %v3832, 7
    %v3834 = vsub.s32 0, %v3833
    %v3835 = vrot.slane %v3622, %v3834
    %v3836 = vlaneseq
    %v3837 = vshrl.u32 %v3836, 7
    %v3838 = vsub.s32 0, %v3837
    %v3839 = vrot.slane %v3630, %v3838
    %v3840 = vlaneseq
    %v3841 = vshrl.u32 %v3840, 7
    %v3842 = vsub.s32 0, %v3841
    %v3843 = vrot.slane %v3632, %v3842
    %v3844 = vlaneseq
    %v3845 = vshrl.u32 %v3844, 7
    %v3846 = vsub.s32 0, %v3845
    %v3847 = vrot.slane %v3615, %v3846
    %v3848 = vlaneseq
    %v3849 = vshrl.u32 %v3848, 7
    %v3850 = vsub.s32 0, %v3849
    %v3851 = vrot.slane %v3629, %v3850
    %v3852 = vlaneseq
    %v3853 = vshrl.u32 %v3852, 7
    %v3854 = vsub.s32 0, %v3853
    %v3855 = vrot.slane %v3631, %v3854
    %v3856 = vlaneseq
    %v3857 = vshrl.u32 %v3856, 7
    %v3858 = vsub.s32 0, %v3857
    %v3859 = vrot.slane %v3633, %v3858
    %v3860 = vlaneseq
    %v3861 = vshrl.u32 %v3860, 7
    %v3862 = vsub.s32 0, %v3861
    %v3863 = vrot.slane %v3657, %v3862
    %v3864 = vlaneseq
    %v3865 = vshrl.u32 %v3864, 7
    %v3866 = vsub.s32 0, %v3865
    %v3867 = vrot.slane %v3671, %v3866
    %v3868 = vlaneseq
    %v3869 = vshrl.u32 %v3868, 7
    %v3870 = vsub.s32 0, %v3869
    %v3871 = vrot.slane %v3679, %v3870
    %v3872 = vlaneseq
    %v3873 = vshrl.u32 %v3872, 7
    %v3874 = vsub.s32 0, %v3873
    %v3875 = vrot.slane %v3681, %v3874
    %v3876 = vlaneseq
    %v3877 = vshrl.u32 %v3876, 7
    %v3878 = vsub.s32 0, %v3877
    %v3879 = vrot.slane %v3664, %v3878
    %v3880 = vlaneseq
    %v3881 = vshrl.u32 %v3880, 7
    %v3882 = vsub.s32 0, %v3881
    %v3883 = vrot.slane %v3678, %v3882
    %v3884 = vlaneseq
    %v3885 = vshrl.u32 %v3884, 7
    %v3886 = vsub.s32 0, %v3885
    %v3887 = vrot.slane %v3680, %v3886
    %v3888 = vlaneseq
    %v3889 = vshrl.u32 %v3888, 7
    %v3890 = vsub.s32 0, %v3889
    %v3891 = vrot.slane %v3682, %v3890
    %v3892 = vlaneseq
    %v3893 = vshrl.u32 %v3892, 7
    %v3894 = vsub.s32 0, %v3893
    %v3895 = vrot.slane %v3706, %v3894
    %v3896 = vlaneseq
    %v3897 = vshrl.u32 %v3896, 7
    %v3898 = vsub.s32 0, %v3897
    %v3899 = vrot.slane %v3720, %v3898
    %v3900 = vlaneseq
    %v3901 = vshrl.u32 %v3900, 7
    %v3902 = vsub.s32 0, %v3901
    %v3903 = vrot.slane %v3728, %v3902
    %v3904 = vlaneseq
    %v3905 = vshrl.u32 %v3904, 7
    %v3906 = vsub.s32 0, %v3905
    %v3907 = vrot.slane %v3730, %v3906
    %v3908 = vlaneseq
    %v3909 = vshrl.u32 %v3908, 7
    %v3910 = vsub.s32 0, %v3909
    %v3911 = vrot.slane %v3713, %v3910
    %v3912 = vlaneseq
    %v3913 = vshrl.u32 %v3912, 7
    %v3914 = vsub.s32 0, %v3913
    %v3915 = vrot.slane %v3727, %v3914
    %v3916 = vlaneseq
    %v3917 = vshrl.u32 %v3916, 7
    %v3918 = vsub.s32 0, %v3917
    %v3919 = vrot.slane %v3729, %v3918
    %v3920 = vlaneseq
    %v3921 = vshrl.u32 %v3920, 7
    %v3922 = vsub.s32 0, %v3921
    %v3923 = vrot.slane %v3731, %v3922
    %3924 = vrot.lane.b32.xlu0 %v3735, 116
    %v3925 = vpop.permute.xlu0 %3924
    %3926 = vrot.lane.b32.xlu0 %v3739, 116
    %v3927 = vpop.permute.xlu0 %3926
    %3928 = vrot.lane.b32.xlu0 %v3743, 116
    %v3929 = vpop.permute.xlu0 %3928
    %3930 = vrot.lane.b32.xlu0 %v3747, 116
    %v3931 = vpop.permute.xlu0 %3930
    %3932 = vrot.lane.b32.xlu0 %v3751, 116
    %v3933 = vpop.permute.xlu0 %3932
    %3934 = vrot.lane.b32.xlu0 %v3755, 116
    %v3935 = vpop.permute.xlu0 %3934
    %3936 = vrot.lane.b32.xlu0 %v3759, 116
    %v3937 = vpop.permute.xlu0 %3936
    %3938 = vrot.lane.b32.xlu0 %v3763, 116
    %v3939 = vpop.permute.xlu0 %3938
    %3940 = vrot.lane.b32.xlu0 %v3767, 116
    %v3941 = vpop.permute.xlu0 %3940
    %3942 = vrot.lane.b32.xlu0 %v3771, 116
    %v3943 = vpop.permute.xlu0 %3942
    %3944 = vrot.lane.b32.xlu0 %v3775, 116
    %v3945 = vpop.permute.xlu0 %3944
    %3946 = vrot.lane.b32.xlu0 %v3779, 116
    %v3947 = vpop.permute.xlu0 %3946
    %3948 = vrot.lane.b32.xlu0 %v3783, 116
    %v3949 = vpop.permute.xlu0 %3948
    %3950 = vrot.lane.b32.xlu0 %v3787, 116
    %v3951 = vpop.permute.xlu0 %3950
    %3952 = vrot.lane.b32.xlu0 %v3791, 116
    %v3953 = vpop.permute.xlu0 %3952
    %3954 = vrot.lane.b32.xlu0 %v3795, 116
    %v3955 = vpop.permute.xlu0 %3954
    %3956 = vrot.lane.b32.xlu0 %v3799, 116
    %v3957 = vpop.permute.xlu0 %3956
    %3958 = vrot.lane.b32.xlu0 %v3803, 116
    %v3959 = vpop.permute.xlu0 %3958
    %3960 = vrot.lane.b32.xlu0 %v3807, 116
    %v3961 = vpop.permute.xlu0 %3960
    %3962 = vrot.lane.b32.xlu0 %v3811, 116
    %v3963 = vpop.permute.xlu0 %3962
    %3964 = vrot.lane.b32.xlu0 %v3815, 116
    %v3965 = vpop.permute.xlu0 %3964
    %3966 = vrot.lane.b32.xlu0 %v3819, 116
    %v3967 = vpop.permute.xlu0 %3966
    %3968 = vrot.lane.b32.xlu0 %v3823, 116
    %v3969 = vpop.permute.xlu0 %3968
    %3970 = vrot.lane.b32.xlu0 %v3827, 116
    %v3971 = vpop.permute.xlu0 %3970
    %3972 = vrot.lane.b32.xlu0 %v3831, 116
    %v3973 = vpop.permute.xlu0 %3972
    %3974 = vrot.lane.b32.xlu0 %v3835, 116
    %v3975 = vpop.permute.xlu0 %3974
    %3976 = vrot.lane.b32.xlu0 %v3839, 116
    %v3977 = vpop.permute.xlu0 %3976
    %3978 = vrot.lane.b32.xlu0 %v3843, 116
    %v3979 = vpop.permute.xlu0 %3978
    %3980 = vrot.lane.b32.xlu0 %v3847, 116
    %v3981 = vpop.permute.xlu0 %3980
    %3982 = vrot.lane.b32.xlu0 %v3851, 116
    %v3983 = vpop.permute.xlu0 %3982
    %3984 = vrot.lane.b32.xlu0 %v3855, 116
    %v3985 = vpop.permute.xlu0 %3984
    %3986 = vrot.lane.b32.xlu0 %v3859, 116
    %v3987 = vpop.permute.xlu0 %3986
    %3988 = vrot.lane.b32.xlu0 %v3863, 116
    %v3989 = vpop.permute.xlu0 %3988
    %3990 = vrot.lane.b32.xlu0 %v3867, 116
    %v3991 = vpop.permute.xlu0 %3990
    %3992 = vrot.lane.b32.xlu0 %v3871, 116
    %v3993 = vpop.permute.xlu0 %3992
    %3994 = vrot.lane.b32.xlu0 %v3875, 116
    %v3995 = vpop.permute.xlu0 %3994
    %3996 = vrot.lane.b32.xlu0 %v3879, 116
    %v3997 = vpop.permute.xlu0 %3996
    %3998 = vrot.lane.b32.xlu0 %v3883, 116
    %v3999 = vpop.permute.xlu0 %3998
    %4000 = vrot.lane.b32.xlu0 %v3887, 116
    %v4001 = vpop.permute.xlu0 %4000
    %4002 = vrot.lane.b32.xlu0 %v3891, 116
    %v4003 = vpop.permute.xlu0 %4002
    %4004 = vrot.lane.b32.xlu0 %v3895, 116
    %v4005 = vpop.permute.xlu0 %4004
    %4006 = vrot.lane.b32.xlu0 %v3899, 116
    %v4007 = vpop.permute.xlu0 %4006
    %4008 = vrot.lane.b32.xlu0 %v3903, 116
    %v4009 = vpop.permute.xlu0 %4008
    %4010 = vrot.lane.b32.xlu0 %v3907, 116
    %v4011 = vpop.permute.xlu0 %4010
    %4012 = vrot.lane.b32.xlu0 %v3911, 116
    %v4013 = vpop.permute.xlu0 %4012
    %4014 = vrot.lane.b32.xlu0 %v3915, 116
    %v4015 = vpop.permute.xlu0 %4014
    %4016 = vrot.lane.b32.xlu0 %v3919, 116
    %v4017 = vpop.permute.xlu0 %4016
    %4018 = vrot.lane.b32.xlu0 %v3923, 116
    %v4019 = vpop.permute.xlu0 %4018
    %4068 = vst.msk [vmem:[#allocation2 + $0x7] sm:$0x1] %vm1168, %v3925
    %4069 = vst.msk [vmem:[#allocation2 + $0x17] sm:$0x1] %vm1168, %v3927
    %4070 = vst.msk [vmem:[#allocation2 + $0x27] sm:$0x1] %vm1168, %v3929
    %4071 = vst.msk [vmem:[#allocation2 + $0x37] sm:$0x1] %vm1168, %v3931
    %4072 = vst.msk [vmem:[#allocation2 + $0x47] sm:$0x1] %vm1168, %v3933
    %4073 = vst.msk [vmem:[#allocation2 + $0x57] sm:$0x1] %vm1168, %v3935
    %4074 = vst.msk [vmem:[#allocation2 + $0x67] sm:$0x1] %vm1168, %v3937
    %4075 = vst.msk [vmem:[#allocation2 + $0x77] sm:$0x1] %vm1168, %v3939
    %4076 = vst.msk [vmem:[#allocation2 + $0x87] sm:$0x1] %vm1168, %v3941
    %4077 = vst.msk [vmem:[#allocation2 + $0x97] sm:$0x1] %vm1168, %v3943
    %4078 = vst.msk [vmem:[#allocation2 + $0xa7] sm:$0x1] %vm1168, %v3945
    %4079 = vst.msk [vmem:[#allocation2 + $0xb7] sm:$0x1] %vm1168, %v3947
    %4080 = vst.msk [vmem:[#allocation2 + $0xc7] sm:$0x1] %vm1168, %v3949
    %4081 = vst.msk [vmem:[#allocation2 + $0xd7] sm:$0x1] %vm1168, %v3951
    %4082 = vst.msk [vmem:[#allocation2 + $0xe7] sm:$0x1] %vm1168, %v3953
    %4083 = vst.msk [vmem:[#allocation2 + $0xf7] sm:$0x1] %vm1168, %v3955
    %4084 = vst.msk [vmem:[#allocation2 + $0x107] sm:$0x1] %vm1168, %v3957
    %4085 = vst.msk [vmem:[#allocation2 + $0x117] sm:$0x1] %vm1168, %v3959
    %4086 = vst.msk [vmem:[#allocation2 + $0x127] sm:$0x1] %vm1168, %v3961
    %4087 = vst.msk [vmem:[#allocation2 + $0x137] sm:$0x1] %vm1168, %v3963
    %4088 = vst.msk [vmem:[#allocation2 + $0x147] sm:$0x1] %vm1168, %v3965
    %4089 = vst.msk [vmem:[#allocation2 + $0x157] sm:$0x1] %vm1168, %v3967
    %4090 = vst.msk [vmem:[#allocation2 + $0x167] sm:$0x1] %vm1168, %v3969
    %4091 = vst.msk [vmem:[#allocation2 + $0x177] sm:$0x1] %vm1168, %v3971
    %4092 = vst.msk [vmem:[#allocation2 + $0x187] sm:$0x1] %vm1168, %v3973
    %4093 = vst.msk [vmem:[#allocation2 + $0x197] sm:$0x1] %vm1168, %v3975
    %4094 = vst.msk [vmem:[#allocation2 + $0x1a7] sm:$0x1] %vm1168, %v3977
    %4095 = vst.msk [vmem:[#allocation2 + $0x1b7] sm:$0x1] %vm1168, %v3979
    %4096 = vst.msk [vmem:[#allocation2 + $0x1c7] sm:$0x1] %vm1168, %v3981
    %4097 = vst.msk [vmem:[#allocation2 + $0x1d7] sm:$0x1] %vm1168, %v3983
    %4098 = vst.msk [vmem:[#allocation2 + $0x1e7] sm:$0x1] %vm1168, %v3985
    %4099 = vst.msk [vmem:[#allocation2 + $0x1f7] sm:$0x1] %vm1168, %v3987
    %4100 = vst.msk [vmem:[#allocation2 + $0x207] sm:$0x1] %vm1168, %v3989
    %4101 = vst.msk [vmem:[#allocation2 + $0x217] sm:$0x1] %vm1168, %v3991
    %4102 = vst.msk [vmem:[#allocation2 + $0x227] sm:$0x1] %vm1168, %v3993
    %4103 = vst.msk [vmem:[#allocation2 + $0x237] sm:$0x1] %vm1168, %v3995
    %4104 = vst.msk [vmem:[#allocation2 + $0x247] sm:$0x1] %vm1168, %v3997
    %4105 = vst.msk [vmem:[#allocation2 + $0x257] sm:$0x1] %vm1168, %v3999
    %4106 = vst.msk [vmem:[#allocation2 + $0x267] sm:$0x1] %vm1168, %v4001
    %4107 = vst.msk [vmem:[#allocation2 + $0x277] sm:$0x1] %vm1168, %v4003
    %4108 = vst.msk [vmem:[#allocation2 + $0x287] sm:$0x1] %vm1168, %v4005
    %4109 = vst.msk [vmem:[#allocation2 + $0x297] sm:$0x1] %vm1168, %v4007
    %4110 = vst.msk [vmem:[#allocation2 + $0x2a7] sm:$0x1] %vm1168, %v4009
    %4111 = vst.msk [vmem:[#allocation2 + $0x2b7] sm:$0x1] %vm1168, %v4011
    %4112 = vst.msk [vmem:[#allocation2 + $0x2c7] sm:$0x1] %vm1168, %v4013
    %4113 = vst.msk [vmem:[#allocation2 + $0x2d7] sm:$0x1] %vm1168, %v4015
    %4114 = vst.msk [vmem:[#allocation2 + $0x2e7] sm:$0x1] %vm1168, %v4017
    %4115 = vst.msk [vmem:[#allocation2 + $0x2f7] sm:$0x1] %vm1168, %v4019
    %4116 = vrot.lane.b32.xlu0 %v3735, 96
    %v4117 = vpop.permute.xlu0 %4116
    %4118 = vrot.lane.b32.xlu0 %v3739, 96
    %v4119 = vpop.permute.xlu0 %4118
    %4120 = vrot.lane.b32.xlu0 %v3743, 96
    %v4121 = vpop.permute.xlu0 %4120
    %4122 = vrot.lane.b32.xlu0 %v3747, 96
    %v4123 = vpop.permute.xlu0 %4122
    %4124 = vrot.lane.b32.xlu0 %v3751, 96
    %v4125 = vpop.permute.xlu0 %4124
    %4126 = vrot.lane.b32.xlu0 %v3755, 96
    %v4127 = vpop.permute.xlu0 %4126
    %4128 = vrot.lane.b32.xlu0 %v3759, 96
    %v4129 = vpop.permute.xlu0 %4128
    %4130 = vrot.lane.b32.xlu0 %v3763, 96
    %v4131 = vpop.permute.xlu0 %4130
    %4132 = vrot.lane.b32.xlu0 %v3767, 96
    %v4133 = vpop.permute.xlu0 %4132
    %4134 = vrot.lane.b32.xlu0 %v3771, 96
    %v4135 = vpop.permute.xlu0 %4134
    %4136 = vrot.lane.b32.xlu0 %v3775, 96
    %v4137 = vpop.permute.xlu0 %4136
    %4138 = vrot.lane.b32.xlu0 %v3779, 96
    %v4139 = vpop.permute.xlu0 %4138
    %4140 = vrot.lane.b32.xlu0 %v3783, 96
    %v4141 = vpop.permute.xlu0 %4140
    %4142 = vrot.lane.b32.xlu0 %v3787, 96
    %v4143 = vpop.permute.xlu0 %4142
    %4144 = vrot.lane.b32.xlu0 %v3791, 96
    %v4145 = vpop.permute.xlu0 %4144
    %4146 = vrot.lane.b32.xlu0 %v3795, 96
    %v4147 = vpop.permute.xlu0 %4146
    %4148 = vrot.lane.b32.xlu0 %v3799, 96
    %v4149 = vpop.permute.xlu0 %4148
    %4150 = vrot.lane.b32.xlu0 %v3803, 96
    %v4151 = vpop.permute.xlu0 %4150
    %4152 = vrot.lane.b32.xlu0 %v3807, 96
    %v4153 = vpop.permute.xlu0 %4152
    %4154 = vrot.lane.b32.xlu0 %v3811, 96
    %v4155 = vpop.permute.xlu0 %4154
    %4156 = vrot.lane.b32.xlu0 %v3815, 96
    %v4157 = vpop.permute.xlu0 %4156
    %4158 = vrot.lane.b32.xlu0 %v3819, 96
    %v4159 = vpop.permute.xlu0 %4158
    %4160 = vrot.lane.b32.xlu0 %v3823, 96
    %v4161 = vpop.permute.xlu0 %4160
    %4162 = vrot.lane.b32.xlu0 %v3827, 96
    %v4163 = vpop.permute.xlu0 %4162
    %4164 = vrot.lane.b32.xlu0 %v3831, 96
    %v4165 = vpop.permute.xlu0 %4164
    %4166 = vrot.lane.b32.xlu0 %v3835, 96
    %v4167 = vpop.permute.xlu0 %4166
    %4168 = vrot.lane.b32.xlu0 %v3839, 96
    %v4169 = vpop.permute.xlu0 %4168
    %4170 = vrot.lane.b32.xlu0 %v3843, 96
    %v4171 = vpop.permute.xlu0 %4170
    %4172 = vrot.lane.b32.xlu0 %v3847, 96
    %v4173 = vpop.permute.xlu0 %4172
    %4174 = vrot.lane.b32.xlu0 %v3851, 96
    %v4175 = vpop.permute.xlu0 %4174
    %4176 = vrot.lane.b32.xlu0 %v3855, 96
    %v4177 = vpop.permute.xlu0 %4176
    %4178 = vrot.lane.b32.xlu0 %v3859, 96
    %v4179 = vpop.permute.xlu0 %4178
    %4180 = vrot.lane.b32.xlu0 %v3863, 96
    %v4181 = vpop.permute.xlu0 %4180
    %4182 = vrot.lane.b32.xlu0 %v3867, 96
    %v4183 = vpop.permute.xlu0 %4182
    %4184 = vrot.lane.b32.xlu0 %v3871, 96
    %v4185 = vpop.permute.xlu0 %4184
    %4186 = vrot.lane.b32.xlu0 %v3875, 96
    %v4187 = vpop.permute.xlu0 %4186
    %4188 = vrot.lane.b32.xlu0 %v3879, 96
    %v4189 = vpop.permute.xlu0 %4188
    %4190 = vrot.lane.b32.xlu0 %v3883, 96
    %v4191 = vpop.permute.xlu0 %4190
    %4192 = vrot.lane.b32.xlu0 %v3887, 96
    %v4193 = vpop.permute.xlu0 %4192
    %4194 = vrot.lane.b32.xlu0 %v3891, 96
    %v4195 = vpop.permute.xlu0 %4194
    %4196 = vrot.lane.b32.xlu0 %v3895, 96
    %v4197 = vpop.permute.xlu0 %4196
    %4198 = vrot.lane.b32.xlu0 %v3899, 96
    %v4199 = vpop.permute.xlu0 %4198
    %4200 = vrot.lane.b32.xlu0 %v3903, 96
    %v4201 = vpop.permute.xlu0 %4200
    %4202 = vrot.lane.b32.xlu0 %v3907, 96
    %v4203 = vpop.permute.xlu0 %4202
    %4204 = vrot.lane.b32.xlu0 %v3911, 96
    %v4205 = vpop.permute.xlu0 %4204
    %4206 = vrot.lane.b32.xlu0 %v3915, 96
    %v4207 = vpop.permute.xlu0 %4206
    %4208 = vrot.lane.b32.xlu0 %v3919, 96
    %v4209 = vpop.permute.xlu0 %4208
    %4210 = vrot.lane.b32.xlu0 %v3923, 96
    %v4211 = vpop.permute.xlu0 %4210
    %4260 = vst.msk [vmem:[#allocation2 + $0x8] sm:$0x1] %vm1168, %v4117
    %4261 = vst.msk [vmem:[#allocation2 + $0x18] sm:$0x1] %vm1168, %v4119
    %4262 = vst.msk [vmem:[#allocation2 + $0x28] sm:$0x1] %vm1168, %v4121
    %4263 = vst.msk [vmem:[#allocation2 + $0x38] sm:$0x1] %vm1168, %v4123
    %4264 = vst.msk [vmem:[#allocation2 + $0x48] sm:$0x1] %vm1168, %v4125
    %4265 = vst.msk [vmem:[#allocation2 + $0x58] sm:$0x1] %vm1168, %v4127
    %4266 = vst.msk [vmem:[#allocation2 + $0x68] sm:$0x1] %vm1168, %v4129
    %4267 = vst.msk [vmem:[#allocation2 + $0x78] sm:$0x1] %vm1168, %v4131
    %4268 = vst.msk [vmem:[#allocation2 + $0x88] sm:$0x1] %vm1168, %v4133
    %4269 = vst.msk [vmem:[#allocation2 + $0x98] sm:$0x1] %vm1168, %v4135
    %4270 = vst.msk [vmem:[#allocation2 + $0xa8] sm:$0x1] %vm1168, %v4137
    %4271 = vst.msk [vmem:[#allocation2 + $0xb8] sm:$0x1] %vm1168, %v4139
    %4272 = vst.msk [vmem:[#allocation2 + $0xc8] sm:$0x1] %vm1168, %v4141
    %4273 = vst.msk [vmem:[#allocation2 + $0xd8] sm:$0x1] %vm1168, %v4143
    %4274 = vst.msk [vmem:[#allocation2 + $0xe8] sm:$0x1] %vm1168, %v4145
    %4275 = vst.msk [vmem:[#allocation2 + $0xf8] sm:$0x1] %vm1168, %v4147
    %4276 = vst.msk [vmem:[#allocation2 + $0x108] sm:$0x1] %vm1168, %v4149
    %4277 = vst.msk [vmem:[#allocation2 + $0x118] sm:$0x1] %vm1168, %v4151
    %4278 = vst.msk [vmem:[#allocation2 + $0x128] sm:$0x1] %vm1168, %v4153
    %4279 = vst.msk [vmem:[#allocation2 + $0x138] sm:$0x1] %vm1168, %v4155
    %4280 = vst.msk [vmem:[#allocation2 + $0x148] sm:$0x1] %vm1168, %v4157
    %4281 = vst.msk [vmem:[#allocation2 + $0x158] sm:$0x1] %vm1168, %v4159
    %4282 = vst.msk [vmem:[#allocation2 + $0x168] sm:$0x1] %vm1168, %v4161
    %4283 = vst.msk [vmem:[#allocation2 + $0x178] sm:$0x1] %vm1168, %v4163
    %4284 = vst.msk [vmem:[#allocation2 + $0x188] sm:$0x1] %vm1168, %v4165
    %4285 = vst.msk [vmem:[#allocation2 + $0x198] sm:$0x1] %vm1168, %v4167
    %4286 = vst.msk [vmem:[#allocation2 + $0x1a8] sm:$0x1] %vm1168, %v4169
    %4287 = vst.msk [vmem:[#allocation2 + $0x1b8] sm:$0x1] %vm1168, %v4171
    %4288 = vst.msk [vmem:[#allocation2 + $0x1c8] sm:$0x1] %vm1168, %v4173
    %4289 = vst.msk [vmem:[#allocation2 + $0x1d8] sm:$0x1] %vm1168, %v4175
    %4290 = vst.msk [vmem:[#allocation2 + $0x1e8] sm:$0x1] %vm1168, %v4177
    %4291 = vst.msk [vmem:[#allocation2 + $0x1f8] sm:$0x1] %vm1168, %v4179
    %4292 = vst.msk [vmem:[#allocation2 + $0x208] sm:$0x1] %vm1168, %v4181
    %4293 = vst.msk [vmem:[#allocation2 + $0x218] sm:$0x1] %vm1168, %v4183
    %4294 = vst.msk [vmem:[#allocation2 + $0x228] sm:$0x1] %vm1168, %v4185
    %4295 = vst.msk [vmem:[#allocation2 + $0x238] sm:$0x1] %vm1168, %v4187
    %4296 = vst.msk [vmem:[#allocation2 + $0x248] sm:$0x1] %vm1168, %v4189
    %4297 = vst.msk [vmem:[#allocation2 + $0x258] sm:$0x1] %vm1168, %v4191
    %4298 = vst.msk [vmem:[#allocation2 + $0x268] sm:$0x1] %vm1168, %v4193
    %4299 = vst.msk [vmem:[#allocation2 + $0x278] sm:$0x1] %vm1168, %v4195
    %4300 = vst.msk [vmem:[#allocation2 + $0x288] sm:$0x1] %vm1168, %v4197
    %4301 = vst.msk [vmem:[#allocation2 + $0x298] sm:$0x1] %vm1168, %v4199
    %4302 = vst.msk [vmem:[#allocation2 + $0x2a8] sm:$0x1] %vm1168, %v4201
    %4303 = vst.msk [vmem:[#allocation2 + $0x2b8] sm:$0x1] %vm1168, %v4203
    %4304 = vst.msk [vmem:[#allocation2 + $0x2c8] sm:$0x1] %vm1168, %v4205
    %4305 = vst.msk [vmem:[#allocation2 + $0x2d8] sm:$0x1] %vm1168, %v4207
    %4306 = vst.msk [vmem:[#allocation2 + $0x2e8] sm:$0x1] %vm1168, %v4209
    %4307 = vst.msk [vmem:[#allocation2 + $0x2f8] sm:$0x1] %vm1168, %v4211
    %4308 = vrot.lane.b32.xlu0 %v3735, 76
    %v4309 = vpop.permute.xlu0 %4308
    %4310 = vrot.lane.b32.xlu0 %v3739, 76
    %v4311 = vpop.permute.xlu0 %4310
    %4312 = vrot.lane.b32.xlu0 %v3743, 76
    %v4313 = vpop.permute.xlu0 %4312
    %4314 = vrot.lane.b32.xlu0 %v3747, 76
    %v4315 = vpop.permute.xlu0 %4314
    %4316 = vrot.lane.b32.xlu0 %v3751, 76
    %v4317 = vpop.permute.xlu0 %4316
    %4318 = vrot.lane.b32.xlu0 %v3755, 76
    %v4319 = vpop.permute.xlu0 %4318
    %4320 = vrot.lane.b32.xlu0 %v3759, 76
    %v4321 = vpop.permute.xlu0 %4320
    %4322 = vrot.lane.b32.xlu0 %v3763, 76
    %v4323 = vpop.permute.xlu0 %4322
    %4324 = vrot.lane.b32.xlu0 %v3767, 76
    %v4325 = vpop.permute.xlu0 %4324
    %4326 = vrot.lane.b32.xlu0 %v3771, 76
    %v4327 = vpop.permute.xlu0 %4326
    %4328 = vrot.lane.b32.xlu0 %v3775, 76
    %v4329 = vpop.permute.xlu0 %4328
    %4330 = vrot.lane.b32.xlu0 %v3779, 76
    %v4331 = vpop.permute.xlu0 %4330
    %4332 = vrot.lane.b32.xlu0 %v3783, 76
    %v4333 = vpop.permute.xlu0 %4332
    %4334 = vrot.lane.b32.xlu0 %v3787, 76
    %v4335 = vpop.permute.xlu0 %4334
    %4336 = vrot.lane.b32.xlu0 %v3791, 76
    %v4337 = vpop.permute.xlu0 %4336
    %4338 = vrot.lane.b32.xlu0 %v3795, 76
    %v4339 = vpop.permute.xlu0 %4338
    %4340 = vrot.lane.b32.xlu0 %v3799, 76
    %v4341 = vpop.permute.xlu0 %4340
    %4342 = vrot.lane.b32.xlu0 %v3803, 76
    %v4343 = vpop.permute.xlu0 %4342
    %4344 = vrot.lane.b32.xlu0 %v3807, 76
    %v4345 = vpop.permute.xlu0 %4344
    %4346 = vrot.lane.b32.xlu0 %v3811, 76
    %v4347 = vpop.permute.xlu0 %4346
    %4348 = vrot.lane.b32.xlu0 %v3815, 76
    %v4349 = vpop.permute.xlu0 %4348
    %4350 = vrot.lane.b32.xlu0 %v3819, 76
    %v4351 = vpop.permute.xlu0 %4350
    %4352 = vrot.lane.b32.xlu0 %v3823, 76
    %v4353 = vpop.permute.xlu0 %4352
    %4354 = vrot.lane.b32.xlu0 %v3827, 76
    %v4355 = vpop.permute.xlu0 %4354
    %4356 = vrot.lane.b32.xlu0 %v3831, 76
    %v4357 = vpop.permute.xlu0 %4356
    %4358 = vrot.lane.b32.xlu0 %v3835, 76
    %v4359 = vpop.permute.xlu0 %4358
    %4360 = vrot.lane.b32.xlu0 %v3839, 76
    %v4361 = vpop.permute.xlu0 %4360
    %4362 = vrot.lane.b32.xlu0 %v3843, 76
    %v4363 = vpop.permute.xlu0 %4362
    %4364 = vrot.lane.b32.xlu0 %v3847, 76
    %v4365 = vpop.permute.xlu0 %4364
    %4366 = vrot.lane.b32.xlu0 %v3851, 76
    %v4367 = vpop.permute.xlu0 %4366
    %4368 = vrot.lane.b32.xlu0 %v3855, 76
    %v4369 = vpop.permute.xlu0 %4368
    %4370 = vrot.lane.b32.xlu0 %v3859, 76
    %v4371 = vpop.permute.xlu0 %4370
    %4372 = vrot.lane.b32.xlu0 %v3863, 76
    %v4373 = vpop.permute.xlu0 %4372
    %4374 = vrot.lane.b32.xlu0 %v3867, 76
    %v4375 = vpop.permute.xlu0 %4374
    %4376 = vrot.lane.b32.xlu0 %v3871, 76
    %v4377 = vpop.permute.xlu0 %4376
    %4378 = vrot.lane.b32.xlu0 %v3875, 76
    %v4379 = vpop.permute.xlu0 %4378
    %4380 = vrot.lane.b32.xlu0 %v3879, 76
    %v4381 = vpop.permute.xlu0 %4380
    %4382 = vrot.lane.b32.xlu0 %v3883, 76
    %v4383 = vpop.permute.xlu0 %4382
    %4384 = vrot.lane.b32.xlu0 %v3887, 76
    %v4385 = vpop.permute.xlu0 %4384
    %4386 = vrot.lane.b32.xlu0 %v3891, 76
    %v4387 = vpop.permute.xlu0 %4386
    %4388 = vrot.lane.b32.xlu0 %v3895, 76
    %v4389 = vpop.permute.xlu0 %4388
    %4390 = vrot.lane.b32.xlu0 %v3899, 76
    %v4391 = vpop.permute.xlu0 %4390
    %4392 = vrot.lane.b32.xlu0 %v3903, 76
    %v4393 = vpop.permute.xlu0 %4392
    %4394 = vrot.lane.b32.xlu0 %v3907, 76
    %v4395 = vpop.permute.xlu0 %4394
    %4396 = vrot.lane.b32.xlu0 %v3911, 76
    %v4397 = vpop.permute.xlu0 %4396
    %4398 = vrot.lane.b32.xlu0 %v3915, 76
    %v4399 = vpop.permute.xlu0 %4398
    %4400 = vrot.lane.b32.xlu0 %v3919, 76
    %v4401 = vpop.permute.xlu0 %4400
    %4402 = vrot.lane.b32.xlu0 %v3923, 76
    %v4403 = vpop.permute.xlu0 %4402
    %4452 = vst.msk [vmem:[#allocation2 + $0x9] sm:$0x1] %vm1168, %v4309
    %4453 = vst.msk [vmem:[#allocation2 + $0x19] sm:$0x1] %vm1168, %v4311
    %4454 = vst.msk [vmem:[#allocation2 + $0x29] sm:$0x1] %vm1168, %v4313
    %4455 = vst.msk [vmem:[#allocation2 + $0x39] sm:$0x1] %vm1168, %v4315
    %4456 = vst.msk [vmem:[#allocation2 + $0x49] sm:$0x1] %vm1168, %v4317
    %4457 = vst.msk [vmem:[#allocation2 + $0x59] sm:$0x1] %vm1168, %v4319
    %4458 = vst.msk [vmem:[#allocation2 + $0x69] sm:$0x1] %vm1168, %v4321
    %4459 = vst.msk [vmem:[#allocation2 + $0x79] sm:$0x1] %vm1168, %v4323
    %4460 = vst.msk [vmem:[#allocation2 + $0x89] sm:$0x1] %vm1168, %v4325
    %4461 = vst.msk [vmem:[#allocation2 + $0x99] sm:$0x1] %vm1168, %v4327
    %4462 = vst.msk [vmem:[#allocation2 + $0xa9] sm:$0x1] %vm1168, %v4329
    %4463 = vst.msk [vmem:[#allocation2 + $0xb9] sm:$0x1] %vm1168, %v4331
    %4464 = vst.msk [vmem:[#allocation2 + $0xc9] sm:$0x1] %vm1168, %v4333
    %4465 = vst.msk [vmem:[#allocation2 + $0xd9] sm:$0x1] %vm1168, %v4335
    %4466 = vst.msk [vmem:[#allocation2 + $0xe9] sm:$0x1] %vm1168, %v4337
    %4467 = vst.msk [vmem:[#allocation2 + $0xf9] sm:$0x1] %vm1168, %v4339
    %4468 = vst.msk [vmem:[#allocation2 + $0x109] sm:$0x1] %vm1168, %v4341
    %4469 = vst.msk [vmem:[#allocation2 + $0x119] sm:$0x1] %vm1168, %v4343
    %4470 = vst.msk [vmem:[#allocation2 + $0x129] sm:$0x1] %vm1168, %v4345
    %4471 = vst.msk [vmem:[#allocation2 + $0x139] sm:$0x1] %vm1168, %v4347
    %4472 = vst.msk [vmem:[#allocation2 + $0x149] sm:$0x1] %vm1168, %v4349
    %4473 = vst.msk [vmem:[#allocation2 + $0x159] sm:$0x1] %vm1168, %v4351
    %4474 = vst.msk [vmem:[#allocation2 + $0x169] sm:$0x1] %vm1168, %v4353
    %4475 = vst.msk [vmem:[#allocation2 + $0x179] sm:$0x1] %vm1168, %v4355
    %4476 = vst.msk [vmem:[#allocation2 + $0x189] sm:$0x1] %vm1168, %v4357
    %4477 = vst.msk [vmem:[#allocation2 + $0x199] sm:$0x1] %vm1168, %v4359
    %4478 = vst.msk [vmem:[#allocation2 + $0x1a9] sm:$0x1] %vm1168, %v4361
    %4479 = vst.msk [vmem:[#allocation2 + $0x1b9] sm:$0x1] %vm1168, %v4363
    %4480 = vst.msk [vmem:[#allocation2 + $0x1c9] sm:$0x1] %vm1168, %v4365
    %4481 = vst.msk [vmem:[#allocation2 + $0x1d9] sm:$0x1] %vm1168, %v4367
    %4482 = vst.msk [vmem:[#allocation2 + $0x1e9] sm:$0x1] %vm1168, %v4369
    %4483 = vst.msk [vmem:[#allocation2 + $0x1f9] sm:$0x1] %vm1168, %v4371
    %4484 = vst.msk [vmem:[#allocation2 + $0x209] sm:$0x1] %vm1168, %v4373
    %4485 = vst.msk [vmem:[#allocation2 + $0x219] sm:$0x1] %vm1168, %v4375
    %4486 = vst.msk [vmem:[#allocation2 + $0x229] sm:$0x1] %vm1168, %v4377
    %4487 = vst.msk [vmem:[#allocation2 + $0x239] sm:$0x1] %vm1168, %v4379
    %4488 = vst.msk [vmem:[#allocation2 + $0x249] sm:$0x1] %vm1168, %v4381
    %4489 = vst.msk [vmem:[#allocation2 + $0x259] sm:$0x1] %vm1168, %v4383
    %4490 = vst.msk [vmem:[#allocation2 + $0x269] sm:$0x1] %vm1168, %v4385
    %4491 = vst.msk [vmem:[#allocation2 + $0x279] sm:$0x1] %vm1168, %v4387
    %4492 = vst.msk [vmem:[#allocation2 + $0x289] sm:$0x1] %vm1168, %v4389
    %4493 = vst.msk [vmem:[#allocation2 + $0x299] sm:$0x1] %vm1168, %v4391
    %4494 = vst.msk [vmem:[#allocation2 + $0x2a9] sm:$0x1] %vm1168, %v4393
    %4495 = vst.msk [vmem:[#allocation2 + $0x2b9] sm:$0x1] %vm1168, %v4395
    %4496 = vst.msk [vmem:[#allocation2 + $0x2c9] sm:$0x1] %vm1168, %v4397
    %4497 = vst.msk [vmem:[#allocation2 + $0x2d9] sm:$0x1] %vm1168, %v4399
    %4498 = vst.msk [vmem:[#allocation2 + $0x2e9] sm:$0x1] %vm1168, %v4401
    %4499 = vst.msk [vmem:[#allocation2 + $0x2f9] sm:$0x1] %vm1168, %v4403
    %4500 = vrot.lane.b32.xlu0 %v3735, 56
    %v4501 = vpop.permute.xlu0 %4500
    %4502 = vrot.lane.b32.xlu0 %v3739, 56
    %v4503 = vpop.permute.xlu0 %4502
    %4504 = vrot.lane.b32.xlu0 %v3743, 56
    %v4505 = vpop.permute.xlu0 %4504
    %4506 = vrot.lane.b32.xlu0 %v3747, 56
    %v4507 = vpop.permute.xlu0 %4506
    %4508 = vrot.lane.b32.xlu0 %v3751, 56
    %v4509 = vpop.permute.xlu0 %4508
    %4510 = vrot.lane.b32.xlu0 %v3755, 56
    %v4511 = vpop.permute.xlu0 %4510
    %4512 = vrot.lane.b32.xlu0 %v3759, 56
    %v4513 = vpop.permute.xlu0 %4512
    %4514 = vrot.lane.b32.xlu0 %v3763, 56
    %v4515 = vpop.permute.xlu0 %4514
    %4516 = vrot.lane.b32.xlu0 %v3767, 56
    %v4517 = vpop.permute.xlu0 %4516
    %4518 = vrot.lane.b32.xlu0 %v3771, 56
    %v4519 = vpop.permute.xlu0 %4518
    %4520 = vrot.lane.b32.xlu0 %v3775, 56
    %v4521 = vpop.permute.xlu0 %4520
    %4522 = vrot.lane.b32.xlu0 %v3779, 56
    %v4523 = vpop.permute.xlu0 %4522
    %4524 = vrot.lane.b32.xlu0 %v3783, 56
    %v4525 = vpop.permute.xlu0 %4524
    %4526 = vrot.lane.b32.xlu0 %v3787, 56
    %v4527 = vpop.permute.xlu0 %4526
    %4528 = vrot.lane.b32.xlu0 %v3791, 56
    %v4529 = vpop.permute.xlu0 %4528
    %4530 = vrot.lane.b32.xlu0 %v3795, 56
    %v4531 = vpop.permute.xlu0 %4530
    %4532 = vrot.lane.b32.xlu0 %v3799, 56
    %v4533 = vpop.permute.xlu0 %4532
    %4534 = vrot.lane.b32.xlu0 %v3803, 56
    %v4535 = vpop.permute.xlu0 %4534
    %4536 = vrot.lane.b32.xlu0 %v3807, 56
    %v4537 = vpop.permute.xlu0 %4536
    %4538 = vrot.lane.b32.xlu0 %v3811, 56
    %v4539 = vpop.permute.xlu0 %4538
    %4540 = vrot.lane.b32.xlu0 %v3815, 56
    %v4541 = vpop.permute.xlu0 %4540
    %4542 = vrot.lane.b32.xlu0 %v3819, 56
    %v4543 = vpop.permute.xlu0 %4542
    %4544 = vrot.lane.b32.xlu0 %v3823, 56
    %v4545 = vpop.permute.xlu0 %4544
    %4546 = vrot.lane.b32.xlu0 %v3827, 56
    %v4547 = vpop.permute.xlu0 %4546
    %4548 = vrot.lane.b32.xlu0 %v3831, 56
    %v4549 = vpop.permute.xlu0 %4548
    %4550 = vrot.lane.b32.xlu0 %v3835, 56
    %v4551 = vpop.permute.xlu0 %4550
    %4552 = vrot.lane.b32.xlu0 %v3839, 56
    %v4553 = vpop.permute.xlu0 %4552
    %4554 = vrot.lane.b32.xlu0 %v3843, 56
    %v4555 = vpop.permute.xlu0 %4554
    %4556 = vrot.lane.b32.xlu0 %v3847, 56
    %v4557 = vpop.permute.xlu0 %4556
    %4558 = vrot.lane.b32.xlu0 %v3851, 56
    %v4559 = vpop.permute.xlu0 %4558
    %4560 = vrot.lane.b32.xlu0 %v3855, 56
    %v4561 = vpop.permute.xlu0 %4560
    %4562 = vrot.lane.b32.xlu0 %v3859, 56
    %v4563 = vpop.permute.xlu0 %4562
    %4564 = vrot.lane.b32.xlu0 %v3863, 56
    %v4565 = vpop.permute.xlu0 %4564
    %4566 = vrot.lane.b32.xlu0 %v3867, 56
    %v4567 = vpop.permute.xlu0 %4566
    %4568 = vrot.lane.b32.xlu0 %v3871, 56
    %v4569 = vpop.permute.xlu0 %4568
    %4570 = vrot.lane.b32.xlu0 %v3875, 56
    %v4571 = vpop.permute.xlu0 %4570
    %4572 = vrot.lane.b32.xlu0 %v3879, 56
    %v4573 = vpop.permute.xlu0 %4572
    %4574 = vrot.lane.b32.xlu0 %v3883, 56
    %v4575 = vpop.permute.xlu0 %4574
    %4576 = vrot.lane.b32.xlu0 %v3887, 56
    %v4577 = vpop.permute.xlu0 %4576
    %4578 = vrot.lane.b32.xlu0 %v3891, 56
    %v4579 = vpop.permute.xlu0 %4578
    %4580 = vrot.lane.b32.xlu0 %v3895, 56
    %v4581 = vpop.permute.xlu0 %4580
    %4582 = vrot.lane.b32.xlu0 %v3899, 56
    %v4583 = vpop.permute.xlu0 %4582
    %4584 = vrot.lane.b32.xlu0 %v3903, 56
    %v4585 = vpop.permute.xlu0 %4584
    %4586 = vrot.lane.b32.xlu0 %v3907, 56
    %v4587 = vpop.permute.xlu0 %4586
    %4588 = vrot.lane.b32.xlu0 %v3911, 56
    %v4589 = vpop.permute.xlu0 %4588
    %4590 = vrot.lane.b32.xlu0 %v3915, 56
    %v4591 = vpop.permute.xlu0 %4590
    %4592 = vrot.lane.b32.xlu0 %v3919, 56
    %v4593 = vpop.permute.xlu0 %4592
    %4594 = vrot.lane.b32.xlu0 %v3923, 56
    %v4595 = vpop.permute.xlu0 %4594
    %4644 = vst.msk [vmem:[#allocation2 + $0xa] sm:$0x1] %vm1168, %v4501
    %4645 = vst.msk [vmem:[#allocation2 + $0x1a] sm:$0x1] %vm1168, %v4503
    %4646 = vst.msk [vmem:[#allocation2 + $0x2a] sm:$0x1] %vm1168, %v4505
    %4647 = vst.msk [vmem:[#allocation2 + $0x3a] sm:$0x1] %vm1168, %v4507
    %4648 = vst.msk [vmem:[#allocation2 + $0x4a] sm:$0x1] %vm1168, %v4509
    %4649 = vst.msk [vmem:[#allocation2 + $0x5a] sm:$0x1] %vm1168, %v4511
    %4650 = vst.msk [vmem:[#allocation2 + $0x6a] sm:$0x1] %vm1168, %v4513
    %4651 = vst.msk [vmem:[#allocation2 + $0x7a] sm:$0x1] %vm1168, %v4515
    %4652 = vst.msk [vmem:[#allocation2 + $0x8a] sm:$0x1] %vm1168, %v4517
    %4653 = vst.msk [vmem:[#allocation2 + $0x9a] sm:$0x1] %vm1168, %v4519
    %4654 = vst.msk [vmem:[#allocation2 + $0xaa] sm:$0x1] %vm1168, %v4521
    %4655 = vst.msk [vmem:[#allocation2 + $0xba] sm:$0x1] %vm1168, %v4523
    %4656 = vst.msk [vmem:[#allocation2 + $0xca] sm:$0x1] %vm1168, %v4525
    %4657 = vst.msk [vmem:[#allocation2 + $0xda] sm:$0x1] %vm1168, %v4527
    %4658 = vst.msk [vmem:[#allocation2 + $0xea] sm:$0x1] %vm1168, %v4529
    %4659 = vst.msk [vmem:[#allocation2 + $0xfa] sm:$0x1] %vm1168, %v4531
    %4660 = vst.msk [vmem:[#allocation2 + $0x10a] sm:$0x1] %vm1168, %v4533
    %4661 = vst.msk [vmem:[#allocation2 + $0x11a] sm:$0x1] %vm1168, %v4535
    %4662 = vst.msk [vmem:[#allocation2 + $0x12a] sm:$0x1] %vm1168, %v4537
    %4663 = vst.msk [vmem:[#allocation2 + $0x13a] sm:$0x1] %vm1168, %v4539
    %4664 = vst.msk [vmem:[#allocation2 + $0x14a] sm:$0x1] %vm1168, %v4541
    %4665 = vst.msk [vmem:[#allocation2 + $0x15a] sm:$0x1] %vm1168, %v4543
    %4666 = vst.msk [vmem:[#allocation2 + $0x16a] sm:$0x1] %vm1168, %v4545
    %4667 = vst.msk [vmem:[#allocation2 + $0x17a] sm:$0x1] %vm1168, %v4547
    %4668 = vst.msk [vmem:[#allocation2 + $0x18a] sm:$0x1] %vm1168, %v4549
    %4669 = vst.msk [vmem:[#allocation2 + $0x19a] sm:$0x1] %vm1168, %v4551
    %4670 = vst.msk [vmem:[#allocation2 + $0x1aa] sm:$0x1] %vm1168, %v4553
    %4671 = vst.msk [vmem:[#allocation2 + $0x1ba] sm:$0x1] %vm1168, %v4555
    %4672 = vst.msk [vmem:[#allocation2 + $0x1ca] sm:$0x1] %vm1168, %v4557
    %4673 = vst.msk [vmem:[#allocation2 + $0x1da] sm:$0x1] %vm1168, %v4559
    %4674 = vst.msk [vmem:[#allocation2 + $0x1ea] sm:$0x1] %vm1168, %v4561
    %4675 = vst.msk [vmem:[#allocation2 + $0x1fa] sm:$0x1] %vm1168, %v4563
    %4676 = vst.msk [vmem:[#allocation2 + $0x20a] sm:$0x1] %vm1168, %v4565
    %4677 = vst.msk [vmem:[#allocation2 + $0x21a] sm:$0x1] %vm1168, %v4567
    %4678 = vst.msk [vmem:[#allocation2 + $0x22a] sm:$0x1] %vm1168, %v4569
    %4679 = vst.msk [vmem:[#allocation2 + $0x23a] sm:$0x1] %vm1168, %v4571
    %4680 = vst.msk [vmem:[#allocation2 + $0x24a] sm:$0x1] %vm1168, %v4573
    %4681 = vst.msk [vmem:[#allocation2 + $0x25a] sm:$0x1] %vm1168, %v4575
    %4682 = vst.msk [vmem:[#allocation2 + $0x26a] sm:$0x1] %vm1168, %v4577
    %4683 = vst.msk [vmem:[#allocation2 + $0x27a] sm:$0x1] %vm1168, %v4579
    %4684 = vst.msk [vmem:[#allocation2 + $0x28a] sm:$0x1] %vm1168, %v4581
    %4685 = vst.msk [vmem:[#allocation2 + $0x29a] sm:$0x1] %vm1168, %v4583
    %4686 = vst.msk [vmem:[#allocation2 + $0x2aa] sm:$0x1] %vm1168, %v4585
    %4687 = vst.msk [vmem:[#allocation2 + $0x2ba] sm:$0x1] %vm1168, %v4587
    %4688 = vst.msk [vmem:[#allocation2 + $0x2ca] sm:$0x1] %vm1168, %v4589
    %4689 = vst.msk [vmem:[#allocation2 + $0x2da] sm:$0x1] %vm1168, %v4591
    %4690 = vst.msk [vmem:[#allocation2 + $0x2ea] sm:$0x1] %vm1168, %v4593
    %4691 = vst.msk [vmem:[#allocation2 + $0x2fa] sm:$0x1] %vm1168, %v4595
    %4692 = vrot.lane.b32.xlu0 %v3735, 36
    %v4693 = vpop.permute.xlu0 %4692
    %4694 = vrot.lane.b32.xlu0 %v3739, 36
    %v4695 = vpop.permute.xlu0 %4694
    %4696 = vrot.lane.b32.xlu0 %v3743, 36
    %v4697 = vpop.permute.xlu0 %4696
    %4698 = vrot.lane.b32.xlu0 %v3747, 36
    %v4699 = vpop.permute.xlu0 %4698
    %4700 = vrot.lane.b32.xlu0 %v3751, 36
    %v4701 = vpop.permute.xlu0 %4700
    %4702 = vrot.lane.b32.xlu0 %v3755, 36
    %v4703 = vpop.permute.xlu0 %4702
    %4704 = vrot.lane.b32.xlu0 %v3759, 36
    %v4705 = vpop.permute.xlu0 %4704
    %4706 = vrot.lane.b32.xlu0 %v3763, 36
    %v4707 = vpop.permute.xlu0 %4706
    %4708 = vrot.lane.b32.xlu0 %v3767, 36
    %v4709 = vpop.permute.xlu0 %4708
    %4710 = vrot.lane.b32.xlu0 %v3771, 36
    %v4711 = vpop.permute.xlu0 %4710
    %4712 = vrot.lane.b32.xlu0 %v3775, 36
    %v4713 = vpop.permute.xlu0 %4712
    %4714 = vrot.lane.b32.xlu0 %v3779, 36
    %v4715 = vpop.permute.xlu0 %4714
    %4716 = vrot.lane.b32.xlu0 %v3783, 36
    %v4717 = vpop.permute.xlu0 %4716
    %4718 = vrot.lane.b32.xlu0 %v3787, 36
    %v4719 = vpop.permute.xlu0 %4718
    %4720 = vrot.lane.b32.xlu0 %v3791, 36
    %v4721 = vpop.permute.xlu0 %4720
    %4722 = vrot.lane.b32.xlu0 %v3795, 36
    %v4723 = vpop.permute.xlu0 %4722
    %4724 = vrot.lane.b32.xlu0 %v3799, 36
    %v4725 = vpop.permute.xlu0 %4724
    %4726 = vrot.lane.b32.xlu0 %v3803, 36
    %v4727 = vpop.permute.xlu0 %4726
    %4728 = vrot.lane.b32.xlu0 %v3807, 36
    %v4729 = vpop.permute.xlu0 %4728
    %4730 = vrot.lane.b32.xlu0 %v3811, 36
    %v4731 = vpop.permute.xlu0 %4730
    %4732 = vrot.lane.b32.xlu0 %v3815, 36
    %v4733 = vpop.permute.xlu0 %4732
    %4734 = vrot.lane.b32.xlu0 %v3819, 36
    %v4735 = vpop.permute.xlu0 %4734
    %4736 = vrot.lane.b32.xlu0 %v3823, 36
    %v4737 = vpop.permute.xlu0 %4736
    %4738 = vrot.lane.b32.xlu0 %v3827, 36
    %v4739 = vpop.permute.xlu0 %4738
    %4740 = vrot.lane.b32.xlu0 %v3831, 36
    %v4741 = vpop.permute.xlu0 %4740
    %4742 = vrot.lane.b32.xlu0 %v3835, 36
    %v4743 = vpop.permute.xlu0 %4742
    %4744 = vrot.lane.b32.xlu0 %v3839, 36
    %v4745 = vpop.permute.xlu0 %4744
    %4746 = vrot.lane.b32.xlu0 %v3843, 36
    %v4747 = vpop.permute.xlu0 %4746
    %4748 = vrot.lane.b32.xlu0 %v3847, 36
    %v4749 = vpop.permute.xlu0 %4748
    %4750 = vrot.lane.b32.xlu0 %v3851, 36
    %v4751 = vpop.permute.xlu0 %4750
    %4752 = vrot.lane.b32.xlu0 %v3855, 36
    %v4753 = vpop.permute.xlu0 %4752
    %4754 = vrot.lane.b32.xlu0 %v3859, 36
    %v4755 = vpop.permute.xlu0 %4754
    %4756 = vrot.lane.b32.xlu0 %v3863, 36
    %v4757 = vpop.permute.xlu0 %4756
    %4758 = vrot.lane.b32.xlu0 %v3867, 36
    %v4759 = vpop.permute.xlu0 %4758
    %4760 = vrot.lane.b32.xlu0 %v3871, 36
    %v4761 = vpop.permute.xlu0 %4760
    %4762 = vrot.lane.b32.xlu0 %v3875, 36
    %v4763 = vpop.permute.xlu0 %4762
    %4764 = vrot.lane.b32.xlu0 %v3879, 36
    %v4765 = vpop.permute.xlu0 %4764
    %4766 = vrot.lane.b32.xlu0 %v3883, 36
    %v4767 = vpop.permute.xlu0 %4766
    %4768 = vrot.lane.b32.xlu0 %v3887, 36
    %v4769 = vpop.permute.xlu0 %4768
    %4770 = vrot.lane.b32.xlu0 %v3891, 36
    %v4771 = vpop.permute.xlu0 %4770
    %4772 = vrot.lane.b32.xlu0 %v3895, 36
    %v4773 = vpop.permute.xlu0 %4772
    %4774 = vrot.lane.b32.xlu0 %v3899, 36
    %v4775 = vpop.permute.xlu0 %4774
    %4776 = vrot.lane.b32.xlu0 %v3903, 36
    %v4777 = vpop.permute.xlu0 %4776
    %4778 = vrot.lane.b32.xlu0 %v3907, 36
    %v4779 = vpop.permute.xlu0 %4778
    %4780 = vrot.lane.b32.xlu0 %v3911, 36
    %v4781 = vpop.permute.xlu0 %4780
    %4782 = vrot.lane.b32.xlu0 %v3915, 36
    %v4783 = vpop.permute.xlu0 %4782
    %4784 = vrot.lane.b32.xlu0 %v3919, 36
    %v4785 = vpop.permute.xlu0 %4784
    %4786 = vrot.lane.b32.xlu0 %v3923, 36
    %v4787 = vpop.permute.xlu0 %4786
    %4836 = vst.msk [vmem:[#allocation2 + $0xb] sm:$0x1] %vm1168, %v4693
    %4837 = vst.msk [vmem:[#allocation2 + $0x1b] sm:$0x1] %vm1168, %v4695
    %4838 = vst.msk [vmem:[#allocation2 + $0x2b] sm:$0x1] %vm1168, %v4697
    %4839 = vst.msk [vmem:[#allocation2 + $0x3b] sm:$0x1] %vm1168, %v4699
    %4840 = vst.msk [vmem:[#allocation2 + $0x4b] sm:$0x1] %vm1168, %v4701
    %4841 = vst.msk [vmem:[#allocation2 + $0x5b] sm:$0x1] %vm1168, %v4703
    %4842 = vst.msk [vmem:[#allocation2 + $0x6b] sm:$0x1] %vm1168, %v4705
    %4843 = vst.msk [vmem:[#allocation2 + $0x7b] sm:$0x1] %vm1168, %v4707
    %4844 = vst.msk [vmem:[#allocation2 + $0x8b] sm:$0x1] %vm1168, %v4709
    %4845 = vst.msk [vmem:[#allocation2 + $0x9b] sm:$0x1] %vm1168, %v4711
    %4846 = vst.msk [vmem:[#allocation2 + $0xab] sm:$0x1] %vm1168, %v4713
    %4847 = vst.msk [vmem:[#allocation2 + $0xbb] sm:$0x1] %vm1168, %v4715
    %4848 = vst.msk [vmem:[#allocation2 + $0xcb] sm:$0x1] %vm1168, %v4717
    %4849 = vst.msk [vmem:[#allocation2 + $0xdb] sm:$0x1] %vm1168, %v4719
    %4850 = vst.msk [vmem:[#allocation2 + $0xeb] sm:$0x1] %vm1168, %v4721
    %4851 = vst.msk [vmem:[#allocation2 + $0xfb] sm:$0x1] %vm1168, %v4723
    %4852 = vst.msk [vmem:[#allocation2 + $0x10b] sm:$0x1] %vm1168, %v4725
    %4853 = vst.msk [vmem:[#allocation2 + $0x11b] sm:$0x1] %vm1168, %v4727
    %4854 = vst.msk [vmem:[#allocation2 + $0x12b] sm:$0x1] %vm1168, %v4729
    %4855 = vst.msk [vmem:[#allocation2 + $0x13b] sm:$0x1] %vm1168, %v4731
    %4856 = vst.msk [vmem:[#allocation2 + $0x14b] sm:$0x1] %vm1168, %v4733
    %4857 = vst.msk [vmem:[#allocation2 + $0x15b] sm:$0x1] %vm1168, %v4735
    %4858 = vst.msk [vmem:[#allocation2 + $0x16b] sm:$0x1] %vm1168, %v4737
    %4859 = vst.msk [vmem:[#allocation2 + $0x17b] sm:$0x1] %vm1168, %v4739
    %4860 = vst.msk [vmem:[#allocation2 + $0x18b] sm:$0x1] %vm1168, %v4741
    %4861 = vst.msk [vmem:[#allocation2 + $0x19b] sm:$0x1] %vm1168, %v4743
    %4862 = vst.msk [vmem:[#allocation2 + $0x1ab] sm:$0x1] %vm1168, %v4745
    %4863 = vst.msk [vmem:[#allocation2 + $0x1bb] sm:$0x1] %vm1168, %v4747
    %4864 = vst.msk [vmem:[#allocation2 + $0x1cb] sm:$0x1] %vm1168, %v4749
    %4865 = vst.msk [vmem:[#allocation2 + $0x1db] sm:$0x1] %vm1168, %v4751
    %4866 = vst.msk [vmem:[#allocation2 + $0x1eb] sm:$0x1] %vm1168, %v4753
    %4867 = vst.msk [vmem:[#allocation2 + $0x1fb] sm:$0x1] %vm1168, %v4755
    %4868 = vst.msk [vmem:[#allocation2 + $0x20b] sm:$0x1] %vm1168, %v4757
    %4869 = vst.msk [vmem:[#allocation2 + $0x21b] sm:$0x1] %vm1168, %v4759
    %4870 = vst.msk [vmem:[#allocation2 + $0x22b] sm:$0x1] %vm1168, %v4761
    %4871 = vst.msk [vmem:[#allocation2 + $0x23b] sm:$0x1] %vm1168, %v4763
    %4872 = vst.msk [vmem:[#allocation2 + $0x24b] sm:$0x1] %vm1168, %v4765
    %4873 = vst.msk [vmem:[#allocation2 + $0x25b] sm:$0x1] %vm1168, %v4767
    %4874 = vst.msk [vmem:[#allocation2 + $0x26b] sm:$0x1] %vm1168, %v4769
    %4875 = vst.msk [vmem:[#allocation2 + $0x27b] sm:$0x1] %vm1168, %v4771
    %4876 = vst.msk [vmem:[#allocation2 + $0x28b] sm:$0x1] %vm1168, %v4773
    %4877 = vst.msk [vmem:[#allocation2 + $0x29b] sm:$0x1] %vm1168, %v4775
    %4878 = vst.msk [vmem:[#allocation2 + $0x2ab] sm:$0x1] %vm1168, %v4777
    %4879 = vst.msk [vmem:[#allocation2 + $0x2bb] sm:$0x1] %vm1168, %v4779
    %4880 = vst.msk [vmem:[#allocation2 + $0x2cb] sm:$0x1] %vm1168, %v4781
    %4881 = vst.msk [vmem:[#allocation2 + $0x2db] sm:$0x1] %vm1168, %v4783
    %4882 = vst.msk [vmem:[#allocation2 + $0x2eb] sm:$0x1] %vm1168, %v4785
    %4883 = vst.msk [vmem:[#allocation2 + $0x2fb] sm:$0x1] %vm1168, %v4787
    %v4884 = vld [vmem:[#allocation2] sm:$0xff]
    %v4885 = vld [vmem:[#allocation2 + $0x8] sm:$0xf]
    %v4886 = vld [vmem:[#allocation2 + $0x20] sm:$0xff]
    %v4887 = vld [vmem:[#allocation2 + $0x28] sm:$0xf]
    %v4888 = vld [vmem:[#allocation2 + $0x40] sm:$0xff]
    %v4889 = vld [vmem:[#allocation2 + $0x48] sm:$0xf]
    %v4890 = vld [vmem:[#allocation2 + $0x60] sm:$0xff]
    %v4891 = vld [vmem:[#allocation2 + $0x68] sm:$0xf]
    %v4892 = vld [vmem:[#allocation2 + $0x80] sm:$0xff]
    %v4893 = vld [vmem:[#allocation2 + $0x88] sm:$0xf]
    %v4894 = vld [vmem:[#allocation2 + $0xa0] sm:$0xff]
    %v4895 = vld [vmem:[#allocation2 + $0xa8] sm:$0xf]
    %v4896 = vld [vmem:[#allocation2 + $0xc0] sm:$0xff]
    %v4897 = vld [vmem:[#allocation2 + $0xc8] sm:$0xf]
    %v4898 = vld [vmem:[#allocation2 + $0xe0] sm:$0xff]
    %v4899 = vld [vmem:[#allocation2 + $0xe8] sm:$0xf]
    %v4900 = vld [vmem:[#allocation2 + $0x100] sm:$0xff]
    %v4901 = vld [vmem:[#allocation2 + $0x108] sm:$0xf]
    %v4902 = vld [vmem:[#allocation2 + $0x120] sm:$0xff]
    %v4903 = vld [vmem:[#allocation2 + $0x128] sm:$0xf]
    %v4904 = vld [vmem:[#allocation2 + $0x140] sm:$0xff]
    %v4905 = vld [vmem:[#allocation2 + $0x148] sm:$0xf]
    %v4906 = vld [vmem:[#allocation2 + $0x160] sm:$0xff]
    %v4907 = vld [vmem:[#allocation2 + $0x168] sm:$0xf]
    %v4908 = vld [vmem:[#allocation2 + $0x180] sm:$0xff]
    %v4909 = vld [vmem:[#allocation2 + $0x188] sm:$0xf]
    %v4910 = vld [vmem:[#allocation2 + $0x1a0] sm:$0xff]
    %v4911 = vld [vmem:[#allocation2 + $0x1a8] sm:$0xf]
    %v4912 = vld [vmem:[#allocation2 + $0x1c0] sm:$0xff]
    %v4913 = vld [vmem:[#allocation2 + $0x1c8] sm:$0xf]
    %v4914 = vld [vmem:[#allocation2 + $0x1e0] sm:$0xff]
    %v4915 = vld [vmem:[#allocation2 + $0x1e8] sm:$0xf]
    %v4916 = vld [vmem:[#allocation2 + $0x200] sm:$0xff]
    %v4917 = vld [vmem:[#allocation2 + $0x208] sm:$0xf]
    %v4918 = vld [vmem:[#allocation2 + $0x220] sm:$0xff]
    %v4919 = vld [vmem:[#allocation2 + $0x228] sm:$0xf]
    %v4920 = vld [vmem:[#allocation2 + $0x240] sm:$0xff]
    %v4921 = vld [vmem:[#allocation2 + $0x248] sm:$0xf]
    %v4922 = vld [vmem:[#allocation2 + $0x260] sm:$0xff]
    %v4923 = vld [vmem:[#allocation2 + $0x268] sm:$0xf]
    %v4924 = vld [vmem:[#allocation2 + $0x280] sm:$0xff]
    %v4925 = vld [vmem:[#allocation2 + $0x288] sm:$0xf]
    %v4926 = vld [vmem:[#allocation2 + $0x2a0] sm:$0xff]
    %v4927 = vld [vmem:[#allocation2 + $0x2a8] sm:$0xf]
    %v4928 = vld [vmem:[#allocation2 + $0x2c0] sm:$0xff]
    %v4929 = vld [vmem:[#allocation2 + $0x2c8] sm:$0xf]
    %v4930 = vld [vmem:[#allocation2 + $0x2e0] sm:$0xff]
    %v4931 = vld [vmem:[#allocation2 + $0x2e8] sm:$0xf]
    %s4932 = scalar_lea.vmem [#allocation2], 16
    %v4933 = vld [vmem:[%s4932] sm:$0xff]
    %v4934 = vld [vmem:[%s4932 + $0x8] sm:$0xf]
    %v4935 = vld [vmem:[%s4932 + $0x20] sm:$0xff]
    %v4936 = vld [vmem:[%s4932 + $0x28] sm:$0xf]
    %v4937 = vld [vmem:[%s4932 + $0x40] sm:$0xff]
    %v4938 = vld [vmem:[%s4932 + $0x48] sm:$0xf]
    %v4939 = vld [vmem:[%s4932 + $0x60] sm:$0xff]
    %v4940 = vld [vmem:[%s4932 + $0x68] sm:$0xf]
    %v4941 = vld [vmem:[%s4932 + $0x80] sm:$0xff]
    %v4942 = vld [vmem:[%s4932 + $0x88] sm:$0xf]
    %v4943 = vld [vmem:[%s4932 + $0xa0] sm:$0xff]
    %v4944 = vld [vmem:[%s4932 + $0xa8] sm:$0xf]
    %v4945 = vld [vmem:[%s4932 + $0xc0] sm:$0xff]
    %v4946 = vld [vmem:[%s4932 + $0xc8] sm:$0xf]
    %v4947 = vld [vmem:[%s4932 + $0xe0] sm:$0xff]
    %v4948 = vld [vmem:[%s4932 + $0xe8] sm:$0xf]
    %v4949 = vld [vmem:[%s4932 + $0x100] sm:$0xff]
    %v4950 = vld [vmem:[%s4932 + $0x108] sm:$0xf]
    %v4951 = vld [vmem:[%s4932 + $0x120] sm:$0xff]
    %v4952 = vld [vmem:[%s4932 + $0x128] sm:$0xf]
    %v4953 = vld [vmem:[%s4932 + $0x140] sm:$0xff]
    %v4954 = vld [vmem:[%s4932 + $0x148] sm:$0xf]
    %v4955 = vld [vmem:[%s4932 + $0x160] sm:$0xff]
    %v4956 = vld [vmem:[%s4932 + $0x168] sm:$0xf]
    %v4957 = vld [vmem:[%s4932 + $0x180] sm:$0xff]
    %v4958 = vld [vmem:[%s4932 + $0x188] sm:$0xf]
    %v4959 = vld [vmem:[%s4932 + $0x1a0] sm:$0xff]
    %v4960 = vld [vmem:[%s4932 + $0x1a8] sm:$0xf]
    %v4961 = vld [vmem:[%s4932 + $0x1c0] sm:$0xff]
    %v4962 = vld [vmem:[%s4932 + $0x1c8] sm:$0xf]
    %v4963 = vld [vmem:[%s4932 + $0x1e0] sm:$0xff]
    %v4964 = vld [vmem:[%s4932 + $0x1e8] sm:$0xf]
    %v4965 = vld [vmem:[%s4932 + $0x200] sm:$0xff]
    %v4966 = vld [vmem:[%s4932 + $0x208] sm:$0xf]
    %v4967 = vld [vmem:[%s4932 + $0x220] sm:$0xff]
    %v4968 = vld [vmem:[%s4932 + $0x228] sm:$0xf]
    %v4969 = vld [vmem:[%s4932 + $0x240] sm:$0xff]
    %v4970 = vld [vmem:[%s4932 + $0x248] sm:$0xf]
    %v4971 = vld [vmem:[%s4932 + $0x260] sm:$0xff]
    %v4972 = vld [vmem:[%s4932 + $0x268] sm:$0xf]
    %v4973 = vld [vmem:[%s4932 + $0x280] sm:$0xff]
    %v4974 = vld [vmem:[%s4932 + $0x288] sm:$0xf]
    %v4975 = vld [vmem:[%s4932 + $0x2a0] sm:$0xff]
    %v4976 = vld [vmem:[%s4932 + $0x2a8] sm:$0xf]
    %v4977 = vld [vmem:[%s4932 + $0x2c0] sm:$0xff]
    %v4978 = vld [vmem:[%s4932 + $0x2c8] sm:$0xf]
    %v4979 = vld [vmem:[%s4932 + $0x2e0] sm:$0xff]
    %v4980 = vld [vmem:[%s4932 + $0x2e8] sm:$0xf]
    %v4981 = vmax.f32 %v4884, %v4933
    %v4982 = vmax.f32 %v4885, %v4934
    %v4983 = vmax.f32 %v4886, %v4935
    %v4984 = vmax.f32 %v4887, %v4936
    %v4985 = vmax.f32 %v4888, %v4937
    %v4986 = vmax.f32 %v4889, %v4938
    %v4987 = vmax.f32 %v4890, %v4939
    %v4988 = vmax.f32 %v4891, %v4940
    %v4989 = vmax.f32 %v4892, %v4941
    %v4990 = vmax.f32 %v4893, %v4942
    %v4991 = vmax.f32 %v4894, %v4943
    %v4992 = vmax.f32 %v4895, %v4944
    %v4993 = vmax.f32 %v4896, %v4945
    %v4994 = vmax.f32 %v4897, %v4946
    %v4995 = vmax.f32 %v4898, %v4947
    %v4996 = vmax.f32 %v4899, %v4948
    %v4997 = vmax.f32 %v4900, %v4949
    %v4998 = vmax.f32 %v4901, %v4950
    %v4999 = vmax.f32 %v4902, %v4951
    %v5000 = vmax.f32 %v4903, %v4952
    %v5001 = vmax.f32 %v4904, %v4953
    %v5002 = vmax.f32 %v4905, %v4954
    %v5003 = vmax.f32 %v4906, %v4955
    %v5004 = vmax.f32 %v4907, %v4956
    %v5005 = vmax.f32 %v4908, %v4957
    %v5006 = vmax.f32 %v4909, %v4958
    %v5007 = vmax.f32 %v4910, %v4959
    %v5008 = vmax.f32 %v4911, %v4960
    %v5009 = vmax.f32 %v4912, %v4961
    %v5010 = vmax.f32 %v4913, %v4962
    %v5011 = vmax.f32 %v4914, %v4963
    %v5012 = vmax.f32 %v4915, %v4964
    %v5013 = vmax.f32 %v4916, %v4965
    %v5014 = vmax.f32 %v4917, %v4966
    %v5015 = vmax.f32 %v4918, %v4967
    %v5016 = vmax.f32 %v4919, %v4968
    %v5017 = vmax.f32 %v4920, %v4969
    %v5018 = vmax.f32 %v4921, %v4970
    %v5019 = vmax.f32 %v4922, %v4971
    %v5020 = vmax.f32 %v4923, %v4972
    %v5021 = vmax.f32 %v4924, %v4973
    %v5022 = vmax.f32 %v4925, %v4974
    %v5023 = vmax.f32 %v4926, %v4975
    %v5024 = vmax.f32 %v4927, %v4976
    %v5025 = vmax.f32 %v4928, %v4977
    %v5026 = vmax.f32 %v4929, %v4978
    %v5027 = vmax.f32 %v4930, %v4979
    %v5028 = vmax.f32 %v4931, %v4980
    %v5029 = vld [vmem:[%s2] sm:$0x1]
    %v5031 = vlaneseq
    %v5032 = vshrl.u32 %v5031, 7
    %v5033 = vsub.s32 0, %v5032
    %v5034 = vrot.slane %v5029, %v5033
    %v5036 = vadd.f32 %v4981, %v5034
    %v5037 = vadd.f32 %v4982, %v5034
    %v5038 = vadd.f32 %v4983, %v5034
    %v5039 = vadd.f32 %v4984, %v5034
    %v5040 = vadd.f32 %v4985, %v5034
    %v5041 = vadd.f32 %v4986, %v5034
    %v5042 = vadd.f32 %v4987, %v5034
    %v5043 = vadd.f32 %v4988, %v5034
    %v5044 = vadd.f32 %v4989, %v5034
    %v5045 = vadd.f32 %v4990, %v5034
    %v5046 = vadd.f32 %v4991, %v5034
    %v5047 = vadd.f32 %v4992, %v5034
    %v5048 = vadd.f32 %v4993, %v5034
    %v5049 = vadd.f32 %v4994, %v5034
    %v5050 = vadd.f32 %v4995, %v5034
    %v5051 = vadd.f32 %v4996, %v5034
    %v5052 = vadd.f32 %v4997, %v5034
    %v5053 = vadd.f32 %v4998, %v5034
    %v5054 = vadd.f32 %v4999, %v5034
    %v5055 = vadd.f32 %v5000, %v5034
    %v5056 = vadd.f32 %v5001, %v5034
    %v5057 = vadd.f32 %v5002, %v5034
    %v5058 = vadd.f32 %v5003, %v5034
    %v5059 = vadd.f32 %v5004, %v5034
    %v5060 = vadd.f32 %v5005, %v5034
    %v5061 = vadd.f32 %v5006, %v5034
    %v5062 = vadd.f32 %v5007, %v5034
    %v5063 = vadd.f32 %v5008, %v5034
    %v5064 = vadd.f32 %v5009, %v5034
    %v5065 = vadd.f32 %v5010, %v5034
    %v5066 = vadd.f32 %v5011, %v5034
    %v5067 = vadd.f32 %v5012, %v5034
    %v5068 = vadd.f32 %v5013, %v5034
    %v5069 = vadd.f32 %v5014, %v5034
    %v5070 = vadd.f32 %v5015, %v5034
    %v5071 = vadd.f32 %v5016, %v5034
    %v5072 = vadd.f32 %v5017, %v5034
    %v5073 = vadd.f32 %v5018, %v5034
    %v5074 = vadd.f32 %v5019, %v5034
    %v5075 = vadd.f32 %v5020, %v5034
    %v5076 = vadd.f32 %v5021, %v5034
    %v5077 = vadd.f32 %v5022, %v5034
    %v5078 = vadd.f32 %v5023, %v5034
    %v5079 = vadd.f32 %v5024, %v5034
    %v5080 = vadd.f32 %v5025, %v5034
    %v5081 = vadd.f32 %v5026, %v5034
    %v5082 = vadd.f32 %v5027, %v5034
    %v5083 = vadd.f32 %v5028, %v5034
    %v5084 = vmax.f32 %v5036, 0.0
    %v5085 = vmax.f32 %v5037, 0.0
    %v5086 = vmax.f32 %v5038, 0.0
    %v5087 = vmax.f32 %v5039, 0.0
    %v5088 = vmax.f32 %v5040, 0.0
    %v5089 = vmax.f32 %v5041, 0.0
    %v5090 = vmax.f32 %v5042, 0.0
    %v5091 = vmax.f32 %v5043, 0.0
    %v5092 = vmax.f32 %v5044, 0.0
    %v5093 = vmax.f32 %v5045, 0.0
    %v5094 = vmax.f32 %v5046, 0.0
    %v5095 = vmax.f32 %v5047, 0.0
    %v5096 = vmax.f32 %v5048, 0.0
    %v5097 = vmax.f32 %v5049, 0.0
    %v5098 = vmax.f32 %v5050, 0.0
    %v5099 = vmax.f32 %v5051, 0.0
    %v5100 = vmax.f32 %v5052, 0.0
    %v5101 = vmax.f32 %v5053, 0.0
    %v5102 = vmax.f32 %v5054, 0.0
    %v5103 = vmax.f32 %v5055, 0.0
    %v5104 = vmax.f32 %v5056, 0.0
    %v5105 = vmax.f32 %v5057, 0.0
    %v5106 = vmax.f32 %v5058, 0.0
    %v5107 = vmax.f32 %v5059, 0.0
    %v5108 = vmax.f32 %v5060, 0.0
    %v5109 = vmax.f32 %v5061, 0.0
    %v5110 = vmax.f32 %v5062, 0.0
    %v5111 = vmax.f32 %v5063, 0.0
    %v5112 = vmax.f32 %v5064, 0.0
    %v5113 = vmax.f32 %v5065, 0.0
    %v5114 = vmax.f32 %v5066, 0.0
    %v5115 = vmax.f32 %v5067, 0.0
    %v5116 = vmax.f32 %v5068, 0.0
    %v5117 = vmax.f32 %v5069, 0.0
    %v5118 = vmax.f32 %v5070, 0.0
    %v5119 = vmax.f32 %v5071, 0.0
    %v5120 = vmax.f32 %v5072, 0.0
    %v5121 = vmax.f32 %v5073, 0.0
    %v5122 = vmax.f32 %v5074, 0.0
    %v5123 = vmax.f32 %v5075, 0.0
    %v5124 = vmax.f32 %v5076, 0.0
    %v5125 = vmax.f32 %v5077, 0.0
    %v5126 = vmax.f32 %v5078, 0.0
    %v5127 = vmax.f32 %v5079, 0.0
    %v5128 = vmax.f32 %v5080, 0.0
    %v5129 = vmax.f32 %v5081, 0.0
    %v5130 = vmax.f32 %v5082, 0.0
    %v5131 = vmax.f32 %v5083, 0.0
    %v5132 = vrsqrt.pop %v5084
    %v5133 = vmul.f32 %v5084, %v5132
    %vm5134 = vcmp.eq.f32.partialorder %v5084, inf
    %v5135 = vsel %vm5134, %v5084, %v5133
    %vm5136 = vcmp.eq.f32.partialorder %v5084, 0.0
    %v5137 = vand.u32 %v5084, 2147483648
    %v5138 = vsel %vm5136, %v5137, %v5135
    %v5139 = vrsqrt.pop %v5085
    %v5140 = vmul.f32 %v5085, %v5139
    %vm5141 = vcmp.eq.f32.partialorder %v5085, inf
    %v5142 = vsel %vm5141, %v5085, %v5140
    %vm5143 = vcmp.eq.f32.partialorder %v5085, 0.0
    %v5144 = vand.u32 %v5085, 2147483648
    %v5145 = vsel %vm5143, %v5144, %v5142
    %v5146 = vrsqrt.pop %v5086
    %v5147 = vmul.f32 %v5086, %v5146
    %vm5148 = vcmp.eq.f32.partialorder %v5086, inf
    %v5149 = vsel %vm5148, %v5086, %v5147
    %vm5150 = vcmp.eq.f32.partialorder %v5086, 0.0
    %v5151 = vand.u32 %v5086, 2147483648
    %v5152 = vsel %vm5150, %v5151, %v5149
    %v5153 = vrsqrt.pop %v5087
    %v5154 = vmul.f32 %v5087, %v5153
    %vm5155 = vcmp.eq.f32.partialorder %v5087, inf
    %v5156 = vsel %vm5155, %v5087, %v5154
    %vm5157 = vcmp.eq.f32.partialorder %v5087, 0.0
    %v5158 = vand.u32 %v5087, 2147483648
    %v5159 = vsel %vm5157, %v5158, %v5156
    %v5160 = vrsqrt.pop %v5088
    %v5161 = vmul.f32 %v5088, %v5160
    %vm5162 = vcmp.eq.f32.partialorder %v5088, inf
    %v5163 = vsel %vm5162, %v5088, %v5161
    %vm5164 = vcmp.eq.f32.partialorder %v5088, 0.0
    %v5165 = vand.u32 %v5088, 2147483648
    %v5166 = vsel %vm5164, %v5165, %v5163
    %v5167 = vrsqrt.pop %v5089
    %v5168 = vmul.f32 %v5089, %v5167
    %vm5169 = vcmp.eq.f32.partialorder %v5089, inf
    %v5170 = vsel %vm5169, %v5089, %v5168
    %vm5171 = vcmp.eq.f32.partialorder %v5089, 0.0
    %v5172 = vand.u32 %v5089, 2147483648
    %v5173 = vsel %vm5171, %v5172, %v5170
    %v5174 = vrsqrt.pop %v5090
    %v5175 = vmul.f32 %v5090, %v5174
    %vm5176 = vcmp.eq.f32.partialorder %v5090, inf
    %v5177 = vsel %vm5176, %v5090, %v5175
    %vm5178 = vcmp.eq.f32.partialorder %v5090, 0.0
    %v5179 = vand.u32 %v5090, 2147483648
    %v5180 = vsel %vm5178, %v5179, %v5177
    %v5181 = vrsqrt.pop %v5091
    %v5182 = vmul.f32 %v5091, %v5181
    %vm5183 = vcmp.eq.f32.partialorder %v5091, inf
    %v5184 = vsel %vm5183, %v5091, %v5182
    %vm5185 = vcmp.eq.f32.partialorder %v5091, 0.0
    %v5186 = vand.u32 %v5091, 2147483648
    %v5187 = vsel %vm5185, %v5186, %v5184
    %v5188 = vrsqrt.pop %v5092
    %v5189 = vmul.f32 %v5092, %v5188
    %vm5190 = vcmp.eq.f32.partialorder %v5092, inf
    %v5191 = vsel %vm5190, %v5092, %v5189
    %vm5192 = vcmp.eq.f32.partialorder %v5092, 0.0
    %v5193 = vand.u32 %v5092, 2147483648
    %v5194 = vsel %vm5192, %v5193, %v5191
    %v5195 = vrsqrt.pop %v5093
    %v5196 = vmul.f32 %v5093, %v5195
    %vm5197 = vcmp.eq.f32.partialorder %v5093, inf
    %v5198 = vsel %vm5197, %v5093, %v5196
    %vm5199 = vcmp.eq.f32.partialorder %v5093, 0.0
    %v5200 = vand.u32 %v5093, 2147483648
    %v5201 = vsel %vm5199, %v5200, %v5198
    %v5202 = vrsqrt.pop %v5094
    %v5203 = vmul.f32 %v5094, %v5202
    %vm5204 = vcmp.eq.f32.partialorder %v5094, inf
    %v5205 = vsel %vm5204, %v5094, %v5203
    %vm5206 = vcmp.eq.f32.partialorder %v5094, 0.0
    %v5207 = vand.u32 %v5094, 2147483648
    %v5208 = vsel %vm5206, %v5207, %v5205
    %v5209 = vrsqrt.pop %v5095
    %v5210 = vmul.f32 %v5095, %v5209
    %vm5211 = vcmp.eq.f32.partialorder %v5095, inf
    %v5212 = vsel %vm5211, %v5095, %v5210
    %vm5213 = vcmp.eq.f32.partialorder %v5095, 0.0
    %v5214 = vand.u32 %v5095, 2147483648
    %v5215 = vsel %vm5213, %v5214, %v5212
    %v5216 = vrsqrt.pop %v5096
    %v5217 = vmul.f32 %v5096, %v5216
    %vm5218 = vcmp.eq.f32.partialorder %v5096, inf
    %v5219 = vsel %vm5218, %v5096, %v5217
    %vm5220 = vcmp.eq.f32.partialorder %v5096, 0.0
    %v5221 = vand.u32 %v5096, 2147483648
    %v5222 = vsel %vm5220, %v5221, %v5219
    %v5223 = vrsqrt.pop %v5097
    %v5224 = vmul.f32 %v5097, %v5223
    %vm5225 = vcmp.eq.f32.partialorder %v5097, inf
    %v5226 = vsel %vm5225, %v5097, %v5224
    %vm5227 = vcmp.eq.f32.partialorder %v5097, 0.0
    %v5228 = vand.u32 %v5097, 2147483648
    %v5229 = vsel %vm5227, %v5228, %v5226
    %v5230 = vrsqrt.pop %v5098
    %v5231 = vmul.f32 %v5098, %v5230
    %vm5232 = vcmp.eq.f32.partialorder %v5098, inf
    %v5233 = vsel %vm5232, %v5098, %v5231
    %vm5234 = vcmp.eq.f32.partialorder %v5098, 0.0
    %v5235 = vand.u32 %v5098, 2147483648
    %v5236 = vsel %vm5234, %v5235, %v5233
    %v5237 = vrsqrt.pop %v5099
    %v5238 = vmul.f32 %v5099, %v5237
    %vm5239 = vcmp.eq.f32.partialorder %v5099, inf
    %v5240 = vsel %vm5239, %v5099, %v5238
    %vm5241 = vcmp.eq.f32.partialorder %v5099, 0.0
    %v5242 = vand.u32 %v5099, 2147483648
    %v5243 = vsel %vm5241, %v5242, %v5240
    %v5244 = vrsqrt.pop %v5100
    %v5245 = vmul.f32 %v5100, %v5244
    %vm5246 = vcmp.eq.f32.partialorder %v5100, inf
    %v5247 = vsel %vm5246, %v5100, %v5245
    %vm5248 = vcmp.eq.f32.partialorder %v5100, 0.0
    %v5249 = vand.u32 %v5100, 2147483648
    %v5250 = vsel %vm5248, %v5249, %v5247
    %v5251 = vrsqrt.pop %v5101
    %v5252 = vmul.f32 %v5101, %v5251
    %vm5253 = vcmp.eq.f32.partialorder %v5101, inf
    %v5254 = vsel %vm5253, %v5101, %v5252
    %vm5255 = vcmp.eq.f32.partialorder %v5101, 0.0
    %v5256 = vand.u32 %v5101, 2147483648
    %v5257 = vsel %vm5255, %v5256, %v5254
    %v5258 = vrsqrt.pop %v5102
    %v5259 = vmul.f32 %v5102, %v5258
    %vm5260 = vcmp.eq.f32.partialorder %v5102, inf
    %v5261 = vsel %vm5260, %v5102, %v5259
    %vm5262 = vcmp.eq.f32.partialorder %v5102, 0.0
    %v5263 = vand.u32 %v5102, 2147483648
    %v5264 = vsel %vm5262, %v5263, %v5261
    %v5265 = vrsqrt.pop %v5103
    %v5266 = vmul.f32 %v5103, %v5265
    %vm5267 = vcmp.eq.f32.partialorder %v5103, inf
    %v5268 = vsel %vm5267, %v5103, %v5266
    %vm5269 = vcmp.eq.f32.partialorder %v5103, 0.0
    %v5270 = vand.u32 %v5103, 2147483648
    %v5271 = vsel %vm5269, %v5270, %v5268
    %v5272 = vrsqrt.pop %v5104
    %v5273 = vmul.f32 %v5104, %v5272
    %vm5274 = vcmp.eq.f32.partialorder %v5104, inf
    %v5275 = vsel %vm5274, %v5104, %v5273
    %vm5276 = vcmp.eq.f32.partialorder %v5104, 0.0
    %v5277 = vand.u32 %v5104, 2147483648
    %v5278 = vsel %vm5276, %v5277, %v5275
    %v5279 = vrsqrt.pop %v5105
    %v5280 = vmul.f32 %v5105, %v5279
    %vm5281 = vcmp.eq.f32.partialorder %v5105, inf
    %v5282 = vsel %vm5281, %v5105, %v5280
    %vm5283 = vcmp.eq.f32.partialorder %v5105, 0.0
    %v5284 = vand.u32 %v5105, 2147483648
    %v5285 = vsel %vm5283, %v5284, %v5282
    %v5286 = vrsqrt.pop %v5106
    %v5287 = vmul.f32 %v5106, %v5286
    %vm5288 = vcmp.eq.f32.partialorder %v5106, inf
    %v5289 = vsel %vm5288, %v5106, %v5287
    %vm5290 = vcmp.eq.f32.partialorder %v5106, 0.0
    %v5291 = vand.u32 %v5106, 2147483648
    %v5292 = vsel %vm5290, %v5291, %v5289
    %v5293 = vrsqrt.pop %v5107
    %v5294 = vmul.f32 %v5107, %v5293
    %vm5295 = vcmp.eq.f32.partialorder %v5107, inf
    %v5296 = vsel %vm5295, %v5107, %v5294
    %vm5297 = vcmp.eq.f32.partialorder %v5107, 0.0
    %v5298 = vand.u32 %v5107, 2147483648
    %v5299 = vsel %vm5297, %v5298, %v5296
    %v5300 = vrsqrt.pop %v5108
    %v5301 = vmul.f32 %v5108, %v5300
    %vm5302 = vcmp.eq.f32.partialorder %v5108, inf
    %v5303 = vsel %vm5302, %v5108, %v5301
    %vm5304 = vcmp.eq.f32.partialorder %v5108, 0.0
    %v5305 = vand.u32 %v5108, 2147483648
    %v5306 = vsel %vm5304, %v5305, %v5303
    %v5307 = vrsqrt.pop %v5109
    %v5308 = vmul.f32 %v5109, %v5307
    %vm5309 = vcmp.eq.f32.partialorder %v5109, inf
    %v5310 = vsel %vm5309, %v5109, %v5308
    %vm5311 = vcmp.eq.f32.partialorder %v5109, 0.0
    %v5312 = vand.u32 %v5109, 2147483648
    %v5313 = vsel %vm5311, %v5312, %v5310
    %v5314 = vrsqrt.pop %v5110
    %v5315 = vmul.f32 %v5110, %v5314
    %vm5316 = vcmp.eq.f32.partialorder %v5110, inf
    %v5317 = vsel %vm5316, %v5110, %v5315
    %vm5318 = vcmp.eq.f32.partialorder %v5110, 0.0
    %v5319 = vand.u32 %v5110, 2147483648
    %v5320 = vsel %vm5318, %v5319, %v5317
    %v5321 = vrsqrt.pop %v5111
    %v5322 = vmul.f32 %v5111, %v5321
    %vm5323 = vcmp.eq.f32.partialorder %v5111, inf
    %v5324 = vsel %vm5323, %v5111, %v5322
    %vm5325 = vcmp.eq.f32.partialorder %v5111, 0.0
    %v5326 = vand.u32 %v5111, 2147483648
    %v5327 = vsel %vm5325, %v5326, %v5324
    %v5328 = vrsqrt.pop %v5112
    %v5329 = vmul.f32 %v5112, %v5328
    %vm5330 = vcmp.eq.f32.partialorder %v5112, inf
    %v5331 = vsel %vm5330, %v5112, %v5329
    %vm5332 = vcmp.eq.f32.partialorder %v5112, 0.0
    %v5333 = vand.u32 %v5112, 2147483648
    %v5334 = vsel %vm5332, %v5333, %v5331
    %v5335 = vrsqrt.pop %v5113
    %v5336 = vmul.f32 %v5113, %v5335
    %vm5337 = vcmp.eq.f32.partialorder %v5113, inf
    %v5338 = vsel %vm5337, %v5113, %v5336
    %vm5339 = vcmp.eq.f32.partialorder %v5113, 0.0
    %v5340 = vand.u32 %v5113, 2147483648
    %v5341 = vsel %vm5339, %v5340, %v5338
    %v5342 = vrsqrt.pop %v5114
    %v5343 = vmul.f32 %v5114, %v5342
    %vm5344 = vcmp.eq.f32.partialorder %v5114, inf
    %v5345 = vsel %vm5344, %v5114, %v5343
    %vm5346 = vcmp.eq.f32.partialorder %v5114, 0.0
    %v5347 = vand.u32 %v5114, 2147483648
    %v5348 = vsel %vm5346, %v5347, %v5345
    %v5349 = vrsqrt.pop %v5115
    %v5350 = vmul.f32 %v5115, %v5349
    %vm5351 = vcmp.eq.f32.partialorder %v5115, inf
    %v5352 = vsel %vm5351, %v5115, %v5350
    %vm5353 = vcmp.eq.f32.partialorder %v5115, 0.0
    %v5354 = vand.u32 %v5115, 2147483648
    %v5355 = vsel %vm5353, %v5354, %v5352
    %v5356 = vrsqrt.pop %v5116
    %v5357 = vmul.f32 %v5116, %v5356
    %vm5358 = vcmp.eq.f32.partialorder %v5116, inf
    %v5359 = vsel %vm5358, %v5116, %v5357
    %vm5360 = vcmp.eq.f32.partialorder %v5116, 0.0
    %v5361 = vand.u32 %v5116, 2147483648
    %v5362 = vsel %vm5360, %v5361, %v5359
    %v5363 = vrsqrt.pop %v5117
    %v5364 = vmul.f32 %v5117, %v5363
    %vm5365 = vcmp.eq.f32.partialorder %v5117, inf
    %v5366 = vsel %vm5365, %v5117, %v5364
    %vm5367 = vcmp.eq.f32.partialorder %v5117, 0.0
    %v5368 = vand.u32 %v5117, 2147483648
    %v5369 = vsel %vm5367, %v5368, %v5366
    %v5370 = vrsqrt.pop %v5118
    %v5371 = vmul.f32 %v5118, %v5370
    %vm5372 = vcmp.eq.f32.partialorder %v5118, inf
    %v5373 = vsel %vm5372, %v5118, %v5371
    %vm5374 = vcmp.eq.f32.partialorder %v5118, 0.0
    %v5375 = vand.u32 %v5118, 2147483648
    %v5376 = vsel %vm5374, %v5375, %v5373
    %v5377 = vrsqrt.pop %v5119
    %v5378 = vmul.f32 %v5119, %v5377
    %vm5379 = vcmp.eq.f32.partialorder %v5119, inf
    %v5380 = vsel %vm5379, %v5119, %v5378
    %vm5381 = vcmp.eq.f32.partialorder %v5119, 0.0
    %v5382 = vand.u32 %v5119, 2147483648
    %v5383 = vsel %vm5381, %v5382, %v5380
    %v5384 = vrsqrt.pop %v5120
    %v5385 = vmul.f32 %v5120, %v5384
    %vm5386 = vcmp.eq.f32.partialorder %v5120, inf
    %v5387 = vsel %vm5386, %v5120, %v5385
    %vm5388 = vcmp.eq.f32.partialorder %v5120, 0.0
    %v5389 = vand.u32 %v5120, 2147483648
    %v5390 = vsel %vm5388, %v5389, %v5387
    %v5391 = vrsqrt.pop %v5121
    %v5392 = vmul.f32 %v5121, %v5391
    %vm5393 = vcmp.eq.f32.partialorder %v5121, inf
    %v5394 = vsel %vm5393, %v5121, %v5392
    %vm5395 = vcmp.eq.f32.partialorder %v5121, 0.0
    %v5396 = vand.u32 %v5121, 2147483648
    %v5397 = vsel %vm5395, %v5396, %v5394
    %v5398 = vrsqrt.pop %v5122
    %v5399 = vmul.f32 %v5122, %v5398
    %vm5400 = vcmp.eq.f32.partialorder %v5122, inf
    %v5401 = vsel %vm5400, %v5122, %v5399
    %vm5402 = vcmp.eq.f32.partialorder %v5122, 0.0
    %v5403 = vand.u32 %v5122, 2147483648
    %v5404 = vsel %vm5402, %v5403, %v5401
    %v5405 = vrsqrt.pop %v5123
    %v5406 = vmul.f32 %v5123, %v5405
    %vm5407 = vcmp.eq.f32.partialorder %v5123, inf
    %v5408 = vsel %vm5407, %v5123, %v5406
    %vm5409 = vcmp.eq.f32.partialorder %v5123, 0.0
    %v5410 = vand.u32 %v5123, 2147483648
    %v5411 = vsel %vm5409, %v5410, %v5408
    %v5412 = vrsqrt.pop %v5124
    %v5413 = vmul.f32 %v5124, %v5412
    %vm5414 = vcmp.eq.f32.partialorder %v5124, inf
    %v5415 = vsel %vm5414, %v5124, %v5413
    %vm5416 = vcmp.eq.f32.partialorder %v5124, 0.0
    %v5417 = vand.u32 %v5124, 2147483648
    %v5418 = vsel %vm5416, %v5417, %v5415
    %v5419 = vrsqrt.pop %v5125
    %v5420 = vmul.f32 %v5125, %v5419
    %vm5421 = vcmp.eq.f32.partialorder %v5125, inf
    %v5422 = vsel %vm5421, %v5125, %v5420
    %vm5423 = vcmp.eq.f32.partialorder %v5125, 0.0
    %v5424 = vand.u32 %v5125, 2147483648
    %v5425 = vsel %vm5423, %v5424, %v5422
    %v5426 = vrsqrt.pop %v5126
    %v5427 = vmul.f32 %v5126, %v5426
    %vm5428 = vcmp.eq.f32.partialorder %v5126, inf
    %v5429 = vsel %vm5428, %v5126, %v5427
    %vm5430 = vcmp.eq.f32.partialorder %v5126, 0.0
    %v5431 = vand.u32 %v5126, 2147483648
    %v5432 = vsel %vm5430, %v5431, %v5429
    %v5433 = vrsqrt.pop %v5127
    %v5434 = vmul.f32 %v5127, %v5433
    %vm5435 = vcmp.eq.f32.partialorder %v5127, inf
    %v5436 = vsel %vm5435, %v5127, %v5434
    %vm5437 = vcmp.eq.f32.partialorder %v5127, 0.0
    %v5438 = vand.u32 %v5127, 2147483648
    %v5439 = vsel %vm5437, %v5438, %v5436
    %v5440 = vrsqrt.pop %v5128
    %v5441 = vmul.f32 %v5128, %v5440
    %vm5442 = vcmp.eq.f32.partialorder %v5128, inf
    %v5443 = vsel %vm5442, %v5128, %v5441
    %vm5444 = vcmp.eq.f32.partialorder %v5128, 0.0
    %v5445 = vand.u32 %v5128, 2147483648
    %v5446 = vsel %vm5444, %v5445, %v5443
    %v5447 = vrsqrt.pop %v5129
    %v5448 = vmul.f32 %v5129, %v5447
    %vm5449 = vcmp.eq.f32.partialorder %v5129, inf
    %v5450 = vsel %vm5449, %v5129, %v5448
    %vm5451 = vcmp.eq.f32.partialorder %v5129, 0.0
    %v5452 = vand.u32 %v5129, 2147483648
    %v5453 = vsel %vm5451, %v5452, %v5450
    %v5454 = vrsqrt.pop %v5130
    %v5455 = vmul.f32 %v5130, %v5454
    %vm5456 = vcmp.eq.f32.partialorder %v5130, inf
    %v5457 = vsel %vm5456, %v5130, %v5455
    %vm5458 = vcmp.eq.f32.partialorder %v5130, 0.0
    %v5459 = vand.u32 %v5130, 2147483648
    %v5460 = vsel %vm5458, %v5459, %v5457
    %v5461 = vrsqrt.pop %v5131
    %v5462 = vmul.f32 %v5131, %v5461
    %vm5463 = vcmp.eq.f32.partialorder %v5131, inf
    %v5464 = vsel %vm5463, %v5131, %v5462
    %vm5465 = vcmp.eq.f32.partialorder %v5131, 0.0
    %v5466 = vand.u32 %v5131, 2147483648
    %v5467 = vsel %vm5465, %v5466, %v5464
    %vm5468 = vcmask 80896
    %5469 = vst.msk [vmem:[%s9] sm:$0xff] %vm5468, %v5138
    %vm5470 = vcmask 76800
    %5471 = vst.msk [vmem:[%s9 + $0x8] sm:$0xf] %vm5470, %v5145
    %5472 = vst.msk [vmem:[%s9 + $0x10] sm:$0xff] %vm5468, %v5152
    %5473 = vst.msk [vmem:[%s9 + $0x18] sm:$0xf] %vm5470, %v5159
    %5474 = vst.msk [vmem:[%s9 + $0x20] sm:$0xff] %vm5468, %v5166
    %5475 = vst.msk [vmem:[%s9 + $0x28] sm:$0xf] %vm5470, %v5173
    %5476 = vst.msk [vmem:[%s9 + $0x30] sm:$0xff] %vm5468, %v5180
    %5477 = vst.msk [vmem:[%s9 + $0x38] sm:$0xf] %vm5470, %v5187
    %5478 = vst.msk [vmem:[%s9 + $0x40] sm:$0xff] %vm5468, %v5194
    %5479 = vst.msk [vmem:[%s9 + $0x48] sm:$0xf] %vm5470, %v5201
    %5480 = vst.msk [vmem:[%s9 + $0x50] sm:$0xff] %vm5468, %v5208
    %5481 = vst.msk [vmem:[%s9 + $0x58] sm:$0xf] %vm5470, %v5215
    %5482 = vst.msk [vmem:[%s9 + $0x60] sm:$0xff] %vm5468, %v5222
    %5483 = vst.msk [vmem:[%s9 + $0x68] sm:$0xf] %vm5470, %v5229
    %5484 = vst.msk [vmem:[%s9 + $0x70] sm:$0xff] %vm5468, %v5236
    %5485 = vst.msk [vmem:[%s9 + $0x78] sm:$0xf] %vm5470, %v5243
    %5486 = vst.msk [vmem:[%s9 + $0x80] sm:$0xff] %vm5468, %v5250
    %5487 = vst.msk [vmem:[%s9 + $0x88] sm:$0xf] %vm5470, %v5257
    %5488 = vst.msk [vmem:[%s9 + $0x90] sm:$0xff] %vm5468, %v5264
    %5489 = vst.msk [vmem:[%s9 + $0x98] sm:$0xf] %vm5470, %v5271
    %5490 = vst.msk [vmem:[%s9 + $0xa0] sm:$0xff] %vm5468, %v5278
    %5491 = vst.msk [vmem:[%s9 + $0xa8] sm:$0xf] %vm5470, %v5285
    %5492 = vst.msk [vmem:[%s9 + $0xb0] sm:$0xff] %vm5468, %v5292
    %5493 = vst.msk [vmem:[%s9 + $0xb8] sm:$0xf] %vm5470, %v5299
    %5494 = vst.msk [vmem:[%s9 + $0xc0] sm:$0xff] %vm5468, %v5306
    %5495 = vst.msk [vmem:[%s9 + $0xc8] sm:$0xf] %vm5470, %v5313
    %5496 = vst.msk [vmem:[%s9 + $0xd0] sm:$0xff] %vm5468, %v5320
    %5497 = vst.msk [vmem:[%s9 + $0xd8] sm:$0xf] %vm5470, %v5327
    %5498 = vst.msk [vmem:[%s9 + $0xe0] sm:$0xff] %vm5468, %v5334
    %5499 = vst.msk [vmem:[%s9 + $0xe8] sm:$0xf] %vm5470, %v5341
    %5500 = vst.msk [vmem:[%s9 + $0xf0] sm:$0xff] %vm5468, %v5348
    %5501 = vst.msk [vmem:[%s9 + $0xf8] sm:$0xf] %vm5470, %v5355
    %5502 = vst.msk [vmem:[%s9 + $0x100] sm:$0xff] %vm5468, %v5362
    %5503 = vst.msk [vmem:[%s9 + $0x108] sm:$0xf] %vm5470, %v5369
    %5504 = vst.msk [vmem:[%s9 + $0x110] sm:$0xff] %vm5468, %v5376
    %5505 = vst.msk [vmem:[%s9 + $0x118] sm:$0xf] %vm5470, %v5383
    %5506 = vst.msk [vmem:[%s9 + $0x120] sm:$0xff] %vm5468, %v5390
    %5507 = vst.msk [vmem:[%s9 + $0x128] sm:$0xf] %vm5470, %v5397
    %5508 = vst.msk [vmem:[%s9 + $0x130] sm:$0xff] %vm5468, %v5404
    %5509 = vst.msk [vmem:[%s9 + $0x138] sm:$0xf] %vm5470, %v5411
    %5510 = vst.msk [vmem:[%s9 + $0x140] sm:$0xff] %vm5468, %v5418
    %5511 = vst.msk [vmem:[%s9 + $0x148] sm:$0xf] %vm5470, %v5425
    %5512 = vst.msk [vmem:[%s9 + $0x150] sm:$0xff] %vm5468, %v5432
    %5513 = vst.msk [vmem:[%s9 + $0x158] sm:$0xf] %vm5470, %v5439
    %5514 = vst.msk [vmem:[%s9 + $0x160] sm:$0xff] %vm5468, %v5446
    %5515 = vst.msk [vmem:[%s9 + $0x168] sm:$0xf] %vm5470, %v5453
    %5516 = vst.msk [vmem:[%s9 + $0x170] sm:$0xff] %vm5468, %v5460
    %5517 = vst.msk [vmem:[%s9 + $0x178] sm:$0xf] %vm5470, %v5467
    %5518 = vst.msk [vmem:[#allocation3] sm:$0xff] %vm5468, %v5084
    %5519 = vst.msk [vmem:[#allocation3 + $0x10] sm:$0xff] %vm5468, %v5086
    %5520 = vst.msk [vmem:[#allocation3 + $0x20] sm:$0xff] %vm5468, %v5088
    %5521 = vst.msk [vmem:[#allocation3 + $0x30] sm:$0xff] %vm5468, %v5090
    %5522 = vst.msk [vmem:[#allocation3 + $0x40] sm:$0xff] %vm5468, %v5092
    %5523 = vst.msk [vmem:[#allocation3 + $0x50] sm:$0xff] %vm5468, %v5094
    %5524 = vst.msk [vmem:[#allocation3 + $0x60] sm:$0xff] %vm5468, %v5096
    %5525 = vst.msk [vmem:[#allocation3 + $0x70] sm:$0xff] %vm5468, %v5098
    %5526 = vst.msk [vmem:[#allocation3 + $0x80] sm:$0xff] %vm5468, %v5108
    %5527 = vst.msk [vmem:[#allocation3 + $0x90] sm:$0xff] %vm5468, %v5110
    %5528 = vst.msk [vmem:[#allocation3 + $0xa0] sm:$0xff] %vm5468, %v5112
    %5529 = vst.msk [vmem:[#allocation3 + $0xb0] sm:$0xff] %vm5468, %v5114
    %5530 = vst.msk [vmem:[#allocation3 + $0xc0] sm:$0xff] %vm5468, %v5116
    %5531 = vst.msk [vmem:[#allocation3 + $0xd0] sm:$0xff] %vm5468, %v5118
    %5532 = vst.msk [vmem:[#allocation3 + $0xe0] sm:$0xff] %vm5468, %v5120
    %5533 = vst.msk [vmem:[#allocation3 + $0xf0] sm:$0xff] %vm5468, %v5122
    %v5566 = vrot.slane %v5084, 1
    %v5567 = vrot.slane %v5085, 1
    %v5568 = vsel %vm62, %v5566, %v5567
    %v5569 = vrot.slane %v5086, 1
    %v5570 = vrot.slane %v5087, 1
    %v5571 = vsel %vm62, %v5569, %v5570
    %v5572 = vrot.slane %v5088, 1
    %v5573 = vrot.slane %v5089, 1
    %v5574 = vsel %vm62, %v5572, %v5573
    %v5575 = vrot.slane %v5090, 1
    %v5576 = vrot.slane %v5091, 1
    %v5577 = vsel %vm62, %v5575, %v5576
    %v5578 = vrot.slane %v5092, 1
    %v5579 = vrot.slane %v5093, 1
    %v5580 = vsel %vm62, %v5578, %v5579
    %v5581 = vrot.slane %v5094, 1
    %v5582 = vrot.slane %v5095, 1
    %v5583 = vsel %vm62, %v5581, %v5582
    %v5584 = vrot.slane %v5096, 1
    %v5585 = vrot.slane %v5097, 1
    %v5586 = vsel %vm62, %v5584, %v5585
    %v5587 = vrot.slane %v5098, 1
    %v5588 = vrot.slane %v5099, 1
    %v5589 = vsel %vm62, %v5587, %v5588
    %v5590 = vrot.slane %v5108, 1
    %v5591 = vrot.slane %v5109, 1
    %v5592 = vsel %vm62, %v5590, %v5591
    %v5593 = vrot.slane %v5110, 1
    %v5594 = vrot.slane %v5111, 1
    %v5595 = vsel %vm62, %v5593, %v5594
    %v5596 = vrot.slane %v5112, 1
    %v5597 = vrot.slane %v5113, 1
    %v5598 = vsel %vm62, %v5596, %v5597
    %v5599 = vrot.slane %v5114, 1
    %v5600 = vrot.slane %v5115, 1
    %v5601 = vsel %vm62, %v5599, %v5600
    %v5602 = vrot.slane %v5116, 1
    %v5603 = vrot.slane %v5117, 1
    %v5604 = vsel %vm62, %v5602, %v5603
    %v5605 = vrot.slane %v5118, 1
    %v5606 = vrot.slane %v5119, 1
    %v5607 = vsel %vm62, %v5605, %v5606
    %v5608 = vrot.slane %v5120, 1
    %v5609 = vrot.slane %v5121, 1
    %v5610 = vsel %vm62, %v5608, %v5609
    %v5611 = vrot.slane %v5122, 1
    %v5612 = vrot.slane %v5123, 1
    %v5613 = vsel %vm62, %v5611, %v5612
    %5614 = vrot.lane.b32.xlu0 %v5568, 10
    %v5615 = vpop.permute.xlu0 %5614
    %5616 = vrot.lane.b32.xlu0 %v5571, 10
    %v5617 = vpop.permute.xlu0 %5616
    %5618 = vrot.lane.b32.xlu0 %v5574, 10
    %v5619 = vpop.permute.xlu0 %5618
    %5620 = vrot.lane.b32.xlu0 %v5577, 10
    %v5621 = vpop.permute.xlu0 %5620
    %5622 = vrot.lane.b32.xlu0 %v5580, 10
    %v5623 = vpop.permute.xlu0 %5622
    %5624 = vrot.lane.b32.xlu0 %v5583, 10
    %v5625 = vpop.permute.xlu0 %5624
    %5626 = vrot.lane.b32.xlu0 %v5586, 10
    %v5627 = vpop.permute.xlu0 %5626
    %5628 = vrot.lane.b32.xlu0 %v5589, 10
    %v5629 = vpop.permute.xlu0 %5628
    %5630 = vrot.lane.b32.xlu0 %v5592, 10
    %v5631 = vpop.permute.xlu0 %5630
    %5632 = vrot.lane.b32.xlu0 %v5595, 10
    %v5633 = vpop.permute.xlu0 %5632
    %5634 = vrot.lane.b32.xlu0 %v5598, 10
    %v5635 = vpop.permute.xlu0 %5634
    %5636 = vrot.lane.b32.xlu0 %v5601, 10
    %v5637 = vpop.permute.xlu0 %5636
    %5638 = vrot.lane.b32.xlu0 %v5604, 10
    %v5639 = vpop.permute.xlu0 %5638
    %5640 = vrot.lane.b32.xlu0 %v5607, 10
    %v5641 = vpop.permute.xlu0 %5640
    %5642 = vrot.lane.b32.xlu0 %v5610, 10
    %v5643 = vpop.permute.xlu0 %5642
    %5644 = vrot.lane.b32.xlu0 %v5613, 10
    %v5645 = vpop.permute.xlu0 %5644
    %vm5662 = vcmask 162896
    %5663 = vst.msk [vmem:[#allocation3] sm:$0xff] %vm5662, %v5615
    %5664 = vst.msk [vmem:[#allocation3 + $0x10] sm:$0xff] %vm5662, %v5617
    %5665 = vst.msk [vmem:[#allocation3 + $0x20] sm:$0xff] %vm5662, %v5619
    %5666 = vst.msk [vmem:[#allocation3 + $0x30] sm:$0xff] %vm5662, %v5621
    %5667 = vst.msk [vmem:[#allocation3 + $0x40] sm:$0xff] %vm5662, %v5623
    %5668 = vst.msk [vmem:[#allocation3 + $0x50] sm:$0xff] %vm5662, %v5625
    %5669 = vst.msk [vmem:[#allocation3 + $0x60] sm:$0xff] %vm5662, %v5627
    %5670 = vst.msk [vmem:[#allocation3 + $0x70] sm:$0xff] %vm5662, %v5629
    %5671 = vst.msk [vmem:[#allocation3 + $0x80] sm:$0xff] %vm5662, %v5631
    %5672 = vst.msk [vmem:[#allocation3 + $0x90] sm:$0xff] %vm5662, %v5633
    %5673 = vst.msk [vmem:[#allocation3 + $0xa0] sm:$0xff] %vm5662, %v5635
    %5674 = vst.msk [vmem:[#allocation3 + $0xb0] sm:$0xff] %vm5662, %v5637
    %5675 = vst.msk [vmem:[#allocation3 + $0xc0] sm:$0xff] %vm5662, %v5639
    %5676 = vst.msk [vmem:[#allocation3 + $0xd0] sm:$0xff] %vm5662, %v5641
    %5677 = vst.msk [vmem:[#allocation3 + $0xe0] sm:$0xff] %vm5662, %v5643
    %5678 = vst.msk [vmem:[#allocation3 + $0xf0] sm:$0xff] %vm5662, %v5645
    %v5679 = vrot.slane %v5084, 2
    %v5680 = vrot.slane %v5085, 2
    %v5681 = vsel %vm326, %v5679, %v5680
    %v5682 = vrot.slane %v5086, 2
    %v5683 = vrot.slane %v5087, 2
    %v5684 = vsel %vm326, %v5682, %v5683
    %v5685 = vrot.slane %v5088, 2
    %v5686 = vrot.slane %v5089, 2
    %v5687 = vsel %vm326, %v5685, %v5686
    %v5688 = vrot.slane %v5090, 2
    %v5689 = vrot.slane %v5091, 2
    %v5690 = vsel %vm326, %v5688, %v5689
    %v5691 = vrot.slane %v5092, 2
    %v5692 = vrot.slane %v5093, 2
    %v5693 = vsel %vm326, %v5691, %v5692
    %v5694 = vrot.slane %v5094, 2
    %v5695 = vrot.slane %v5095, 2
    %v5696 = vsel %vm326, %v5694, %v5695
    %v5697 = vrot.slane %v5096, 2
    %v5698 = vrot.slane %v5097, 2
    %v5699 = vsel %vm326, %v5697, %v5698
    %v5700 = vrot.slane %v5098, 2
    %v5701 = vrot.slane %v5099, 2
    %v5702 = vsel %vm326, %v5700, %v5701
    %v5703 = vrot.slane %v5108, 2
    %v5704 = vrot.slane %v5109, 2
    %v5705 = vsel %vm326, %v5703, %v5704
    %v5706 = vrot.slane %v5110, 2
    %v5707 = vrot.slane %v5111, 2
    %v5708 = vsel %vm326, %v5706, %v5707
    %v5709 = vrot.slane %v5112, 2
    %v5710 = vrot.slane %v5113, 2
    %v5711 = vsel %vm326, %v5709, %v5710
    %v5712 = vrot.slane %v5114, 2
    %v5713 = vrot.slane %v5115, 2
    %v5714 = vsel %vm326, %v5712, %v5713
    %v5715 = vrot.slane %v5116, 2
    %v5716 = vrot.slane %v5117, 2
    %v5717 = vsel %vm326, %v5715, %v5716
    %v5718 = vrot.slane %v5118, 2
    %v5719 = vrot.slane %v5119, 2
    %v5720 = vsel %vm326, %v5718, %v5719
    %v5721 = vrot.slane %v5120, 2
    %v5722 = vrot.slane %v5121, 2
    %v5723 = vsel %vm326, %v5721, %v5722
    %v5724 = vrot.slane %v5122, 2
    %v5725 = vrot.slane %v5123, 2
    %v5726 = vsel %vm326, %v5724, %v5725
    %5727 = vrot.lane.b32.xlu0 %v5681, 20
    %v5728 = vpop.permute.xlu0 %5727
    %5729 = vrot.lane.b32.xlu0 %v5684, 20
    %v5730 = vpop.permute.xlu0 %5729
    %5731 = vrot.lane.b32.xlu0 %v5687, 20
    %v5732 = vpop.permute.xlu0 %5731
    %5733 = vrot.lane.b32.xlu0 %v5690, 20
    %v5734 = vpop.permute.xlu0 %5733
    %5735 = vrot.lane.b32.xlu0 %v5693, 20
    %v5736 = vpop.permute.xlu0 %5735
    %5737 = vrot.lane.b32.xlu0 %v5696, 20
    %v5738 = vpop.permute.xlu0 %5737
    %5739 = vrot.lane.b32.xlu0 %v5699, 20
    %v5740 = vpop.permute.xlu0 %5739
    %5741 = vrot.lane.b32.xlu0 %v5702, 20
    %v5742 = vpop.permute.xlu0 %5741
    %5743 = vrot.lane.b32.xlu0 %v5705, 20
    %v5744 = vpop.permute.xlu0 %5743
    %5745 = vrot.lane.b32.xlu0 %v5708, 20
    %v5746 = vpop.permute.xlu0 %5745
    %5747 = vrot.lane.b32.xlu0 %v5711, 20
    %v5748 = vpop.permute.xlu0 %5747
    %5749 = vrot.lane.b32.xlu0 %v5714, 20
    %v5750 = vpop.permute.xlu0 %5749
    %5751 = vrot.lane.b32.xlu0 %v5717, 20
    %v5752 = vpop.permute.xlu0 %5751
    %5753 = vrot.lane.b32.xlu0 %v5720, 20
    %v5754 = vpop.permute.xlu0 %5753
    %5755 = vrot.lane.b32.xlu0 %v5723, 20
    %v5756 = vpop.permute.xlu0 %5755
    %5757 = vrot.lane.b32.xlu0 %v5726, 20
    %v5758 = vpop.permute.xlu0 %5757
    %vm5775 = vcmask 244896
    %5776 = vst.msk [vmem:[#allocation3] sm:$0xff] %vm5775, %v5728
    %5777 = vst.msk [vmem:[#allocation3 + $0x10] sm:$0xff] %vm5775, %v5730
    %5778 = vst.msk [vmem:[#allocation3 + $0x20] sm:$0xff] %vm5775, %v5732
    %5779 = vst.msk [vmem:[#allocation3 + $0x30] sm:$0xff] %vm5775, %v5734
    %5780 = vst.msk [vmem:[#allocation3 + $0x40] sm:$0xff] %vm5775, %v5736
    %5781 = vst.msk [vmem:[#allocation3 + $0x50] sm:$0xff] %vm5775, %v5738
    %5782 = vst.msk [vmem:[#allocation3 + $0x60] sm:$0xff] %vm5775, %v5740
    %5783 = vst.msk [vmem:[#allocation3 + $0x70] sm:$0xff] %vm5775, %v5742
    %5784 = vst.msk [vmem:[#allocation3 + $0x80] sm:$0xff] %vm5775, %v5744
    %5785 = vst.msk [vmem:[#allocation3 + $0x90] sm:$0xff] %vm5775, %v5746
    %5786 = vst.msk [vmem:[#allocation3 + $0xa0] sm:$0xff] %vm5775, %v5748
    %5787 = vst.msk [vmem:[#allocation3 + $0xb0] sm:$0xff] %vm5775, %v5750
    %5788 = vst.msk [vmem:[#allocation3 + $0xc0] sm:$0xff] %vm5775, %v5752
    %5789 = vst.msk [vmem:[#allocation3 + $0xd0] sm:$0xff] %vm5775, %v5754
    %5790 = vst.msk [vmem:[#allocation3 + $0xe0] sm:$0xff] %vm5775, %v5756
    %5791 = vst.msk [vmem:[#allocation3 + $0xf0] sm:$0xff] %vm5775, %v5758
    %v5792 = vrot.slane %v5084, 3
    %v5793 = vrot.slane %v5085, 3
    %v5794 = vsel %vm481, %v5792, %v5793
    %v5795 = vrot.slane %v5086, 3
    %v5796 = vrot.slane %v5087, 3
    %v5797 = vsel %vm481, %v5795, %v5796
    %v5798 = vrot.slane %v5088, 3
    %v5799 = vrot.slane %v5089, 3
    %v5800 = vsel %vm481, %v5798, %v5799
    %v5801 = vrot.slane %v5090, 3
    %v5802 = vrot.slane %v5091, 3
    %v5803 = vsel %vm481, %v5801, %v5802
    %v5804 = vrot.slane %v5092, 3
    %v5805 = vrot.slane %v5093, 3
    %v5806 = vsel %vm481, %v5804, %v5805
    %v5807 = vrot.slane %v5094, 3
    %v5808 = vrot.slane %v5095, 3
    %v5809 = vsel %vm481, %v5807, %v5808
    %v5810 = vrot.slane %v5096, 3
    %v5811 = vrot.slane %v5097, 3
    %v5812 = vsel %vm481, %v5810, %v5811
    %v5813 = vrot.slane %v5098, 3
    %v5814 = vrot.slane %v5099, 3
    %v5815 = vsel %vm481, %v5813, %v5814
    %v5816 = vrot.slane %v5108, 3
    %v5817 = vrot.slane %v5109, 3
    %v5818 = vsel %vm481, %v5816, %v5817
    %v5819 = vrot.slane %v5110, 3
    %v5820 = vrot.slane %v5111, 3
    %v5821 = vsel %vm481, %v5819, %v5820
    %v5822 = vrot.slane %v5112, 3
    %v5823 = vrot.slane %v5113, 3
    %v5824 = vsel %vm481, %v5822, %v5823
    %v5825 = vrot.slane %v5114, 3
    %v5826 = vrot.slane %v5115, 3
    %v5827 = vsel %vm481, %v5825, %v5826
    %v5828 = vrot.slane %v5116, 3
    %v5829 = vrot.slane %v5117, 3
    %v5830 = vsel %vm481, %v5828, %v5829
    %v5831 = vrot.slane %v5118, 3
    %v5832 = vrot.slane %v5119, 3
    %v5833 = vsel %vm481, %v5831, %v5832
    %v5834 = vrot.slane %v5120, 3
    %v5835 = vrot.slane %v5121, 3
    %v5836 = vsel %vm481, %v5834, %v5835
    %v5837 = vrot.slane %v5122, 3
    %v5838 = vrot.slane %v5123, 3
    %v5839 = vsel %vm481, %v5837, %v5838
    %5840 = vrot.lane.b32.xlu0 %v5794, 30
    %v5841 = vpop.permute.xlu0 %5840
    %5842 = vrot.lane.b32.xlu0 %v5797, 30
    %v5843 = vpop.permute.xlu0 %5842
    %5844 = vrot.lane.b32.xlu0 %v5800, 30
    %v5845 = vpop.permute.xlu0 %5844
    %5846 = vrot.lane.b32.xlu0 %v5803, 30
    %v5847 = vpop.permute.xlu0 %5846
    %5848 = vrot.lane.b32.xlu0 %v5806, 30
    %v5849 = vpop.permute.xlu0 %5848
    %5850 = vrot.lane.b32.xlu0 %v5809, 30
    %v5851 = vpop.permute.xlu0 %5850
    %5852 = vrot.lane.b32.xlu0 %v5812, 30
    %v5853 = vpop.permute.xlu0 %5852
    %5854 = vrot.lane.b32.xlu0 %v5815, 30
    %v5855 = vpop.permute.xlu0 %5854
    %5856 = vrot.lane.b32.xlu0 %v5818, 30
    %v5857 = vpop.permute.xlu0 %5856
    %5858 = vrot.lane.b32.xlu0 %v5821, 30
    %v5859 = vpop.permute.xlu0 %5858
    %5860 = vrot.lane.b32.xlu0 %v5824, 30
    %v5861 = vpop.permute.xlu0 %5860
    %5862 = vrot.lane.b32.xlu0 %v5827, 30
    %v5863 = vpop.permute.xlu0 %5862
    %5864 = vrot.lane.b32.xlu0 %v5830, 30
    %v5865 = vpop.permute.xlu0 %5864
    %5866 = vrot.lane.b32.xlu0 %v5833, 30
    %v5867 = vpop.permute.xlu0 %5866
    %5868 = vrot.lane.b32.xlu0 %v5836, 30
    %v5869 = vpop.permute.xlu0 %5868
    %5870 = vrot.lane.b32.xlu0 %v5839, 30
    %v5871 = vpop.permute.xlu0 %5870
    %vm5888 = vcmask 326896
    %5889 = vst.msk [vmem:[#allocation3] sm:$0xff] %vm5888, %v5841
    %5890 = vst.msk [vmem:[#allocation3 + $0x10] sm:$0xff] %vm5888, %v5843
    %5891 = vst.msk [vmem:[#allocation3 + $0x20] sm:$0xff] %vm5888, %v5845
    %5892 = vst.msk [vmem:[#allocation3 + $0x30] sm:$0xff] %vm5888, %v5847
    %5893 = vst.msk [vmem:[#allocation3 + $0x40] sm:$0xff] %vm5888, %v5849
    %5894 = vst.msk [vmem:[#allocation3 + $0x50] sm:$0xff] %vm5888, %v5851
    %5895 = vst.msk [vmem:[#allocation3 + $0x60] sm:$0xff] %vm5888, %v5853
    %5896 = vst.msk [vmem:[#allocation3 + $0x70] sm:$0xff] %vm5888, %v5855
    %5897 = vst.msk [vmem:[#allocation3 + $0x80] sm:$0xff] %vm5888, %v5857
    %5898 = vst.msk [vmem:[#allocation3 + $0x90] sm:$0xff] %vm5888, %v5859
    %5899 = vst.msk [vmem:[#allocation3 + $0xa0] sm:$0xff] %vm5888, %v5861
    %5900 = vst.msk [vmem:[#allocation3 + $0xb0] sm:$0xff] %vm5888, %v5863
    %5901 = vst.msk [vmem:[#allocation3 + $0xc0] sm:$0xff] %vm5888, %v5865
    %5902 = vst.msk [vmem:[#allocation3 + $0xd0] sm:$0xff] %vm5888, %v5867
    %5903 = vst.msk [vmem:[#allocation3 + $0xe0] sm:$0xff] %vm5888, %v5869
    %5904 = vst.msk [vmem:[#allocation3 + $0xf0] sm:$0xff] %vm5888, %v5871
    %v5905 = vrot.slane %v5084, 4
    %v5906 = vrot.slane %v5085, 4
    %v5907 = vsel %vm99, %v5905, %v5906
    %v5908 = vrot.slane %v5086, 4
    %v5909 = vrot.slane %v5087, 4
    %v5910 = vsel %vm99, %v5908, %v5909
    %v5911 = vrot.slane %v5088, 4
    %v5912 = vrot.slane %v5089, 4
    %v5913 = vsel %vm99, %v5911, %v5912
    %v5914 = vrot.slane %v5090, 4
    %v5915 = vrot.slane %v5091, 4
    %v5916 = vsel %vm99, %v5914, %v5915
    %v5917 = vrot.slane %v5092, 4
    %v5918 = vrot.slane %v5093, 4
    %v5919 = vsel %vm99, %v5917, %v5918
    %v5920 = vrot.slane %v5094, 4
    %v5921 = vrot.slane %v5095, 4
    %v5922 = vsel %vm99, %v5920, %v5921
    %v5923 = vrot.slane %v5096, 4
    %v5924 = vrot.slane %v5097, 4
    %v5925 = vsel %vm99, %v5923, %v5924
    %v5926 = vrot.slane %v5098, 4
    %v5927 = vrot.slane %v5099, 4
    %v5928 = vsel %vm99, %v5926, %v5927
    %v5929 = vrot.slane %v5108, 4
    %v5930 = vrot.slane %v5109, 4
    %v5931 = vsel %vm99, %v5929, %v5930
    %v5932 = vrot.slane %v5110, 4
    %v5933 = vrot.slane %v5111, 4
    %v5934 = vsel %vm99, %v5932, %v5933
    %v5935 = vrot.slane %v5112, 4
    %v5936 = vrot.slane %v5113, 4
    %v5937 = vsel %vm99, %v5935, %v5936
    %v5938 = vrot.slane %v5114, 4
    %v5939 = vrot.slane %v5115, 4
    %v5940 = vsel %vm99, %v5938, %v5939
    %v5941 = vrot.slane %v5116, 4
    %v5942 = vrot.slane %v5117, 4
    %v5943 = vsel %vm99, %v5941, %v5942
    %v5944 = vrot.slane %v5118, 4
    %v5945 = vrot.slane %v5119, 4
    %v5946 = vsel %vm99, %v5944, %v5945
    %v5947 = vrot.slane %v5120, 4
    %v5948 = vrot.slane %v5121, 4
    %v5949 = vsel %vm99, %v5947, %v5948
    %v5950 = vrot.slane %v5122, 4
    %v5951 = vrot.slane %v5123, 4
    %v5952 = vsel %vm99, %v5950, %v5951
    %5953 = vrot.lane.b32.xlu0 %v5907, 40
    %v5954 = vpop.permute.xlu0 %5953
    %5955 = vrot.lane.b32.xlu0 %v5910, 40
    %v5956 = vpop.permute.xlu0 %5955
    %5957 = vrot.lane.b32.xlu0 %v5913, 40
    %v5958 = vpop.permute.xlu0 %5957
    %5959 = vrot.lane.b32.xlu0 %v5916, 40
    %v5960 = vpop.permute.xlu0 %5959
    %5961 = vrot.lane.b32.xlu0 %v5919, 40
    %v5962 = vpop.permute.xlu0 %5961
    %5963 = vrot.lane.b32.xlu0 %v5922, 40
    %v5964 = vpop.permute.xlu0 %5963
    %5965 = vrot.lane.b32.xlu0 %v5925, 40
    %v5966 = vpop.permute.xlu0 %5965
    %5967 = vrot.lane.b32.xlu0 %v5928, 40
    %v5968 = vpop.permute.xlu0 %5967
    %5969 = vrot.lane.b32.xlu0 %v5931, 40
    %v5970 = vpop.permute.xlu0 %5969
    %5971 = vrot.lane.b32.xlu0 %v5934, 40
    %v5972 = vpop.permute.xlu0 %5971
    %5973 = vrot.lane.b32.xlu0 %v5937, 40
    %v5974 = vpop.permute.xlu0 %5973
    %5975 = vrot.lane.b32.xlu0 %v5940, 40
    %v5976 = vpop.permute.xlu0 %5975
    %5977 = vrot.lane.b32.xlu0 %v5943, 40
    %v5978 = vpop.permute.xlu0 %5977
    %5979 = vrot.lane.b32.xlu0 %v5946, 40
    %v5980 = vpop.permute.xlu0 %5979
    %5981 = vrot.lane.b32.xlu0 %v5949, 40
    %v5982 = vpop.permute.xlu0 %5981
    %5983 = vrot.lane.b32.xlu0 %v5952, 40
    %v5984 = vpop.permute.xlu0 %5983
    %vm6001 = vcmask 408896
    %6002 = vst.msk [vmem:[#allocation3] sm:$0xff] %vm6001, %v5954
    %6003 = vst.msk [vmem:[#allocation3 + $0x10] sm:$0xff] %vm6001, %v5956
    %6004 = vst.msk [vmem:[#allocation3 + $0x20] sm:$0xff] %vm6001, %v5958
    %6005 = vst.msk [vmem:[#allocation3 + $0x30] sm:$0xff] %vm6001, %v5960
    %6006 = vst.msk [vmem:[#allocation3 + $0x40] sm:$0xff] %vm6001, %v5962
    %6007 = vst.msk [vmem:[#allocation3 + $0x50] sm:$0xff] %vm6001, %v5964
    %6008 = vst.msk [vmem:[#allocation3 + $0x60] sm:$0xff] %vm6001, %v5966
    %6009 = vst.msk [vmem:[#allocation3 + $0x70] sm:$0xff] %vm6001, %v5968
    %6010 = vst.msk [vmem:[#allocation3 + $0x80] sm:$0xff] %vm6001, %v5970
    %6011 = vst.msk [vmem:[#allocation3 + $0x90] sm:$0xff] %vm6001, %v5972
    %6012 = vst.msk [vmem:[#allocation3 + $0xa0] sm:$0xff] %vm6001, %v5974
    %6013 = vst.msk [vmem:[#allocation3 + $0xb0] sm:$0xff] %vm6001, %v5976
    %6014 = vst.msk [vmem:[#allocation3 + $0xc0] sm:$0xff] %vm6001, %v5978
    %6015 = vst.msk [vmem:[#allocation3 + $0xd0] sm:$0xff] %vm6001, %v5980
    %6016 = vst.msk [vmem:[#allocation3 + $0xe0] sm:$0xff] %vm6001, %v5982
    %6017 = vst.msk [vmem:[#allocation3 + $0xf0] sm:$0xff] %vm6001, %v5984
    %6020 = vrot.lane.b32.xlu0 %v5086, 50
    %v6021 = vpop.permute.xlu0 %6020
    %6022 = vrot.lane.b32.xlu0 %v5088, 50
    %v6023 = vpop.permute.xlu0 %6022
    %6024 = vrot.lane.b32.xlu0 %v5090, 50
    %v6025 = vpop.permute.xlu0 %6024
    %6026 = vrot.lane.b32.xlu0 %v5092, 50
    %v6027 = vpop.permute.xlu0 %6026
    %6028 = vrot.lane.b32.xlu0 %v5094, 50
    %v6029 = vpop.permute.xlu0 %6028
    %6030 = vrot.lane.b32.xlu0 %v5096, 50
    %v6031 = vpop.permute.xlu0 %6030
    %6032 = vrot.lane.b32.xlu0 %v5098, 50
    %v6033 = vpop.permute.xlu0 %6032
    %6034 = vrot.lane.b32.xlu0 %v5100, 50
    %v6035 = vpop.permute.xlu0 %6034
    %6036 = vrot.lane.b32.xlu0 %v5110, 50
    %v6037 = vpop.permute.xlu0 %6036
    %6038 = vrot.lane.b32.xlu0 %v5112, 50
    %v6039 = vpop.permute.xlu0 %6038
    %6040 = vrot.lane.b32.xlu0 %v5114, 50
    %v6041 = vpop.permute.xlu0 %6040
    %6042 = vrot.lane.b32.xlu0 %v5116, 50
    %v6043 = vpop.permute.xlu0 %6042
    %6044 = vrot.lane.b32.xlu0 %v5118, 50
    %v6045 = vpop.permute.xlu0 %6044
    %6046 = vrot.lane.b32.xlu0 %v5120, 50
    %v6047 = vpop.permute.xlu0 %6046
    %6048 = vrot.lane.b32.xlu0 %v5122, 50
    %v6049 = vpop.permute.xlu0 %6048
    %6050 = vrot.lane.b32.xlu0 %v5124, 50
    %v6051 = vpop.permute.xlu0 %6050
    %vm6068 = vcmask 490896
    %6069 = vst.msk [vmem:[#allocation3] sm:$0xff] %vm6068, %v6021
    %6070 = vst.msk [vmem:[#allocation3 + $0x10] sm:$0xff] %vm6068, %v6023
    %6071 = vst.msk [vmem:[#allocation3 + $0x20] sm:$0xff] %vm6068, %v6025
    %6072 = vst.msk [vmem:[#allocation3 + $0x30] sm:$0xff] %vm6068, %v6027
    %6073 = vst.msk [vmem:[#allocation3 + $0x40] sm:$0xff] %vm6068, %v6029
    %6074 = vst.msk [vmem:[#allocation3 + $0x50] sm:$0xff] %vm6068, %v6031
    %6075 = vst.msk [vmem:[#allocation3 + $0x60] sm:$0xff] %vm6068, %v6033
    %6076 = vst.msk [vmem:[#allocation3 + $0x70] sm:$0xff] %vm6068, %v6035
    %6077 = vst.msk [vmem:[#allocation3 + $0x80] sm:$0xff] %vm6068, %v6037
    %6078 = vst.msk [vmem:[#allocation3 + $0x90] sm:$0xff] %vm6068, %v6039
    %6079 = vst.msk [vmem:[#allocation3 + $0xa0] sm:$0xff] %vm6068, %v6041
    %6080 = vst.msk [vmem:[#allocation3 + $0xb0] sm:$0xff] %vm6068, %v6043
    %6081 = vst.msk [vmem:[#allocation3 + $0xc0] sm:$0xff] %vm6068, %v6045
    %6082 = vst.msk [vmem:[#allocation3 + $0xd0] sm:$0xff] %vm6068, %v6047
    %6083 = vst.msk [vmem:[#allocation3 + $0xe0] sm:$0xff] %vm6068, %v6049
    %6084 = vst.msk [vmem:[#allocation3 + $0xf0] sm:$0xff] %vm6068, %v6051
    %v6087 = vrot.slane %v5100, 1
    %v6088 = vrot.slane %v5101, 1
    %v6089 = vsel %vm62, %v6087, %v6088
    %v6090 = vrot.slane %v5124, 1
    %v6091 = vrot.slane %v5125, 1
    %v6092 = vsel %vm62, %v6090, %v6091
    %6093 = vrot.lane.b32.xlu0 %v5571, 60
    %v6094 = vpop.permute.xlu0 %6093
    %6095 = vrot.lane.b32.xlu0 %v5574, 60
    %v6096 = vpop.permute.xlu0 %6095
    %6097 = vrot.lane.b32.xlu0 %v5577, 60
    %v6098 = vpop.permute.xlu0 %6097
    %6099 = vrot.lane.b32.xlu0 %v5580, 60
    %v6100 = vpop.permute.xlu0 %6099
    %6101 = vrot.lane.b32.xlu0 %v5583, 60
    %v6102 = vpop.permute.xlu0 %6101
    %6103 = vrot.lane.b32.xlu0 %v5586, 60
    %v6104 = vpop.permute.xlu0 %6103
    %6105 = vrot.lane.b32.xlu0 %v5589, 60
    %v6106 = vpop.permute.xlu0 %6105
    %6107 = vrot.lane.b32.xlu0 %v6089, 60
    %v6108 = vpop.permute.xlu0 %6107
    %6109 = vrot.lane.b32.xlu0 %v5595, 60
    %v6110 = vpop.permute.xlu0 %6109
    %6111 = vrot.lane.b32.xlu0 %v5598, 60
    %v6112 = vpop.permute.xlu0 %6111
    %6113 = vrot.lane.b32.xlu0 %v5601, 60
    %v6114 = vpop.permute.xlu0 %6113
    %6115 = vrot.lane.b32.xlu0 %v5604, 60
    %v6116 = vpop.permute.xlu0 %6115
    %6117 = vrot.lane.b32.xlu0 %v5607, 60
    %v6118 = vpop.permute.xlu0 %6117
    %6119 = vrot.lane.b32.xlu0 %v5610, 60
    %v6120 = vpop.permute.xlu0 %6119
    %6121 = vrot.lane.b32.xlu0 %v5613, 60
    %v6122 = vpop.permute.xlu0 %6121
    %6123 = vrot.lane.b32.xlu0 %v6092, 60
    %v6124 = vpop.permute.xlu0 %6123
    %vm6141 = vcmask 572896
    %6142 = vst.msk [vmem:[#allocation3] sm:$0xff] %vm6141, %v6094
    %6143 = vst.msk [vmem:[#allocation3 + $0x10] sm:$0xff] %vm6141, %v6096
    %6144 = vst.msk [vmem:[#allocation3 + $0x20] sm:$0xff] %vm6141, %v6098
    %6145 = vst.msk [vmem:[#allocation3 + $0x30] sm:$0xff] %vm6141, %v6100
    %6146 = vst.msk [vmem:[#allocation3 + $0x40] sm:$0xff] %vm6141, %v6102
    %6147 = vst.msk [vmem:[#allocation3 + $0x50] sm:$0xff] %vm6141, %v6104
    %6148 = vst.msk [vmem:[#allocation3 + $0x60] sm:$0xff] %vm6141, %v6106
    %6149 = vst.msk [vmem:[#allocation3 + $0x70] sm:$0xff] %vm6141, %v6108
    %6150 = vst.msk [vmem:[#allocation3 + $0x80] sm:$0xff] %vm6141, %v6110
    %6151 = vst.msk [vmem:[#allocation3 + $0x90] sm:$0xff] %vm6141, %v6112
    %6152 = vst.msk [vmem:[#allocation3 + $0xa0] sm:$0xff] %vm6141, %v6114
    %6153 = vst.msk [vmem:[#allocation3 + $0xb0] sm:$0xff] %vm6141, %v6116
    %6154 = vst.msk [vmem:[#allocation3 + $0xc0] sm:$0xff] %vm6141, %v6118
    %6155 = vst.msk [vmem:[#allocation3 + $0xd0] sm:$0xff] %vm6141, %v6120
    %6156 = vst.msk [vmem:[#allocation3 + $0xe0] sm:$0xff] %vm6141, %v6122
    %6157 = vst.msk [vmem:[#allocation3 + $0xf0] sm:$0xff] %vm6141, %v6124
    %v6158 = vrot.slane %v5100, 2
    %v6159 = vrot.slane %v5101, 2
    %v6160 = vsel %vm326, %v6158, %v6159
    %v6161 = vrot.slane %v5124, 2
    %v6162 = vrot.slane %v5125, 2
    %v6163 = vsel %vm326, %v6161, %v6162
    %6164 = vrot.lane.b32.xlu0 %v5684, 70
    %v6165 = vpop.permute.xlu0 %6164
    %6166 = vrot.lane.b32.xlu0 %v5687, 70
    %v6167 = vpop.permute.xlu0 %6166
    %6168 = vrot.lane.b32.xlu0 %v5690, 70
    %v6169 = vpop.permute.xlu0 %6168
    %6170 = vrot.lane.b32.xlu0 %v5693, 70
    %v6171 = vpop.permute.xlu0 %6170
    %6172 = vrot.lane.b32.xlu0 %v5696, 70
    %v6173 = vpop.permute.xlu0 %6172
    %6174 = vrot.lane.b32.xlu0 %v5699, 70
    %v6175 = vpop.permute.xlu0 %6174
    %6176 = vrot.lane.b32.xlu0 %v5702, 70
    %v6177 = vpop.permute.xlu0 %6176
    %6178 = vrot.lane.b32.xlu0 %v6160, 70
    %v6179 = vpop.permute.xlu0 %6178
    %6180 = vrot.lane.b32.xlu0 %v5708, 70
    %v6181 = vpop.permute.xlu0 %6180
    %6182 = vrot.lane.b32.xlu0 %v5711, 70
    %v6183 = vpop.permute.xlu0 %6182
    %6184 = vrot.lane.b32.xlu0 %v5714, 70
    %v6185 = vpop.permute.xlu0 %6184
    %6186 = vrot.lane.b32.xlu0 %v5717, 70
    %v6187 = vpop.permute.xlu0 %6186
    %6188 = vrot.lane.b32.xlu0 %v5720, 70
    %v6189 = vpop.permute.xlu0 %6188
    %6190 = vrot.lane.b32.xlu0 %v5723, 70
    %v6191 = vpop.permute.xlu0 %6190
    %6192 = vrot.lane.b32.xlu0 %v5726, 70
    %v6193 = vpop.permute.xlu0 %6192
    %6194 = vrot.lane.b32.xlu0 %v6163, 70
    %v6195 = vpop.permute.xlu0 %6194
    %vm6212 = vcmask 654896
    %6213 = vst.msk [vmem:[#allocation3] sm:$0xff] %vm6212, %v6165
    %6214 = vst.msk [vmem:[#allocation3 + $0x10] sm:$0xff] %vm6212, %v6167
    %6215 = vst.msk [vmem:[#allocation3 + $0x20] sm:$0xff] %vm6212, %v6169
    %6216 = vst.msk [vmem:[#allocation3 + $0x30] sm:$0xff] %vm6212, %v6171
    %6217 = vst.msk [vmem:[#allocation3 + $0x40] sm:$0xff] %vm6212, %v6173
    %6218 = vst.msk [vmem:[#allocation3 + $0x50] sm:$0xff] %vm6212, %v6175
    %6219 = vst.msk [vmem:[#allocation3 + $0x60] sm:$0xff] %vm6212, %v6177
    %6220 = vst.msk [vmem:[#allocation3 + $0x70] sm:$0xff] %vm6212, %v6179
    %6221 = vst.msk [vmem:[#allocation3 + $0x80] sm:$0xff] %vm6212, %v6181
    %6222 = vst.msk [vmem:[#allocation3 + $0x90] sm:$0xff] %vm6212, %v6183
    %6223 = vst.msk [vmem:[#allocation3 + $0xa0] sm:$0xff] %vm6212, %v6185
    %6224 = vst.msk [vmem:[#allocation3 + $0xb0] sm:$0xff] %vm6212, %v6187
    %6225 = vst.msk [vmem:[#allocation3 + $0xc0] sm:$0xff] %vm6212, %v6189
    %6226 = vst.msk [vmem:[#allocation3 + $0xd0] sm:$0xff] %vm6212, %v6191
    %6227 = vst.msk [vmem:[#allocation3 + $0xe0] sm:$0xff] %vm6212, %v6193
    %6228 = vst.msk [vmem:[#allocation3 + $0xf0] sm:$0xff] %vm6212, %v6195
    %v6229 = vrot.slane %v5100, 3
    %v6230 = vrot.slane %v5101, 3
    %v6231 = vsel %vm481, %v6229, %v6230
    %v6232 = vrot.slane %v5124, 3
    %v6233 = vrot.slane %v5125, 3
    %v6234 = vsel %vm481, %v6232, %v6233
    %6235 = vrot.lane.b32.xlu0 %v5797, 80
    %v6236 = vpop.permute.xlu0 %6235
    %6237 = vrot.lane.b32.xlu0 %v5800, 80
    %v6238 = vpop.permute.xlu0 %6237
    %6239 = vrot.lane.b32.xlu0 %v5803, 80
    %v6240 = vpop.permute.xlu0 %6239
    %6241 = vrot.lane.b32.xlu0 %v5806, 80
    %v6242 = vpop.permute.xlu0 %6241
    %6243 = vrot.lane.b32.xlu0 %v5809, 80
    %v6244 = vpop.permute.xlu0 %6243
    %6245 = vrot.lane.b32.xlu0 %v5812, 80
    %v6246 = vpop.permute.xlu0 %6245
    %6247 = vrot.lane.b32.xlu0 %v5815, 80
    %v6248 = vpop.permute.xlu0 %6247
    %6249 = vrot.lane.b32.xlu0 %v6231, 80
    %v6250 = vpop.permute.xlu0 %6249
    %6251 = vrot.lane.b32.xlu0 %v5821, 80
    %v6252 = vpop.permute.xlu0 %6251
    %6253 = vrot.lane.b32.xlu0 %v5824, 80
    %v6254 = vpop.permute.xlu0 %6253
    %6255 = vrot.lane.b32.xlu0 %v5827, 80
    %v6256 = vpop.permute.xlu0 %6255
    %6257 = vrot.lane.b32.xlu0 %v5830, 80
    %v6258 = vpop.permute.xlu0 %6257
    %6259 = vrot.lane.b32.xlu0 %v5833, 80
    %v6260 = vpop.permute.xlu0 %6259
    %6261 = vrot.lane.b32.xlu0 %v5836, 80
    %v6262 = vpop.permute.xlu0 %6261
    %6263 = vrot.lane.b32.xlu0 %v5839, 80
    %v6264 = vpop.permute.xlu0 %6263
    %6265 = vrot.lane.b32.xlu0 %v6234, 80
    %v6266 = vpop.permute.xlu0 %6265
    %vm6283 = vcmask 736896
    %6284 = vst.msk [vmem:[#allocation3] sm:$0xff] %vm6283, %v6236
    %6285 = vst.msk [vmem:[#allocation3 + $0x10] sm:$0xff] %vm6283, %v6238
    %6286 = vst.msk [vmem:[#allocation3 + $0x20] sm:$0xff] %vm6283, %v6240
    %6287 = vst.msk [vmem:[#allocation3 + $0x30] sm:$0xff] %vm6283, %v6242
    %6288 = vst.msk [vmem:[#allocation3 + $0x40] sm:$0xff] %vm6283, %v6244
    %6289 = vst.msk [vmem:[#allocation3 + $0x50] sm:$0xff] %vm6283, %v6246
    %6290 = vst.msk [vmem:[#allocation3 + $0x60] sm:$0xff] %vm6283, %v6248
    %6291 = vst.msk [vmem:[#allocation3 + $0x70] sm:$0xff] %vm6283, %v6250
    %6292 = vst.msk [vmem:[#allocation3 + $0x80] sm:$0xff] %vm6283, %v6252
    %6293 = vst.msk [vmem:[#allocation3 + $0x90] sm:$0xff] %vm6283, %v6254
    %6294 = vst.msk [vmem:[#allocation3 + $0xa0] sm:$0xff] %vm6283, %v6256
    %6295 = vst.msk [vmem:[#allocation3 + $0xb0] sm:$0xff] %vm6283, %v6258
    %6296 = vst.msk [vmem:[#allocation3 + $0xc0] sm:$0xff] %vm6283, %v6260
    %6297 = vst.msk [vmem:[#allocation3 + $0xd0] sm:$0xff] %vm6283, %v6262
    %6298 = vst.msk [vmem:[#allocation3 + $0xe0] sm:$0xff] %vm6283, %v6264
    %6299 = vst.msk [vmem:[#allocation3 + $0xf0] sm:$0xff] %vm6283, %v6266
    %v6300 = vrot.slane %v5100, 4
    %v6301 = vrot.slane %v5101, 4
    %v6302 = vsel %vm99, %v6300, %v6301
    %v6303 = vrot.slane %v5124, 4
    %v6304 = vrot.slane %v5125, 4
    %v6305 = vsel %vm99, %v6303, %v6304
    %6306 = vrot.lane.b32.xlu0 %v5910, 90
    %v6307 = vpop.permute.xlu0 %6306
    %6308 = vrot.lane.b32.xlu0 %v5913, 90
    %v6309 = vpop.permute.xlu0 %6308
    %6310 = vrot.lane.b32.xlu0 %v5916, 90
    %v6311 = vpop.permute.xlu0 %6310
    %6312 = vrot.lane.b32.xlu0 %v5919, 90
    %v6313 = vpop.permute.xlu0 %6312
    %6314 = vrot.lane.b32.xlu0 %v5922, 90
    %v6315 = vpop.permute.xlu0 %6314
    %6316 = vrot.lane.b32.xlu0 %v5925, 90
    %v6317 = vpop.permute.xlu0 %6316
    %6318 = vrot.lane.b32.xlu0 %v5928, 90
    %v6319 = vpop.permute.xlu0 %6318
    %6320 = vrot.lane.b32.xlu0 %v6302, 90
    %v6321 = vpop.permute.xlu0 %6320
    %6322 = vrot.lane.b32.xlu0 %v5934, 90
    %v6323 = vpop.permute.xlu0 %6322
    %6324 = vrot.lane.b32.xlu0 %v5937, 90
    %v6325 = vpop.permute.xlu0 %6324
    %6326 = vrot.lane.b32.xlu0 %v5940, 90
    %v6327 = vpop.permute.xlu0 %6326
    %6328 = vrot.lane.b32.xlu0 %v5943, 90
    %v6329 = vpop.permute.xlu0 %6328
    %6330 = vrot.lane.b32.xlu0 %v5946, 90
    %v6331 = vpop.permute.xlu0 %6330
    %6332 = vrot.lane.b32.xlu0 %v5949, 90
    %v6333 = vpop.permute.xlu0 %6332
    %6334 = vrot.lane.b32.xlu0 %v5952, 90
    %v6335 = vpop.permute.xlu0 %6334
    %6336 = vrot.lane.b32.xlu0 %v6305, 90
    %v6337 = vpop.permute.xlu0 %6336
    %vm6354 = vcmask 818896
    %6355 = vst.msk [vmem:[#allocation3] sm:$0xff] %vm6354, %v6307
    %6356 = vst.msk [vmem:[#allocation3 + $0x10] sm:$0xff] %vm6354, %v6309
    %6357 = vst.msk [vmem:[#allocation3 + $0x20] sm:$0xff] %vm6354, %v6311
    %6358 = vst.msk [vmem:[#allocation3 + $0x30] sm:$0xff] %vm6354, %v6313
    %6359 = vst.msk [vmem:[#allocation3 + $0x40] sm:$0xff] %vm6354, %v6315
    %6360 = vst.msk [vmem:[#allocation3 + $0x50] sm:$0xff] %vm6354, %v6317
    %6361 = vst.msk [vmem:[#allocation3 + $0x60] sm:$0xff] %vm6354, %v6319
    %6362 = vst.msk [vmem:[#allocation3 + $0x70] sm:$0xff] %vm6354, %v6321
    %6363 = vst.msk [vmem:[#allocation3 + $0x80] sm:$0xff] %vm6354, %v6323
    %6364 = vst.msk [vmem:[#allocation3 + $0x90] sm:$0xff] %vm6354, %v6325
    %6365 = vst.msk [vmem:[#allocation3 + $0xa0] sm:$0xff] %vm6354, %v6327
    %6366 = vst.msk [vmem:[#allocation3 + $0xb0] sm:$0xff] %vm6354, %v6329
    %6367 = vst.msk [vmem:[#allocation3 + $0xc0] sm:$0xff] %vm6354, %v6331
    %6368 = vst.msk [vmem:[#allocation3 + $0xd0] sm:$0xff] %vm6354, %v6333
    %6369 = vst.msk [vmem:[#allocation3 + $0xe0] sm:$0xff] %vm6354, %v6335
    %6370 = vst.msk [vmem:[#allocation3 + $0xf0] sm:$0xff] %vm6354, %v6337
    %6373 = vrot.lane.b32.xlu0 %v5088, 100
    %v6374 = vpop.permute.xlu0 %6373
    %6375 = vrot.lane.b32.xlu0 %v5090, 100
    %v6376 = vpop.permute.xlu0 %6375
    %6377 = vrot.lane.b32.xlu0 %v5092, 100
    %v6378 = vpop.permute.xlu0 %6377
    %6379 = vrot.lane.b32.xlu0 %v5094, 100
    %v6380 = vpop.permute.xlu0 %6379
    %6381 = vrot.lane.b32.xlu0 %v5096, 100
    %v6382 = vpop.permute.xlu0 %6381
    %6383 = vrot.lane.b32.xlu0 %v5098, 100
    %v6384 = vpop.permute.xlu0 %6383
    %6385 = vrot.lane.b32.xlu0 %v5100, 100
    %v6386 = vpop.permute.xlu0 %6385
    %6387 = vrot.lane.b32.xlu0 %v5102, 100
    %v6388 = vpop.permute.xlu0 %6387
    %6389 = vrot.lane.b32.xlu0 %v5112, 100
    %v6390 = vpop.permute.xlu0 %6389
    %6391 = vrot.lane.b32.xlu0 %v5114, 100
    %v6392 = vpop.permute.xlu0 %6391
    %6393 = vrot.lane.b32.xlu0 %v5116, 100
    %v6394 = vpop.permute.xlu0 %6393
    %6395 = vrot.lane.b32.xlu0 %v5118, 100
    %v6396 = vpop.permute.xlu0 %6395
    %6397 = vrot.lane.b32.xlu0 %v5120, 100
    %v6398 = vpop.permute.xlu0 %6397
    %6399 = vrot.lane.b32.xlu0 %v5122, 100
    %v6400 = vpop.permute.xlu0 %6399
    %6401 = vrot.lane.b32.xlu0 %v5124, 100
    %v6402 = vpop.permute.xlu0 %6401
    %6403 = vrot.lane.b32.xlu0 %v5126, 100
    %v6404 = vpop.permute.xlu0 %6403
    %vm6421 = vcmask 900896
    %6422 = vst.msk [vmem:[#allocation3] sm:$0xff] %vm6421, %v6374
    %6423 = vst.msk [vmem:[#allocation3 + $0x10] sm:$0xff] %vm6421, %v6376
    %6424 = vst.msk [vmem:[#allocation3 + $0x20] sm:$0xff] %vm6421, %v6378
    %6425 = vst.msk [vmem:[#allocation3 + $0x30] sm:$0xff] %vm6421, %v6380
    %6426 = vst.msk [vmem:[#allocation3 + $0x40] sm:$0xff] %vm6421, %v6382
    %6427 = vst.msk [vmem:[#allocation3 + $0x50] sm:$0xff] %vm6421, %v6384
    %6428 = vst.msk [vmem:[#allocation3 + $0x60] sm:$0xff] %vm6421, %v6386
    %6429 = vst.msk [vmem:[#allocation3 + $0x70] sm:$0xff] %vm6421, %v6388
    %6430 = vst.msk [vmem:[#allocation3 + $0x80] sm:$0xff] %vm6421, %v6390
    %6431 = vst.msk [vmem:[#allocation3 + $0x90] sm:$0xff] %vm6421, %v6392
    %6432 = vst.msk [vmem:[#allocation3 + $0xa0] sm:$0xff] %vm6421, %v6394
    %6433 = vst.msk [vmem:[#allocation3 + $0xb0] sm:$0xff] %vm6421, %v6396
    %6434 = vst.msk [vmem:[#allocation3 + $0xc0] sm:$0xff] %vm6421, %v6398
    %6435 = vst.msk [vmem:[#allocation3 + $0xd0] sm:$0xff] %vm6421, %v6400
    %6436 = vst.msk [vmem:[#allocation3 + $0xe0] sm:$0xff] %vm6421, %v6402
    %6437 = vst.msk [vmem:[#allocation3 + $0xf0] sm:$0xff] %vm6421, %v6404
    %v6440 = vrot.slane %v5102, 1
    %v6441 = vrot.slane %v5103, 1
    %v6442 = vsel %vm62, %v6440, %v6441
    %v6443 = vrot.slane %v5126, 1
    %v6444 = vrot.slane %v5127, 1
    %v6445 = vsel %vm62, %v6443, %v6444
    %6446 = vrot.lane.b32.xlu0 %v5574, 110
    %v6447 = vpop.permute.xlu0 %6446
    %6448 = vrot.lane.b32.xlu0 %v5577, 110
    %v6449 = vpop.permute.xlu0 %6448
    %6450 = vrot.lane.b32.xlu0 %v5580, 110
    %v6451 = vpop.permute.xlu0 %6450
    %6452 = vrot.lane.b32.xlu0 %v5583, 110
    %v6453 = vpop.permute.xlu0 %6452
    %6454 = vrot.lane.b32.xlu0 %v5586, 110
    %v6455 = vpop.permute.xlu0 %6454
    %6456 = vrot.lane.b32.xlu0 %v5589, 110
    %v6457 = vpop.permute.xlu0 %6456
    %6458 = vrot.lane.b32.xlu0 %v6089, 110
    %v6459 = vpop.permute.xlu0 %6458
    %6460 = vrot.lane.b32.xlu0 %v6442, 110
    %v6461 = vpop.permute.xlu0 %6460
    %6462 = vrot.lane.b32.xlu0 %v5598, 110
    %v6463 = vpop.permute.xlu0 %6462
    %6464 = vrot.lane.b32.xlu0 %v5601, 110
    %v6465 = vpop.permute.xlu0 %6464
    %6466 = vrot.lane.b32.xlu0 %v5604, 110
    %v6467 = vpop.permute.xlu0 %6466
    %6468 = vrot.lane.b32.xlu0 %v5607, 110
    %v6469 = vpop.permute.xlu0 %6468
    %6470 = vrot.lane.b32.xlu0 %v5610, 110
    %v6471 = vpop.permute.xlu0 %6470
    %6472 = vrot.lane.b32.xlu0 %v5613, 110
    %v6473 = vpop.permute.xlu0 %6472
    %6474 = vrot.lane.b32.xlu0 %v6092, 110
    %v6475 = vpop.permute.xlu0 %6474
    %6476 = vrot.lane.b32.xlu0 %v6445, 110
    %v6477 = vpop.permute.xlu0 %6476
    %vm6494 = vcmask 982896
    %6495 = vst.msk [vmem:[#allocation3] sm:$0xff] %vm6494, %v6447
    %6496 = vst.msk [vmem:[#allocation3 + $0x10] sm:$0xff] %vm6494, %v6449
    %6497 = vst.msk [vmem:[#allocation3 + $0x20] sm:$0xff] %vm6494, %v6451
    %6498 = vst.msk [vmem:[#allocation3 + $0x30] sm:$0xff] %vm6494, %v6453
    %6499 = vst.msk [vmem:[#allocation3 + $0x40] sm:$0xff] %vm6494, %v6455
    %6500 = vst.msk [vmem:[#allocation3 + $0x50] sm:$0xff] %vm6494, %v6457
    %6501 = vst.msk [vmem:[#allocation3 + $0x60] sm:$0xff] %vm6494, %v6459
    %6502 = vst.msk [vmem:[#allocation3 + $0x70] sm:$0xff] %vm6494, %v6461
    %6503 = vst.msk [vmem:[#allocation3 + $0x80] sm:$0xff] %vm6494, %v6463
    %6504 = vst.msk [vmem:[#allocation3 + $0x90] sm:$0xff] %vm6494, %v6465
    %6505 = vst.msk [vmem:[#allocation3 + $0xa0] sm:$0xff] %vm6494, %v6467
    %6506 = vst.msk [vmem:[#allocation3 + $0xb0] sm:$0xff] %vm6494, %v6469
    %6507 = vst.msk [vmem:[#allocation3 + $0xc0] sm:$0xff] %vm6494, %v6471
    %6508 = vst.msk [vmem:[#allocation3 + $0xd0] sm:$0xff] %vm6494, %v6473
    %6509 = vst.msk [vmem:[#allocation3 + $0xe0] sm:$0xff] %vm6494, %v6475
    %6510 = vst.msk [vmem:[#allocation3 + $0xf0] sm:$0xff] %vm6494, %v6477
    %v6511 = vrot.slane %v5102, 2
    %v6512 = vrot.slane %v5103, 2
    %v6513 = vsel %vm326, %v6511, %v6512
    %v6514 = vrot.slane %v5126, 2
    %v6515 = vrot.slane %v5127, 2
    %v6516 = vsel %vm326, %v6514, %v6515
    %6517 = vrot.lane.b32.xlu0 %v5687, 120
    %v6518 = vpop.permute.xlu0 %6517
    %6519 = vrot.lane.b32.xlu0 %v5690, 120
    %v6520 = vpop.permute.xlu0 %6519
    %6521 = vrot.lane.b32.xlu0 %v5693, 120
    %v6522 = vpop.permute.xlu0 %6521
    %6523 = vrot.lane.b32.xlu0 %v5696, 120
    %v6524 = vpop.permute.xlu0 %6523
    %6525 = vrot.lane.b32.xlu0 %v5699, 120
    %v6526 = vpop.permute.xlu0 %6525
    %6527 = vrot.lane.b32.xlu0 %v5702, 120
    %v6528 = vpop.permute.xlu0 %6527
    %6529 = vrot.lane.b32.xlu0 %v6160, 120
    %v6530 = vpop.permute.xlu0 %6529
    %6531 = vrot.lane.b32.xlu0 %v6513, 120
    %v6532 = vpop.permute.xlu0 %6531
    %6533 = vrot.lane.b32.xlu0 %v5711, 120
    %v6534 = vpop.permute.xlu0 %6533
    %6535 = vrot.lane.b32.xlu0 %v5714, 120
    %v6536 = vpop.permute.xlu0 %6535
    %6537 = vrot.lane.b32.xlu0 %v5717, 120
    %v6538 = vpop.permute.xlu0 %6537
    %6539 = vrot.lane.b32.xlu0 %v5720, 120
    %v6540 = vpop.permute.xlu0 %6539
    %6541 = vrot.lane.b32.xlu0 %v5723, 120
    %v6542 = vpop.permute.xlu0 %6541
    %6543 = vrot.lane.b32.xlu0 %v5726, 120
    %v6544 = vpop.permute.xlu0 %6543
    %6545 = vrot.lane.b32.xlu0 %v6163, 120
    %v6546 = vpop.permute.xlu0 %6545
    %6547 = vrot.lane.b32.xlu0 %v6516, 120
    %v6548 = vpop.permute.xlu0 %6547
    %vm6565 = vcmask 1048512
    %6566 = vst.msk [vmem:[#allocation3] sm:$0xff] %vm6565, %v6518
    %vm6567 = vcmask 15360
    %6568 = vst.msk [vmem:[#allocation3 + $0x8] sm:$0xff] %vm6567, %v6518
    %6569 = vst.msk [vmem:[#allocation3 + $0x10] sm:$0xff] %vm6565, %v6520
    %6570 = vst.msk [vmem:[#allocation3 + $0x18] sm:$0xff] %vm6567, %v6520
    %6571 = vst.msk [vmem:[#allocation3 + $0x20] sm:$0xff] %vm6565, %v6522
    %6572 = vst.msk [vmem:[#allocation3 + $0x28] sm:$0xff] %vm6567, %v6522
    %6573 = vst.msk [vmem:[#allocation3 + $0x30] sm:$0xff] %vm6565, %v6524
    %6574 = vst.msk [vmem:[#allocation3 + $0x38] sm:$0xff] %vm6567, %v6524
    %6575 = vst.msk [vmem:[#allocation3 + $0x40] sm:$0xff] %vm6565, %v6526
    %6576 = vst.msk [vmem:[#allocation3 + $0x48] sm:$0xff] %vm6567, %v6526
    %6577 = vst.msk [vmem:[#allocation3 + $0x50] sm:$0xff] %vm6565, %v6528
    %6578 = vst.msk [vmem:[#allocation3 + $0x58] sm:$0xff] %vm6567, %v6528
    %6579 = vst.msk [vmem:[#allocation3 + $0x60] sm:$0xff] %vm6565, %v6530
    %6580 = vst.msk [vmem:[#allocation3 + $0x68] sm:$0xff] %vm6567, %v6530
    %6581 = vst.msk [vmem:[#allocation3 + $0x70] sm:$0xff] %vm6565, %v6532
    %6582 = vst.msk [vmem:[#allocation3 + $0x78] sm:$0xff] %vm6567, %v6532
    %6583 = vst.msk [vmem:[#allocation3 + $0x80] sm:$0xff] %vm6565, %v6534
    %6584 = vst.msk [vmem:[#allocation3 + $0x88] sm:$0xff] %vm6567, %v6534
    %6585 = vst.msk [vmem:[#allocation3 + $0x90] sm:$0xff] %vm6565, %v6536
    %6586 = vst.msk [vmem:[#allocation3 + $0x98] sm:$0xff] %vm6567, %v6536
    %6587 = vst.msk [vmem:[#allocation3 + $0xa0] sm:$0xff] %vm6565, %v6538
    %6588 = vst.msk [vmem:[#allocation3 + $0xa8] sm:$0xff] %vm6567, %v6538
    %6589 = vst.msk [vmem:[#allocation3 + $0xb0] sm:$0xff] %vm6565, %v6540
    %6590 = vst.msk [vmem:[#allocation3 + $0xb8] sm:$0xff] %vm6567, %v6540
    %6591 = vst.msk [vmem:[#allocation3 + $0xc0] sm:$0xff] %vm6565, %v6542
    %6592 = vst.msk [vmem:[#allocation3 + $0xc8] sm:$0xff] %vm6567, %v6542
    %6593 = vst.msk [vmem:[#allocation3 + $0xd0] sm:$0xff] %vm6565, %v6544
    %6594 = vst.msk [vmem:[#allocation3 + $0xd8] sm:$0xff] %vm6567, %v6544
    %6595 = vst.msk [vmem:[#allocation3 + $0xe0] sm:$0xff] %vm6565, %v6546
    %6596 = vst.msk [vmem:[#allocation3 + $0xe8] sm:$0xff] %vm6567, %v6546
    %6597 = vst.msk [vmem:[#allocation3 + $0xf0] sm:$0xff] %vm6565, %v6548
    %6598 = vst.msk [vmem:[#allocation3 + $0xf8] sm:$0xff] %vm6567, %v6548
    %v6599 = vrot.slane %v5102, 3
    %v6600 = vrot.slane %v5103, 3
    %v6601 = vsel %vm481, %v6599, %v6600
    %v6602 = vrot.slane %v5126, 3
    %v6603 = vrot.slane %v5127, 3
    %v6604 = vsel %vm481, %v6602, %v6603
    %6605 = vrot.lane.b32.xlu0 %v5800, 2
    %v6606 = vpop.permute.xlu0 %6605
    %6607 = vrot.lane.b32.xlu0 %v5803, 2
    %v6608 = vpop.permute.xlu0 %6607
    %6609 = vrot.lane.b32.xlu0 %v5806, 2
    %v6610 = vpop.permute.xlu0 %6609
    %6611 = vrot.lane.b32.xlu0 %v5809, 2
    %v6612 = vpop.permute.xlu0 %6611
    %6613 = vrot.lane.b32.xlu0 %v5812, 2
    %v6614 = vpop.permute.xlu0 %6613
    %6615 = vrot.lane.b32.xlu0 %v5815, 2
    %v6616 = vpop.permute.xlu0 %6615
    %6617 = vrot.lane.b32.xlu0 %v6231, 2
    %v6618 = vpop.permute.xlu0 %6617
    %6619 = vrot.lane.b32.xlu0 %v6601, 2
    %v6620 = vpop.permute.xlu0 %6619
    %6621 = vrot.lane.b32.xlu0 %v5824, 2
    %v6622 = vpop.permute.xlu0 %6621
    %6623 = vrot.lane.b32.xlu0 %v5827, 2
    %v6624 = vpop.permute.xlu0 %6623
    %6625 = vrot.lane.b32.xlu0 %v5830, 2
    %v6626 = vpop.permute.xlu0 %6625
    %6627 = vrot.lane.b32.xlu0 %v5833, 2
    %v6628 = vpop.permute.xlu0 %6627
    %6629 = vrot.lane.b32.xlu0 %v5836, 2
    %v6630 = vpop.permute.xlu0 %6629
    %6631 = vrot.lane.b32.xlu0 %v5839, 2
    %v6632 = vpop.permute.xlu0 %6631
    %6633 = vrot.lane.b32.xlu0 %v6234, 2
    %v6634 = vpop.permute.xlu0 %6633
    %6635 = vrot.lane.b32.xlu0 %v6604, 2
    %v6636 = vpop.permute.xlu0 %6635
    %vm6653 = vcmask 97296
    %6654 = vst.msk [vmem:[#allocation3 + $0x8] sm:$0xff] %vm6653, %v6606
    %6655 = vst.msk [vmem:[#allocation3 + $0x18] sm:$0xff] %vm6653, %v6608
    %6656 = vst.msk [vmem:[#allocation3 + $0x28] sm:$0xff] %vm6653, %v6610
    %6657 = vst.msk [vmem:[#allocation3 + $0x38] sm:$0xff] %vm6653, %v6612
    %6658 = vst.msk [vmem:[#allocation3 + $0x48] sm:$0xff] %vm6653, %v6614
    %6659 = vst.msk [vmem:[#allocation3 + $0x58] sm:$0xff] %vm6653, %v6616
    %6660 = vst.msk [vmem:[#allocation3 + $0x68] sm:$0xff] %vm6653, %v6618
    %6661 = vst.msk [vmem:[#allocation3 + $0x78] sm:$0xff] %vm6653, %v6620
    %6662 = vst.msk [vmem:[#allocation3 + $0x88] sm:$0xff] %vm6653, %v6622
    %6663 = vst.msk [vmem:[#allocation3 + $0x98] sm:$0xff] %vm6653, %v6624
    %6664 = vst.msk [vmem:[#allocation3 + $0xa8] sm:$0xff] %vm6653, %v6626
    %6665 = vst.msk [vmem:[#allocation3 + $0xb8] sm:$0xff] %vm6653, %v6628
    %6666 = vst.msk [vmem:[#allocation3 + $0xc8] sm:$0xff] %vm6653, %v6630
    %6667 = vst.msk [vmem:[#allocation3 + $0xd8] sm:$0xff] %vm6653, %v6632
    %6668 = vst.msk [vmem:[#allocation3 + $0xe8] sm:$0xff] %vm6653, %v6634
    %6669 = vst.msk [vmem:[#allocation3 + $0xf8] sm:$0xff] %vm6653, %v6636
    %v6670 = vrot.slane %v5102, 4
    %v6671 = vrot.slane %v5103, 4
    %v6672 = vsel %vm99, %v6670, %v6671
    %v6673 = vrot.slane %v5126, 4
    %v6674 = vrot.slane %v5127, 4
    %v6675 = vsel %vm99, %v6673, %v6674
    %6676 = vrot.lane.b32.xlu0 %v5913, 12
    %v6677 = vpop.permute.xlu0 %6676
    %6678 = vrot.lane.b32.xlu0 %v5916, 12
    %v6679 = vpop.permute.xlu0 %6678
    %6680 = vrot.lane.b32.xlu0 %v5919, 12
    %v6681 = vpop.permute.xlu0 %6680
    %6682 = vrot.lane.b32.xlu0 %v5922, 12
    %v6683 = vpop.permute.xlu0 %6682
    %6684 = vrot.lane.b32.xlu0 %v5925, 12
    %v6685 = vpop.permute.xlu0 %6684
    %6686 = vrot.lane.b32.xlu0 %v5928, 12
    %v6687 = vpop.permute.xlu0 %6686
    %6688 = vrot.lane.b32.xlu0 %v6302, 12
    %v6689 = vpop.permute.xlu0 %6688
    %6690 = vrot.lane.b32.xlu0 %v6672, 12
    %v6691 = vpop.permute.xlu0 %6690
    %6692 = vrot.lane.b32.xlu0 %v5937, 12
    %v6693 = vpop.permute.xlu0 %6692
    %6694 = vrot.lane.b32.xlu0 %v5940, 12
    %v6695 = vpop.permute.xlu0 %6694
    %6696 = vrot.lane.b32.xlu0 %v5943, 12
    %v6697 = vpop.permute.xlu0 %6696
    %6698 = vrot.lane.b32.xlu0 %v5946, 12
    %v6699 = vpop.permute.xlu0 %6698
    %6700 = vrot.lane.b32.xlu0 %v5949, 12
    %v6701 = vpop.permute.xlu0 %6700
    %6702 = vrot.lane.b32.xlu0 %v5952, 12
    %v6703 = vpop.permute.xlu0 %6702
    %6704 = vrot.lane.b32.xlu0 %v6305, 12
    %v6705 = vpop.permute.xlu0 %6704
    %6706 = vrot.lane.b32.xlu0 %v6675, 12
    %v6707 = vpop.permute.xlu0 %6706
    %vm6724 = vcmask 179296
    %6725 = vst.msk [vmem:[#allocation3 + $0x8] sm:$0xff] %vm6724, %v6677
    %6726 = vst.msk [vmem:[#allocation3 + $0x18] sm:$0xff] %vm6724, %v6679
    %6727 = vst.msk [vmem:[#allocation3 + $0x28] sm:$0xff] %vm6724, %v6681
    %6728 = vst.msk [vmem:[#allocation3 + $0x38] sm:$0xff] %vm6724, %v6683
    %6729 = vst.msk [vmem:[#allocation3 + $0x48] sm:$0xff] %vm6724, %v6685
    %6730 = vst.msk [vmem:[#allocation3 + $0x58] sm:$0xff] %vm6724, %v6687
    %6731 = vst.msk [vmem:[#allocation3 + $0x68] sm:$0xff] %vm6724, %v6689
    %6732 = vst.msk [vmem:[#allocation3 + $0x78] sm:$0xff] %vm6724, %v6691
    %6733 = vst.msk [vmem:[#allocation3 + $0x88] sm:$0xff] %vm6724, %v6693
    %6734 = vst.msk [vmem:[#allocation3 + $0x98] sm:$0xff] %vm6724, %v6695
    %6735 = vst.msk [vmem:[#allocation3 + $0xa8] sm:$0xff] %vm6724, %v6697
    %6736 = vst.msk [vmem:[#allocation3 + $0xb8] sm:$0xff] %vm6724, %v6699
    %6737 = vst.msk [vmem:[#allocation3 + $0xc8] sm:$0xff] %vm6724, %v6701
    %6738 = vst.msk [vmem:[#allocation3 + $0xd8] sm:$0xff] %vm6724, %v6703
    %6739 = vst.msk [vmem:[#allocation3 + $0xe8] sm:$0xff] %vm6724, %v6705
    %6740 = vst.msk [vmem:[#allocation3 + $0xf8] sm:$0xff] %vm6724, %v6707
    %6743 = vrot.lane.b32.xlu0 %v5090, 22
    %v6744 = vpop.permute.xlu0 %6743
    %6745 = vrot.lane.b32.xlu0 %v5092, 22
    %v6746 = vpop.permute.xlu0 %6745
    %6747 = vrot.lane.b32.xlu0 %v5094, 22
    %v6748 = vpop.permute.xlu0 %6747
    %6749 = vrot.lane.b32.xlu0 %v5096, 22
    %v6750 = vpop.permute.xlu0 %6749
    %6751 = vrot.lane.b32.xlu0 %v5098, 22
    %v6752 = vpop.permute.xlu0 %6751
    %6753 = vrot.lane.b32.xlu0 %v5100, 22
    %v6754 = vpop.permute.xlu0 %6753
    %6755 = vrot.lane.b32.xlu0 %v5102, 22
    %v6756 = vpop.permute.xlu0 %6755
    %6757 = vrot.lane.b32.xlu0 %v5104, 22
    %v6758 = vpop.permute.xlu0 %6757
    %6759 = vrot.lane.b32.xlu0 %v5114, 22
    %v6760 = vpop.permute.xlu0 %6759
    %6761 = vrot.lane.b32.xlu0 %v5116, 22
    %v6762 = vpop.permute.xlu0 %6761
    %6763 = vrot.lane.b32.xlu0 %v5118, 22
    %v6764 = vpop.permute.xlu0 %6763
    %6765 = vrot.lane.b32.xlu0 %v5120, 22
    %v6766 = vpop.permute.xlu0 %6765
    %6767 = vrot.lane.b32.xlu0 %v5122, 22
    %v6768 = vpop.permute.xlu0 %6767
    %6769 = vrot.lane.b32.xlu0 %v5124, 22
    %v6770 = vpop.permute.xlu0 %6769
    %6771 = vrot.lane.b32.xlu0 %v5126, 22
    %v6772 = vpop.permute.xlu0 %6771
    %6773 = vrot.lane.b32.xlu0 %v5128, 22
    %v6774 = vpop.permute.xlu0 %6773
    %vm6791 = vcmask 261296
    %6792 = vst.msk [vmem:[#allocation3 + $0x8] sm:$0xff] %vm6791, %v6744
    %6793 = vst.msk [vmem:[#allocation3 + $0x18] sm:$0xff] %vm6791, %v6746
    %6794 = vst.msk [vmem:[#allocation3 + $0x28] sm:$0xff] %vm6791, %v6748
    %6795 = vst.msk [vmem:[#allocation3 + $0x38] sm:$0xff] %vm6791, %v6750
    %6796 = vst.msk [vmem:[#allocation3 + $0x48] sm:$0xff] %vm6791, %v6752
    %6797 = vst.msk [vmem:[#allocation3 + $0x58] sm:$0xff] %vm6791, %v6754
    %6798 = vst.msk [vmem:[#allocation3 + $0x68] sm:$0xff] %vm6791, %v6756
    %6799 = vst.msk [vmem:[#allocation3 + $0x78] sm:$0xff] %vm6791, %v6758
    %6800 = vst.msk [vmem:[#allocation3 + $0x88] sm:$0xff] %vm6791, %v6760
    %6801 = vst.msk [vmem:[#allocation3 + $0x98] sm:$0xff] %vm6791, %v6762
    %6802 = vst.msk [vmem:[#allocation3 + $0xa8] sm:$0xff] %vm6791, %v6764
    %6803 = vst.msk [vmem:[#allocation3 + $0xb8] sm:$0xff] %vm6791, %v6766
    %6804 = vst.msk [vmem:[#allocation3 + $0xc8] sm:$0xff] %vm6791, %v6768
    %6805 = vst.msk [vmem:[#allocation3 + $0xd8] sm:$0xff] %vm6791, %v6770
    %6806 = vst.msk [vmem:[#allocation3 + $0xe8] sm:$0xff] %vm6791, %v6772
    %6807 = vst.msk [vmem:[#allocation3 + $0xf8] sm:$0xff] %vm6791, %v6774
    %v6810 = vrot.slane %v5104, 1
    %v6811 = vrot.slane %v5105, 1
    %v6812 = vsel %vm62, %v6810, %v6811
    %v6813 = vrot.slane %v5128, 1
    %v6814 = vrot.slane %v5129, 1
    %v6815 = vsel %vm62, %v6813, %v6814
    %6816 = vrot.lane.b32.xlu0 %v5577, 32
    %v6817 = vpop.permute.xlu0 %6816
    %6818 = vrot.lane.b32.xlu0 %v5580, 32
    %v6819 = vpop.permute.xlu0 %6818
    %6820 = vrot.lane.b32.xlu0 %v5583, 32
    %v6821 = vpop.permute.xlu0 %6820
    %6822 = vrot.lane.b32.xlu0 %v5586, 32
    %v6823 = vpop.permute.xlu0 %6822
    %6824 = vrot.lane.b32.xlu0 %v5589, 32
    %v6825 = vpop.permute.xlu0 %6824
    %6826 = vrot.lane.b32.xlu0 %v6089, 32
    %v6827 = vpop.permute.xlu0 %6826
    %6828 = vrot.lane.b32.xlu0 %v6442, 32
    %v6829 = vpop.permute.xlu0 %6828
    %6830 = vrot.lane.b32.xlu0 %v6812, 32
    %v6831 = vpop.permute.xlu0 %6830
    %6832 = vrot.lane.b32.xlu0 %v5601, 32
    %v6833 = vpop.permute.xlu0 %6832
    %6834 = vrot.lane.b32.xlu0 %v5604, 32
    %v6835 = vpop.permute.xlu0 %6834
    %6836 = vrot.lane.b32.xlu0 %v5607, 32
    %v6837 = vpop.permute.xlu0 %6836
    %6838 = vrot.lane.b32.xlu0 %v5610, 32
    %v6839 = vpop.permute.xlu0 %6838
    %6840 = vrot.lane.b32.xlu0 %v5613, 32
    %v6841 = vpop.permute.xlu0 %6840
    %6842 = vrot.lane.b32.xlu0 %v6092, 32
    %v6843 = vpop.permute.xlu0 %6842
    %6844 = vrot.lane.b32.xlu0 %v6445, 32
    %v6845 = vpop.permute.xlu0 %6844
    %6846 = vrot.lane.b32.xlu0 %v6815, 32
    %v6847 = vpop.permute.xlu0 %6846
    %vm6864 = vcmask 343296
    %6865 = vst.msk [vmem:[#allocation3 + $0x8] sm:$0xff] %vm6864, %v6817
    %6866 = vst.msk [vmem:[#allocation3 + $0x18] sm:$0xff] %vm6864, %v6819
    %6867 = vst.msk [vmem:[#allocation3 + $0x28] sm:$0xff] %vm6864, %v6821
    %6868 = vst.msk [vmem:[#allocation3 + $0x38] sm:$0xff] %vm6864, %v6823
    %6869 = vst.msk [vmem:[#allocation3 + $0x48] sm:$0xff] %vm6864, %v6825
    %6870 = vst.msk [vmem:[#allocation3 + $0x58] sm:$0xff] %vm6864, %v6827
    %6871 = vst.msk [vmem:[#allocation3 + $0x68] sm:$0xff] %vm6864, %v6829
    %6872 = vst.msk [vmem:[#allocation3 + $0x78] sm:$0xff] %vm6864, %v6831
    %6873 = vst.msk [vmem:[#allocation3 + $0x88] sm:$0xff] %vm6864, %v6833
    %6874 = vst.msk [vmem:[#allocation3 + $0x98] sm:$0xff] %vm6864, %v6835
    %6875 = vst.msk [vmem:[#allocation3 + $0xa8] sm:$0xff] %vm6864, %v6837
    %6876 = vst.msk [vmem:[#allocation3 + $0xb8] sm:$0xff] %vm6864, %v6839
    %6877 = vst.msk [vmem:[#allocation3 + $0xc8] sm:$0xff] %vm6864, %v6841
    %6878 = vst.msk [vmem:[#allocation3 + $0xd8] sm:$0xff] %vm6864, %v6843
    %6879 = vst.msk [vmem:[#allocation3 + $0xe8] sm:$0xff] %vm6864, %v6845
    %6880 = vst.msk [vmem:[#allocation3 + $0xf8] sm:$0xff] %vm6864, %v6847
    %v6881 = vrot.slane %v5104, 2
    %v6882 = vrot.slane %v5105, 2
    %v6883 = vsel %vm326, %v6881, %v6882
    %v6884 = vrot.slane %v5128, 2
    %v6885 = vrot.slane %v5129, 2
    %v6886 = vsel %vm326, %v6884, %v6885
    %6887 = vrot.lane.b32.xlu0 %v5690, 42
    %v6888 = vpop.permute.xlu0 %6887
    %6889 = vrot.lane.b32.xlu0 %v5693, 42
    %v6890 = vpop.permute.xlu0 %6889
    %6891 = vrot.lane.b32.xlu0 %v5696, 42
    %v6892 = vpop.permute.xlu0 %6891
    %6893 = vrot.lane.b32.xlu0 %v5699, 42
    %v6894 = vpop.permute.xlu0 %6893
    %6895 = vrot.lane.b32.xlu0 %v5702, 42
    %v6896 = vpop.permute.xlu0 %6895
    %6897 = vrot.lane.b32.xlu0 %v6160, 42
    %v6898 = vpop.permute.xlu0 %6897
    %6899 = vrot.lane.b32.xlu0 %v6513, 42
    %v6900 = vpop.permute.xlu0 %6899
    %6901 = vrot.lane.b32.xlu0 %v6883, 42
    %v6902 = vpop.permute.xlu0 %6901
    %6903 = vrot.lane.b32.xlu0 %v5714, 42
    %v6904 = vpop.permute.xlu0 %6903
    %6905 = vrot.lane.b32.xlu0 %v5717, 42
    %v6906 = vpop.permute.xlu0 %6905
    %6907 = vrot.lane.b32.xlu0 %v5720, 42
    %v6908 = vpop.permute.xlu0 %6907
    %6909 = vrot.lane.b32.xlu0 %v5723, 42
    %v6910 = vpop.permute.xlu0 %6909
    %6911 = vrot.lane.b32.xlu0 %v5726, 42
    %v6912 = vpop.permute.xlu0 %6911
    %6913 = vrot.lane.b32.xlu0 %v6163, 42
    %v6914 = vpop.permute.xlu0 %6913
    %6915 = vrot.lane.b32.xlu0 %v6516, 42
    %v6916 = vpop.permute.xlu0 %6915
    %6917 = vrot.lane.b32.xlu0 %v6886, 42
    %v6918 = vpop.permute.xlu0 %6917
    %vm6935 = vcmask 425296
    %6936 = vst.msk [vmem:[#allocation3 + $0x8] sm:$0xff] %vm6935, %v6888
    %6937 = vst.msk [vmem:[#allocation3 + $0x18] sm:$0xff] %vm6935, %v6890
    %6938 = vst.msk [vmem:[#allocation3 + $0x28] sm:$0xff] %vm6935, %v6892
    %6939 = vst.msk [vmem:[#allocation3 + $0x38] sm:$0xff] %vm6935, %v6894
    %6940 = vst.msk [vmem:[#allocation3 + $0x48] sm:$0xff] %vm6935, %v6896
    %6941 = vst.msk [vmem:[#allocation3 + $0x58] sm:$0xff] %vm6935, %v6898
    %6942 = vst.msk [vmem:[#allocation3 + $0x68] sm:$0xff] %vm6935, %v6900
    %6943 = vst.msk [vmem:[#allocation3 + $0x78] sm:$0xff] %vm6935, %v6902
    %6944 = vst.msk [vmem:[#allocation3 + $0x88] sm:$0xff] %vm6935, %v6904
    %6945 = vst.msk [vmem:[#allocation3 + $0x98] sm:$0xff] %vm6935, %v6906
    %6946 = vst.msk [vmem:[#allocation3 + $0xa8] sm:$0xff] %vm6935, %v6908
    %6947 = vst.msk [vmem:[#allocation3 + $0xb8] sm:$0xff] %vm6935, %v6910
    %6948 = vst.msk [vmem:[#allocation3 + $0xc8] sm:$0xff] %vm6935, %v6912
    %6949 = vst.msk [vmem:[#allocation3 + $0xd8] sm:$0xff] %vm6935, %v6914
    %6950 = vst.msk [vmem:[#allocation3 + $0xe8] sm:$0xff] %vm6935, %v6916
    %6951 = vst.msk [vmem:[#allocation3 + $0xf8] sm:$0xff] %vm6935, %v6918
    %v6952 = vrot.slane %v5104, 3
    %v6953 = vrot.slane %v5105, 3
    %v6954 = vsel %vm481, %v6952, %v6953
    %v6955 = vrot.slane %v5128, 3
    %v6956 = vrot.slane %v5129, 3
    %v6957 = vsel %vm481, %v6955, %v6956
    %6958 = vrot.lane.b32.xlu0 %v5803, 52
    %v6959 = vpop.permute.xlu0 %6958
    %6960 = vrot.lane.b32.xlu0 %v5806, 52
    %v6961 = vpop.permute.xlu0 %6960
    %6962 = vrot.lane.b32.xlu0 %v5809, 52
    %v6963 = vpop.permute.xlu0 %6962
    %6964 = vrot.lane.b32.xlu0 %v5812, 52
    %v6965 = vpop.permute.xlu0 %6964
    %6966 = vrot.lane.b32.xlu0 %v5815, 52
    %v6967 = vpop.permute.xlu0 %6966
    %6968 = vrot.lane.b32.xlu0 %v6231, 52
    %v6969 = vpop.permute.xlu0 %6968
    %6970 = vrot.lane.b32.xlu0 %v6601, 52
    %v6971 = vpop.permute.xlu0 %6970
    %6972 = vrot.lane.b32.xlu0 %v6954, 52
    %v6973 = vpop.permute.xlu0 %6972
    %6974 = vrot.lane.b32.xlu0 %v5827, 52
    %v6975 = vpop.permute.xlu0 %6974
    %6976 = vrot.lane.b32.xlu0 %v5830, 52
    %v6977 = vpop.permute.xlu0 %6976
    %6978 = vrot.lane.b32.xlu0 %v5833, 52
    %v6979 = vpop.permute.xlu0 %6978
    %6980 = vrot.lane.b32.xlu0 %v5836, 52
    %v6981 = vpop.permute.xlu0 %6980
    %6982 = vrot.lane.b32.xlu0 %v5839, 52
    %v6983 = vpop.permute.xlu0 %6982
    %6984 = vrot.lane.b32.xlu0 %v6234, 52
    %v6985 = vpop.permute.xlu0 %6984
    %6986 = vrot.lane.b32.xlu0 %v6604, 52
    %v6987 = vpop.permute.xlu0 %6986
    %6988 = vrot.lane.b32.xlu0 %v6957, 52
    %v6989 = vpop.permute.xlu0 %6988
    %vm7006 = vcmask 507296
    %7007 = vst.msk [vmem:[#allocation3 + $0x8] sm:$0xff] %vm7006, %v6959
    %7008 = vst.msk [vmem:[#allocation3 + $0x18] sm:$0xff] %vm7006, %v6961
    %7009 = vst.msk [vmem:[#allocation3 + $0x28] sm:$0xff] %vm7006, %v6963
    %7010 = vst.msk [vmem:[#allocation3 + $0x38] sm:$0xff] %vm7006, %v6965
    %7011 = vst.msk [vmem:[#allocation3 + $0x48] sm:$0xff] %vm7006, %v6967
    %7012 = vst.msk [vmem:[#allocation3 + $0x58] sm:$0xff] %vm7006, %v6969
    %7013 = vst.msk [vmem:[#allocation3 + $0x68] sm:$0xff] %vm7006, %v6971
    %7014 = vst.msk [vmem:[#allocation3 + $0x78] sm:$0xff] %vm7006, %v6973
    %7015 = vst.msk [vmem:[#allocation3 + $0x88] sm:$0xff] %vm7006, %v6975
    %7016 = vst.msk [vmem:[#allocation3 + $0x98] sm:$0xff] %vm7006, %v6977
    %7017 = vst.msk [vmem:[#allocation3 + $0xa8] sm:$0xff] %vm7006, %v6979
    %7018 = vst.msk [vmem:[#allocation3 + $0xb8] sm:$0xff] %vm7006, %v6981
    %7019 = vst.msk [vmem:[#allocation3 + $0xc8] sm:$0xff] %vm7006, %v6983
    %7020 = vst.msk [vmem:[#allocation3 + $0xd8] sm:$0xff] %vm7006, %v6985
    %7021 = vst.msk [vmem:[#allocation3 + $0xe8] sm:$0xff] %vm7006, %v6987
    %7022 = vst.msk [vmem:[#allocation3 + $0xf8] sm:$0xff] %vm7006, %v6989
    %v7023 = vrot.slane %v5104, 4
    %v7024 = vrot.slane %v5105, 4
    %v7025 = vsel %vm99, %v7023, %v7024
    %v7026 = vrot.slane %v5128, 4
    %v7027 = vrot.slane %v5129, 4
    %v7028 = vsel %vm99, %v7026, %v7027
    %7029 = vrot.lane.b32.xlu0 %v5916, 62
    %v7030 = vpop.permute.xlu0 %7029
    %7031 = vrot.lane.b32.xlu0 %v5919, 62
    %v7032 = vpop.permute.xlu0 %7031
    %7033 = vrot.lane.b32.xlu0 %v5922, 62
    %v7034 = vpop.permute.xlu0 %7033
    %7035 = vrot.lane.b32.xlu0 %v5925, 62
    %v7036 = vpop.permute.xlu0 %7035
    %7037 = vrot.lane.b32.xlu0 %v5928, 62
    %v7038 = vpop.permute.xlu0 %7037
    %7039 = vrot.lane.b32.xlu0 %v6302, 62
    %v7040 = vpop.permute.xlu0 %7039
    %7041 = vrot.lane.b32.xlu0 %v6672, 62
    %v7042 = vpop.permute.xlu0 %7041
    %7043 = vrot.lane.b32.xlu0 %v7025, 62
    %v7044 = vpop.permute.xlu0 %7043
    %7045 = vrot.lane.b32.xlu0 %v5940, 62
    %v7046 = vpop.permute.xlu0 %7045
    %7047 = vrot.lane.b32.xlu0 %v5943, 62
    %v7048 = vpop.permute.xlu0 %7047
    %7049 = vrot.lane.b32.xlu0 %v5946, 62
    %v7050 = vpop.permute.xlu0 %7049
    %7051 = vrot.lane.b32.xlu0 %v5949, 62
    %v7052 = vpop.permute.xlu0 %7051
    %7053 = vrot.lane.b32.xlu0 %v5952, 62
    %v7054 = vpop.permute.xlu0 %7053
    %7055 = vrot.lane.b32.xlu0 %v6305, 62
    %v7056 = vpop.permute.xlu0 %7055
    %7057 = vrot.lane.b32.xlu0 %v6675, 62
    %v7058 = vpop.permute.xlu0 %7057
    %7059 = vrot.lane.b32.xlu0 %v7028, 62
    %v7060 = vpop.permute.xlu0 %7059
    %vm7077 = vcmask 589296
    %7078 = vst.msk [vmem:[#allocation3 + $0x8] sm:$0xff] %vm7077, %v7030
    %7079 = vst.msk [vmem:[#allocation3 + $0x18] sm:$0xff] %vm7077, %v7032
    %7080 = vst.msk [vmem:[#allocation3 + $0x28] sm:$0xff] %vm7077, %v7034
    %7081 = vst.msk [vmem:[#allocation3 + $0x38] sm:$0xff] %vm7077, %v7036
    %7082 = vst.msk [vmem:[#allocation3 + $0x48] sm:$0xff] %vm7077, %v7038
    %7083 = vst.msk [vmem:[#allocation3 + $0x58] sm:$0xff] %vm7077, %v7040
    %7084 = vst.msk [vmem:[#allocation3 + $0x68] sm:$0xff] %vm7077, %v7042
    %7085 = vst.msk [vmem:[#allocation3 + $0x78] sm:$0xff] %vm7077, %v7044
    %7086 = vst.msk [vmem:[#allocation3 + $0x88] sm:$0xff] %vm7077, %v7046
    %7087 = vst.msk [vmem:[#allocation3 + $0x98] sm:$0xff] %vm7077, %v7048
    %7088 = vst.msk [vmem:[#allocation3 + $0xa8] sm:$0xff] %vm7077, %v7050
    %7089 = vst.msk [vmem:[#allocation3 + $0xb8] sm:$0xff] %vm7077, %v7052
    %7090 = vst.msk [vmem:[#allocation3 + $0xc8] sm:$0xff] %vm7077, %v7054
    %7091 = vst.msk [vmem:[#allocation3 + $0xd8] sm:$0xff] %vm7077, %v7056
    %7092 = vst.msk [vmem:[#allocation3 + $0xe8] sm:$0xff] %vm7077, %v7058
    %7093 = vst.msk [vmem:[#allocation3 + $0xf8] sm:$0xff] %vm7077, %v7060
    %7096 = vrot.lane.b32.xlu0 %v5092, 72
    %v7097 = vpop.permute.xlu0 %7096
    %7098 = vrot.lane.b32.xlu0 %v5094, 72
    %v7099 = vpop.permute.xlu0 %7098
    %7100 = vrot.lane.b32.xlu0 %v5096, 72
    %v7101 = vpop.permute.xlu0 %7100
    %7102 = vrot.lane.b32.xlu0 %v5098, 72
    %v7103 = vpop.permute.xlu0 %7102
    %7104 = vrot.lane.b32.xlu0 %v5100, 72
    %v7105 = vpop.permute.xlu0 %7104
    %7106 = vrot.lane.b32.xlu0 %v5102, 72
    %v7107 = vpop.permute.xlu0 %7106
    %7108 = vrot.lane.b32.xlu0 %v5104, 72
    %v7109 = vpop.permute.xlu0 %7108
    %7110 = vrot.lane.b32.xlu0 %v5106, 72
    %v7111 = vpop.permute.xlu0 %7110
    %7112 = vrot.lane.b32.xlu0 %v5116, 72
    %v7113 = vpop.permute.xlu0 %7112
    %7114 = vrot.lane.b32.xlu0 %v5118, 72
    %v7115 = vpop.permute.xlu0 %7114
    %7116 = vrot.lane.b32.xlu0 %v5120, 72
    %v7117 = vpop.permute.xlu0 %7116
    %7118 = vrot.lane.b32.xlu0 %v5122, 72
    %v7119 = vpop.permute.xlu0 %7118
    %7120 = vrot.lane.b32.xlu0 %v5124, 72
    %v7121 = vpop.permute.xlu0 %7120
    %7122 = vrot.lane.b32.xlu0 %v5126, 72
    %v7123 = vpop.permute.xlu0 %7122
    %7124 = vrot.lane.b32.xlu0 %v5128, 72
    %v7125 = vpop.permute.xlu0 %7124
    %7126 = vrot.lane.b32.xlu0 %v5130, 72
    %v7127 = vpop.permute.xlu0 %7126
    %vm7144 = vcmask 671296
    %7145 = vst.msk [vmem:[#allocation3 + $0x8] sm:$0xff] %vm7144, %v7097
    %7146 = vst.msk [vmem:[#allocation3 + $0x18] sm:$0xff] %vm7144, %v7099
    %7147 = vst.msk [vmem:[#allocation3 + $0x28] sm:$0xff] %vm7144, %v7101
    %7148 = vst.msk [vmem:[#allocation3 + $0x38] sm:$0xff] %vm7144, %v7103
    %7149 = vst.msk [vmem:[#allocation3 + $0x48] sm:$0xff] %vm7144, %v7105
    %7150 = vst.msk [vmem:[#allocation3 + $0x58] sm:$0xff] %vm7144, %v7107
    %7151 = vst.msk [vmem:[#allocation3 + $0x68] sm:$0xff] %vm7144, %v7109
    %7152 = vst.msk [vmem:[#allocation3 + $0x78] sm:$0xff] %vm7144, %v7111
    %7153 = vst.msk [vmem:[#allocation3 + $0x88] sm:$0xff] %vm7144, %v7113
    %7154 = vst.msk [vmem:[#allocation3 + $0x98] sm:$0xff] %vm7144, %v7115
    %7155 = vst.msk [vmem:[#allocation3 + $0xa8] sm:$0xff] %vm7144, %v7117
    %7156 = vst.msk [vmem:[#allocation3 + $0xb8] sm:$0xff] %vm7144, %v7119
    %7157 = vst.msk [vmem:[#allocation3 + $0xc8] sm:$0xff] %vm7144, %v7121
    %7158 = vst.msk [vmem:[#allocation3 + $0xd8] sm:$0xff] %vm7144, %v7123
    %7159 = vst.msk [vmem:[#allocation3 + $0xe8] sm:$0xff] %vm7144, %v7125
    %7160 = vst.msk [vmem:[#allocation3 + $0xf8] sm:$0xff] %vm7144, %v7127
    %v7163 = vrot.slane %v5106, 1
    %v7164 = vrot.slane %v5107, 1
    %v7165 = vsel %vm62, %v7163, %v7164
    %v7166 = vrot.slane %v5130, 1
    %v7167 = vrot.slane %v5131, 1
    %v7168 = vsel %vm62, %v7166, %v7167
    %7169 = vrot.lane.b32.xlu0 %v5580, 82
    %v7170 = vpop.permute.xlu0 %7169
    %7171 = vrot.lane.b32.xlu0 %v5583, 82
    %v7172 = vpop.permute.xlu0 %7171
    %7173 = vrot.lane.b32.xlu0 %v5586, 82
    %v7174 = vpop.permute.xlu0 %7173
    %7175 = vrot.lane.b32.xlu0 %v5589, 82
    %v7176 = vpop.permute.xlu0 %7175
    %7177 = vrot.lane.b32.xlu0 %v6089, 82
    %v7178 = vpop.permute.xlu0 %7177
    %7179 = vrot.lane.b32.xlu0 %v6442, 82
    %v7180 = vpop.permute.xlu0 %7179
    %7181 = vrot.lane.b32.xlu0 %v6812, 82
    %v7182 = vpop.permute.xlu0 %7181
    %7183 = vrot.lane.b32.xlu0 %v7165, 82
    %v7184 = vpop.permute.xlu0 %7183
    %7185 = vrot.lane.b32.xlu0 %v5604, 82
    %v7186 = vpop.permute.xlu0 %7185
    %7187 = vrot.lane.b32.xlu0 %v5607, 82
    %v7188 = vpop.permute.xlu0 %7187
    %7189 = vrot.lane.b32.xlu0 %v5610, 82
    %v7190 = vpop.permute.xlu0 %7189
    %7191 = vrot.lane.b32.xlu0 %v5613, 82
    %v7192 = vpop.permute.xlu0 %7191
    %7193 = vrot.lane.b32.xlu0 %v6092, 82
    %v7194 = vpop.permute.xlu0 %7193
    %7195 = vrot.lane.b32.xlu0 %v6445, 82
    %v7196 = vpop.permute.xlu0 %7195
    %7197 = vrot.lane.b32.xlu0 %v6815, 82
    %v7198 = vpop.permute.xlu0 %7197
    %7199 = vrot.lane.b32.xlu0 %v7168, 82
    %v7200 = vpop.permute.xlu0 %7199
    %vm7217 = vcmask 753296
    %7218 = vst.msk [vmem:[#allocation3 + $0x8] sm:$0xff] %vm7217, %v7170
    %7219 = vst.msk [vmem:[#allocation3 + $0x18] sm:$0xff] %vm7217, %v7172
    %7220 = vst.msk [vmem:[#allocation3 + $0x28] sm:$0xff] %vm7217, %v7174
    %7221 = vst.msk [vmem:[#allocation3 + $0x38] sm:$0xff] %vm7217, %v7176
    %7222 = vst.msk [vmem:[#allocation3 + $0x48] sm:$0xff] %vm7217, %v7178
    %7223 = vst.msk [vmem:[#allocation3 + $0x58] sm:$0xff] %vm7217, %v7180
    %7224 = vst.msk [vmem:[#allocation3 + $0x68] sm:$0xff] %vm7217, %v7182
    %7225 = vst.msk [vmem:[#allocation3 + $0x78] sm:$0xff] %vm7217, %v7184
    %7226 = vst.msk [vmem:[#allocation3 + $0x88] sm:$0xff] %vm7217, %v7186
    %7227 = vst.msk [vmem:[#allocation3 + $0x98] sm:$0xff] %vm7217, %v7188
    %7228 = vst.msk [vmem:[#allocation3 + $0xa8] sm:$0xff] %vm7217, %v7190
    %7229 = vst.msk [vmem:[#allocation3 + $0xb8] sm:$0xff] %vm7217, %v7192
    %7230 = vst.msk [vmem:[#allocation3 + $0xc8] sm:$0xff] %vm7217, %v7194
    %7231 = vst.msk [vmem:[#allocation3 + $0xd8] sm:$0xff] %vm7217, %v7196
    %7232 = vst.msk [vmem:[#allocation3 + $0xe8] sm:$0xff] %vm7217, %v7198
    %7233 = vst.msk [vmem:[#allocation3 + $0xf8] sm:$0xff] %vm7217, %v7200
    %v7234 = vrot.slane %v5106, 2
    %v7235 = vrot.slane %v5107, 2
    %v7236 = vsel %vm326, %v7234, %v7235
    %v7237 = vrot.slane %v5130, 2
    %v7238 = vrot.slane %v5131, 2
    %v7239 = vsel %vm326, %v7237, %v7238
    %7240 = vrot.lane.b32.xlu0 %v5693, 92
    %v7241 = vpop.permute.xlu0 %7240
    %7242 = vrot.lane.b32.xlu0 %v5696, 92
    %v7243 = vpop.permute.xlu0 %7242
    %7244 = vrot.lane.b32.xlu0 %v5699, 92
    %v7245 = vpop.permute.xlu0 %7244
    %7246 = vrot.lane.b32.xlu0 %v5702, 92
    %v7247 = vpop.permute.xlu0 %7246
    %7248 = vrot.lane.b32.xlu0 %v6160, 92
    %v7249 = vpop.permute.xlu0 %7248
    %7250 = vrot.lane.b32.xlu0 %v6513, 92
    %v7251 = vpop.permute.xlu0 %7250
    %7252 = vrot.lane.b32.xlu0 %v6883, 92
    %v7253 = vpop.permute.xlu0 %7252
    %7254 = vrot.lane.b32.xlu0 %v7236, 92
    %v7255 = vpop.permute.xlu0 %7254
    %7256 = vrot.lane.b32.xlu0 %v5717, 92
    %v7257 = vpop.permute.xlu0 %7256
    %7258 = vrot.lane.b32.xlu0 %v5720, 92
    %v7259 = vpop.permute.xlu0 %7258
    %7260 = vrot.lane.b32.xlu0 %v5723, 92
    %v7261 = vpop.permute.xlu0 %7260
    %7262 = vrot.lane.b32.xlu0 %v5726, 92
    %v7263 = vpop.permute.xlu0 %7262
    %7264 = vrot.lane.b32.xlu0 %v6163, 92
    %v7265 = vpop.permute.xlu0 %7264
    %7266 = vrot.lane.b32.xlu0 %v6516, 92
    %v7267 = vpop.permute.xlu0 %7266
    %7268 = vrot.lane.b32.xlu0 %v6886, 92
    %v7269 = vpop.permute.xlu0 %7268
    %7270 = vrot.lane.b32.xlu0 %v7239, 92
    %v7271 = vpop.permute.xlu0 %7270
    %vm7288 = vcmask 835296
    %7289 = vst.msk [vmem:[#allocation3 + $0x8] sm:$0xff] %vm7288, %v7241
    %7290 = vst.msk [vmem:[#allocation3 + $0x18] sm:$0xff] %vm7288, %v7243
    %7291 = vst.msk [vmem:[#allocation3 + $0x28] sm:$0xff] %vm7288, %v7245
    %7292 = vst.msk [vmem:[#allocation3 + $0x38] sm:$0xff] %vm7288, %v7247
    %7293 = vst.msk [vmem:[#allocation3 + $0x48] sm:$0xff] %vm7288, %v7249
    %7294 = vst.msk [vmem:[#allocation3 + $0x58] sm:$0xff] %vm7288, %v7251
    %7295 = vst.msk [vmem:[#allocation3 + $0x68] sm:$0xff] %vm7288, %v7253
    %7296 = vst.msk [vmem:[#allocation3 + $0x78] sm:$0xff] %vm7288, %v7255
    %7297 = vst.msk [vmem:[#allocation3 + $0x88] sm:$0xff] %vm7288, %v7257
    %7298 = vst.msk [vmem:[#allocation3 + $0x98] sm:$0xff] %vm7288, %v7259
    %7299 = vst.msk [vmem:[#allocation3 + $0xa8] sm:$0xff] %vm7288, %v7261
    %7300 = vst.msk [vmem:[#allocation3 + $0xb8] sm:$0xff] %vm7288, %v7263
    %7301 = vst.msk [vmem:[#allocation3 + $0xc8] sm:$0xff] %vm7288, %v7265
    %7302 = vst.msk [vmem:[#allocation3 + $0xd8] sm:$0xff] %vm7288, %v7267
    %7303 = vst.msk [vmem:[#allocation3 + $0xe8] sm:$0xff] %vm7288, %v7269
    %7304 = vst.msk [vmem:[#allocation3 + $0xf8] sm:$0xff] %vm7288, %v7271
    %v7305 = vrot.slane %v5106, 3
    %v7306 = vrot.slane %v5107, 3
    %v7307 = vsel %vm481, %v7305, %v7306
    %v7308 = vrot.slane %v5130, 3
    %v7309 = vrot.slane %v5131, 3
    %v7310 = vsel %vm481, %v7308, %v7309
    %7311 = vrot.lane.b32.xlu0 %v5806, 102
    %v7312 = vpop.permute.xlu0 %7311
    %7313 = vrot.lane.b32.xlu0 %v5809, 102
    %v7314 = vpop.permute.xlu0 %7313
    %7315 = vrot.lane.b32.xlu0 %v5812, 102
    %v7316 = vpop.permute.xlu0 %7315
    %7317 = vrot.lane.b32.xlu0 %v5815, 102
    %v7318 = vpop.permute.xlu0 %7317
    %7319 = vrot.lane.b32.xlu0 %v6231, 102
    %v7320 = vpop.permute.xlu0 %7319
    %7321 = vrot.lane.b32.xlu0 %v6601, 102
    %v7322 = vpop.permute.xlu0 %7321
    %7323 = vrot.lane.b32.xlu0 %v6954, 102
    %v7324 = vpop.permute.xlu0 %7323
    %7325 = vrot.lane.b32.xlu0 %v7307, 102
    %v7326 = vpop.permute.xlu0 %7325
    %7327 = vrot.lane.b32.xlu0 %v5830, 102
    %v7328 = vpop.permute.xlu0 %7327
    %7329 = vrot.lane.b32.xlu0 %v5833, 102
    %v7330 = vpop.permute.xlu0 %7329
    %7331 = vrot.lane.b32.xlu0 %v5836, 102
    %v7332 = vpop.permute.xlu0 %7331
    %7333 = vrot.lane.b32.xlu0 %v5839, 102
    %v7334 = vpop.permute.xlu0 %7333
    %7335 = vrot.lane.b32.xlu0 %v6234, 102
    %v7336 = vpop.permute.xlu0 %7335
    %7337 = vrot.lane.b32.xlu0 %v6604, 102
    %v7338 = vpop.permute.xlu0 %7337
    %7339 = vrot.lane.b32.xlu0 %v6957, 102
    %v7340 = vpop.permute.xlu0 %7339
    %7341 = vrot.lane.b32.xlu0 %v7310, 102
    %v7342 = vpop.permute.xlu0 %7341
    %vm7359 = vcmask 917296
    %7360 = vst.msk [vmem:[#allocation3 + $0x8] sm:$0xff] %vm7359, %v7312
    %7361 = vst.msk [vmem:[#allocation3 + $0x18] sm:$0xff] %vm7359, %v7314
    %7362 = vst.msk [vmem:[#allocation3 + $0x28] sm:$0xff] %vm7359, %v7316
    %7363 = vst.msk [vmem:[#allocation3 + $0x38] sm:$0xff] %vm7359, %v7318
    %7364 = vst.msk [vmem:[#allocation3 + $0x48] sm:$0xff] %vm7359, %v7320
    %7365 = vst.msk [vmem:[#allocation3 + $0x58] sm:$0xff] %vm7359, %v7322
    %7366 = vst.msk [vmem:[#allocation3 + $0x68] sm:$0xff] %vm7359, %v7324
    %7367 = vst.msk [vmem:[#allocation3 + $0x78] sm:$0xff] %vm7359, %v7326
    %7368 = vst.msk [vmem:[#allocation3 + $0x88] sm:$0xff] %vm7359, %v7328
    %7369 = vst.msk [vmem:[#allocation3 + $0x98] sm:$0xff] %vm7359, %v7330
    %7370 = vst.msk [vmem:[#allocation3 + $0xa8] sm:$0xff] %vm7359, %v7332
    %7371 = vst.msk [vmem:[#allocation3 + $0xb8] sm:$0xff] %vm7359, %v7334
    %7372 = vst.msk [vmem:[#allocation3 + $0xc8] sm:$0xff] %vm7359, %v7336
    %7373 = vst.msk [vmem:[#allocation3 + $0xd8] sm:$0xff] %vm7359, %v7338
    %7374 = vst.msk [vmem:[#allocation3 + $0xe8] sm:$0xff] %vm7359, %v7340
    %7375 = vst.msk [vmem:[#allocation3 + $0xf8] sm:$0xff] %vm7359, %v7342
    %v7376 = vrot.slane %v5106, 4
    %v7377 = vrot.slane %v5107, 4
    %v7378 = vsel %vm99, %v7376, %v7377
    %v7379 = vrot.slane %v5130, 4
    %v7380 = vrot.slane %v5131, 4
    %v7381 = vsel %vm99, %v7379, %v7380
    %7382 = vrot.lane.b32.xlu0 %v5919, 112
    %v7383 = vpop.permute.xlu0 %7382
    %7384 = vrot.lane.b32.xlu0 %v5922, 112
    %v7385 = vpop.permute.xlu0 %7384
    %7386 = vrot.lane.b32.xlu0 %v5925, 112
    %v7387 = vpop.permute.xlu0 %7386
    %7388 = vrot.lane.b32.xlu0 %v5928, 112
    %v7389 = vpop.permute.xlu0 %7388
    %7390 = vrot.lane.b32.xlu0 %v6302, 112
    %v7391 = vpop.permute.xlu0 %7390
    %7392 = vrot.lane.b32.xlu0 %v6672, 112
    %v7393 = vpop.permute.xlu0 %7392
    %7394 = vrot.lane.b32.xlu0 %v7025, 112
    %v7395 = vpop.permute.xlu0 %7394
    %7396 = vrot.lane.b32.xlu0 %v7378, 112
    %v7397 = vpop.permute.xlu0 %7396
    %7398 = vrot.lane.b32.xlu0 %v5943, 112
    %v7399 = vpop.permute.xlu0 %7398
    %7400 = vrot.lane.b32.xlu0 %v5946, 112
    %v7401 = vpop.permute.xlu0 %7400
    %7402 = vrot.lane.b32.xlu0 %v5949, 112
    %v7403 = vpop.permute.xlu0 %7402
    %7404 = vrot.lane.b32.xlu0 %v5952, 112
    %v7405 = vpop.permute.xlu0 %7404
    %7406 = vrot.lane.b32.xlu0 %v6305, 112
    %v7407 = vpop.permute.xlu0 %7406
    %7408 = vrot.lane.b32.xlu0 %v6675, 112
    %v7409 = vpop.permute.xlu0 %7408
    %7410 = vrot.lane.b32.xlu0 %v7028, 112
    %v7411 = vpop.permute.xlu0 %7410
    %7412 = vrot.lane.b32.xlu0 %v7381, 112
    %v7413 = vpop.permute.xlu0 %7412
    %vm7430 = vcmask 999296
    %7431 = vst.msk [vmem:[#allocation3 + $0x8] sm:$0xff] %vm7430, %v7383
    %7432 = vst.msk [vmem:[#allocation3 + $0x18] sm:$0xff] %vm7430, %v7385
    %7433 = vst.msk [vmem:[#allocation3 + $0x28] sm:$0xff] %vm7430, %v7387
    %7434 = vst.msk [vmem:[#allocation3 + $0x38] sm:$0xff] %vm7430, %v7389
    %7435 = vst.msk [vmem:[#allocation3 + $0x48] sm:$0xff] %vm7430, %v7391
    %7436 = vst.msk [vmem:[#allocation3 + $0x58] sm:$0xff] %vm7430, %v7393
    %7437 = vst.msk [vmem:[#allocation3 + $0x68] sm:$0xff] %vm7430, %v7395
    %7438 = vst.msk [vmem:[#allocation3 + $0x78] sm:$0xff] %vm7430, %v7397
    %7439 = vst.msk [vmem:[#allocation3 + $0x88] sm:$0xff] %vm7430, %v7399
    %7440 = vst.msk [vmem:[#allocation3 + $0x98] sm:$0xff] %vm7430, %v7401
    %7441 = vst.msk [vmem:[#allocation3 + $0xa8] sm:$0xff] %vm7430, %v7403
    %7442 = vst.msk [vmem:[#allocation3 + $0xb8] sm:$0xff] %vm7430, %v7405
    %7443 = vst.msk [vmem:[#allocation3 + $0xc8] sm:$0xff] %vm7430, %v7407
    %7444 = vst.msk [vmem:[#allocation3 + $0xd8] sm:$0xff] %vm7430, %v7409
    %7445 = vst.msk [vmem:[#allocation3 + $0xe8] sm:$0xff] %vm7430, %v7411
    %7446 = vst.msk [vmem:[#allocation3 + $0xf8] sm:$0xff] %vm7430, %v7413
    %v7447 = vld [vmem:[#allocation3] sm:$0xff]
    %v7448 = vld [vmem:[#allocation3 + $0x8] sm:$0xff]
    %v7449 = vld [vmem:[#allocation3 + $0x10] sm:$0xff]
    %v7450 = vld [vmem:[#allocation3 + $0x18] sm:$0xff]
    %v7451 = vld [vmem:[#allocation3 + $0x20] sm:$0xff]
    %v7452 = vld [vmem:[#allocation3 + $0x28] sm:$0xff]
    %v7453 = vld [vmem:[#allocation3 + $0x30] sm:$0xff]
    %v7454 = vld [vmem:[#allocation3 + $0x38] sm:$0xff]
    %v7455 = vld [vmem:[#allocation3 + $0x40] sm:$0xff]
    %v7456 = vld [vmem:[#allocation3 + $0x48] sm:$0xff]
    %v7457 = vld [vmem:[#allocation3 + $0x50] sm:$0xff]
    %v7458 = vld [vmem:[#allocation3 + $0x58] sm:$0xff]
    %v7459 = vld [vmem:[#allocation3 + $0x60] sm:$0xff]
    %v7460 = vld [vmem:[#allocation3 + $0x68] sm:$0xff]
    %v7461 = vld [vmem:[#allocation3 + $0x70] sm:$0xff]
    %v7462 = vld [vmem:[#allocation3 + $0x78] sm:$0xff]
    %v7463 = vld [vmem:[#allocation3 + $0x80] sm:$0xff]
    %v7464 = vld [vmem:[#allocation3 + $0x88] sm:$0xff]
    %v7465 = vld [vmem:[#allocation3 + $0x90] sm:$0xff]
    %v7466 = vld [vmem:[#allocation3 + $0x98] sm:$0xff]
    %v7467 = vld [vmem:[#allocation3 + $0xa0] sm:$0xff]
    %v7468 = vld [vmem:[#allocation3 + $0xa8] sm:$0xff]
    %v7469 = vld [vmem:[#allocation3 + $0xb0] sm:$0xff]
    %v7470 = vld [vmem:[#allocation3 + $0xb8] sm:$0xff]
    %v7471 = vld [vmem:[#allocation3 + $0xc0] sm:$0xff]
    %v7472 = vld [vmem:[#allocation3 + $0xc8] sm:$0xff]
    %v7473 = vld [vmem:[#allocation3 + $0xd0] sm:$0xff]
    %v7474 = vld [vmem:[#allocation3 + $0xd8] sm:$0xff]
    %v7475 = vld [vmem:[#allocation3 + $0xe0] sm:$0xff]
    %v7476 = vld [vmem:[#allocation3 + $0xe8] sm:$0xff]
    %v7477 = vld [vmem:[#allocation3 + $0xf0] sm:$0xff]
    %v7478 = vld [vmem:[#allocation3 + $0xf8] sm:$0xff]
    %v7479 = vld [vmem:[%s3] sm:$0xff]
    %v7480 = vld [vmem:[%s3 + $0x8] sm:$0xff]
    %v7481 = vld [vmem:[%s3 + $0x10] sm:$0xff]
    %v7482 = vld [vmem:[%s3 + $0x18] sm:$0xff]
    %v7483 = vld [vmem:[%s3 + $0x20] sm:$0xff]
    %v7484 = vld [vmem:[%s3 + $0x28] sm:$0xff]
    %v7485 = vld [vmem:[%s3 + $0x30] sm:$0xff]
    %v7486 = vld [vmem:[%s3 + $0x38] sm:$0xff]
    %v7487 = vld [vmem:[%s3 + $0x40] sm:$0xff]
    %v7488 = vld [vmem:[%s3 + $0x48] sm:$0xff]
    %v7489 = vld [vmem:[%s3 + $0x50] sm:$0xff]
    %v7490 = vld [vmem:[%s3 + $0x58] sm:$0xff]
    %v7491 = vld [vmem:[%s3 + $0x60] sm:$0xff]
    %v7492 = vld [vmem:[%s3 + $0x68] sm:$0xff]
    %v7493 = vld [vmem:[%s3 + $0x70] sm:$0xff]
    %v7494 = vld [vmem:[%s3 + $0x78] sm:$0xff]
    %v7495 = vld [vmem:[%s3 + $0x80] sm:$0xff]
    %v7496 = vld [vmem:[%s3 + $0x88] sm:$0xff]
    %v7497 = vld [vmem:[%s3 + $0x90] sm:$0xff]
    %v7498 = vld [vmem:[%s3 + $0x98] sm:$0xff]
    %v7499 = vld [vmem:[%s3 + $0xa0] sm:$0xff]
    %v7500 = vld [vmem:[%s3 + $0xa8] sm:$0xff]
    %v7501 = vld [vmem:[%s3 + $0xb0] sm:$0xff]
    %v7502 = vld [vmem:[%s3 + $0xb8] sm:$0xff]
    %v7503 = vld [vmem:[%s3 + $0xc0] sm:$0xff]
    %v7504 = vld [vmem:[%s3 + $0xc8] sm:$0xff]
    %v7505 = vld [vmem:[%s3 + $0xd0] sm:$0xff]
    %v7506 = vld [vmem:[%s3 + $0xd8] sm:$0xff]
    %v7507 = vld [vmem:[%s3 + $0xe0] sm:$0xff]
    %v7508 = vld [vmem:[%s3 + $0xe8] sm:$0xff]
    %v7509 = vld [vmem:[%s3 + $0xf0] sm:$0xff]
    %v7510 = vld [vmem:[%s3 + $0xf8] sm:$0x3]
    %vm7511 = vcmask 998400
    %v7513 = vsel %vm7511, %v7448, 0
    %v7516 = vsel %vm7511, %v7450, 0
    %v7519 = vsel %vm7511, %v7452, 0
    %v7522 = vsel %vm7511, %v7454, 0
    %v7525 = vsel %vm7511, %v7456, 0
    %v7528 = vsel %vm7511, %v7458, 0
    %v7531 = vsel %vm7511, %v7460, 0
    %v7534 = vsel %vm7511, %v7462, 0
    %v7537 = vsel %vm7511, %v7464, 0
    %v7540 = vsel %vm7511, %v7466, 0
    %v7543 = vsel %vm7511, %v7468, 0
    %v7546 = vsel %vm7511, %v7470, 0
    %v7549 = vsel %vm7511, %v7472, 0
    %v7552 = vsel %vm7511, %v7474, 0
    %v7555 = vsel %vm7511, %v7476, 0
    %v7558 = vsel %vm7511, %v7478, 0
    %vm7560 = vcmask 1041408
    %v7562 = vsel %vm7560, %v7510, 0
    %7564 = vmatprep.subr.mxu0 0.0
    %7565 = vmatpush1.msra.mxu0 %v7479
    %7566 = vmatprep.subr.mxu0 0.0
    %7567 = vmatpush1.msra.mxu0 %v7480
    %7568 = vmatprep.subr.mxu0 0.0
    %7569 = vmatpush1.msra.mxu0 %v7481
    %7570 = vmatprep.subr.mxu0 0.0
    %7571 = vmatpush1.msra.mxu0 %v7482
    %7572 = vmatprep.subr.mxu0 0.0
    %7573 = vmatpush1.msra.mxu0 %v7483
    %7574 = vmatprep.subr.mxu0 0.0
    %7575 = vmatpush1.msra.mxu0 %v7484
    %7576 = vmatprep.subr.mxu0 0.0
    %7577 = vmatpush1.msra.mxu0 %v7485
    %7578 = vmatprep.subr.mxu0 0.0
    %7579 = vmatpush1.msra.mxu0 %v7486
    %7580 = vmatprep.subr.mxu0 0.0
    %7581 = vmatpush1.msra.mxu0 %v7487
    %7582 = vmatprep.subr.mxu0 0.0
    %7583 = vmatpush1.msra.mxu0 %v7488
    %7584 = vmatprep.subr.mxu0 0.0
    %7585 = vmatpush1.msra.mxu0 %v7489
    %7586 = vmatprep.subr.mxu0 0.0
    %7587 = vmatpush1.msra.mxu0 %v7490
    %7588 = vmatprep.subr.mxu0 0.0
    %7589 = vmatpush1.msra.mxu0 %v7491
    %7590 = vmatprep.subr.mxu0 0.0
    %7591 = vmatpush1.msra.mxu0 %v7492
    %7592 = vmatprep.subr.mxu0 0.0
    %7593 = vmatpush1.msra.mxu0 %v7493
    %7594 = vmatprep.subr.mxu0 0.0
    %7595 = vmatpush1.msra.mxu0 %v7494
    %7596 = vmatprep.subr.mxu0 0.0
    %7597 = vmatpush1.msra.mxu0 %v7495
    %7598 = vmatprep.subr.mxu0 0.0
    %7599 = vmatpush1.msra.mxu0 %v7496
    %7600 = vmatprep.subr.mxu0 0.0
    %7601 = vmatpush1.msra.mxu0 %v7497
    %7602 = vmatprep.subr.mxu0 0.0
    %7603 = vmatpush1.msra.mxu0 %v7498
    %7604 = vmatprep.subr.mxu0 0.0
    %7605 = vmatpush1.msra.mxu0 %v7499
    %7606 = vmatprep.subr.mxu0 0.0
    %7607 = vmatpush1.msra.mxu0 %v7500
    %7608 = vmatprep.subr.mxu0 0.0
    %7609 = vmatpush1.msra.mxu0 %v7501
    %7610 = vmatprep.subr.mxu0 0.0
    %7611 = vmatpush1.msra.mxu0 %v7502
    %7612 = vmatprep.subr.mxu0 0.0
    %7613 = vmatpush1.msra.mxu0 %v7503
    %7614 = vmatprep.subr.mxu0 0.0
    %7615 = vmatpush1.msra.mxu0 %v7504
    %7616 = vmatprep.subr.mxu0 0.0
    %7617 = vmatpush1.msra.mxu0 %v7505
    %7618 = vmatprep.subr.mxu0 0.0
    %7619 = vmatpush1.msra.mxu0 %v7506
    %7620 = vmatprep.subr.mxu0 0.0
    %7621 = vmatpush1.msra.mxu0 %v7507
    %7622 = vmatprep.subr.mxu0 0.0
    %7623 = vmatpush1.msra.mxu0 %v7508
    %7624 = vmatprep.subr.mxu0 0.0
    %7625 = vmatpush1.msra.mxu0 %v7509
    %7626 = vmatprep.subr.mxu0 0.0
    %7627 = vmatpush1.msra.mxu0 %v7562
    %7628 = vmatprep.mubr.f32.mxu0 %v7513
    %7629 = vmatmul.mubr.f32.gmra.mrb[0].mxu0 %v7447
    %v7630 = vpop.f32.mrb[0].mxu0
    %v7631 = vadd.f32 0.0, %v7630
    %v7632 = vpop.f32.mrb[0].mxu0
    %7633 = vmatprep.mubr.f32.mxu0 %v7516
    %7634 = vmatmul.mubr.f32.gmra.mrb[0].mxu0 %v7449
    %v7635 = vpop.f32.mrb[0].mxu0
    %v7636 = vadd.f32 0.0, %v7635
    %v7637 = vpop.f32.mrb[0].mxu0
    %7638 = vmatprep.mubr.f32.mxu0 %v7519
    %7639 = vmatmul.mubr.f32.gmra.mrb[0].mxu0 %v7451
    %v7640 = vpop.f32.mrb[0].mxu0
    %v7641 = vadd.f32 0.0, %v7640
    %v7642 = vpop.f32.mrb[0].mxu0
    %7643 = vmatprep.mubr.f32.mxu0 %v7522
    %7644 = vmatmul.mubr.f32.gmra.mrb[0].mxu0 %v7453
    %v7645 = vpop.f32.mrb[0].mxu0
    %v7646 = vadd.f32 0.0, %v7645
    %v7647 = vpop.f32.mrb[0].mxu0
    %7648 = vmatprep.mubr.f32.mxu0 %v7525
    %7649 = vmatmul.mubr.f32.gmra.mrb[0].mxu0 %v7455
    %v7650 = vpop.f32.mrb[0].mxu0
    %v7651 = vadd.f32 0.0, %v7650
    %v7652 = vpop.f32.mrb[0].mxu0
    %7653 = vmatprep.mubr.f32.mxu0 %v7528
    %7654 = vmatmul.mubr.f32.gmra.mrb[0].mxu0 %v7457
    %v7655 = vpop.f32.mrb[0].mxu0
    %v7656 = vadd.f32 0.0, %v7655
    %v7657 = vpop.f32.mrb[0].mxu0
    %7658 = vmatprep.mubr.f32.mxu0 %v7531
    %7659 = vmatmul.mubr.f32.gmra.mrb[0].mxu0 %v7459
    %v7660 = vpop.f32.mrb[0].mxu0
    %v7661 = vadd.f32 0.0, %v7660
    %v7662 = vpop.f32.mrb[0].mxu0
    %7663 = vmatprep.mubr.f32.mxu0 %v7534
    %7664 = vmatmul.mubr.f32.gmra.mrb[0].mxu0 %v7461
    %v7665 = vpop.f32.mrb[0].mxu0
    %v7666 = vadd.f32 0.0, %v7665
    %v7667 = vpop.f32.mrb[0].mxu0
    %7668 = vmatprep.mubr.f32.mxu0 %v7537
    %7669 = vmatmul.mubr.f32.gmra.mrb[0].mxu0 %v7463
    %v7670 = vpop.f32.mrb[0].mxu0
    %v7671 = vadd.f32 0.0, %v7670
    %v7672 = vpop.f32.mrb[0].mxu0
    %7673 = vmatprep.mubr.f32.mxu0 %v7540
    %7674 = vmatmul.mubr.f32.gmra.mrb[0].mxu0 %v7465
    %v7675 = vpop.f32.mrb[0].mxu0
    %v7676 = vadd.f32 0.0, %v7675
    %v7677 = vpop.f32.mrb[0].mxu0
    %7678 = vmatprep.mubr.f32.mxu0 %v7543
    %7679 = vmatmul.mubr.f32.gmra.mrb[0].mxu0 %v7467
    %v7680 = vpop.f32.mrb[0].mxu0
    %v7681 = vadd.f32 0.0, %v7680
    %v7682 = vpop.f32.mrb[0].mxu0
    %7683 = vmatprep.mubr.f32.mxu0 %v7546
    %7684 = vmatmul.mubr.f32.gmra.mrb[0].mxu0 %v7469
    %v7685 = vpop.f32.mrb[0].mxu0
    %v7686 = vadd.f32 0.0, %v7685
    %v7687 = vpop.f32.mrb[0].mxu0
    %7688 = vmatprep.mubr.f32.mxu0 %v7549
    %7689 = vmatmul.mubr.f32.gmra.mrb[0].mxu0 %v7471
    %v7690 = vpop.f32.mrb[0].mxu0
    %v7691 = vadd.f32 0.0, %v7690
    %v7692 = vpop.f32.mrb[0].mxu0
    %7693 = vmatprep.mubr.f32.mxu0 %v7552
    %7694 = vmatmul.mubr.f32.gmra.mrb[0].mxu0 %v7473
    %v7695 = vpop.f32.mrb[0].mxu0
    %v7696 = vadd.f32 0.0, %v7695
    %v7697 = vpop.f32.mrb[0].mxu0
    %7698 = vmatprep.mubr.f32.mxu0 %v7555
    %7699 = vmatmul.mubr.f32.gmra.mrb[0].mxu0 %v7475
    %v7700 = vpop.f32.mrb[0].mxu0
    %v7701 = vadd.f32 0.0, %v7700
    %v7702 = vpop.f32.mrb[0].mxu0
    %7703 = vmatprep.mubr.f32.mxu0 %v7558
    %7704 = vmatmul.mubr.f32.gmra.mrb[0].mxu0 %v7477
    %v7705 = vpop.f32.mrb[0].mxu0
    %v7706 = vadd.f32 0.0, %v7705
    %v7707 = vpop.f32.mrb[0].mxu0
    %7708 = vdwg.mxu0
    %vm7709 = vcmask 162816
    %7710 = vst.msk [vmem:[#allocation4] sm:$0xff] %vm7709, %v7631
    %7711 = vst.msk [vmem:[#allocation4 + $0x8] sm:$0xff] %vm7709, %v7636
    %7712 = vst.msk [vmem:[#allocation4 + $0x10] sm:$0xff] %vm7709, %v7641
    %7713 = vst.msk [vmem:[#allocation4 + $0x18] sm:$0xff] %vm7709, %v7646
    %7714 = vst.msk [vmem:[#allocation4 + $0x20] sm:$0xff] %vm7709, %v7651
    %7715 = vst.msk [vmem:[#allocation4 + $0x28] sm:$0xff] %vm7709, %v7656
    %7716 = vst.msk [vmem:[#allocation4 + $0x30] sm:$0xff] %vm7709, %v7661
    %7717 = vst.msk [vmem:[#allocation4 + $0x38] sm:$0xff] %vm7709, %v7666
    %7718 = vst.msk [vmem:[#allocation4 + $0x40] sm:$0xff] %vm7709, %v7671
    %7719 = vst.msk [vmem:[#allocation4 + $0x48] sm:$0xff] %vm7709, %v7676
    %7720 = vst.msk [vmem:[#allocation4 + $0x50] sm:$0xff] %vm7709, %v7681
    %7721 = vst.msk [vmem:[#allocation4 + $0x58] sm:$0xff] %vm7709, %v7686
    %7722 = vst.msk [vmem:[#allocation4 + $0x60] sm:$0xff] %vm7709, %v7691
    %7723 = vst.msk [vmem:[#allocation4 + $0x68] sm:$0xff] %vm7709, %v7696
    %7724 = vst.msk [vmem:[#allocation4 + $0x70] sm:$0xff] %vm7709, %v7701
    %7725 = vst.msk [vmem:[#allocation4 + $0x78] sm:$0xff] %vm7709, %v7706
    %v7726 = vld [vmem:[#allocation4] ss:$2 sm:$0xf]
    %s7727 = scalar_lea.vmem [#allocation4], 8
    %v7728 = vld [vmem:[%s7727] ss:$2 sm:$0xf]
    %s7729 = scalar_lea.vmem [#allocation4], 16
    %v7730 = vld [vmem:[%s7729] ss:$2 sm:$0xf]
    %s7731 = scalar_lea.vmem [#allocation4], 24
    %v7732 = vld [vmem:[%s7731] ss:$2 sm:$0xf]
    %s7733 = scalar_lea.vmem [#allocation4], 32
    %v7734 = vld [vmem:[%s7733] ss:$2 sm:$0xf]
    %s7735 = scalar_lea.vmem [#allocation4], 40
    %v7736 = vld [vmem:[%s7735] ss:$2 sm:$0xf]
    %s7737 = scalar_lea.vmem [#allocation4], 48
    %v7738 = vld [vmem:[%s7737] ss:$2 sm:$0xf]
    %s7739 = scalar_lea.vmem [#allocation4], 56
    %v7740 = vld [vmem:[%s7739] ss:$2 sm:$0xf]
    %s7741 = scalar_lea.vmem [#allocation4], 64
    %v7742 = vld [vmem:[%s7741] ss:$2 sm:$0xf]
    %s7743 = scalar_lea.vmem [#allocation4], 72
    %v7744 = vld [vmem:[%s7743] ss:$2 sm:$0xf]
    %s7745 = scalar_lea.vmem [#allocation4], 80
    %v7746 = vld [vmem:[%s7745] ss:$2 sm:$0xf]
    %s7747 = scalar_lea.vmem [#allocation4], 88
    %v7748 = vld [vmem:[%s7747] ss:$2 sm:$0xf]
    %s7749 = scalar_lea.vmem [#allocation4], 96
    %v7750 = vld [vmem:[%s7749] ss:$2 sm:$0xf]
    %s7751 = scalar_lea.vmem [#allocation4], 104
    %v7752 = vld [vmem:[%s7751] ss:$2 sm:$0xf]
    %s7753 = scalar_lea.vmem [#allocation4], 112
    %v7754 = vld [vmem:[%s7753] ss:$2 sm:$0xf]
    %s7755 = scalar_lea.vmem [#allocation4], 120
    %v7756 = vld [vmem:[%s7755] ss:$2 sm:$0xf]
    %s7757 = scalar_lea.vmem [#allocation4], 1
    %v7758 = vld [vmem:[%s7757] ss:$2 sm:$0xf]
    %s7759 = scalar_lea.vmem [#allocation4], 9
    %v7760 = vld [vmem:[%s7759] ss:$2 sm:$0xf]
    %s7761 = scalar_lea.vmem [#allocation4], 17
    %v7762 = vld [vmem:[%s7761] ss:$2 sm:$0xf]
    %s7763 = scalar_lea.vmem [#allocation4], 25
    %v7764 = vld [vmem:[%s7763] ss:$2 sm:$0xf]
    %s7765 = scalar_lea.vmem [#allocation4], 33
    %v7766 = vld [vmem:[%s7765] ss:$2 sm:$0xf]
    %s7767 = scalar_lea.vmem [#allocation4], 41
    %v7768 = vld [vmem:[%s7767] ss:$2 sm:$0xf]
    %s7769 = scalar_lea.vmem [#allocation4], 49
    %v7770 = vld [vmem:[%s7769] ss:$2 sm:$0xf]
    %s7771 = scalar_lea.vmem [#allocation4], 57
    %v7772 = vld [vmem:[%s7771] ss:$2 sm:$0xf]
    %s7773 = scalar_lea.vmem [#allocation4], 65
    %v7774 = vld [vmem:[%s7773] ss:$2 sm:$0xf]
    %s7775 = scalar_lea.vmem [#allocation4], 73
    %v7776 = vld [vmem:[%s7775] ss:$2 sm:$0xf]
    %s7777 = scalar_lea.vmem [#allocation4], 81
    %v7778 = vld [vmem:[%s7777] ss:$2 sm:$0xf]
    %s7779 = scalar_lea.vmem [#allocation4], 89
    %v7780 = vld [vmem:[%s7779] ss:$2 sm:$0xf]
    %s7781 = scalar_lea.vmem [#allocation4], 97
    %v7782 = vld [vmem:[%s7781] ss:$2 sm:$0xf]
    %s7783 = scalar_lea.vmem [#allocation4], 105
    %v7784 = vld [vmem:[%s7783] ss:$2 sm:$0xf]
    %s7785 = scalar_lea.vmem [#allocation4], 113
    %v7786 = vld [vmem:[%s7785] ss:$2 sm:$0xf]
    %s7787 = scalar_lea.vmem [#allocation4], 121
    %v7788 = vld [vmem:[%s7787] ss:$2 sm:$0xf]
    %v7789 = vmax.f32 %v7726, %v7758
    %v7790 = vmax.f32 %v7728, %v7760
    %v7791 = vmax.f32 %v7730, %v7762
    %v7792 = vmax.f32 %v7732, %v7764
    %v7793 = vmax.f32 %v7734, %v7766
    %v7794 = vmax.f32 %v7736, %v7768
    %v7795 = vmax.f32 %v7738, %v7770
    %v7796 = vmax.f32 %v7740, %v7772
    %v7797 = vmax.f32 %v7742, %v7774
    %v7798 = vmax.f32 %v7744, %v7776
    %v7799 = vmax.f32 %v7746, %v7778
    %v7800 = vmax.f32 %v7748, %v7780
    %v7801 = vmax.f32 %v7750, %v7782
    %v7802 = vmax.f32 %v7752, %v7784
    %v7803 = vmax.f32 %v7754, %v7786
    %v7804 = vmax.f32 %v7756, %v7788
    %v7805 = vmax.f32 %v7789, %v7790
    %v7806 = vmax.f32 %v7791, %v7792
    %v7807 = vmax.f32 %v7793, %v7794
    %v7808 = vmax.f32 %v7795, %v7796
    %v7809 = vmax.f32 %v7797, %v7798
    %v7810 = vmax.f32 %v7799, %v7800
    %v7811 = vmax.f32 %v7801, %v7802
    %v7812 = vmax.f32 %v7803, %v7804
    %v7813 = vld [vmem:[%s4] sm:$0x1]
    %v7815 = vlaneseq
    %v7816 = vshrl.u32 %v7815, 7
    %v7817 = vsub.s32 0, %v7816
    %v7818 = vrot.slane %v7813, %v7817
    %v7820 = vadd.f32 %v7805, %v7818
    %v7821 = vadd.f32 %v7806, %v7818
    %v7822 = vadd.f32 %v7807, %v7818
    %v7823 = vadd.f32 %v7808, %v7818
    %v7824 = vadd.f32 %v7809, %v7818
    %v7825 = vadd.f32 %v7810, %v7818
    %v7826 = vadd.f32 %v7811, %v7818
    %v7827 = vadd.f32 %v7812, %v7818
    %v7828 = vmax.f32 %v7820, 0.0
    %v7829 = vmax.f32 %v7821, 0.0
    %v7830 = vmax.f32 %v7822, 0.0
    %v7831 = vmax.f32 %v7823, 0.0
    %v7832 = vmax.f32 %v7824, 0.0
    %v7833 = vmax.f32 %v7825, 0.0
    %v7834 = vmax.f32 %v7826, 0.0
    %v7835 = vmax.f32 %v7827, 0.0
    %v7839 = vunpack.c.l.s4 1983009808
    %v7840 = vunpack.c.0.s8 %v7839
    %v7841 = vlaneseq
    %v7842 = vshrl.u32 %v7841, 7
    %v7843 = vsub.s32 %v7840, %v7842
    %v7844 = vrot.slane %v7828, %v7843
    %v7846 = vunpack.c.l.s4 1983009808
    %v7847 = vunpack.c.0.s8 %v7846
    %v7848 = vlaneseq
    %v7849 = vshrl.u32 %v7848, 7
    %v7850 = vsub.s32 %v7847, %v7849
    %v7851 = vrot.slane %v7832, %v7850
    %vm7852 = vcmask 1044484
    %v7853 = vsel %vm7852, %v7844, %v7844
    %vm7854 = vcmask 1046534
    %v7855 = vsel %vm7854, %v7844, %v7853
    %v7856 = vrot.slane %v7851, 7
    %vm7857 = vcmask 1041409
    %v7858 = vsel %vm7857, %v7856, %v7855
    %vm7859 = vcmask 1043459
    %v7860 = vsel %vm7859, %v7856, %v7858
    %vm7861 = vcmask 1045509
    %v7862 = vsel %vm7861, %v7856, %v7860
    %vm7863 = vcmask 1047559
    %v7864 = vsel %vm7863, %v7856, %v7862
    %vm7866 = vcmask 156672
    %7867 = vst.msk [vmem:[#allocation5] sm:$0x3] %vm7866, %v7864
    %v7868 = vrot.slane %v7844, 1
    %v7869 = vsel %vm7852, %v7868, %v7868
    %v7870 = vsel %vm7854, %v7868, %v7869
    %v7871 = vsel %vm7857, %v7851, %v7870
    %v7872 = vsel %vm7859, %v7851, %v7871
    %v7873 = vsel %vm7861, %v7851, %v7872
    %v7874 = vsel %vm7863, %v7851, %v7873
    %7875 = vrot.lane.b32.xlu0 %v7874, 20
    %v7876 = vpop.permute.xlu0 %7875
    %vm7878 = vcmask 320672
    %7879 = vst.msk [vmem:[#allocation5] sm:$0x3] %vm7878, %v7876
    %v7880 = vcombine.high %v7844, %v7844
    %v7881 = vcombine.high %v7851, %v7851
    %v7882 = vsel %vm7852, %v7880, %v7880
    %v7883 = vsel %vm7854, %v7880, %v7882
    %v7884 = vrot.slane %v7881, 7
    %v7885 = vsel %vm7857, %v7884, %v7883
    %v7886 = vsel %vm7859, %v7884, %v7885
    %v7887 = vsel %vm7861, %v7884, %v7886
    %v7888 = vsel %vm7863, %v7884, %v7887
    %7889 = vrot.lane.b32.xlu0 %v7888, 40
    %v7890 = vpop.permute.xlu0 %7889
    %vm7892 = vcmask 484672
    %7893 = vst.msk [vmem:[#allocation5] sm:$0x3] %vm7892, %v7890
    %v7894 = vrot.slane %v7880, 1
    %v7895 = vsel %vm7852, %v7894, %v7894
    %v7896 = vsel %vm7854, %v7894, %v7895
    %v7897 = vsel %vm7857, %v7881, %v7896
    %v7898 = vsel %vm7859, %v7881, %v7897
    %v7899 = vsel %vm7861, %v7881, %v7898
    %v7900 = vsel %vm7863, %v7881, %v7899
    %7901 = vrot.lane.b32.xlu0 %v7900, 60
    %v7902 = vpop.permute.xlu0 %7901
    %vm7904 = vcmask 648672
    %7905 = vst.msk [vmem:[#allocation5] sm:$0x3] %vm7904, %v7902
    %v7909 = vunpack.c.l.s4 1983009808
    %v7910 = vunpack.c.0.s8 %v7909
    %v7911 = vlaneseq
    %v7912 = vshrl.u32 %v7911, 7
    %v7913 = vsub.s32 %v7910, %v7912
    %v7914 = vrot.slane %v7829, %v7913
    %v7916 = vunpack.c.l.s4 1983009808
    %v7917 = vunpack.c.0.s8 %v7916
    %v7918 = vlaneseq
    %v7919 = vshrl.u32 %v7918, 7
    %v7920 = vsub.s32 %v7917, %v7919
    %v7921 = vrot.slane %v7833, %v7920
    %v7922 = vsel %vm7852, %v7914, %v7914
    %v7923 = vsel %vm7854, %v7914, %v7922
    %v7924 = vrot.slane %v7921, 7
    %v7925 = vsel %vm7857, %v7924, %v7923
    %v7926 = vsel %vm7859, %v7924, %v7925
    %v7927 = vsel %vm7861, %v7924, %v7926
    %v7928 = vsel %vm7863, %v7924, %v7927
    %7929 = vrot.lane.b32.xlu0 %v7928, 80
    %v7930 = vpop.permute.xlu0 %7929
    %vm7932 = vcmask 812672
    %7933 = vst.msk [vmem:[#allocation5] sm:$0x3] %vm7932, %v7930
    %v7934 = vrot.slane %v7914, 1
    %v7935 = vsel %vm7852, %v7934, %v7934
    %v7936 = vsel %vm7854, %v7934, %v7935
    %v7937 = vsel %vm7857, %v7921, %v7936
    %v7938 = vsel %vm7859, %v7921, %v7937
    %v7939 = vsel %vm7861, %v7921, %v7938
    %v7940 = vsel %vm7863, %v7921, %v7939
    %7941 = vrot.lane.b32.xlu0 %v7940, 100
    %v7942 = vpop.permute.xlu0 %7941
    %vm7944 = vcmask 976672
    %7945 = vst.msk [vmem:[#allocation5] sm:$0x3] %vm7944, %v7942
    %v7946 = vcombine.high %v7914, %v7914
    %v7947 = vcombine.high %v7921, %v7921
    %v7948 = vsel %vm7852, %v7946, %v7946
    %v7949 = vsel %vm7854, %v7946, %v7948
    %v7950 = vrot.slane %v7947, 7
    %v7951 = vsel %vm7857, %v7950, %v7949
    %v7952 = vsel %vm7859, %v7950, %v7951
    %v7953 = vsel %vm7861, %v7950, %v7952
    %v7954 = vsel %vm7863, %v7950, %v7953
    %7955 = vrot.lane.b32.xlu0 %v7954, 120
    %v7956 = vpop.permute.xlu0 %7955
    %v7957 = vrot.slane %v7956, 6
    %vm7958 = vcmask 982016
    %v7959 = vsel %vm7958, %v7957, %v7956
    %vm7961 = vcmask 1042368
    %vm7962 = vcmask 93186
    %vm7963 = vmor %vm7962, %vm7961
    %7964 = vst.msk [vmem:[#allocation5] sm:$0xf] %vm7963, %v7959
    %v7965 = vrot.slane %v7946, 1
    %v7966 = vsel %vm7852, %v7965, %v7965
    %v7967 = vsel %vm7854, %v7965, %v7966
    %v7968 = vsel %vm7857, %v7947, %v7967
    %v7969 = vsel %vm7859, %v7947, %v7968
    %v7970 = vsel %vm7861, %v7947, %v7969
    %v7971 = vsel %vm7863, %v7947, %v7970
    %7972 = vrot.lane.b32.xlu0 %v7971, 12
    %v7973 = vpop.permute.xlu0 %7972
    %vm7975 = vcmask 255072
    %7976 = vst.msk [vmem:[#allocation5 + $0x2] sm:$0x3] %vm7975, %v7973
    %v7980 = vunpack.c.l.s4 1983009808
    %v7981 = vunpack.c.0.s8 %v7980
    %v7982 = vlaneseq
    %v7983 = vshrl.u32 %v7982, 7
    %v7984 = vsub.s32 %v7981, %v7983
    %v7985 = vrot.slane %v7830, %v7984
    %v7987 = vunpack.c.l.s4 1983009808
    %v7988 = vunpack.c.0.s8 %v7987
    %v7989 = vlaneseq
    %v7990 = vshrl.u32 %v7989, 7
    %v7991 = vsub.s32 %v7988, %v7990
    %v7992 = vrot.slane %v7834, %v7991
    %v7993 = vsel %vm7852, %v7985, %v7985
    %v7994 = vsel %vm7854, %v7985, %v7993
    %v7995 = vrot.slane %v7992, 7
    %v7996 = vsel %vm7857, %v7995, %v7994
    %v7997 = vsel %vm7859, %v7995, %v7996
    %v7998 = vsel %vm7861, %v7995, %v7997
    %v7999 = vsel %vm7863, %v7995, %v7998
    %8000 = vrot.lane.b32.xlu0 %v7999, 32
    %v8001 = vpop.permute.xlu0 %8000
    %vm8003 = vcmask 419072
    %8004 = vst.msk [vmem:[#allocation5 + $0x2] sm:$0x3] %vm8003, %v8001
    %v8005 = vrot.slane %v7985, 1
    %v8006 = vsel %vm7852, %v8005, %v8005
    %v8007 = vsel %vm7854, %v8005, %v8006
    %v8008 = vsel %vm7857, %v7992, %v8007
    %v8009 = vsel %vm7859, %v7992, %v8008
    %v8010 = vsel %vm7861, %v7992, %v8009
    %v8011 = vsel %vm7863, %v7992, %v8010
    %8012 = vrot.lane.b32.xlu0 %v8011, 52
    %v8013 = vpop.permute.xlu0 %8012
    %vm8015 = vcmask 583072
    %8016 = vst.msk [vmem:[#allocation5 + $0x2] sm:$0x3] %vm8015, %v8013
    %v8017 = vcombine.high %v7985, %v7985
    %v8018 = vcombine.high %v7992, %v7992
    %v8019 = vsel %vm7852, %v8017, %v8017
    %v8020 = vsel %vm7854, %v8017, %v8019
    %v8021 = vrot.slane %v8018, 7
    %v8022 = vsel %vm7857, %v8021, %v8020
    %v8023 = vsel %vm7859, %v8021, %v8022
    %v8024 = vsel %vm7861, %v8021, %v8023
    %v8025 = vsel %vm7863, %v8021, %v8024
    %8026 = vrot.lane.b32.xlu0 %v8025, 72
    %v8027 = vpop.permute.xlu0 %8026
    %vm8029 = vcmask 747072
    %8030 = vst.msk [vmem:[#allocation5 + $0x2] sm:$0x3] %vm8029, %v8027
    %v8031 = vrot.slane %v8017, 1
    %v8032 = vsel %vm7852, %v8031, %v8031
    %v8033 = vsel %vm7854, %v8031, %v8032
    %v8034 = vsel %vm7857, %v8018, %v8033
    %v8035 = vsel %vm7859, %v8018, %v8034
    %v8036 = vsel %vm7861, %v8018, %v8035
    %v8037 = vsel %vm7863, %v8018, %v8036
    %8038 = vrot.lane.b32.xlu0 %v8037, 92
    %v8039 = vpop.permute.xlu0 %8038
    %vm8041 = vcmask 911072
    %8042 = vst.msk [vmem:[#allocation5 + $0x2] sm:$0x3] %vm8041, %v8039
    %v8046 = vunpack.c.l.s4 1983009808
    %v8047 = vunpack.c.0.s8 %v8046
    %v8048 = vlaneseq
    %v8049 = vshrl.u32 %v8048, 7
    %v8050 = vsub.s32 %v8047, %v8049
    %v8051 = vrot.slane %v7831, %v8050
    %v8053 = vunpack.c.l.s4 1983009808
    %v8054 = vunpack.c.0.s8 %v8053
    %v8055 = vlaneseq
    %v8056 = vshrl.u32 %v8055, 7
    %v8057 = vsub.s32 %v8054, %v8056
    %v8058 = vrot.slane %v7835, %v8057
    %v8059 = vsel %vm7852, %v8051, %v8051
    %v8060 = vsel %vm7854, %v8051, %v8059
    %v8061 = vrot.slane %v8058, 7
    %v8062 = vsel %vm7857, %v8061, %v8060
    %v8063 = vsel %vm7859, %v8061, %v8062
    %v8064 = vsel %vm7861, %v8061, %v8063
    %v8065 = vsel %vm7863, %v8061, %v8064
    %8066 = vrot.lane.b32.xlu0 %v8065, 112
    %v8067 = vpop.permute.xlu0 %8066
    %v8068 = vrot.slane %v8067, 6
    %vm8069 = vcmask 916480
    %v8070 = vsel %vm8069, %v8068, %v8067
    %vm8072 = vcmask 1042304
    %vm8073 = vcmask 27650
    %vm8074 = vmor %vm8073, %vm8072
    %8075 = vst.msk [vmem:[#allocation5 + $0x2] sm:$0xf] %vm8074, %v8070
    %v8076 = vrot.slane %v8051, 1
    %v8077 = vsel %vm7852, %v8076, %v8076
    %v8078 = vsel %vm7854, %v8076, %v8077
    %v8079 = vsel %vm7857, %v8058, %v8078
    %v8080 = vsel %vm7859, %v8058, %v8079
    %v8081 = vsel %vm7861, %v8058, %v8080
    %v8082 = vsel %vm7863, %v8058, %v8081
    %8083 = vrot.lane.b32.xlu0 %v8082, 4
    %v8084 = vpop.permute.xlu0 %8083
    %vm8086 = vcmask 189472
    %8087 = vst.msk [vmem:[#allocation5 + $0x4] sm:$0x3] %vm8086, %v8084
    %v8088 = vcombine.high %v8051, %v8051
    %v8089 = vcombine.high %v8058, %v8058
    %v8090 = vsel %vm7852, %v8088, %v8088
    %v8091 = vsel %vm7854, %v8088, %v8090
    %v8092 = vrot.slane %v8089, 7
    %v8093 = vsel %vm7857, %v8092, %v8091
    %v8094 = vsel %vm7859, %v8092, %v8093
    %v8095 = vsel %vm7861, %v8092, %v8094
    %v8096 = vsel %vm7863, %v8092, %v8095
    %8097 = vrot.lane.b32.xlu0 %v8096, 24
    %v8098 = vpop.permute.xlu0 %8097
    %vm8100 = vcmask 353472
    %8101 = vst.msk [vmem:[#allocation5 + $0x4] sm:$0x3] %vm8100, %v8098
    %v8102 = vrot.slane %v8088, 1
    %v8103 = vsel %vm7852, %v8102, %v8102
    %v8104 = vsel %vm7854, %v8102, %v8103
    %v8105 = vsel %vm7857, %v8089, %v8104
    %v8106 = vsel %vm7859, %v8089, %v8105
    %v8107 = vsel %vm7861, %v8089, %v8106
    %v8108 = vsel %vm7863, %v8089, %v8107
    %8109 = vrot.lane.b32.xlu0 %v8108, 44
    %v8110 = vpop.permute.xlu0 %8109
    %vm8112 = vcmask 517472
    %8113 = vst.msk [vmem:[#allocation5 + $0x4] sm:$0x3] %vm8112, %v8110
    %v8114 = vld [vmem:[#allocation5] sm:$0x3f]
    %v8115 = vlaneseq
    %v8116 = vshrl.u32 %v8115, 7
    %v8117 = vadd.s32 %v8116, 8
    %v8118 = vadd.s32 %v8116, 16
    %v8119 = vlaneseq
    %v8120 = vand.u32 %v8119, 127
    %v8121 = vadd.s32 %v8120, 128
    %v8122 = vadd.s32 %v8120, 256
    %v8123 = vmul.u32 %v8116, 16
    %v8124 = vmul.u32 %v8117, 16
    %v8125 = vmul.u32 %v8118, 16
    %v8126 = vadd.s32 %v8123, 1
    %v8127 = vadd.s32 %v8124, 1
    %v8128 = vadd.s32 %v8125, 1
    %v8129 = vadd.s32 %v8123, 2
    %v8130 = vadd.s32 %v8124, 2
    %v8131 = vadd.s32 %v8125, 2
    %v8132 = vadd.s32 %v8123, 3
    %v8133 = vadd.s32 %v8124, 3
    %v8134 = vadd.s32 %v8125, 3
    %v8135 = vadd.s32 %v8123, 4
    %v8136 = vadd.s32 %v8124, 4
    %v8137 = vadd.s32 %v8125, 4
    %v8138 = vadd.s32 %v8123, 5
    %v8139 = vadd.s32 %v8124, 5
    %v8140 = vadd.s32 %v8125, 5
    %v8141 = vadd.s32 %v8123, 6
    %v8142 = vadd.s32 %v8124, 6
    %v8143 = vadd.s32 %v8125, 6
    %v8144 = vadd.s32 %v8123, 7
    %v8145 = vadd.s32 %v8124, 7
    %v8146 = vadd.s32 %v8125, 7
    %v8147 = vadd.s32 %v8123, 8
    %v8148 = vadd.s32 %v8124, 8
    %v8149 = vadd.s32 %v8125, 8
    %v8150 = vadd.s32 %v8123, 9
    %v8151 = vadd.s32 %v8124, 9
    %v8152 = vadd.s32 %v8125, 9
    %v8153 = vadd.s32 %v8123, 10
    %v8154 = vadd.s32 %v8124, 10
    %v8155 = vadd.s32 %v8125, 10
    %v8156 = vadd.s32 %v8123, 11
    %v8157 = vadd.s32 %v8124, 11
    %v8158 = vadd.s32 %v8125, 11
    %v8159 = vadd.s32 %v8123, 12
    %v8160 = vadd.s32 %v8124, 12
    %v8161 = vadd.s32 %v8125, 12
    %v8162 = vadd.s32 %v8123, 13
    %v8163 = vadd.s32 %v8124, 13
    %v8164 = vadd.s32 %v8125, 13
    %v8165 = vadd.s32 %v8123, 14
    %v8166 = vadd.s32 %v8124, 14
    %v8167 = vadd.s32 %v8125, 14
    %v8168 = vadd.s32 %v8123, 15
    %v8169 = vadd.s32 %v8124, 15
    %v8170 = vadd.s32 %v8125, 15
    %vm8171 = vcmp.eq.s32.totalorder %v8120, %v8123
    %vm8172 = vcmp.eq.s32.totalorder %v8121, %v8123
    %vm8173 = vcmp.eq.s32.totalorder %v8122, %v8123
    %vm8174 = vcmp.eq.s32.totalorder %v8120, %v8124
    %vm8175 = vcmp.eq.s32.totalorder %v8121, %v8124
    %vm8176 = vcmp.eq.s32.totalorder %v8122, %v8124
    %vm8177 = vcmp.eq.s32.totalorder %v8120, %v8125
    %vm8178 = vcmp.eq.s32.totalorder %v8121, %v8125
    %vm8179 = vcmp.eq.s32.totalorder %v8122, %v8125
    %vm8180 = vcmp.eq.s32.totalorder %v8120, %v8126
    %vm8181 = vcmp.eq.s32.totalorder %v8121, %v8126
    %vm8182 = vcmp.eq.s32.totalorder %v8122, %v8126
    %vm8183 = vcmp.eq.s32.totalorder %v8120, %v8127
    %vm8184 = vcmp.eq.s32.totalorder %v8121, %v8127
    %vm8185 = vcmp.eq.s32.totalorder %v8122, %v8127
    %vm8186 = vcmp.eq.s32.totalorder %v8120, %v8128
    %vm8187 = vcmp.eq.s32.totalorder %v8121, %v8128
    %vm8188 = vcmp.eq.s32.totalorder %v8122, %v8128
    %vm8189 = vcmp.eq.s32.totalorder %v8120, %v8129
    %vm8190 = vcmp.eq.s32.totalorder %v8121, %v8129
    %vm8191 = vcmp.eq.s32.totalorder %v8122, %v8129
    %vm8192 = vcmp.eq.s32.totalorder %v8120, %v8130
    %vm8193 = vcmp.eq.s32.totalorder %v8121, %v8130
    %vm8194 = vcmp.eq.s32.totalorder %v8122, %v8130
    %vm8195 = vcmp.eq.s32.totalorder %v8120, %v8131
    %vm8196 = vcmp.eq.s32.totalorder %v8121, %v8131
    %vm8197 = vcmp.eq.s32.totalorder %v8122, %v8131
    %vm8198 = vcmp.eq.s32.totalorder %v8120, %v8132
    %vm8199 = vcmp.eq.s32.totalorder %v8121, %v8132
    %vm8200 = vcmp.eq.s32.totalorder %v8122, %v8132
    %vm8201 = vcmp.eq.s32.totalorder %v8120, %v8133
    %vm8202 = vcmp.eq.s32.totalorder %v8121, %v8133
    %vm8203 = vcmp.eq.s32.totalorder %v8122, %v8133
    %vm8204 = vcmp.eq.s32.totalorder %v8120, %v8134
    %vm8205 = vcmp.eq.s32.totalorder %v8121, %v8134
    %vm8206 = vcmp.eq.s32.totalorder %v8122, %v8134
    %vm8207 = vcmp.eq.s32.totalorder %v8120, %v8135
    %vm8208 = vcmp.eq.s32.totalorder %v8121, %v8135
    %vm8209 = vcmp.eq.s32.totalorder %v8122, %v8135
    %vm8210 = vcmp.eq.s32.totalorder %v8120, %v8136
    %vm8211 = vcmp.eq.s32.totalorder %v8121, %v8136
    %vm8212 = vcmp.eq.s32.totalorder %v8122, %v8136
    %vm8213 = vcmp.eq.s32.totalorder %v8120, %v8137
    %vm8214 = vcmp.eq.s32.totalorder %v8121, %v8137
    %vm8215 = vcmp.eq.s32.totalorder %v8122, %v8137
    %vm8216 = vcmp.eq.s32.totalorder %v8120, %v8138
    %vm8217 = vcmp.eq.s32.totalorder %v8121, %v8138
    %vm8218 = vcmp.eq.s32.totalorder %v8122, %v8138
    %vm8219 = vcmp.eq.s32.totalorder %v8120, %v8139
    %vm8220 = vcmp.eq.s32.totalorder %v8121, %v8139
    %vm8221 = vcmp.eq.s32.totalorder %v8122, %v8139
    %vm8222 = vcmp.eq.s32.totalorder %v8120, %v8140
    %vm8223 = vcmp.eq.s32.totalorder %v8121, %v8140
    %vm8224 = vcmp.eq.s32.totalorder %v8122, %v8140
    %vm8225 = vcmp.eq.s32.totalorder %v8120, %v8141
    %vm8226 = vcmp.eq.s32.totalorder %v8121, %v8141
    %vm8227 = vcmp.eq.s32.totalorder %v8122, %v8141
    %vm8228 = vcmp.eq.s32.totalorder %v8120, %v8142
    %vm8229 = vcmp.eq.s32.totalorder %v8121, %v8142
    %vm8230 = vcmp.eq.s32.totalorder %v8122, %v8142
    %vm8231 = vcmp.eq.s32.totalorder %v8120, %v8143
    %vm8232 = vcmp.eq.s32.totalorder %v8121, %v8143
    %vm8233 = vcmp.eq.s32.totalorder %v8122, %v8143
    %vm8234 = vcmp.eq.s32.totalorder %v8120, %v8144
    %vm8235 = vcmp.eq.s32.totalorder %v8121, %v8144
    %vm8236 = vcmp.eq.s32.totalorder %v8122, %v8144
    %vm8237 = vcmp.eq.s32.totalorder %v8120, %v8145
    %vm8238 = vcmp.eq.s32.totalorder %v8121, %v8145
    %vm8239 = vcmp.eq.s32.totalorder %v8122, %v8145
    %vm8240 = vcmp.eq.s32.totalorder %v8120, %v8146
    %vm8241 = vcmp.eq.s32.totalorder %v8121, %v8146
    %vm8242 = vcmp.eq.s32.totalorder %v8122, %v8146
    %vm8243 = vcmp.eq.s32.totalorder %v8120, %v8147
    %vm8244 = vcmp.eq.s32.totalorder %v8121, %v8147
    %vm8245 = vcmp.eq.s32.totalorder %v8122, %v8147
    %vm8246 = vcmp.eq.s32.totalorder %v8120, %v8148
    %vm8247 = vcmp.eq.s32.totalorder %v8121, %v8148
    %vm8248 = vcmp.eq.s32.totalorder %v8122, %v8148
    %vm8249 = vcmp.eq.s32.totalorder %v8120, %v8149
    %vm8250 = vcmp.eq.s32.totalorder %v8121, %v8149
    %vm8251 = vcmp.eq.s32.totalorder %v8122, %v8149
    %vm8252 = vcmp.eq.s32.totalorder %v8120, %v8150
    %vm8253 = vcmp.eq.s32.totalorder %v8121, %v8150
    %vm8254 = vcmp.eq.s32.totalorder %v8122, %v8150
    %vm8255 = vcmp.eq.s32.totalorder %v8120, %v8151
    %vm8256 = vcmp.eq.s32.totalorder %v8121, %v8151
    %vm8257 = vcmp.eq.s32.totalorder %v8122, %v8151
    %vm8258 = vcmp.eq.s32.totalorder %v8120, %v8152
    %vm8259 = vcmp.eq.s32.totalorder %v8121, %v8152
    %vm8260 = vcmp.eq.s32.totalorder %v8122, %v8152
    %vm8261 = vcmp.eq.s32.totalorder %v8120, %v8153
    %vm8262 = vcmp.eq.s32.totalorder %v8121, %v8153
    %vm8263 = vcmp.eq.s32.totalorder %v8122, %v8153
    %vm8264 = vcmp.eq.s32.totalorder %v8120, %v8154
    %vm8265 = vcmp.eq.s32.totalorder %v8121, %v8154
    %vm8266 = vcmp.eq.s32.totalorder %v8122, %v8154
    %vm8267 = vcmp.eq.s32.totalorder %v8120, %v8155
    %vm8268 = vcmp.eq.s32.totalorder %v8121, %v8155
    %vm8269 = vcmp.eq.s32.totalorder %v8122, %v8155
    %vm8270 = vcmp.eq.s32.totalorder %v8120, %v8156
    %vm8271 = vcmp.eq.s32.totalorder %v8121, %v8156
    %vm8272 = vcmp.eq.s32.totalorder %v8122, %v8156
    %vm8273 = vcmp.eq.s32.totalorder %v8120, %v8157
    %vm8274 = vcmp.eq.s32.totalorder %v8121, %v8157
    %vm8275 = vcmp.eq.s32.totalorder %v8122, %v8157
    %vm8276 = vcmp.eq.s32.totalorder %v8120, %v8158
    %vm8277 = vcmp.eq.s32.totalorder %v8121, %v8158
    %vm8278 = vcmp.eq.s32.totalorder %v8122, %v8158
    %vm8279 = vcmp.eq.s32.totalorder %v8120, %v8159
    %vm8280 = vcmp.eq.s32.totalorder %v8121, %v8159
    %vm8281 = vcmp.eq.s32.totalorder %v8122, %v8159
    %vm8282 = vcmp.eq.s32.totalorder %v8120, %v8160
    %vm8283 = vcmp.eq.s32.totalorder %v8121, %v8160
    %vm8284 = vcmp.eq.s32.totalorder %v8122, %v8160
    %vm8285 = vcmp.eq.s32.totalorder %v8120, %v8161
    %vm8286 = vcmp.eq.s32.totalorder %v8121, %v8161
    %vm8287 = vcmp.eq.s32.totalorder %v8122, %v8161
    %vm8288 = vcmp.eq.s32.totalorder %v8120, %v8162
    %vm8289 = vcmp.eq.s32.totalorder %v8121, %v8162
    %vm8290 = vcmp.eq.s32.totalorder %v8122, %v8162
    %vm8291 = vcmp.eq.s32.totalorder %v8120, %v8163
    %vm8292 = vcmp.eq.s32.totalorder %v8121, %v8163
    %vm8293 = vcmp.eq.s32.totalorder %v8122, %v8163
    %vm8294 = vcmp.eq.s32.totalorder %v8120, %v8164
    %vm8295 = vcmp.eq.s32.totalorder %v8121, %v8164
    %vm8296 = vcmp.eq.s32.totalorder %v8122, %v8164
    %vm8297 = vcmp.eq.s32.totalorder %v8120, %v8165
    %vm8298 = vcmp.eq.s32.totalorder %v8121, %v8165
    %vm8299 = vcmp.eq.s32.totalorder %v8122, %v8165
    %vm8300 = vcmp.eq.s32.totalorder %v8120, %v8166
    %vm8301 = vcmp.eq.s32.totalorder %v8121, %v8166
    %vm8302 = vcmp.eq.s32.totalorder %v8122, %v8166
    %vm8303 = vcmp.eq.s32.totalorder %v8120, %v8167
    %vm8304 = vcmp.eq.s32.totalorder %v8121, %v8167
    %vm8305 = vcmp.eq.s32.totalorder %v8122, %v8167
    %vm8306 = vcmp.eq.s32.totalorder %v8120, %v8168
    %vm8307 = vcmp.eq.s32.totalorder %v8121, %v8168
    %vm8308 = vcmp.eq.s32.totalorder %v8122, %v8168
    %vm8309 = vcmp.eq.s32.totalorder %v8120, %v8169
    %vm8310 = vcmp.eq.s32.totalorder %v8121, %v8169
    %vm8311 = vcmp.eq.s32.totalorder %v8122, %v8169
    %vm8312 = vcmp.eq.s32.totalorder %v8120, %v8170
    %vm8313 = vcmp.eq.s32.totalorder %v8121, %v8170
    %vm8314 = vcmp.eq.s32.totalorder %v8122, %v8170
    %v8315 = vsel %vm8171, 1, 0
    %v8316 = vsel %vm8172, 1, 0
    %v8317 = vsel %vm8173, 1, 0
    %v8318 = vsel %vm8174, 1, 0
    %v8319 = vsel %vm8175, 1, 0
    %v8320 = vsel %vm8176, 1, 0
    %v8321 = vsel %vm8177, 1, 0
    %v8322 = vsel %vm8178, 1, 0
    %v8323 = vsel %vm8179, 1, 0
    %v8324 = vsel %vm8180, 1, 0
    %v8325 = vsel %vm8181, 1, 0
    %v8326 = vsel %vm8182, 1, 0
    %v8327 = vsel %vm8183, 1, 0
    %v8328 = vsel %vm8184, 1, 0
    %v8329 = vsel %vm8185, 1, 0
    %v8330 = vsel %vm8186, 1, 0
    %v8331 = vsel %vm8187, 1, 0
    %v8332 = vsel %vm8188, 1, 0
    %v8333 = vsel %vm8189, 1, 0
    %v8334 = vsel %vm8190, 1, 0
    %v8335 = vsel %vm8191, 1, 0
    %v8336 = vsel %vm8192, 1, 0
    %v8337 = vsel %vm8193, 1, 0
    %v8338 = vsel %vm8194, 1, 0
    %v8339 = vsel %vm8195, 1, 0
    %v8340 = vsel %vm8196, 1, 0
    %v8341 = vsel %vm8197, 1, 0
    %v8342 = vsel %vm8198, 1, 0
    %v8343 = vsel %vm8199, 1, 0
    %v8344 = vsel %vm8200, 1, 0
    %v8345 = vsel %vm8201, 1, 0
    %v8346 = vsel %vm8202, 1, 0
    %v8347 = vsel %vm8203, 1, 0
    %v8348 = vsel %vm8204, 1, 0
    %v8349 = vsel %vm8205, 1, 0
    %v8350 = vsel %vm8206, 1, 0
    %v8351 = vsel %vm8207, 1, 0
    %v8352 = vsel %vm8208, 1, 0
    %v8353 = vsel %vm8209, 1, 0
    %v8354 = vsel %vm8210, 1, 0
    %v8355 = vsel %vm8211, 1, 0
    %v8356 = vsel %vm8212, 1, 0
    %v8357 = vsel %vm8213, 1, 0
    %v8358 = vsel %vm8214, 1, 0
    %v8359 = vsel %vm8215, 1, 0
    %v8360 = vsel %vm8216, 1, 0
    %v8361 = vsel %vm8217, 1, 0
    %v8362 = vsel %vm8218, 1, 0
    %v8363 = vsel %vm8219, 1, 0
    %v8364 = vsel %vm8220, 1, 0
    %v8365 = vsel %vm8221, 1, 0
    %v8366 = vsel %vm8222, 1, 0
    %v8367 = vsel %vm8223, 1, 0
    %v8368 = vsel %vm8224, 1, 0
    %v8369 = vsel %vm8225, 1, 0
    %v8370 = vsel %vm8226, 1, 0
    %v8371 = vsel %vm8227, 1, 0
    %v8372 = vsel %vm8228, 1, 0
    %v8373 = vsel %vm8229, 1, 0
    %v8374 = vsel %vm8230, 1, 0
    %v8375 = vsel %vm8231, 1, 0
    %v8376 = vsel %vm8232, 1, 0
    %v8377 = vsel %vm8233, 1, 0
    %v8378 = vsel %vm8234, 1, 0
    %v8379 = vsel %vm8235, 1, 0
    %v8380 = vsel %vm8236, 1, 0
    %v8381 = vsel %vm8237, 1, 0
    %v8382 = vsel %vm8238, 1, 0
    %v8383 = vsel %vm8239, 1, 0
    %v8384 = vsel %vm8240, 1, 0
    %v8385 = vsel %vm8241, 1, 0
    %v8386 = vsel %vm8242, 1, 0
    %v8387 = vsel %vm8243, 1, 0
    %v8388 = vsel %vm8244, 1, 0
    %v8389 = vsel %vm8245, 1, 0
    %v8390 = vsel %vm8246, 1, 0
    %v8391 = vsel %vm8247, 1, 0
    %v8392 = vsel %vm8248, 1, 0
    %v8393 = vsel %vm8249, 1, 0
    %v8394 = vsel %vm8250, 1, 0
    %v8395 = vsel %vm8251, 1, 0
    %v8396 = vsel %vm8252, 1, 0
    %v8397 = vsel %vm8253, 1, 0
    %v8398 = vsel %vm8254, 1, 0
    %v8399 = vsel %vm8255, 1, 0
    %v8400 = vsel %vm8256, 1, 0
    %v8401 = vsel %vm8257, 1, 0
    %v8402 = vsel %vm8258, 1, 0
    %v8403 = vsel %vm8259, 1, 0
    %v8404 = vsel %vm8260, 1, 0
    %v8405 = vsel %vm8261, 1, 0
    %v8406 = vsel %vm8262, 1, 0
    %v8407 = vsel %vm8263, 1, 0
    %v8408 = vsel %vm8264, 1, 0
    %v8409 = vsel %vm8265, 1, 0
    %v8410 = vsel %vm8266, 1, 0
    %v8411 = vsel %vm8267, 1, 0
    %v8412 = vsel %vm8268, 1, 0
    %v8413 = vsel %vm8269, 1, 0
    %v8414 = vsel %vm8270, 1, 0
    %v8415 = vsel %vm8271, 1, 0
    %v8416 = vsel %vm8272, 1, 0
    %v8417 = vsel %vm8273, 1, 0
    %v8418 = vsel %vm8274, 1, 0
    %v8419 = vsel %vm8275, 1, 0
    %v8420 = vsel %vm8276, 1, 0
    %v8421 = vsel %vm8277, 1, 0
    %v8422 = vsel %vm8278, 1, 0
    %v8423 = vsel %vm8279, 1, 0
    %v8424 = vsel %vm8280, 1, 0
    %v8425 = vsel %vm8281, 1, 0
    %v8426 = vsel %vm8282, 1, 0
    %v8427 = vsel %vm8283, 1, 0
    %v8428 = vsel %vm8284, 1, 0
    %v8429 = vsel %vm8285, 1, 0
    %v8430 = vsel %vm8286, 1, 0
    %v8431 = vsel %vm8287, 1, 0
    %v8432 = vsel %vm8288, 1, 0
    %v8433 = vsel %vm8289, 1, 0
    %v8434 = vsel %vm8290, 1, 0
    %v8435 = vsel %vm8291, 1, 0
    %v8436 = vsel %vm8292, 1, 0
    %v8437 = vsel %vm8293, 1, 0
    %v8438 = vsel %vm8294, 1, 0
    %v8439 = vsel %vm8295, 1, 0
    %v8440 = vsel %vm8296, 1, 0
    %v8441 = vsel %vm8297, 1, 0
    %v8442 = vsel %vm8298, 1, 0
    %v8443 = vsel %vm8299, 1, 0
    %v8444 = vsel %vm8300, 1, 0
    %v8445 = vsel %vm8301, 1, 0
    %v8446 = vsel %vm8302, 1, 0
    %v8447 = vsel %vm8303, 1, 0
    %v8448 = vsel %vm8304, 1, 0
    %v8449 = vsel %vm8305, 1, 0
    %v8450 = vsel %vm8306, 1, 0
    %v8451 = vsel %vm8307, 1, 0
    %v8452 = vsel %vm8308, 1, 0
    %v8453 = vsel %vm8309, 1, 0
    %v8454 = vsel %vm8310, 1, 0
    %v8455 = vsel %vm8311, 1, 0
    %v8456 = vsel %vm8312, 1, 0
    %v8457 = vsel %vm8313, 1, 0
    %v8458 = vsel %vm8314, 1, 0
    %v8459 = vcvt.s32.f32 %v8315
    %v8460 = vcvt.s32.f32 %v8316
    %v8461 = vcvt.s32.f32 %v8317
    %v8462 = vcvt.s32.f32 %v8318
    %v8463 = vcvt.s32.f32 %v8319
    %v8464 = vcvt.s32.f32 %v8320
    %v8465 = vcvt.s32.f32 %v8321
    %v8466 = vcvt.s32.f32 %v8322
    %v8467 = vcvt.s32.f32 %v8323
    %v8468 = vcvt.s32.f32 %v8324
    %v8469 = vcvt.s32.f32 %v8325
    %v8470 = vcvt.s32.f32 %v8326
    %v8471 = vcvt.s32.f32 %v8327
    %v8472 = vcvt.s32.f32 %v8328
    %v8473 = vcvt.s32.f32 %v8329
    %v8474 = vcvt.s32.f32 %v8330
    %v8475 = vcvt.s32.f32 %v8331
    %v8476 = vcvt.s32.f32 %v8332
    %v8477 = vcvt.s32.f32 %v8333
    %v8478 = vcvt.s32.f32 %v8334
    %v8479 = vcvt.s32.f32 %v8335
    %v8480 = vcvt.s32.f32 %v8336
    %v8481 = vcvt.s32.f32 %v8337
    %v8482 = vcvt.s32.f32 %v8338
    %v8483 = vcvt.s32.f32 %v8339
    %v8484 = vcvt.s32.f32 %v8340
    %v8485 = vcvt.s32.f32 %v8341
    %v8486 = vcvt.s32.f32 %v8342
    %v8487 = vcvt.s32.f32 %v8343
    %v8488 = vcvt.s32.f32 %v8344
    %v8489 = vcvt.s32.f32 %v8345
    %v8490 = vcvt.s32.f32 %v8346
    %v8491 = vcvt.s32.f32 %v8347
    %v8492 = vcvt.s32.f32 %v8348
    %v8493 = vcvt.s32.f32 %v8349
    %v8494 = vcvt.s32.f32 %v8350
    %v8495 = vcvt.s32.f32 %v8351
    %v8496 = vcvt.s32.f32 %v8352
    %v8497 = vcvt.s32.f32 %v8353
    %v8498 = vcvt.s32.f32 %v8354
    %v8499 = vcvt.s32.f32 %v8355
    %v8500 = vcvt.s32.f32 %v8356
    %v8501 = vcvt.s32.f32 %v8357
    %v8502 = vcvt.s32.f32 %v8358
    %v8503 = vcvt.s32.f32 %v8359
    %v8504 = vcvt.s32.f32 %v8360
    %v8505 = vcvt.s32.f32 %v8361
    %v8506 = vcvt.s32.f32 %v8362
    %v8507 = vcvt.s32.f32 %v8363
    %v8508 = vcvt.s32.f32 %v8364
    %v8509 = vcvt.s32.f32 %v8365
    %v8510 = vcvt.s32.f32 %v8366
    %v8511 = vcvt.s32.f32 %v8367
    %v8512 = vcvt.s32.f32 %v8368
    %v8513 = vcvt.s32.f32 %v8369
    %v8514 = vcvt.s32.f32 %v8370
    %v8515 = vcvt.s32.f32 %v8371
    %v8516 = vcvt.s32.f32 %v8372
    %v8517 = vcvt.s32.f32 %v8373
    %v8518 = vcvt.s32.f32 %v8374
    %v8519 = vcvt.s32.f32 %v8375
    %v8520 = vcvt.s32.f32 %v8376
    %v8521 = vcvt.s32.f32 %v8377
    %v8522 = vcvt.s32.f32 %v8378
    %v8523 = vcvt.s32.f32 %v8379
    %v8524 = vcvt.s32.f32 %v8380
    %v8525 = vcvt.s32.f32 %v8381
    %v8526 = vcvt.s32.f32 %v8382
    %v8527 = vcvt.s32.f32 %v8383
    %v8528 = vcvt.s32.f32 %v8384
    %v8529 = vcvt.s32.f32 %v8385
    %v8530 = vcvt.s32.f32 %v8386
    %v8531 = vcvt.s32.f32 %v8387
    %v8532 = vcvt.s32.f32 %v8388
    %v8533 = vcvt.s32.f32 %v8389
    %v8534 = vcvt.s32.f32 %v8390
    %v8535 = vcvt.s32.f32 %v8391
    %v8536 = vcvt.s32.f32 %v8392
    %v8537 = vcvt.s32.f32 %v8393
    %v8538 = vcvt.s32.f32 %v8394
    %v8539 = vcvt.s32.f32 %v8395
    %v8540 = vcvt.s32.f32 %v8396
    %v8541 = vcvt.s32.f32 %v8397
    %v8542 = vcvt.s32.f32 %v8398
    %v8543 = vcvt.s32.f32 %v8399
    %v8544 = vcvt.s32.f32 %v8400
    %v8545 = vcvt.s32.f32 %v8401
    %v8546 = vcvt.s32.f32 %v8402
    %v8547 = vcvt.s32.f32 %v8403
    %v8548 = vcvt.s32.f32 %v8404
    %v8549 = vcvt.s32.f32 %v8405
    %v8550 = vcvt.s32.f32 %v8406
    %v8551 = vcvt.s32.f32 %v8407
    %v8552 = vcvt.s32.f32 %v8408
    %v8553 = vcvt.s32.f32 %v8409
    %v8554 = vcvt.s32.f32 %v8410
    %v8555 = vcvt.s32.f32 %v8411
    %v8556 = vcvt.s32.f32 %v8412
    %v8557 = vcvt.s32.f32 %v8413
    %v8558 = vcvt.s32.f32 %v8414
    %v8559 = vcvt.s32.f32 %v8415
    %v8560 = vcvt.s32.f32 %v8416
    %v8561 = vcvt.s32.f32 %v8417
    %v8562 = vcvt.s32.f32 %v8418
    %v8563 = vcvt.s32.f32 %v8419
    %v8564 = vcvt.s32.f32 %v8420
    %v8565 = vcvt.s32.f32 %v8421
    %v8566 = vcvt.s32.f32 %v8422
    %v8567 = vcvt.s32.f32 %v8423
    %v8568 = vcvt.s32.f32 %v8424
    %v8569 = vcvt.s32.f32 %v8425
    %v8570 = vcvt.s32.f32 %v8426
    %v8571 = vcvt.s32.f32 %v8427
    %v8572 = vcvt.s32.f32 %v8428
    %v8573 = vcvt.s32.f32 %v8429
    %v8574 = vcvt.s32.f32 %v8430
    %v8575 = vcvt.s32.f32 %v8431
    %v8576 = vcvt.s32.f32 %v8432
    %v8577 = vcvt.s32.f32 %v8433
    %v8578 = vcvt.s32.f32 %v8434
    %v8579 = vcvt.s32.f32 %v8435
    %v8580 = vcvt.s32.f32 %v8436
    %v8581 = vcvt.s32.f32 %v8437
    %v8582 = vcvt.s32.f32 %v8438
    %v8583 = vcvt.s32.f32 %v8439
    %v8584 = vcvt.s32.f32 %v8440
    %v8585 = vcvt.s32.f32 %v8441
    %v8586 = vcvt.s32.f32 %v8442
    %v8587 = vcvt.s32.f32 %v8443
    %v8588 = vcvt.s32.f32 %v8444
    %v8589 = vcvt.s32.f32 %v8445
    %v8590 = vcvt.s32.f32 %v8446
    %v8591 = vcvt.s32.f32 %v8447
    %v8592 = vcvt.s32.f32 %v8448
    %v8593 = vcvt.s32.f32 %v8449
    %v8594 = vcvt.s32.f32 %v8450
    %v8595 = vcvt.s32.f32 %v8451
    %v8596 = vcvt.s32.f32 %v8452
    %v8597 = vcvt.s32.f32 %v8453
    %v8598 = vcvt.s32.f32 %v8454
    %v8599 = vcvt.s32.f32 %v8455
    %v8600 = vcvt.s32.f32 %v8456
    %v8601 = vcvt.s32.f32 %v8457
    %v8602 = vcvt.s32.f32 %v8458
    %v8747 = vcombine.low %v8459, %v8460
    %v8748 = vcombine.high %v8459, %v8460
    %v8749 = vcombine.high %v8461, %v8461
    %v8750 = vcombine.low %v8462, %v8463
    %v8751 = vcombine.high %v8462, %v8463
    %v8752 = vcombine.high %v8464, %v8464
    %v8753 = vcombine.low %v8465, %v8466
    %v8754 = vcombine.low %v8468, %v8469
    %v8755 = vcombine.high %v8468, %v8469
    %v8756 = vcombine.high %v8470, %v8470
    %v8757 = vcombine.low %v8471, %v8472
    %v8758 = vcombine.high %v8471, %v8472
    %v8759 = vcombine.high %v8473, %v8473
    %v8760 = vcombine.low %v8474, %v8475
    %v8761 = vcombine.low %v8477, %v8478
    %v8762 = vcombine.high %v8477, %v8478
    %v8763 = vcombine.high %v8479, %v8479
    %v8764 = vcombine.low %v8480, %v8481
    %v8765 = vcombine.high %v8480, %v8481
    %v8766 = vcombine.high %v8482, %v8482
    %v8767 = vcombine.low %v8483, %v8484
    %v8768 = vcombine.low %v8486, %v8487
    %v8769 = vcombine.high %v8486, %v8487
    %v8770 = vcombine.high %v8488, %v8488
    %v8771 = vcombine.low %v8489, %v8490
    %v8772 = vcombine.high %v8489, %v8490
    %v8773 = vcombine.high %v8491, %v8491
    %v8774 = vcombine.low %v8492, %v8493
    %v8775 = vcombine.low %v8495, %v8496
    %v8776 = vcombine.high %v8495, %v8496
    %v8777 = vcombine.high %v8497, %v8497
    %v8778 = vcombine.low %v8498, %v8499
    %v8779 = vcombine.high %v8498, %v8499
    %v8780 = vcombine.high %v8500, %v8500
    %v8781 = vcombine.low %v8501, %v8502
    %v8782 = vcombine.low %v8504, %v8505
    %v8783 = vcombine.high %v8504, %v8505
    %v8784 = vcombine.high %v8506, %v8506
    %v8785 = vcombine.low %v8507, %v8508
    %v8786 = vcombine.high %v8507, %v8508
    %v8787 = vcombine.high %v8509, %v8509
    %v8788 = vcombine.low %v8510, %v8511
    %v8789 = vcombine.low %v8513, %v8514
    %v8790 = vcombine.high %v8513, %v8514
    %v8791 = vcombine.high %v8515, %v8515
    %v8792 = vcombine.low %v8516, %v8517
    %v8793 = vcombine.high %v8516, %v8517
    %v8794 = vcombine.high %v8518, %v8518
    %v8795 = vcombine.low %v8519, %v8520
    %v8796 = vcombine.low %v8522, %v8523
    %v8797 = vcombine.high %v8522, %v8523
    %v8798 = vcombine.high %v8524, %v8524
    %v8799 = vcombine.low %v8525, %v8526
    %v8800 = vcombine.high %v8525, %v8526
    %v8801 = vcombine.high %v8527, %v8527
    %v8802 = vcombine.low %v8528, %v8529
    %v8803 = vcombine.low %v8531, %v8532
    %v8804 = vcombine.high %v8531, %v8532
    %v8805 = vcombine.high %v8533, %v8533
    %v8806 = vcombine.low %v8534, %v8535
    %v8807 = vcombine.high %v8534, %v8535
    %v8808 = vcombine.high %v8536, %v8536
    %v8809 = vcombine.low %v8537, %v8538
    %v8810 = vcombine.low %v8540, %v8541
    %v8811 = vcombine.high %v8540, %v8541
    %v8812 = vcombine.high %v8542, %v8542
    %v8813 = vcombine.low %v8543, %v8544
    %v8814 = vcombine.high %v8543, %v8544
    %v8815 = vcombine.high %v8545, %v8545
    %v8816 = vcombine.low %v8546, %v8547
    %v8817 = vcombine.low %v8549, %v8550
    %v8818 = vcombine.high %v8549, %v8550
    %v8819 = vcombine.high %v8551, %v8551
    %v8820 = vcombine.low %v8552, %v8553
    %v8821 = vcombine.high %v8552, %v8553
    %v8822 = vcombine.high %v8554, %v8554
    %v8823 = vcombine.low %v8555, %v8556
    %v8824 = vcombine.low %v8558, %v8559
    %v8825 = vcombine.high %v8558, %v8559
    %v8826 = vcombine.high %v8560, %v8560
    %v8827 = vcombine.low %v8561, %v8562
    %v8828 = vcombine.high %v8561, %v8562
    %v8829 = vcombine.high %v8563, %v8563
    %v8830 = vcombine.low %v8564, %v8565
    %v8831 = vcombine.low %v8567, %v8568
    %v8832 = vcombine.high %v8567, %v8568
    %v8833 = vcombine.high %v8569, %v8569
    %v8834 = vcombine.low %v8570, %v8571
    %v8835 = vcombine.high %v8570, %v8571
    %v8836 = vcombine.high %v8572, %v8572
    %v8837 = vcombine.low %v8573, %v8574
    %v8838 = vcombine.low %v8576, %v8577
    %v8839 = vcombine.high %v8576, %v8577
    %v8840 = vcombine.high %v8578, %v8578
    %v8841 = vcombine.low %v8579, %v8580
    %v8842 = vcombine.high %v8579, %v8580
    %v8843 = vcombine.high %v8581, %v8581
    %v8844 = vcombine.low %v8582, %v8583
    %v8845 = vcombine.low %v8585, %v8586
    %v8846 = vcombine.high %v8585, %v8586
    %v8847 = vcombine.high %v8587, %v8587
    %v8848 = vcombine.low %v8588, %v8589
    %v8849 = vcombine.high %v8588, %v8589
    %v8850 = vcombine.high %v8590, %v8590
    %v8851 = vcombine.low %v8591, %v8592
    %v8852 = vcombine.low %v8594, %v8595
    %v8853 = vcombine.high %v8594, %v8595
    %v8854 = vcombine.high %v8596, %v8596
    %v8855 = vcombine.low %v8597, %v8598
    %v8856 = vcombine.high %v8597, %v8598
    %v8857 = vcombine.high %v8599, %v8599
    %v8858 = vcombine.low %v8600, %v8601
    %v8859 = vrsqrt.pop %v8114
    %v8860 = vmul.f32 %v8114, %v8859
    %vm8861 = vcmp.eq.f32.partialorder %v8114, inf
    %v8862 = vsel %vm8861, %v8114, %v8860
    %vm8863 = vcmp.eq.f32.partialorder %v8114, 0.0
    %v8864 = vand.u32 %v8114, 2147483648
    %v8865 = vsel %vm8863, %v8864, %v8862
    %v8867 = vcombine.high %v8865, %v8865
    %v8869 = vunpack.c.l.s4 1983009808
    %v8870 = vunpack.c.0.s8 %v8869
    %v8871 = vlaneseq
    %v8872 = vshrl.u32 %v8871, 7
    %v8873 = vsub.s32 %v8870, %v8872
    %v8874 = vrot.slane %v8865, %v8873
    %v8876 = vunpack.c.l.s4 1983009808
    %v8877 = vunpack.c.0.s8 %v8876
    %v8878 = vlaneseq
    %v8879 = vshrl.u32 %v8878, 7
    %v8880 = vsub.s32 %v8877, %v8879
    %v8881 = vrot.slane %v8867, %v8880
    %v8882 = vcombine.high %v8874, %v8874
    %v8885 = vcombine.low %v8747, %v8748
    %v8886 = vcombine.high %v8747, %v8748
    %v8887 = vcombine.low %v8461, %v8749
    %v8888 = vcombine.low %v8750, %v8751
    %v8889 = vcombine.high %v8750, %v8751
    %v8890 = vcombine.low %v8464, %v8752
    %v8891 = vcombine.low %v8753, %v8754
    %v8892 = vcombine.high %v8753, %v8754
    %v8893 = vcombine.low %v8467, %v8470
    %v8894 = vcombine.low %v8755, %v8757
    %v8895 = vcombine.high %v8755, %v8757
    %v8896 = vcombine.low %v8756, %v8473
    %v8897 = vcombine.low %v8758, %v8760
    %v8898 = vcombine.high %v8758, %v8760
    %v8899 = vcombine.low %v8759, %v8476
    %v8900 = vcombine.low %v8761, %v8762
    %v8901 = vcombine.high %v8761, %v8762
    %v8902 = vcombine.low %v8479, %v8763
    %v8903 = vcombine.low %v8764, %v8765
    %v8904 = vcombine.high %v8764, %v8765
    %v8905 = vcombine.low %v8482, %v8766
    %v8906 = vcombine.low %v8767, %v8768
    %v8907 = vcombine.high %v8767, %v8768
    %v8908 = vcombine.low %v8485, %v8488
    %v8909 = vcombine.low %v8769, %v8771
    %v8910 = vcombine.high %v8769, %v8771
    %v8911 = vcombine.low %v8770, %v8491
    %v8912 = vcombine.low %v8772, %v8774
    %v8913 = vcombine.high %v8772, %v8774
    %v8914 = vcombine.low %v8773, %v8494
    %v8915 = vcombine.low %v8775, %v8776
    %v8916 = vcombine.high %v8775, %v8776
    %v8917 = vcombine.low %v8497, %v8777
    %v8918 = vcombine.low %v8778, %v8779
    %v8919 = vcombine.high %v8778, %v8779
    %v8920 = vcombine.low %v8500, %v8780
    %v8921 = vcombine.low %v8781, %v8782
    %v8922 = vcombine.high %v8781, %v8782
    %v8923 = vcombine.low %v8503, %v8506
    %v8924 = vcombine.low %v8783, %v8785
    %v8925 = vcombine.high %v8783, %v8785
    %v8926 = vcombine.low %v8784, %v8509
    %v8927 = vcombine.low %v8786, %v8788
    %v8928 = vcombine.high %v8786, %v8788
    %v8929 = vcombine.low %v8787, %v8512
    %v8930 = vcombine.low %v8789, %v8790
    %v8931 = vcombine.high %v8789, %v8790
    %v8932 = vcombine.low %v8515, %v8791
    %v8933 = vcombine.low %v8792, %v8793
    %v8934 = vcombine.high %v8792, %v8793
    %v8935 = vcombine.low %v8518, %v8794
    %v8936 = vcombine.low %v8795, %v8796
    %v8937 = vcombine.high %v8795, %v8796
    %v8938 = vcombine.low %v8521, %v8524
    %v8939 = vcombine.low %v8797, %v8799
    %v8940 = vcombine.high %v8797, %v8799
    %v8941 = vcombine.low %v8798, %v8527
    %v8942 = vcombine.low %v8800, %v8802
    %v8943 = vcombine.high %v8800, %v8802
    %v8944 = vcombine.low %v8801, %v8530
    %v8945 = vcombine.low %v8803, %v8804
    %v8946 = vcombine.high %v8803, %v8804
    %v8947 = vcombine.low %v8533, %v8805
    %v8948 = vcombine.low %v8806, %v8807
    %v8949 = vcombine.high %v8806, %v8807
    %v8950 = vcombine.low %v8536, %v8808
    %v8951 = vcombine.low %v8809, %v8810
    %v8952 = vcombine.high %v8809, %v8810
    %v8953 = vcombine.low %v8539, %v8542
    %v8954 = vcombine.low %v8811, %v8813
    %v8955 = vcombine.high %v8811, %v8813
    %v8956 = vcombine.low %v8812, %v8545
    %v8957 = vcombine.low %v8814, %v8816
    %v8958 = vcombine.high %v8814, %v8816
    %v8959 = vcombine.low %v8815, %v8548
    %v8960 = vcombine.low %v8817, %v8818
    %v8961 = vcombine.high %v8817, %v8818
    %v8962 = vcombine.low %v8551, %v8819
    %v8963 = vcombine.low %v8820, %v8821
    %v8964 = vcombine.high %v8820, %v8821
    %v8965 = vcombine.low %v8554, %v8822
    %v8966 = vcombine.low %v8823, %v8824
    %v8967 = vcombine.high %v8823, %v8824
    %v8968 = vcombine.low %v8557, %v8560
    %v8969 = vcombine.low %v8825, %v8827
    %v8970 = vcombine.high %v8825, %v8827
    %v8971 = vcombine.low %v8826, %v8563
    %v8972 = vcombine.low %v8828, %v8830
    %v8973 = vcombine.high %v8828, %v8830
    %v8974 = vcombine.low %v8829, %v8566
    %v8975 = vcombine.low %v8831, %v8832
    %v8976 = vcombine.high %v8831, %v8832
    %v8977 = vcombine.low %v8569, %v8833
    %v8978 = vcombine.low %v8834, %v8835
    %v8979 = vcombine.high %v8834, %v8835
    %v8980 = vcombine.low %v8572, %v8836
    %v8981 = vcombine.low %v8837, %v8838
    %v8982 = vcombine.high %v8837, %v8838
    %v8983 = vcombine.low %v8575, %v8578
    %v8984 = vcombine.low %v8839, %v8841
    %v8985 = vcombine.high %v8839, %v8841
    %v8986 = vcombine.low %v8840, %v8581
    %v8987 = vcombine.low %v8842, %v8844
    %v8988 = vcombine.high %v8842, %v8844
    %v8989 = vcombine.low %v8843, %v8584
    %v8990 = vcombine.low %v8845, %v8846
    %v8991 = vcombine.high %v8845, %v8846
    %v8992 = vcombine.low %v8587, %v8847
    %v8993 = vcombine.low %v8848, %v8849
    %v8994 = vcombine.high %v8848, %v8849
    %v8995 = vcombine.low %v8590, %v8850
    %v8996 = vcombine.low %v8851, %v8852
    %v8997 = vcombine.high %v8851, %v8852
    %v8998 = vcombine.low %v8593, %v8596
    %v8999 = vcombine.low %v8853, %v8855
    %v9000 = vcombine.high %v8853, %v8855
    %v9001 = vcombine.low %v8854, %v8599
    %v9002 = vcombine.low %v8856, %v8858
    %v9003 = vcombine.high %v8856, %v8858
    %v9004 = vcombine.low %v8857, %v8602
    %vm9125 = vcmask 523264
    %v9126 = vsel %vm9125, %v8881, 0
    %9128 = vmatprep.subr.mxu0 %v8886
    %9129 = vmatpush1.msra.mxu0 %v8885
    %9130 = vmatprep.subr.mxu0 %v8889
    %9131 = vmatpush1.msra.mxu0 %v8888
    %9132 = vmatprep.subr.mxu0 %v8892
    %9133 = vmatpush1.msra.mxu0 %v8891
    %9134 = vmatprep.subr.mxu0 %v8895
    %9135 = vmatpush1.msra.mxu0 %v8894
    %9136 = vmatprep.subr.mxu0 %v8898
    %9137 = vmatpush1.msra.mxu0 %v8897
    %9138 = vmatprep.subr.mxu0 %v8901
    %9139 = vmatpush1.msra.mxu0 %v8900
    %9140 = vmatprep.subr.mxu0 %v8904
    %9141 = vmatpush1.msra.mxu0 %v8903
    %9142 = vmatprep.subr.mxu0 %v8907
    %9143 = vmatpush1.msra.mxu0 %v8906
    %9144 = vmatprep.subr.mxu0 %v8910
    %9145 = vmatpush1.msra.mxu0 %v8909
    %9146 = vmatprep.subr.mxu0 %v8913
    %9147 = vmatpush1.msra.mxu0 %v8912
    %9148 = vmatprep.subr.mxu0 %v8916
    %9149 = vmatpush1.msra.mxu0 %v8915
    %9150 = vmatprep.subr.mxu0 %v8919
    %9151 = vmatpush1.msra.mxu0 %v8918
    %9152 = vmatprep.subr.mxu0 %v8922
    %9153 = vmatpush1.msra.mxu0 %v8921
    %9154 = vmatprep.subr.mxu0 %v8925
    %9155 = vmatpush1.msra.mxu0 %v8924
    %9156 = vmatprep.subr.mxu0 %v8928
    %9157 = vmatpush1.msra.mxu0 %v8927
    %9158 = vmatprep.subr.mxu0 %v8931
    %9159 = vmatpush1.msra.mxu0 %v8930
    %9160 = vmatprep.subr.mxu0 %v8934
    %9161 = vmatpush1.msra.mxu0 %v8933
    %9162 = vmatprep.subr.mxu0 %v8937
    %9163 = vmatpush1.msra.mxu0 %v8936
    %9164 = vmatprep.subr.mxu0 %v8940
    %9165 = vmatpush1.msra.mxu0 %v8939
    %9166 = vmatprep.subr.mxu0 %v8943
    %9167 = vmatpush1.msra.mxu0 %v8942
    %9168 = vmatprep.subr.mxu0 %v8946
    %9169 = vmatpush1.msra.mxu0 %v8945
    %9170 = vmatprep.subr.mxu0 %v8949
    %9171 = vmatpush1.msra.mxu0 %v8948
    %9172 = vmatprep.subr.mxu0 %v8952
    %9173 = vmatpush1.msra.mxu0 %v8951
    %9174 = vmatprep.subr.mxu0 %v8955
    %9175 = vmatpush1.msra.mxu0 %v8954
    %9176 = vmatprep.subr.mxu0 %v8958
    %9177 = vmatpush1.msra.mxu0 %v8957
    %9178 = vmatprep.subr.mxu0 %v8961
    %9179 = vmatpush1.msra.mxu0 %v8960
    %9180 = vmatprep.subr.mxu0 %v8964
    %9181 = vmatpush1.msra.mxu0 %v8963
    %9182 = vmatprep.subr.mxu0 %v8967
    %9183 = vmatpush1.msra.mxu0 %v8966
    %9184 = vmatprep.subr.mxu0 %v8970
    %9185 = vmatpush1.msra.mxu0 %v8969
    %9186 = vmatprep.subr.mxu0 %v8973
    %9187 = vmatpush1.msra.mxu0 %v8972
    %9188 = vmatprep.subr.mxu0 %v8976
    %9189 = vmatpush1.msra.mxu0 %v8975
    %9190 = vmatprep.subr.mxu0 %v8979
    %9191 = vmatpush1.msra.mxu0 %v8978
    %9192 = vmatprep.mubr.f32.mxu0 %v8882
    %9193 = vmatmul.mubr.f32.gmra.mrb[0].mxu0 %v8874
    %v9194 = vpop.f32.mrb[0].mxu0
    %v9195 = vadd.f32 0.0, %v9194
    %v9196 = vpop.f32.mrb[0].mxu0
    %v9197 = vadd.f32 0.0, %v9196
    %9198 = vdwg.mxu0
    %9199 = vmatprep.subr.mxu0 %v8982
    %9200 = vmatpush1.msra.mxu0 %v8981
    %9201 = vmatprep.subr.mxu0 %v8985
    %9202 = vmatpush1.msra.mxu0 %v8984
    %9203 = vmatprep.subr.mxu0 %v8988
    %9204 = vmatpush1.msra.mxu0 %v8987
    %9205 = vmatprep.subr.mxu0 %v8991
    %9206 = vmatpush1.msra.mxu0 %v8990
    %9207 = vmatprep.subr.mxu0 %v8994
    %9208 = vmatpush1.msra.mxu0 %v8993
    %9209 = vmatprep.subr.mxu0 %v8997
    %9210 = vmatpush1.msra.mxu0 %v8996
    %9211 = vmatprep.subr.mxu0 %v9000
    %9212 = vmatpush1.msra.mxu0 %v8999
    %9213 = vmatprep.subr.mxu0 %v9003
    %9214 = vmatpush1.msra.mxu0 %v9002
    %9215 = vmatprep.subr.mxu0 0.0
    %9216 = vmatpush1.msra.mxu0 0.0
    %9217 = vmatprep.subr.mxu0 0.0
    %9218 = vmatpush1.msra.mxu0 0.0
    %9219 = vmatprep.subr.mxu0 0.0
    %9220 = vmatpush1.msra.mxu0 0.0
    %9221 = vmatprep.subr.mxu0 0.0
    %9222 = vmatpush1.msra.mxu0 0.0
    %9223 = vmatprep.subr.mxu0 0.0
    %9224 = vmatpush1.msra.mxu0 0.0
    %9225 = vmatprep.subr.mxu0 0.0
    %9226 = vmatpush1.msra.mxu0 0.0
    %9227 = vmatprep.subr.mxu0 0.0
    %9228 = vmatpush1.msra.mxu0 0.0
    %9229 = vmatprep.subr.mxu0 0.0
    %9230 = vmatpush1.msra.mxu0 0.0
    %9231 = vmatprep.subr.mxu0 0.0
    %9232 = vmatpush1.msra.mxu0 0.0
    %9233 = vmatprep.subr.mxu0 0.0
    %9234 = vmatpush1.msra.mxu0 0.0
    %9235 = vmatprep.subr.mxu0 0.0
    %9236 = vmatpush1.msra.mxu0 0.0
    %9237 = vmatprep.subr.mxu0 0.0
    %9238 = vmatpush1.msra.mxu0 0.0
    %9239 = vmatprep.subr.mxu0 0.0
    %9240 = vmatpush1.msra.mxu0 0.0
    %9241 = vmatprep.subr.mxu0 0.0
    %9242 = vmatpush1.msra.mxu0 0.0
    %9243 = vmatprep.subr.mxu0 0.0
    %9244 = vmatpush1.msra.mxu0 0.0
    %9245 = vmatprep.subr.mxu0 0.0
    %9246 = vmatpush1.msra.mxu0 0.0
    %9247 = vmatprep.subr.mxu0 0.0
    %9248 = vmatpush1.msra.mxu0 0.0
    %9249 = vmatprep.subr.mxu0 0.0
    %9250 = vmatpush1.msra.mxu0 0.0
    %9251 = vmatprep.subr.mxu0 0.0
    %9252 = vmatpush1.msra.mxu0 0.0
    %9253 = vmatprep.subr.mxu0 0.0
    %9254 = vmatpush1.msra.mxu0 0.0
    %9255 = vmatprep.subr.mxu0 0.0
    %9256 = vmatpush1.msra.mxu0 0.0
    %9257 = vmatprep.subr.mxu0 0.0
    %9258 = vmatpush1.msra.mxu0 0.0
    %9259 = vmatprep.subr.mxu0 0.0
    %9260 = vmatpush1.msra.mxu0 0.0
    %9261 = vmatprep.subr.mxu0 0.0
    %9262 = vmatpush1.msra.mxu0 0.0
    %9263 = vmatprep.mubr.f32.mxu0 0.0
    %9264 = vmatmul.mubr.f32.gmra.mrb[0].mxu0 %v9126
    %v9265 = vpop.f32.mrb[0].mxu0
    %v9266 = vadd.f32 %v9195, %v9265
    %v9267 = vpop.f32.mrb[0].mxu0
    %v9268 = vadd.f32 %v9197, %v9267
    %9269 = vdwg.mxu0
    %9270 = vmatprep.subr.mxu0 0.0
    %9271 = vmatpush1.msra.mxu0 %v8887
    %9272 = vmatprep.subr.mxu0 0.0
    %9273 = vmatpush1.msra.mxu0 %v8890
    %9274 = vmatprep.subr.mxu0 0.0
    %9275 = vmatpush1.msra.mxu0 %v8893
    %9276 = vmatprep.subr.mxu0 0.0
    %9277 = vmatpush1.msra.mxu0 %v8896
    %9278 = vmatprep.subr.mxu0 0.0
    %9279 = vmatpush1.msra.mxu0 %v8899
    %9280 = vmatprep.subr.mxu0 0.0
    %9281 = vmatpush1.msra.mxu0 %v8902
    %9282 = vmatprep.subr.mxu0 0.0
    %9283 = vmatpush1.msra.mxu0 %v8905
    %9284 = vmatprep.subr.mxu0 0.0
    %9285 = vmatpush1.msra.mxu0 %v8908
    %9286 = vmatprep.subr.mxu0 0.0
    %9287 = vmatpush1.msra.mxu0 %v8911
    %9288 = vmatprep.subr.mxu0 0.0
    %9289 = vmatpush1.msra.mxu0 %v8914
    %9290 = vmatprep.subr.mxu0 0.0
    %9291 = vmatpush1.msra.mxu0 %v8917
    %9292 = vmatprep.subr.mxu0 0.0
    %9293 = vmatpush1.msra.mxu0 %v8920
    %9294 = vmatprep.subr.mxu0 0.0
    %9295 = vmatpush1.msra.mxu0 %v8923
    %9296 = vmatprep.subr.mxu0 0.0
    %9297 = vmatpush1.msra.mxu0 %v8926
    %9298 = vmatprep.subr.mxu0 0.0
    %9299 = vmatpush1.msra.mxu0 %v8929
    %9300 = vmatprep.subr.mxu0 0.0
    %9301 = vmatpush1.msra.mxu0 %v8932
    %9302 = vmatprep.subr.mxu0 0.0
    %9303 = vmatpush1.msra.mxu0 %v8935
    %9304 = vmatprep.subr.mxu0 0.0
    %9305 = vmatpush1.msra.mxu0 %v8938
    %9306 = vmatprep.subr.mxu0 0.0
    %9307 = vmatpush1.msra.mxu0 %v8941
    %9308 = vmatprep.subr.mxu0 0.0
    %9309 = vmatpush1.msra.mxu0 %v8944
    %9310 = vmatprep.subr.mxu0 0.0
    %9311 = vmatpush1.msra.mxu0 %v8947
    %9312 = vmatprep.subr.mxu0 0.0
    %9313 = vmatpush1.msra.mxu0 %v8950
    %9314 = vmatprep.subr.mxu0 0.0
    %9315 = vmatpush1.msra.mxu0 %v8953
    %9316 = vmatprep.subr.mxu0 0.0
    %9317 = vmatpush1.msra.mxu0 %v8956
    %9318 = vmatprep.subr.mxu0 0.0
    %9319 = vmatpush1.msra.mxu0 %v8959
    %9320 = vmatprep.subr.mxu0 0.0
    %9321 = vmatpush1.msra.mxu0 %v8962
    %9322 = vmatprep.subr.mxu0 0.0
    %9323 = vmatpush1.msra.mxu0 %v8965
    %9324 = vmatprep.subr.mxu0 0.0
    %9325 = vmatpush1.msra.mxu0 %v8968
    %9326 = vmatprep.subr.mxu0 0.0
    %9327 = vmatpush1.msra.mxu0 %v8971
    %9328 = vmatprep.subr.mxu0 0.0
    %9329 = vmatpush1.msra.mxu0 %v8974
    %9330 = vmatprep.subr.mxu0 0.0
    %9331 = vmatpush1.msra.mxu0 %v8977
    %9332 = vmatprep.subr.mxu0 0.0
    %9333 = vmatpush1.msra.mxu0 %v8980
    %9334 = vmatprep.mubr.f32.mxu0 %v8882
    %9335 = vmatmul.mubr.f32.gmra.mrb[0].mxu0 %v8874
    %v9336 = vpop.f32.mrb[0].mxu0
    %v9337 = vadd.f32 0.0, %v9336
    %v9338 = vpop.f32.mrb[0].mxu0
    %9339 = vdwg.mxu0
    %9340 = vmatprep.subr.mxu0 0.0
    %9341 = vmatpush1.msra.mxu0 %v8983
    %9342 = vmatprep.subr.mxu0 0.0
    %9343 = vmatpush1.msra.mxu0 %v8986
    %9344 = vmatprep.subr.mxu0 0.0
    %9345 = vmatpush1.msra.mxu0 %v8989
    %9346 = vmatprep.subr.mxu0 0.0
    %9347 = vmatpush1.msra.mxu0 %v8992
    %9348 = vmatprep.subr.mxu0 0.0
    %9349 = vmatpush1.msra.mxu0 %v8995
    %9350 = vmatprep.subr.mxu0 0.0
    %9351 = vmatpush1.msra.mxu0 %v8998
    %9352 = vmatprep.subr.mxu0 0.0
    %9353 = vmatpush1.msra.mxu0 %v9001
    %9354 = vmatprep.subr.mxu0 0.0
    %9355 = vmatpush1.msra.mxu0 %v9004
    %9356 = vmatprep.subr.mxu0 0.0
    %9357 = vmatpush1.msra.mxu0 0.0
    %9358 = vmatprep.subr.mxu0 0.0
    %9359 = vmatpush1.msra.mxu0 0.0
    %9360 = vmatprep.subr.mxu0 0.0
    %9361 = vmatpush1.msra.mxu0 0.0
    %9362 = vmatprep.subr.mxu0 0.0
    %9363 = vmatpush1.msra.mxu0 0.0
    %9364 = vmatprep.subr.mxu0 0.0
    %9365 = vmatpush1.msra.mxu0 0.0
    %9366 = vmatprep.subr.mxu0 0.0
    %9367 = vmatpush1.msra.mxu0 0.0
    %9368 = vmatprep.subr.mxu0 0.0
    %9369 = vmatpush1.msra.mxu0 0.0
    %9370 = vmatprep.subr.mxu0 0.0
    %9371 = vmatpush1.msra.mxu0 0.0
    %9372 = vmatprep.subr.mxu0 0.0
    %9373 = vmatpush1.msra.mxu0 0.0
    %9374 = vmatprep.subr.mxu0 0.0
    %9375 = vmatpush1.msra.mxu0 0.0
    %9376 = vmatprep.subr.mxu0 0.0
    %9377 = vmatpush1.msra.mxu0 0.0
    %9378 = vmatprep.subr.mxu0 0.0
    %9379 = vmatpush1.msra.mxu0 0.0
    %9380 = vmatprep.subr.mxu0 0.0
    %9381 = vmatpush1.msra.mxu0 0.0
    %9382 = vmatprep.subr.mxu0 0.0
    %9383 = vmatpush1.msra.mxu0 0.0
    %9384 = vmatprep.subr.mxu0 0.0
    %9385 = vmatpush1.msra.mxu0 0.0
    %9386 = vmatprep.subr.mxu0 0.0
    %9387 = vmatpush1.msra.mxu0 0.0
    %9388 = vmatprep.subr.mxu0 0.0
    %9389 = vmatpush1.msra.mxu0 0.0
    %9390 = vmatprep.subr.mxu0 0.0
    %9391 = vmatpush1.msra.mxu0 0.0
    %9392 = vmatprep.subr.mxu0 0.0
    %9393 = vmatpush1.msra.mxu0 0.0
    %9394 = vmatprep.subr.mxu0 0.0
    %9395 = vmatpush1.msra.mxu0 0.0
    %9396 = vmatprep.subr.mxu0 0.0
    %9397 = vmatpush1.msra.mxu0 0.0
    %9398 = vmatprep.subr.mxu0 0.0
    %9399 = vmatpush1.msra.mxu0 0.0
    %9400 = vmatprep.subr.mxu0 0.0
    %9401 = vmatpush1.msra.mxu0 0.0
    %9402 = vmatprep.subr.mxu0 0.0
    %9403 = vmatpush1.msra.mxu0 0.0
    %9404 = vmatprep.mubr.f32.mxu0 0.0
    %9405 = vmatmul.mubr.f32.gmra.mrb[0].mxu0 %v9126
    %v9406 = vpop.f32.mrb[0].mxu0
    %v9407 = vadd.f32 %v9337, %v9406
    %v9408 = vpop.f32.mrb[0].mxu0
    %9409 = vdwg.mxu0
    %v9413 = vcombine.low %v9266, %v9268
    %v9415 = vunpack.c.l.s4 1983009808
    %v9416 = vunpack.c.0.s8 %v9415
    %v9417 = vlaneseq
    %v9418 = vshrl.u32 %v9417, 7
    %v9419 = vsub.s32 %v9416, %v9418
    %v9420 = vrot.slane %v9413, %v9419
    %v9422 = vunpack.c.l.s4 1983009808
    %v9423 = vunpack.c.0.s8 %v9422
    %v9424 = vlaneseq
    %v9425 = vshrl.u32 %v9424, 7
    %v9426 = vsub.s32 %v9423, %v9425
    %v9427 = vrot.slane %v9407, %v9426
    %v9428 = vcombine.low %v9420, %v9427
    %vm9430 = vcmask 1043458
    %vm9431 = vmor %vm9430, %vm7560
    %vm9432 = vcmask 521220
    %vm9433 = vmor %vm9432, %vm9431
    %9434 = vst.msk [vmem:[#allocation6] sm:$0x3f] %vm9433, %v9428
    %v9435 = vld [vmem:[%s5] sm:$0xff]
    %v9436 = vld [vmem:[%s5 + $0x8] sm:$0xff]
    %v9437 = vld [vmem:[%s5 + $0x10] sm:$0xff]
    %v9438 = vld [vmem:[%s5 + $0x18] sm:$0xff]
    %v9439 = vld [vmem:[%s5 + $0x20] sm:$0xff]
    %v9440 = vld [vmem:[%s5 + $0x28] sm:$0xff]
    %v9441 = vld [vmem:[%s5 + $0x30] sm:$0xff]
    %v9442 = vld [vmem:[%s5 + $0x38] sm:$0xff]
    %v9443 = vld [vmem:[%s5 + $0x40] sm:$0xff]
    %v9444 = vld [vmem:[%s5 + $0x48] sm:$0xff]
    %v9445 = vld [vmem:[%s5 + $0x50] sm:$0xff]
    %v9446 = vld [vmem:[%s5 + $0x58] sm:$0xff]
    %v9447 = vld [vmem:[%s5 + $0x60] sm:$0xff]
    %v9448 = vld [vmem:[%s5 + $0x68] sm:$0xff]
    %v9449 = vld [vmem:[%s5 + $0x70] sm:$0xff]
    %v9450 = vld [vmem:[%s5 + $0x78] sm:$0xff]
    %v9451 = vld [vmem:[%s5 + $0x80] sm:$0xff]
    %v9452 = vld [vmem:[%s5 + $0x88] sm:$0xff]
    %v9453 = vld [vmem:[%s5 + $0x90] sm:$0xff]
    %v9454 = vld [vmem:[%s5 + $0x98] sm:$0xff]
    %v9455 = vld [vmem:[%s5 + $0xa0] sm:$0xff]
    %v9456 = vld [vmem:[%s5 + $0xa8] sm:$0xff]
    %v9457 = vld [vmem:[%s5 + $0xb0] sm:$0xff]
    %v9458 = vld [vmem:[%s5 + $0xb8] sm:$0xff]
    %v9459 = vld [vmem:[%s5 + $0xc0] sm:$0xff]
    %v9460 = vld [vmem:[%s5 + $0xc8] sm:$0xff]
    %v9461 = vld [vmem:[%s5 + $0xd0] sm:$0xff]
    %v9462 = vld [vmem:[%s5 + $0xd8] sm:$0xff]
    %v9463 = vld [vmem:[%s5 + $0xe0] sm:$0xff]
    %v9464 = vld [vmem:[%s5 + $0xe8] sm:$0xff]
    %v9465 = vld [vmem:[%s5 + $0xf0] sm:$0xff]
    %v9466 = vld [vmem:[%s5 + $0xf8] sm:$0xff]
    %v9467 = vld [vmem:[%s5 + $0x100] sm:$0xff]
    %v9468 = vld [vmem:[%s5 + $0x108] sm:$0xff]
    %v9469 = vld [vmem:[%s5 + $0x110] sm:$0xff]
    %v9470 = vld [vmem:[%s5 + $0x118] sm:$0xff]
    %v9471 = vld [vmem:[%s5 + $0x120] sm:$0xff]
    %v9472 = vld [vmem:[%s5 + $0x128] sm:$0xff]
    %v9473 = vld [vmem:[%s5 + $0x130] sm:$0xff]
    %v9474 = vld [vmem:[%s5 + $0x138] sm:$0xff]
    %v9475 = vld [vmem:[%s6] sm:$0x1]
    %v9477 = vlaneseq
    %v9478 = vshrl.u32 %v9477, 7
    %v9479 = vsub.s32 0, %v9478
    %v9480 = vrot.slane %v9475, %v9479
    %v9483 = vcombine.high %v8114, %v8114
    %v9485 = vunpack.c.l.s4 1983009808
    %v9486 = vunpack.c.0.s8 %v9485
    %v9487 = vlaneseq
    %v9488 = vshrl.u32 %v9487, 7
    %v9489 = vsub.s32 %v9486, %v9488
    %v9490 = vrot.slane %v8114, %v9489
    %v9492 = vunpack.c.l.s4 1983009808
    %v9493 = vunpack.c.0.s8 %v9492
    %v9494 = vlaneseq
    %v9495 = vshrl.u32 %v9494, 7
    %v9496 = vsub.s32 %v9493, %v9495
    %v9497 = vrot.slane %v9483, %v9496
    %v9498 = vcombine.high %v9490, %v9490
    %v9501 = vsel %vm9125, %v9497, 0
    %9503 = vmatprep.subr.mxu0 0.0
    %9504 = vmatpush1.msra.mxu0 %v9435
    %9505 = vmatprep.subr.mxu0 0.0
    %9506 = vmatpush1.msra.mxu0 %v9436
    %9507 = vmatprep.subr.mxu0 0.0
    %9508 = vmatpush1.msra.mxu0 %v9437
    %9509 = vmatprep.subr.mxu0 0.0
    %9510 = vmatpush1.msra.mxu0 %v9438
    %9511 = vmatprep.subr.mxu0 0.0
    %9512 = vmatpush1.msra.mxu0 %v9439
    %9513 = vmatprep.subr.mxu0 0.0
    %9514 = vmatpush1.msra.mxu0 %v9440
    %9515 = vmatprep.subr.mxu0 0.0
    %9516 = vmatpush1.msra.mxu0 %v9441
    %9517 = vmatprep.subr.mxu0 0.0
    %9518 = vmatpush1.msra.mxu0 %v9442
    %9519 = vmatprep.subr.mxu0 0.0
    %9520 = vmatpush1.msra.mxu0 %v9443
    %9521 = vmatprep.subr.mxu0 0.0
    %9522 = vmatpush1.msra.mxu0 %v9444
    %9523 = vmatprep.subr.mxu0 0.0
    %9524 = vmatpush1.msra.mxu0 %v9445
    %9525 = vmatprep.subr.mxu0 0.0
    %9526 = vmatpush1.msra.mxu0 %v9446
    %9527 = vmatprep.subr.mxu0 0.0
    %9528 = vmatpush1.msra.mxu0 %v9447
    %9529 = vmatprep.subr.mxu0 0.0
    %9530 = vmatpush1.msra.mxu0 %v9448
    %9531 = vmatprep.subr.mxu0 0.0
    %9532 = vmatpush1.msra.mxu0 %v9449
    %9533 = vmatprep.subr.mxu0 0.0
    %9534 = vmatpush1.msra.mxu0 %v9450
    %9535 = vmatprep.subr.mxu0 0.0
    %9536 = vmatpush1.msra.mxu0 %v9451
    %9537 = vmatprep.subr.mxu0 0.0
    %9538 = vmatpush1.msra.mxu0 %v9452
    %9539 = vmatprep.subr.mxu0 0.0
    %9540 = vmatpush1.msra.mxu0 %v9453
    %9541 = vmatprep.subr.mxu0 0.0
    %9542 = vmatpush1.msra.mxu0 %v9454
    %9543 = vmatprep.subr.mxu0 0.0
    %9544 = vmatpush1.msra.mxu0 %v9455
    %9545 = vmatprep.subr.mxu0 0.0
    %9546 = vmatpush1.msra.mxu0 %v9456
    %9547 = vmatprep.subr.mxu0 0.0
    %9548 = vmatpush1.msra.mxu0 %v9457
    %9549 = vmatprep.subr.mxu0 0.0
    %9550 = vmatpush1.msra.mxu0 %v9458
    %9551 = vmatprep.subr.mxu0 0.0
    %9552 = vmatpush1.msra.mxu0 %v9459
    %9553 = vmatprep.subr.mxu0 0.0
    %9554 = vmatpush1.msra.mxu0 %v9460
    %9555 = vmatprep.subr.mxu0 0.0
    %9556 = vmatpush1.msra.mxu0 %v9461
    %9557 = vmatprep.subr.mxu0 0.0
    %9558 = vmatpush1.msra.mxu0 %v9462
    %9559 = vmatprep.subr.mxu0 0.0
    %9560 = vmatpush1.msra.mxu0 %v9463
    %9561 = vmatprep.subr.mxu0 0.0
    %9562 = vmatpush1.msra.mxu0 %v9464
    %9563 = vmatprep.subr.mxu0 0.0
    %9564 = vmatpush1.msra.mxu0 %v9465
    %9565 = vmatprep.subr.mxu0 0.0
    %9566 = vmatpush1.msra.mxu0 %v9466
    %9567 = vmatprep.mubr.f32.mxu0 %v9498
    %9568 = vmatmul.mubr.f32.gmra.mrb[0].mxu0 %v9490
    %v9569 = vpop.f32.mrb[0].mxu0
    %v9570 = vadd.f32 %v9480, %v9569
    %v9571 = vpop.f32.mrb[0].mxu0
    %9572 = vdwg.mxu0
    %9573 = vmatprep.subr.mxu0 0.0
    %9574 = vmatpush1.msra.mxu0 %v9467
    %9575 = vmatprep.subr.mxu0 0.0
    %9576 = vmatpush1.msra.mxu0 %v9468
    %9577 = vmatprep.subr.mxu0 0.0
    %9578 = vmatpush1.msra.mxu0 %v9469
    %9579 = vmatprep.subr.mxu0 0.0
    %9580 = vmatpush1.msra.mxu0 %v9470
    %9581 = vmatprep.subr.mxu0 0.0
    %9582 = vmatpush1.msra.mxu0 %v9471
    %9583 = vmatprep.subr.mxu0 0.0
    %9584 = vmatpush1.msra.mxu0 %v9472
    %9585 = vmatprep.subr.mxu0 0.0
    %9586 = vmatpush1.msra.mxu0 %v9473
    %9587 = vmatprep.subr.mxu0 0.0
    %9588 = vmatpush1.msra.mxu0 %v9474
    %9589 = vmatprep.subr.mxu0 0.0
    %9590 = vmatpush1.msra.mxu0 0.0
    %9591 = vmatprep.subr.mxu0 0.0
    %9592 = vmatpush1.msra.mxu0 0.0
    %9593 = vmatprep.subr.mxu0 0.0
    %9594 = vmatpush1.msra.mxu0 0.0
    %9595 = vmatprep.subr.mxu0 0.0
    %9596 = vmatpush1.msra.mxu0 0.0
    %9597 = vmatprep.subr.mxu0 0.0
    %9598 = vmatpush1.msra.mxu0 0.0
    %9599 = vmatprep.subr.mxu0 0.0
    %9600 = vmatpush1.msra.mxu0 0.0
    %9601 = vmatprep.subr.mxu0 0.0
    %9602 = vmatpush1.msra.mxu0 0.0
    %9603 = vmatprep.subr.mxu0 0.0
    %9604 = vmatpush1.msra.mxu0 0.0
    %9605 = vmatprep.subr.mxu0 0.0
    %9606 = vmatpush1.msra.mxu0 0.0
    %9607 = vmatprep.subr.mxu0 0.0
    %9608 = vmatpush1.msra.mxu0 0.0
    %9609 = vmatprep.subr.mxu0 0.0
    %9610 = vmatpush1.msra.mxu0 0.0
    %9611 = vmatprep.subr.mxu0 0.0
    %9612 = vmatpush1.msra.mxu0 0.0
    %9613 = vmatprep.subr.mxu0 0.0
    %9614 = vmatpush1.msra.mxu0 0.0
    %9615 = vmatprep.subr.mxu0 0.0
    %9616 = vmatpush1.msra.mxu0 0.0
    %9617 = vmatprep.subr.mxu0 0.0
    %9618 = vmatpush1.msra.mxu0 0.0
    %9619 = vmatprep.subr.mxu0 0.0
    %9620 = vmatpush1.msra.mxu0 0.0
    %9621 = vmatprep.subr.mxu0 0.0
    %9622 = vmatpush1.msra.mxu0 0.0
    %9623 = vmatprep.subr.mxu0 0.0
    %9624 = vmatpush1.msra.mxu0 0.0
    %9625 = vmatprep.subr.mxu0 0.0
    %9626 = vmatpush1.msra.mxu0 0.0
    %9627 = vmatprep.subr.mxu0 0.0
    %9628 = vmatpush1.msra.mxu0 0.0
    %9629 = vmatprep.subr.mxu0 0.0
    %9630 = vmatpush1.msra.mxu0 0.0
    %9631 = vmatprep.subr.mxu0 0.0
    %9632 = vmatpush1.msra.mxu0 0.0
    %9633 = vmatprep.subr.mxu0 0.0
    %9634 = vmatpush1.msra.mxu0 0.0
    %9635 = vmatprep.subr.mxu0 0.0
    %9636 = vmatpush1.msra.mxu0 0.0
    %9637 = vmatprep.mubr.f32.mxu0 0.0
    %9638 = vmatmul.mubr.f32.gmra.mrb[0].mxu0 %v9501
    %v9639 = vpop.f32.mrb[0].mxu0
    %v9640 = vadd.f32 %v9570, %v9639
    %v9641 = vpop.f32.mrb[0].mxu0
    %9642 = vdwg.mxu0
    %v9643 = vmax.f32 %v9640, 0.0
    %v9644 = vrsqrt.pop %v9643
    %v9645 = vmul.f32 %v9643, %v9644
    %vm9646 = vcmp.eq.f32.partialorder %v9643, inf
    %v9647 = vsel %vm9646, %v9643, %v9645
    %vm9648 = vcmp.eq.f32.partialorder %v9643, 0.0
    %v9649 = vand.u32 %v9643, 2147483648
    %v9650 = vsel %vm9648, %v9649, %v9647
    %vm9651 = vcmask 402432
    %9652 = vst.msk [vmem:[#allocation8] sm:$0x3] %vm9651, %v9650
    %v9653 = vld [vmem:[%s7] sm:$0xff]
    %v9654 = vld [vmem:[%s7 + $0x8] sm:$0xff]
    %v9655 = vld [vmem:[%s7 + $0x10] sm:$0xff]
    %v9656 = vld [vmem:[%s7 + $0x18] sm:$0xff]
    %v9657 = vld [vmem:[%s7 + $0x20] sm:$0xff]
    %v9658 = vld [vmem:[%s7 + $0x28] sm:$0xff]
    %v9659 = vld [vmem:[%s7 + $0x30] sm:$0x3]
    %v9660 = vld [vmem:[%s8] sm:$0x1]
    %v9662 = vlaneseq
    %v9663 = vshrl.u32 %v9662, 7
    %v9664 = vsub.s32 0, %v9663
    %v9665 = vrot.slane %v9660, %v9664
    %vm9667 = vcmask 408576
    %v9669 = vsel %vm9667, %v9643, 0
    %v9672 = vsel %vm7560, %v9659, 0
    %9674 = vmatprep.subr.mxu0 0.0
    %9675 = vmatpush1.msra.mxu0 %v9653
    %9676 = vmatprep.subr.mxu0 0.0
    %9677 = vmatpush1.msra.mxu0 %v9654
    %9678 = vmatprep.subr.mxu0 0.0
    %9679 = vmatpush1.msra.mxu0 %v9655
    %9680 = vmatprep.subr.mxu0 0.0
    %9681 = vmatpush1.msra.mxu0 %v9656
    %9682 = vmatprep.subr.mxu0 0.0
    %9683 = vmatpush1.msra.mxu0 %v9657
    %9684 = vmatprep.subr.mxu0 0.0
    %9685 = vmatpush1.msra.mxu0 %v9658
    %9686 = vmatprep.subr.mxu0 0.0
    %9687 = vmatpush1.msra.mxu0 %v9672
    %9688 = vmatprep.subr.mxu0 0.0
    %9689 = vmatpush1.msra.mxu0 0.0
    %9690 = vmatprep.subr.mxu0 0.0
    %9691 = vmatpush1.msra.mxu0 0.0
    %9692 = vmatprep.subr.mxu0 0.0
    %9693 = vmatpush1.msra.mxu0 0.0
    %9694 = vmatprep.subr.mxu0 0.0
    %9695 = vmatpush1.msra.mxu0 0.0
    %9696 = vmatprep.subr.mxu0 0.0
    %9697 = vmatpush1.msra.mxu0 0.0
    %9698 = vmatprep.subr.mxu0 0.0
    %9699 = vmatpush1.msra.mxu0 0.0
    %9700 = vmatprep.subr.mxu0 0.0
    %9701 = vmatpush1.msra.mxu0 0.0
    %9702 = vmatprep.subr.mxu0 0.0
    %9703 = vmatpush1.msra.mxu0 0.0
    %9704 = vmatprep.subr.mxu0 0.0
    %9705 = vmatpush1.msra.mxu0 0.0
    %9706 = vmatprep.subr.mxu0 0.0
    %9707 = vmatpush1.msra.mxu0 0.0
    %9708 = vmatprep.subr.mxu0 0.0
    %9709 = vmatpush1.msra.mxu0 0.0
    %9710 = vmatprep.subr.mxu0 0.0
    %9711 = vmatpush1.msra.mxu0 0.0
    %9712 = vmatprep.subr.mxu0 0.0
    %9713 = vmatpush1.msra.mxu0 0.0
    %9714 = vmatprep.subr.mxu0 0.0
    %9715 = vmatpush1.msra.mxu0 0.0
    %9716 = vmatprep.subr.mxu0 0.0
    %9717 = vmatpush1.msra.mxu0 0.0
    %9718 = vmatprep.subr.mxu0 0.0
    %9719 = vmatpush1.msra.mxu0 0.0
    %9720 = vmatprep.subr.mxu0 0.0
    %9721 = vmatpush1.msra.mxu0 0.0
    %9722 = vmatprep.subr.mxu0 0.0
    %9723 = vmatpush1.msra.mxu0 0.0
    %9724 = vmatprep.subr.mxu0 0.0
    %9725 = vmatpush1.msra.mxu0 0.0
    %9726 = vmatprep.subr.mxu0 0.0
    %9727 = vmatpush1.msra.mxu0 0.0
    %9728 = vmatprep.subr.mxu0 0.0
    %9729 = vmatpush1.msra.mxu0 0.0
    %9730 = vmatprep.subr.mxu0 0.0
    %9731 = vmatpush1.msra.mxu0 0.0
    %9732 = vmatprep.subr.mxu0 0.0
    %9733 = vmatpush1.msra.mxu0 0.0
    %9734 = vmatprep.subr.mxu0 0.0
    %9735 = vmatpush1.msra.mxu0 0.0
    %9736 = vmatprep.subr.mxu0 0.0
    %9737 = vmatpush1.msra.mxu0 0.0
    %9738 = vmatprep.mubr.f32.mxu0 0.0
    %9739 = vmatmul.mubr.f32.gmra.mrb[0].mxu0 %v9669
    %v9740 = vpop.f32.mrb[0].mxu0
    %v9741 = vadd.f32 %v9665, %v9740
    %v9742 = vpop.f32.mrb[0].mxu0
    %9743 = vdwg.mxu0
    %vm9744 = vcmask 74752
    %v9745 = vsel %vm9744, %v9741, -inf
    %9746 = vmax.xlane.f32.xlu0 %v9745
    %v9747 = vpop.xlane.xlu0 %9746
    %v9748 = vsub.f32 %v9741, %v9747
    %v9749 = vmul.f32 %v9748, 1.442695
    %v9750 = vpow.pop %v9749
    %v9751 = vsel %vm9744, %v9750, 0.0
    %9752 = vadd.xlane.f32.xlu0 %v9751
    %v9753 = vpop.xlane.xlu0 %9752
    %v9754 = vlog2.pop %v9753
    %v9755 = vmul.f32 %v9754, 0.6931472
    %v9756 = vadd.f32 %v9755, %v9747
    %v9757 = vsub.f32 %v9741, %v9756
    %9758 = vst.msk [vmem:[#allocation10] sm:$0x3] %vm9744, %v9757
    // Predicated region
    $region38: #{my_cnn_net_forward.1} parent=1 // pred_check
      _
    $region39: #{my_cnn_net_forward.1} parent=1 // pred_check_branch
      %9760 = sbr.rel (0) target = $region41
    $region40: #{my_cnn_net_forward.1} parent=1 // pred_region
      _
    $region41: #{my_cnn_net_forward.1} parent=1 // pred_fallthru
      _
    // Predicated region
    $region42: #{my_cnn_net_forward.1} parent=1 // pred_check
      _
    $region43: #{my_cnn_net_forward.1} parent=1 // pred_check_branch
      %9762 = sbr.rel (0) target = $region45
    $region44: #{my_cnn_net_forward.1} parent=1 // pred_region
      %s9764 = ssub.s32 96, 96
      %9765 = vsyncadd [#allocation7], %s9764
      %s9767 = sshll.u32 [#allocation6], 4
      %s9768 = int_to_ptr.vmem [resolvable:$true] %s9767
      %9770 = dma.vmem_to_hbm [thread:$0]  %s9768, 96, %s10, [#allocation7]
    $region45: #{my_cnn_net_forward.1} parent=1 // pred_fallthru
      _
    // Predicated region
    $region46: #{my_cnn_net_forward.1} parent=1 // pred_check
      _
    $region47: #{my_cnn_net_forward.1} parent=1 // pred_check_branch
      %9772 = sbr.rel (0) target = $region49
    $region48: #{my_cnn_net_forward.1} parent=1 // pred_region
      %s9774 = ssub.s32 32, 32
      %9775 = vsyncadd [#allocation9], %s9774
      %s9777 = sshll.u32 [#allocation8], 4
      %s9778 = int_to_ptr.vmem [resolvable:$true] %s9777
      %9780 = dma.vmem_to_hbm [thread:$0]  %s9778, 32, %s11, [#allocation9]
    $region49: #{my_cnn_net_forward.1} parent=1 // pred_fallthru
      _
    // Predicated region
    $region50: #{my_cnn_net_forward.1} parent=1 // pred_check
      _
    $region51: #{my_cnn_net_forward.1} parent=1 // pred_check_branch
      %9782 = sbr.rel (0) target = $region53
    $region52: #{my_cnn_net_forward.1} parent=1 // pred_region
      %s9784 = ssub.s32 32, 32
      %9785 = vsyncadd [#allocation9], %s9784
      %s9787 = sshll.u32 [#allocation10], 4
      %s9788 = int_to_ptr.vmem [resolvable:$true] %s9787
      %9790 = dma.vmem_to_hbm [thread:$0]  %s9788, 32, %s12, [#allocation9]
    $region53: #{my_cnn_net_forward.1} parent=1 // pred_fallthru
      _
    // Predicated region
    $region54: #{my_cnn_net_forward.1} parent=1 // pred_check
      _
    $region55: #{my_cnn_net_forward.1} parent=1 // pred_check_branch
      %9792 = sbr.rel (0) target = $region57
    $region56: #{my_cnn_net_forward.1} parent=1 // pred_region
      _
    $region57: #{my_cnn_net_forward.1} parent=1 // pred_fallthru
      _
    // Predicated region
    $region58: #{my_cnn_net_forward.1} parent=1 // pred_check
      _
    $region59: #{my_cnn_net_forward.1} parent=1 // pred_check_branch
      %9794 = sbr.rel (0) target = $region61
    $region60: #{my_cnn_net_forward.1} parent=1 // pred_region
      %9795 = dma.done [#allocation7], 96
    $region61: #{my_cnn_net_forward.1} parent=1 // pred_fallthru
      _
    // Predicated region
    $region62: #{my_cnn_net_forward.1} parent=1 // pred_check
      _
    $region63: #{my_cnn_net_forward.1} parent=1 // pred_check_branch
      %9797 = sbr.rel (0) target = $region65
    $region64: #{my_cnn_net_forward.1} parent=1 // pred_region
      %9798 = dma.done [#allocation9], 32
    $region65: #{my_cnn_net_forward.1} parent=1 // pred_fallthru
      _
    // Predicated region
    $region66: #{my_cnn_net_forward.1} parent=1 // pred_check
      _
    $region67: #{my_cnn_net_forward.1} parent=1 // pred_check_branch
      %9800 = sbr.rel (0) target = $region69
    $region68: #{my_cnn_net_forward.1} parent=1 // pred_region
      %9801 = dma.done [#allocation9], 32
    $region69: #{my_cnn_net_forward.1} parent=1 // pred_fallthru
      _
    %9802 = vsyncpa [#allocation7], 1
    %9803 = vsyncpa [#allocation9], 1

</llo_original>
